<compile_context>
chip_gen: v6e
topology: v6e:2x2x1
jax: 0.10.0
libtpu: 0.0.40
codegen_flags: <defaults>
</compile_context>

<pallas_src>
import jax
import jax.numpy as jnp
from jax.experimental import pallas as pl
from jax.experimental.pallas import tpu as pltpu

_MAX_TILE_B = 8192  # ~17 MiB of double-buffered input tiles; fits v6e/v7x scoped VMEM


def _round_up(x, m):
    return (x + m - 1) // m * m


def _vmem_limit_bytes(tb):
    # Two double-buffered f32 input streams, lane-padded to 128 lanes, plus
    # double-buffered (1, tb) output tiles, tiny weights, and headroom.
    inputs = 2 * 2 * tb * 128 * 4
    outputs = 2 * tb * 4
    est = inputs + outputs + (1 << 20)
    return int(min(max(est * 5 // 4, 16 << 20), 48 << 20))


def _qfunction_kernel(obs_ref, act_ref, w1o_ref, w1a_ref, w2_ref,
                      consts_ref, b3_ref, o_ref):
    b1 = consts_ref[0:1, :]                         # (1, H)
    b2 = consts_ref[1:2, :]                         # (1, H)
    w3r = consts_ref[2:3, :]                        # (1, H)
    # ---- layer 1: split matmul == concat([obs, action], 1) @ W1 -------------
    h1 = jnp.dot(obs_ref[...], w1o_ref[...], preferred_element_type=jnp.float32)
    h1 = h1 + jnp.dot(act_ref[...], w1a_ref[...],
                      preferred_element_type=jnp.float32)
    h1 = jnp.maximum(h1 + b1, 0.0)                  # [tb, H]
    # ---- layer 2 -------------------------------------------------------------
    h2 = jnp.dot(h1, w2_ref[...], preferred_element_type=jnp.float32)
    h2 = jnp.maximum(h2 + b2, 0.0)                  # [tb, H]
    # ---- layer 3 (out_features = 1): VPU multiply + lane reduction -----------
    q = jnp.sum(h2 * w3r, axis=-1)                  # [tb]
    o_ref[...] = (q[None, :] + b3_ref[...]).astype(o_ref.dtype)  # (1, tb)


def qfunction_reference(obs, action, params):
    """Pure-JAX reference (also used as the small-batch fast path)."""
    w1, b1, w2, b2, w3, b3 = params
    x = jnp.concatenate([obs, action], axis=1)
    h1 = jnp.maximum(x @ w1 + b1, 0.0)
    h2 = jnp.maximum(h1 @ w2 + b2, 0.0)
    return h2 @ w3 + b3


def qfunction_forward(obs, action, params, *, tile_b=4096, min_pallas_batch=512):
    """Pallas implementation of QFunction.forward(obs, action) -> (B, 1)."""
    assert obs.shape[0] == action.shape[0]
    w1, b1, w2, b2, w3, b3 = params
    batch = obs.shape[0]
    obs_dim = obs.shape[1]
    act_dim = action.shape[1]
    hidden = w1.shape[1]

    # Tiny batches: launch overhead + 128-row padding dominate; let XLA fuse it.
    if batch < min_pallas_batch:
        return qfunction_reference(obs, action, params)

    # Split W1 so the kernel never needs a concatenated [obs, action] in HBM;
    # pack the three tiny (1, H) constants into one operand.
    w1_obs = w1[:obs_dim]                                  # (obs_dim, H)
    w1_act = w1[obs_dim:]                                  # (act_dim, H)
    consts = jnp.concatenate([b1, b2, w3.reshape(1, hidden)], axis=0)  # (3, H)
    b3_2d = b3.reshape(1, 1)

    # Batch tile: big (amortize ~0.35us/step), multiple of 128 (lane-dense
    # output stores), capped so double-buffered input tiles fit scoped VMEM.
    tb = min(tile_b, _MAX_TILE_B, _round_up(batch, 128))
    # v7x megacore: if one tile would cover a large batch, split into >= 2 grid
    # steps so the "parallel" axis can shard across the 2 TensorCores.
    if batch >= 2048 and pl.cdiv(batch, tb) < 2:
        tb = _round_up(pl.cdiv(batch, 2), 128)

    grid = (pl.cdiv(batch, tb),)
    const = lambda i: (0, 0)          # weights/biases stay VMEM-resident

    out = pl.pallas_call(
        _qfunction_kernel,
        out_shape=jax.ShapeDtypeStruct((1, batch), jnp.float32),
        grid_spec=pltpu.PrefetchScalarGridSpec(
            num_scalar_prefetch=0,
            grid=grid,
            in_specs=[
                pl.BlockSpec((tb, obs_dim), lambda i: (i, 0)),   # obs tile
                pl.BlockSpec((tb, act_dim), lambda i: (i, 0)),   # action tile
                pl.BlockSpec((obs_dim, hidden), const),          # W1_obs
                pl.BlockSpec((act_dim, hidden), const),          # W1_act
                pl.BlockSpec((hidden, hidden), const),           # W2
                pl.BlockSpec((3, hidden), const),                # [b1; b2; w3^T]
                pl.BlockSpec((1, 1), const),                     # b3
            ],
            out_specs=pl.BlockSpec((1, tb), lambda i: (0, i)),
        ),
        compiler_params=pltpu.CompilerParams(
            dimension_semantics=("parallel",),
            vmem_limit_bytes=_vmem_limit_bytes(tb)),
    )(obs, action, w1_obs, w1_act, w2, consts, b3_2d)

    return out.reshape(batch, 1)


def init_qfunction_params(key, obs_dim, action_dim, hidden_dim):
    """Deterministic init mirroring nn.Linear defaults (U(-1/sqrt(fan_in), ...))."""
    def linear(key, fan_in, fan_out):
        kw, kb = jax.random.split(key)
        bound = 1.0 / jnp.sqrt(fan_in)
        # stored as [in, out] so the kernel does x @ W
        w = jax.random.uniform(kw, (fan_in, fan_out), jnp.float32, -bound, bound)
        b = jax.random.uniform(kb, (1, fan_out), jnp.float32, -bound, bound)
        return w, b

    k1, k2, k3 = jax.random.split(key, 3)
    w1, b1 = linear(k1, obs_dim + action_dim, hidden_dim)
    w2, b2 = linear(k2, hidden_dim, hidden_dim)
    w3, b3 = linear(k3, hidden_dim, 1)
    return (w1, b1, w2, b2, w3, b3)


if __name__ == "__main__":
    obs_dim, action_dim, hidden_dim = 16, 8, 32

    key = jax.random.PRNGKey(0)
    k_obs, k_act, k_params = jax.random.split(key, 3)
    params = init_qfunction_params(k_params, obs_dim, action_dim, hidden_dim)

    # Pallas path: batch above the fallback threshold and ragged vs. the
    # 128-row tile, so the masked last block / no-pad path is exercised.
    batch = 600
    obs = jax.random.normal(k_obs, (batch, obs_dim), jnp.float32)
    action = jax.random.normal(k_act, (batch, action_dim), jnp.float32)

    q = jax.block_until_ready(qfunction_forward(obs, action, params))
    q_ref = qfunction_reference(obs, action, params)
    assert q.shape == (batch, 1)
    assert jnp.allclose(q, q_ref, atol=1e-5, rtol=1e-5), \
        float(jnp.max(jnp.abs(q - q_ref)))

    # Small-batch fallback path (pure JAX, no kernel launch).
    small = 8
    q_s = jax.block_until_ready(qfunction_forward(obs[:small], action[:small], params))
    q_s_ref = qfunction_reference(obs[:small], action[:small], params)
    assert q_s.shape == (small, 1)
    assert jnp.allclose(q_s, q_s_ref, atol=1e-5, rtol=1e-5)

    print("KERNEL_OK")
</pallas_src>

<mosaic_0001>
module attributes {stable_mosaic.version = 11 : i64} {
  func.func @_qfunction_kernel(%arg0: i32, %arg1: memref<640x16xf32, #tpu.memory_space<vmem>>, %arg2: memref<640x8xf32, #tpu.memory_space<vmem>>, %arg3: memref<16x32xf32, #tpu.memory_space<vmem>>, %arg4: memref<8x32xf32, #tpu.memory_space<vmem>>, %arg5: memref<32x32xf32, #tpu.memory_space<vmem>>, %arg6: memref<3x32xf32, #tpu.memory_space<vmem>>, %arg7: memref<1x1xf32, #tpu.memory_space<vmem>>, %arg8: memref<1x640xf32, #tpu.memory_space<vmem>>) attributes {dimension_semantics = [#tpu.dimension_semantics<parallel>], iteration_bounds = array<i64: 1>, scalar_prefetch = 0 : i64, scratch_operands = 0 : i64, tpu.core_type = #tpu.core_type<tc>, window_params = [{transform_indices = @transform_0, window_bounds = array<i64: 640, 16>}, {transform_indices = @transform_1, window_bounds = array<i64: 640, 8>}, {pipeline_mode = #tpu.pipeline_mode<synchronous>, transform_indices = @transform_2, window_bounds = array<i64: 16, 32>}, {pipeline_mode = #tpu.pipeline_mode<synchronous>, transform_indices = @transform_3, window_bounds = array<i64: 8, 32>}, {pipeline_mode = #tpu.pipeline_mode<synchronous>, transform_indices = @transform_4, window_bounds = array<i64: 32, 32>}, {pipeline_mode = #tpu.pipeline_mode<synchronous>, transform_indices = @transform_5, window_bounds = array<i64: 3, 32>}, {pipeline_mode = #tpu.pipeline_mode<synchronous>, transform_indices = @transform_6, window_bounds = array<i64: 1, 1>}, {transform_indices = @transform_7, window_bounds = array<i64: 1, 640>}]} {
    %c0 = arith.constant 0 : index
    %c0_0 = arith.constant 0 : index
    %0 = vector.load %arg6[%c0, %c0_0] : memref<3x32xf32, #tpu.memory_space<vmem>>, vector<1x32xf32>
    %c1 = arith.constant 1 : index
    %c0_1 = arith.constant 0 : index
    %1 = vector.load %arg6[%c1, %c0_1] : memref<3x32xf32, #tpu.memory_space<vmem>>, vector<1x32xf32>
    %c2 = arith.constant 2 : index
    %c0_2 = arith.constant 0 : index
    %2 = vector.load %arg6[%c2, %c0_2] : memref<3x32xf32, #tpu.memory_space<vmem>>, vector<1x32xf32>
    %c0_3 = arith.constant 0 : index
    %c0_4 = arith.constant 0 : index
    %3 = vector.load %arg1[%c0_3, %c0_4] : memref<640x16xf32, #tpu.memory_space<vmem>>, vector<640x16xf32>
    %c0_5 = arith.constant 0 : index
    %c0_6 = arith.constant 0 : index
    %4 = vector.load %arg3[%c0_5, %c0_6] : memref<16x32xf32, #tpu.memory_space<vmem>>, vector<16x32xf32>
    %cst = arith.constant dense<0.000000e+00> : vector<640x32xf32>
    %5 = tpu.matmul %3, %4, %cst {dimension_numbers = #tpu.dot_dimension_numbers<[1], [0], [0], [1], [0, 0, 1, 1], [], []>} : vector<640x16xf32>, vector<16x32xf32>, vector<640x32xf32> -> vector<640x32xf32>
    %c0_7 = arith.constant 0 : index
    %c0_8 = arith.constant 0 : index
    %6 = vector.load %arg2[%c0_7, %c0_8] : memref<640x8xf32, #tpu.memory_space<vmem>>, vector<640x8xf32>
    %c0_9 = arith.constant 0 : index
    %c0_10 = arith.constant 0 : index
    %7 = vector.load %arg4[%c0_9, %c0_10] : memref<8x32xf32, #tpu.memory_space<vmem>>, vector<8x32xf32>
    %cst_11 = arith.constant dense<0.000000e+00> : vector<640x32xf32>
    %8 = tpu.matmul %6, %7, %cst_11 {dimension_numbers = #tpu.dot_dimension_numbers<[1], [0], [0], [1], [0, 0, 1, 1], [], []>} : vector<640x8xf32>, vector<8x32xf32>, vector<640x32xf32> -> vector<640x32xf32>
    %9 = arith.addf %5, %8 : vector<640x32xf32>
    %10 = vector.broadcast %0 : vector<1x32xf32> to vector<640x32xf32>
    %11 = arith.addf %9, %10 : vector<640x32xf32>
    %cst_12 = arith.constant 0.000000e+00 : f32
    %12 = vector.broadcast %cst_12 : f32 to vector<640x32xf32>
    %13 = arith.maximumf %11, %12 : vector<640x32xf32>
    %c0_13 = arith.constant 0 : index
    %c0_14 = arith.constant 0 : index
    %14 = vector.load %arg5[%c0_13, %c0_14] : memref<32x32xf32, #tpu.memory_space<vmem>>, vector<32x32xf32>
    %cst_15 = arith.constant dense<0.000000e+00> : vector<640x32xf32>
    %15 = tpu.matmul %13, %14, %cst_15 {dimension_numbers = #tpu.dot_dimension_numbers<[1], [0], [0], [1], [0, 0, 1, 1], [], []>} : vector<640x32xf32>, vector<32x32xf32>, vector<640x32xf32> -> vector<640x32xf32>
    %16 = vector.broadcast %1 : vector<1x32xf32> to vector<640x32xf32>
    %17 = arith.addf %15, %16 : vector<640x32xf32>
    %cst_16 = arith.constant 0.000000e+00 : f32
    %18 = vector.broadcast %cst_16 : f32 to vector<640x32xf32>
    %19 = arith.maximumf %17, %18 : vector<640x32xf32>
    %20 = vector.broadcast %2 : vector<1x32xf32> to vector<640x32xf32>
    %21 = arith.mulf %19, %20 : vector<640x32xf32>
    %cst_17 = arith.constant dense<0.000000e+00> : vector<640xf32>
    %22 = vector.multi_reduction <add>, %21, %cst_17 [1] : vector<640x32xf32> to vector<640xf32>
    %23 = vector.shape_cast %22 : vector<640xf32> to vector<1x640xf32>
    %c0_18 = arith.constant 0 : index
    %c0_19 = arith.constant 0 : index
    %24 = vector.load %arg7[%c0_18, %c0_19] : memref<1x1xf32, #tpu.memory_space<vmem>>, vector<1x1xf32>
    %25 = vector.broadcast %24 : vector<1x1xf32> to vector<1x640xf32>
    %26 = arith.addf %23, %25 : vector<1x640xf32>
    %c0_20 = arith.constant 0 : index
    %c0_21 = arith.constant 0 : index
    %27 = vector.load %arg8[%c0_20, %c0_21] : memref<1x640xf32, #tpu.memory_space<vmem>>, vector<1x640xf32>
    tpu.vector_store %arg8[%c0_20, %c0_21], %26 {strides = array<i32>} : memref<1x640xf32, #tpu.memory_space<vmem>>, vector<1x640xf32>,
    return
  }
  func.func @transform_0(%arg0: i32) -> (i32, i32) {
    %c0_i32 = arith.constant 0 : i32
    %c0_i32_0 = arith.constant 0 : i32
    return %arg0, %c0_i32 : i32, i32
  }
  func.func @transform_1(%arg0: i32) -> (i32, i32) {
    %c0_i32 = arith.constant 0 : i32
    %c0_i32_0 = arith.constant 0 : i32
    return %arg0, %c0_i32 : i32, i32
  }
  func.func @transform_2(%arg0: i32) -> (i32, i32) {
    %c0_i32 = arith.constant 0 : i32
    %c0_i32_0 = arith.constant 0 : i32
    %c0_i32_1 = arith.constant 0 : i32
    return %c0_i32, %c0_i32_0 : i32, i32
  }
  func.func @transform_3(%arg0: i32) -> (i32, i32) {
    %c0_i32 = arith.constant 0 : i32
    %c0_i32_0 = arith.constant 0 : i32
    %c0_i32_1 = arith.constant 0 : i32
    return %c0_i32, %c0_i32_0 : i32, i32
  }
  func.func @transform_4(%arg0: i32) -> (i32, i32) {
    %c0_i32 = arith.constant 0 : i32
    %c0_i32_0 = arith.constant 0 : i32
    %c0_i32_1 = arith.constant 0 : i32
    return %c0_i32, %c0_i32_0 : i32, i32
  }
  func.func @transform_5(%arg0: i32) -> (i32, i32) {
    %c0_i32 = arith.constant 0 : i32
    %c0_i32_0 = arith.constant 0 : i32
    %c0_i32_1 = arith.constant 0 : i32
    return %c0_i32, %c0_i32_0 : i32, i32
  }
  func.func @transform_6(%arg0: i32) -> (i32, i32) {
    %c0_i32 = arith.constant 0 : i32
    %c0_i32_0 = arith.constant 0 : i32
    %c0_i32_1 = arith.constant 0 : i32
    return %c0_i32, %c0_i32_0 : i32, i32
  }
  func.func @transform_7(%arg0: i32) -> (i32, i32) {
    %c0_i32 = arith.constant 0 : i32
    %c0_i32_0 = arith.constant 0 : i32
    return %c0_i32, %arg0 : i32, i32
  }
}

</mosaic_0001>

<llo_original>
// kernel: tpu_custom_call.1
$region0: #{tpu_custom_call.1}
  #allocation0 [shape = 'u32[]', space=smem, size = 0x4, offset = 0x4, fixed_abs, tag = 'smem constant byte address 0x4 - core index']
  #allocation1 [shape = 'u32[144,128]{1,0:T(1,128)}', space=vmem, size = 0x12000, scoped, tag = 'internal scratch']
  #allocation2 [shape = 'f32[1,1]{1,0:T(1,128)S(1)}', space=vmem, size = 0x200, scoped, tag = 'scoped memory for tpu_custom_call.1']
  %s0 = inlined_call_operand.vmem [shape: f32[600,16], index: 0, kind: input, shape index: {}]
  %s1 = inlined_call_operand.vmem [shape: f32[600,8], index: 1, kind: input, shape index: {}]
  %s2 = inlined_call_operand.vmem [shape: f32[16,32], index: 2, kind: input, shape index: {}]
  %s3 = inlined_call_operand.vmem [shape: f32[8,32], index: 3, kind: input, shape index: {}]
  %s4 = inlined_call_operand.vmem [shape: f32[32,32], index: 4, kind: input, shape index: {}]
  %s5 = inlined_call_operand.vmem [shape: f32[3,32], index: 5, kind: input, shape index: {}]
  %s6 = inlined_call_operand.<no memory space> [shape: f32[1,1], index: 6, kind: input, shape index: {}]
  %s7 = inlined_call_operand.hbm [shape: f32[1,600], index: 7, kind: output, shape index: {}]
  %s8 = sld [smem:[#allocation0]]
  $region38: #{tpu_custom_call.1} parent=0
    _
  %s10 = ssub.s32 1, %s8
  %s11 = scalar_select 0, %s10, %s8
  %v12 = vstv %s6
  %13 = vst [vmem:[#allocation2] sm:$0x1] %v12
  $region1: #{tpu_custom_call.1} parent=0
    #allocation3 [shape = 'u8[2560]{0}', space=vmem, size = 0xc00, scoped, tag = 'output window, operand 0, single buffered']
    #allocation4 [shape = 's32[1]{0}', space=sflag, size = 0x4, scoped, tag = 'scoped memory for tpu_custom_call.1']
    %14 = vsyncpa [#allocation4], 0
    // Predicated region
    $region2: #{tpu_custom_call.1} parent=1 // pred_check
      _
    $region3: #{tpu_custom_call.1} parent=1 // pred_check_branch
      %16 = sbr.rel (0) target = $region5
    $region4: #{tpu_custom_call.1} parent=1 // pred_region
      _
    $region5: #{tpu_custom_call.1} parent=1 // pred_fallthru
      _
    // Predicated region
    $region6: #{tpu_custom_call.1} parent=1 // pred_check
      _
    $region7: #{tpu_custom_call.1} parent=1 // pred_check_branch
      %18 = sbr.rel (0) target = $region9
    $region8: #{tpu_custom_call.1} parent=1 // pred_region
      _
    $region9: #{tpu_custom_call.1} parent=1 // pred_fallthru
      _
    // Predicated region
    $region10: #{tpu_custom_call.1} parent=1 // pred_check
      _
    $region11: #{tpu_custom_call.1} parent=1 // pred_check_branch
      %20 = sbr.rel (0) target = $region13
    $region12: #{tpu_custom_call.1} parent=1 // pred_region
      _
    $region13: #{tpu_custom_call.1} parent=1 // pred_fallthru
      _
    // Predicated region
    $region14: #{tpu_custom_call.1} parent=1 // pred_check
      _
    $region15: #{tpu_custom_call.1} parent=1 // pred_check_branch
      %22 = sbr.rel (0) target = $region17
    $region16: #{tpu_custom_call.1} parent=1 // pred_region
      _
    $region17: #{tpu_custom_call.1} parent=1 // pred_fallthru
      _
    // Predicated region
    $region18: #{tpu_custom_call.1} parent=1 // pred_check
      _
    $region19: #{tpu_custom_call.1} parent=1 // pred_check_branch
      %24 = sbr.rel (0) target = $region21
    $region20: #{tpu_custom_call.1} parent=1 // pred_region
      _
    $region21: #{tpu_custom_call.1} parent=1 // pred_fallthru
      _
    // Predicated region
    $region22: #{tpu_custom_call.1} parent=1 // pred_check
      _
    $region23: #{tpu_custom_call.1} parent=1 // pred_check_branch
      %26 = sbr.rel (0) target = $region25
    $region24: #{tpu_custom_call.1} parent=1 // pred_region
      _
    $region25: #{tpu_custom_call.1} parent=1 // pred_fallthru
      _
    // Predicated region
    $region26: #{tpu_custom_call.1} parent=1 // pred_check
      _
    $region27: #{tpu_custom_call.1} parent=1 // pred_check_branch
      %28 = sbr.rel (0) target = $region29
    $region28: #{tpu_custom_call.1} parent=1 // pred_region
      _
    $region29: #{tpu_custom_call.1} parent=1 // pred_fallthru
      _
    %v29 = vld [vmem:[%s5] sm:$0x1]
    %v30 = vld [vmem:[%s5 + $0x1] sm:$0x1]
    %v31 = vld [vmem:[%s5 + $0x2] sm:$0x1]
    %v32 = vld [vmem:[%s0] sm:$0xff]
    %v33 = vld [vmem:[%s0 + $0x8] sm:$0xff]
    %v34 = vld [vmem:[%s0 + $0x10] sm:$0xff]
    %v35 = vld [vmem:[%s0 + $0x18] sm:$0xff]
    %v36 = vld [vmem:[%s0 + $0x20] sm:$0xff]
    %v37 = vld [vmem:[%s0 + $0x28] sm:$0xff]
    %v38 = vld [vmem:[%s0 + $0x30] sm:$0xff]
    %v39 = vld [vmem:[%s0 + $0x38] sm:$0xff]
    %v40 = vld [vmem:[%s0 + $0x40] sm:$0xff]
    %v41 = vld [vmem:[%s0 + $0x48] sm:$0xff]
    %v42 = vld [vmem:[%s0 + $0x50] sm:$0xff]
    %v43 = vld [vmem:[%s0 + $0x58] sm:$0xff]
    %v44 = vld [vmem:[%s0 + $0x60] sm:$0xff]
    %v45 = vld [vmem:[%s0 + $0x68] sm:$0xff]
    %v46 = vld [vmem:[%s0 + $0x70] sm:$0xff]
    %v47 = vld [vmem:[%s0 + $0x78] sm:$0xff]
    %v48 = vld [vmem:[%s0 + $0x80] sm:$0xff]
    %v49 = vld [vmem:[%s0 + $0x88] sm:$0xff]
    %v50 = vld [vmem:[%s0 + $0x90] sm:$0xff]
    %v51 = vld [vmem:[%s0 + $0x98] sm:$0xff]
    %v52 = vld [vmem:[%s0 + $0xa0] sm:$0xff]
    %v53 = vld [vmem:[%s0 + $0xa8] sm:$0xff]
    %v54 = vld [vmem:[%s0 + $0xb0] sm:$0xff]
    %v55 = vld [vmem:[%s0 + $0xb8] sm:$0xff]
    %v56 = vld [vmem:[%s0 + $0xc0] sm:$0xff]
    %v57 = vld [vmem:[%s0 + $0xc8] sm:$0xff]
    %v58 = vld [vmem:[%s0 + $0xd0] sm:$0xff]
    %v59 = vld [vmem:[%s0 + $0xd8] sm:$0xff]
    %v60 = vld [vmem:[%s0 + $0xe0] sm:$0xff]
    %v61 = vld [vmem:[%s0 + $0xe8] sm:$0xff]
    %v62 = vld [vmem:[%s0 + $0xf0] sm:$0xff]
    %v63 = vld [vmem:[%s0 + $0xf8] sm:$0xff]
    %v64 = vld [vmem:[%s0 + $0x100] sm:$0xff]
    %v65 = vld [vmem:[%s0 + $0x108] sm:$0xff]
    %v66 = vld [vmem:[%s0 + $0x110] sm:$0xff]
    %v67 = vld [vmem:[%s0 + $0x118] sm:$0xff]
    %v68 = vld [vmem:[%s0 + $0x120] sm:$0xff]
    %v69 = vld [vmem:[%s0 + $0x128] sm:$0xff]
    %v70 = vld [vmem:[%s0 + $0x130] sm:$0xff]
    %v71 = vld [vmem:[%s0 + $0x138] sm:$0xff]
    %v72 = vld [vmem:[%s0 + $0x140] sm:$0xff]
    %v73 = vld [vmem:[%s0 + $0x148] sm:$0xff]
    %v74 = vld [vmem:[%s0 + $0x150] sm:$0xff]
    %v75 = vld [vmem:[%s0 + $0x158] sm:$0xff]
    %v76 = vld [vmem:[%s0 + $0x160] sm:$0xff]
    %v77 = vld [vmem:[%s0 + $0x168] sm:$0xff]
    %v78 = vld [vmem:[%s0 + $0x170] sm:$0xff]
    %v79 = vld [vmem:[%s0 + $0x178] sm:$0xff]
    %v80 = vld [vmem:[%s0 + $0x180] sm:$0xff]
    %v81 = vld [vmem:[%s0 + $0x188] sm:$0xff]
    %v82 = vld [vmem:[%s0 + $0x190] sm:$0xff]
    %v83 = vld [vmem:[%s0 + $0x198] sm:$0xff]
    %v84 = vld [vmem:[%s0 + $0x1a0] sm:$0xff]
    %v85 = vld [vmem:[%s0 + $0x1a8] sm:$0xff]
    %v86 = vld [vmem:[%s0 + $0x1b0] sm:$0xff]
    %v87 = vld [vmem:[%s0 + $0x1b8] sm:$0xff]
    %v88 = vld [vmem:[%s0 + $0x1c0] sm:$0xff]
    %v89 = vld [vmem:[%s0 + $0x1c8] sm:$0xff]
    %v90 = vld [vmem:[%s0 + $0x1d0] sm:$0xff]
    %v91 = vld [vmem:[%s0 + $0x1d8] sm:$0xff]
    %v92 = vld [vmem:[%s0 + $0x1e0] sm:$0xff]
    %v93 = vld [vmem:[%s0 + $0x1e8] sm:$0xff]
    %v94 = vld [vmem:[%s0 + $0x1f0] sm:$0xff]
    %v95 = vld [vmem:[%s0 + $0x1f8] sm:$0xff]
    %v96 = vld [vmem:[%s0 + $0x200] sm:$0xff]
    %v97 = vld [vmem:[%s0 + $0x208] sm:$0xff]
    %v98 = vld [vmem:[%s0 + $0x210] sm:$0xff]
    %v99 = vld [vmem:[%s0 + $0x218] sm:$0xff]
    %v100 = vld [vmem:[%s0 + $0x220] sm:$0xff]
    %v101 = vld [vmem:[%s0 + $0x228] sm:$0xff]
    %v102 = vld [vmem:[%s0 + $0x230] sm:$0xff]
    %v103 = vld [vmem:[%s0 + $0x238] sm:$0xff]
    %v104 = vld [vmem:[%s0 + $0x240] sm:$0xff]
    %v105 = vld [vmem:[%s0 + $0x248] sm:$0xff]
    %v106 = vld [vmem:[%s0 + $0x250] sm:$0xff]
    %v107 = vld [vmem:[%s0 + $0x258] sm:$0xff]
    %v108 = vld [vmem:[%s0 + $0x260] sm:$0xff]
    %v109 = vld [vmem:[%s0 + $0x268] sm:$0xff]
    %v110 = vld [vmem:[%s0 + $0x270] sm:$0xff]
    %v111 = vld [vmem:[%s0 + $0x278] sm:$0xff]
    %v112 = vld [vmem:[%s2] sm:$0xff]
    %v113 = vld [vmem:[%s2 + $0x8] sm:$0xff]
    %v114 = vld [vmem:[%s1] sm:$0xff]
    %v115 = vld [vmem:[%s1 + $0x8] sm:$0xff]
    %v116 = vld [vmem:[%s1 + $0x10] sm:$0xff]
    %v117 = vld [vmem:[%s1 + $0x18] sm:$0xff]
    %v118 = vld [vmem:[%s1 + $0x20] sm:$0xff]
    %v119 = vld [vmem:[%s1 + $0x28] sm:$0xff]
    %v120 = vld [vmem:[%s1 + $0x30] sm:$0xff]
    %v121 = vld [vmem:[%s1 + $0x38] sm:$0xff]
    %v122 = vld [vmem:[%s1 + $0x40] sm:$0xff]
    %v123 = vld [vmem:[%s1 + $0x48] sm:$0xff]
    %v124 = vld [vmem:[%s1 + $0x50] sm:$0xff]
    %v125 = vld [vmem:[%s1 + $0x58] sm:$0xff]
    %v126 = vld [vmem:[%s1 + $0x60] sm:$0xff]
    %v127 = vld [vmem:[%s1 + $0x68] sm:$0xff]
    %v128 = vld [vmem:[%s1 + $0x70] sm:$0xff]
    %v129 = vld [vmem:[%s1 + $0x78] sm:$0xff]
    %v130 = vld [vmem:[%s1 + $0x80] sm:$0xff]
    %v131 = vld [vmem:[%s1 + $0x88] sm:$0xff]
    %v132 = vld [vmem:[%s1 + $0x90] sm:$0xff]
    %v133 = vld [vmem:[%s1 + $0x98] sm:$0xff]
    %v134 = vld [vmem:[%s1 + $0xa0] sm:$0xff]
    %v135 = vld [vmem:[%s1 + $0xa8] sm:$0xff]
    %v136 = vld [vmem:[%s1 + $0xb0] sm:$0xff]
    %v137 = vld [vmem:[%s1 + $0xb8] sm:$0xff]
    %v138 = vld [vmem:[%s1 + $0xc0] sm:$0xff]
    %v139 = vld [vmem:[%s1 + $0xc8] sm:$0xff]
    %v140 = vld [vmem:[%s1 + $0xd0] sm:$0xff]
    %v141 = vld [vmem:[%s1 + $0xd8] sm:$0xff]
    %v142 = vld [vmem:[%s1 + $0xe0] sm:$0xff]
    %v143 = vld [vmem:[%s1 + $0xe8] sm:$0xff]
    %v144 = vld [vmem:[%s1 + $0xf0] sm:$0xff]
    %v145 = vld [vmem:[%s1 + $0xf8] sm:$0xff]
    %v146 = vld [vmem:[%s1 + $0x100] sm:$0xff]
    %v147 = vld [vmem:[%s1 + $0x108] sm:$0xff]
    %v148 = vld [vmem:[%s1 + $0x110] sm:$0xff]
    %v149 = vld [vmem:[%s1 + $0x118] sm:$0xff]
    %v150 = vld [vmem:[%s1 + $0x120] sm:$0xff]
    %v151 = vld [vmem:[%s1 + $0x128] sm:$0xff]
    %v152 = vld [vmem:[%s1 + $0x130] sm:$0xff]
    %v153 = vld [vmem:[%s1 + $0x138] sm:$0xff]
    %v154 = vld [vmem:[%s1 + $0x140] sm:$0xff]
    %v155 = vld [vmem:[%s1 + $0x148] sm:$0xff]
    %v156 = vld [vmem:[%s1 + $0x150] sm:$0xff]
    %v157 = vld [vmem:[%s1 + $0x158] sm:$0xff]
    %v158 = vld [vmem:[%s1 + $0x160] sm:$0xff]
    %v159 = vld [vmem:[%s1 + $0x168] sm:$0xff]
    %v160 = vld [vmem:[%s1 + $0x170] sm:$0xff]
    %v161 = vld [vmem:[%s1 + $0x178] sm:$0xff]
    %v162 = vld [vmem:[%s1 + $0x180] sm:$0xff]
    %v163 = vld [vmem:[%s1 + $0x188] sm:$0xff]
    %v164 = vld [vmem:[%s1 + $0x190] sm:$0xff]
    %v165 = vld [vmem:[%s1 + $0x198] sm:$0xff]
    %v166 = vld [vmem:[%s1 + $0x1a0] sm:$0xff]
    %v167 = vld [vmem:[%s1 + $0x1a8] sm:$0xff]
    %v168 = vld [vmem:[%s1 + $0x1b0] sm:$0xff]
    %v169 = vld [vmem:[%s1 + $0x1b8] sm:$0xff]
    %v170 = vld [vmem:[%s1 + $0x1c0] sm:$0xff]
    %v171 = vld [vmem:[%s1 + $0x1c8] sm:$0xff]
    %v172 = vld [vmem:[%s1 + $0x1d0] sm:$0xff]
    %v173 = vld [vmem:[%s1 + $0x1d8] sm:$0xff]
    %v174 = vld [vmem:[%s1 + $0x1e0] sm:$0xff]
    %v175 = vld [vmem:[%s1 + $0x1e8] sm:$0xff]
    %v176 = vld [vmem:[%s1 + $0x1f0] sm:$0xff]
    %v177 = vld [vmem:[%s1 + $0x1f8] sm:$0xff]
    %v178 = vld [vmem:[%s1 + $0x200] sm:$0xff]
    %v179 = vld [vmem:[%s1 + $0x208] sm:$0xff]
    %v180 = vld [vmem:[%s1 + $0x210] sm:$0xff]
    %v181 = vld [vmem:[%s1 + $0x218] sm:$0xff]
    %v182 = vld [vmem:[%s1 + $0x220] sm:$0xff]
    %v183 = vld [vmem:[%s1 + $0x228] sm:$0xff]
    %v184 = vld [vmem:[%s1 + $0x230] sm:$0xff]
    %v185 = vld [vmem:[%s1 + $0x238] sm:$0xff]
    %v186 = vld [vmem:[%s1 + $0x240] sm:$0xff]
    %v187 = vld [vmem:[%s1 + $0x248] sm:$0xff]
    %v188 = vld [vmem:[%s1 + $0x250] sm:$0xff]
    %v189 = vld [vmem:[%s1 + $0x258] sm:$0xff]
    %v190 = vld [vmem:[%s1 + $0x260] sm:$0xff]
    %v191 = vld [vmem:[%s1 + $0x268] sm:$0xff]
    %v192 = vld [vmem:[%s1 + $0x270] sm:$0xff]
    %v193 = vld [vmem:[%s1 + $0x278] sm:$0xff]
    %v194 = vld [vmem:[%s3] sm:$0xff]
    %vm195 = vcmask 64512
    %v197 = vsel %vm195, %v114, 0
    %v200 = vsel %vm195, %v115, 0
    %v203 = vsel %vm195, %v116, 0
    %v206 = vsel %vm195, %v117, 0
    %v209 = vsel %vm195, %v118, 0
    %v212 = vsel %vm195, %v119, 0
    %v215 = vsel %vm195, %v120, 0
    %v218 = vsel %vm195, %v121, 0
    %v221 = vsel %vm195, %v122, 0
    %v224 = vsel %vm195, %v123, 0
    %v227 = vsel %vm195, %v124, 0
    %v230 = vsel %vm195, %v125, 0
    %v233 = vsel %vm195, %v126, 0
    %v236 = vsel %vm195, %v127, 0
    %v239 = vsel %vm195, %v128, 0
    %v242 = vsel %vm195, %v129, 0
    %v245 = vsel %vm195, %v130, 0
    %v248 = vsel %vm195, %v131, 0
    %v251 = vsel %vm195, %v132, 0
    %v254 = vsel %vm195, %v133, 0
    %v257 = vsel %vm195, %v134, 0
    %v260 = vsel %vm195, %v135, 0
    %v263 = vsel %vm195, %v136, 0
    %v266 = vsel %vm195, %v137, 0
    %v269 = vsel %vm195, %v138, 0
    %v272 = vsel %vm195, %v139, 0
    %v275 = vsel %vm195, %v140, 0
    %v278 = vsel %vm195, %v141, 0
    %v281 = vsel %vm195, %v142, 0
    %v284 = vsel %vm195, %v143, 0
    %v287 = vsel %vm195, %v144, 0
    %v290 = vsel %vm195, %v145, 0
    %v293 = vsel %vm195, %v146, 0
    %v296 = vsel %vm195, %v147, 0
    %v299 = vsel %vm195, %v148, 0
    %v302 = vsel %vm195, %v149, 0
    %v305 = vsel %vm195, %v150, 0
    %v308 = vsel %vm195, %v151, 0
    %v311 = vsel %vm195, %v152, 0
    %v314 = vsel %vm195, %v153, 0
    %v317 = vsel %vm195, %v154, 0
    %v320 = vsel %vm195, %v155, 0
    %v323 = vsel %vm195, %v156, 0
    %v326 = vsel %vm195, %v157, 0
    %v329 = vsel %vm195, %v158, 0
    %v332 = vsel %vm195, %v159, 0
    %v335 = vsel %vm195, %v160, 0
    %v338 = vsel %vm195, %v161, 0
    %v341 = vsel %vm195, %v162, 0
    %v344 = vsel %vm195, %v163, 0
    %v347 = vsel %vm195, %v164, 0
    %v350 = vsel %vm195, %v165, 0
    %v353 = vsel %vm195, %v166, 0
    %v356 = vsel %vm195, %v167, 0
    %v359 = vsel %vm195, %v168, 0
    %v362 = vsel %vm195, %v169, 0
    %v365 = vsel %vm195, %v170, 0
    %v368 = vsel %vm195, %v171, 0
    %v371 = vsel %vm195, %v172, 0
    %v374 = vsel %vm195, %v173, 0
    %v377 = vsel %vm195, %v174, 0
    %v380 = vsel %vm195, %v175, 0
    %v383 = vsel %vm195, %v176, 0
    %v386 = vsel %vm195, %v177, 0
    %v389 = vsel %vm195, %v178, 0
    %v392 = vsel %vm195, %v179, 0
    %v395 = vsel %vm195, %v180, 0
    %v398 = vsel %vm195, %v181, 0
    %v401 = vsel %vm195, %v182, 0
    %v404 = vsel %vm195, %v183, 0
    %v407 = vsel %vm195, %v184, 0
    %v410 = vsel %vm195, %v185, 0
    %v413 = vsel %vm195, %v186, 0
    %v416 = vsel %vm195, %v187, 0
    %v419 = vsel %vm195, %v188, 0
    %v422 = vsel %vm195, %v189, 0
    %v425 = vsel %vm195, %v190, 0
    %v428 = vsel %vm195, %v191, 0
    %v431 = vsel %vm195, %v192, 0
    %v434 = vsel %vm195, %v193, 0
    %436 = vmatprep.subr.mxu0 0.0
    %437 = vmatpush1.msra.mxu0 0.0
    %438 = vmatprep.subr.mxu0 0.0
    %439 = vmatpush1.msra.mxu0 0.0
    %440 = vmatprep.subr.mxu0 0.0
    %441 = vmatpush1.msra.mxu0 0.0
    %442 = vmatprep.subr.mxu0 0.0
    %443 = vmatpush1.msra.mxu0 0.0
    %444 = vmatprep.subr.mxu0 0.0
    %445 = vmatpush1.msra.mxu0 0.0
    %446 = vmatprep.subr.mxu0 0.0
    %447 = vmatpush1.msra.mxu0 0.0
    %448 = vmatprep.subr.mxu0 0.0
    %449 = vmatpush1.msra.mxu0 0.0
    %450 = vmatprep.subr.mxu0 0.0
    %451 = vmatpush1.msra.mxu0 0.0
    %452 = vmatprep.subr.mxu0 0.0
    %453 = vmatpush1.msra.mxu0 0.0
    %454 = vmatprep.subr.mxu0 0.0
    %455 = vmatpush1.msra.mxu0 0.0
    %456 = vmatprep.subr.mxu0 0.0
    %457 = vmatpush1.msra.mxu0 0.0
    %458 = vmatprep.subr.mxu0 0.0
    %459 = vmatpush1.msra.mxu0 0.0
    %460 = vmatprep.subr.mxu0 0.0
    %461 = vmatpush1.msra.mxu0 0.0
    %462 = vmatprep.subr.mxu0 0.0
    %463 = vmatpush1.msra.mxu0 0.0
    %464 = vmatprep.subr.mxu0 0.0
    %465 = vmatpush1.msra.mxu0 0.0
    %466 = vmatprep.subr.mxu0 0.0
    %467 = vmatpush1.msra.mxu0 %v194
    %468 = vmatprep.subr.mxu0 0.0
    %469 = vmatpush2.msra.mxu0 0.0
    %470 = vmatprep.subr.mxu0 0.0
    %471 = vmatpush2.msra.mxu0 0.0
    %472 = vmatprep.subr.mxu0 0.0
    %473 = vmatpush2.msra.mxu0 0.0
    %474 = vmatprep.subr.mxu0 0.0
    %475 = vmatpush2.msra.mxu0 0.0
    %476 = vmatprep.subr.mxu0 0.0
    %477 = vmatpush2.msra.mxu0 0.0
    %478 = vmatprep.subr.mxu0 0.0
    %479 = vmatpush2.msra.mxu0 0.0
    %480 = vmatprep.subr.mxu0 0.0
    %481 = vmatpush2.msra.mxu0 0.0
    %482 = vmatprep.subr.mxu0 0.0
    %483 = vmatpush2.msra.mxu0 0.0
    %484 = vmatprep.subr.mxu0 0.0
    %485 = vmatpush2.msra.mxu0 0.0
    %486 = vmatprep.subr.mxu0 0.0
    %487 = vmatpush2.msra.mxu0 0.0
    %488 = vmatprep.subr.mxu0 0.0
    %489 = vmatpush2.msra.mxu0 0.0
    %490 = vmatprep.subr.mxu0 0.0
    %491 = vmatpush2.msra.mxu0 0.0
    %492 = vmatprep.subr.mxu0 0.0
    %493 = vmatpush2.msra.mxu0 0.0
    %494 = vmatprep.subr.mxu0 0.0
    %495 = vmatpush2.msra.mxu0 0.0
    %496 = vmatprep.subr.mxu0 0.0
    %497 = vmatpush2.msra.mxu0 0.0
    %498 = vmatprep.subr.mxu0 0.0
    %499 = vmatpush2.msra.mxu0 0.0
    %500 = vmatprep.mubr.f32.mxu0 0.0
    %501 = vmatmul.mubr.f32.gmra.mxu0 %v197
    %v502 = vpop.f32.mrf.mxu0
    %v503 = vadd.f32 0.0, %v502
    %v504 = vpop.f32.mrf.mxu0
    %505 = vmatprep.mubr.f32.mxu0 0.0
    %506 = vmatmul.mubr.f32.gmra.mxu0 %v200
    %v507 = vpop.f32.mrf.mxu0
    %v508 = vadd.f32 0.0, %v507
    %v509 = vpop.f32.mrf.mxu0
    %510 = vmatprep.mubr.f32.mxu0 0.0
    %511 = vmatmul.mubr.f32.gmra.mxu0 %v203
    %v512 = vpop.f32.mrf.mxu0
    %v513 = vadd.f32 0.0, %v512
    %v514 = vpop.f32.mrf.mxu0
    %515 = vmatprep.mubr.f32.mxu0 0.0
    %516 = vmatmul.mubr.f32.gmra.mxu0 %v206
    %v517 = vpop.f32.mrf.mxu0
    %v518 = vadd.f32 0.0, %v517
    %v519 = vpop.f32.mrf.mxu0
    %520 = vmatprep.mubr.f32.mxu0 0.0
    %521 = vmatmul.mubr.f32.gmra.mxu0 %v209
    %v522 = vpop.f32.mrf.mxu0
    %v523 = vadd.f32 0.0, %v522
    %v524 = vpop.f32.mrf.mxu0
    %525 = vmatprep.mubr.f32.mxu0 0.0
    %526 = vmatmul.mubr.f32.gmra.mxu0 %v212
    %v527 = vpop.f32.mrf.mxu0
    %v528 = vadd.f32 0.0, %v527
    %v529 = vpop.f32.mrf.mxu0
    %530 = vmatprep.mubr.f32.mxu0 0.0
    %531 = vmatmul.mubr.f32.gmra.mxu0 %v215
    %v532 = vpop.f32.mrf.mxu0
    %v533 = vadd.f32 0.0, %v532
    %v534 = vpop.f32.mrf.mxu0
    %535 = vmatprep.mubr.f32.mxu0 0.0
    %536 = vmatmul.mubr.f32.gmra.mxu0 %v218
    %v537 = vpop.f32.mrf.mxu0
    %v538 = vadd.f32 0.0, %v537
    %v539 = vpop.f32.mrf.mxu0
    %540 = vmatprep.mubr.f32.mxu0 0.0
    %541 = vmatmul.mubr.f32.gmra.mxu0 %v221
    %v542 = vpop.f32.mrf.mxu0
    %v543 = vadd.f32 0.0, %v542
    %v544 = vpop.f32.mrf.mxu0
    %545 = vmatprep.mubr.f32.mxu0 0.0
    %546 = vmatmul.mubr.f32.gmra.mxu0 %v224
    %v547 = vpop.f32.mrf.mxu0
    %v548 = vadd.f32 0.0, %v547
    %v549 = vpop.f32.mrf.mxu0
    %550 = vmatprep.mubr.f32.mxu0 0.0
    %551 = vmatmul.mubr.f32.gmra.mxu0 %v227
    %v552 = vpop.f32.mrf.mxu0
    %v553 = vadd.f32 0.0, %v552
    %v554 = vpop.f32.mrf.mxu0
    %555 = vmatprep.mubr.f32.mxu0 0.0
    %556 = vmatmul.mubr.f32.gmra.mxu0 %v230
    %v557 = vpop.f32.mrf.mxu0
    %v558 = vadd.f32 0.0, %v557
    %v559 = vpop.f32.mrf.mxu0
    %560 = vmatprep.mubr.f32.mxu0 0.0
    %561 = vmatmul.mubr.f32.gmra.mxu0 %v233
    %v562 = vpop.f32.mrf.mxu0
    %v563 = vadd.f32 0.0, %v562
    %v564 = vpop.f32.mrf.mxu0
    %565 = vmatprep.mubr.f32.mxu0 0.0
    %566 = vmatmul.mubr.f32.gmra.mxu0 %v236
    %v567 = vpop.f32.mrf.mxu0
    %v568 = vadd.f32 0.0, %v567
    %v569 = vpop.f32.mrf.mxu0
    %570 = vmatprep.mubr.f32.mxu0 0.0
    %571 = vmatmul.mubr.f32.gmra.mxu0 %v239
    %v572 = vpop.f32.mrf.mxu0
    %v573 = vadd.f32 0.0, %v572
    %v574 = vpop.f32.mrf.mxu0
    %575 = vmatprep.mubr.f32.mxu0 0.0
    %576 = vmatmul.mubr.f32.gmra.mxu0 %v242
    %v577 = vpop.f32.mrf.mxu0
    %v578 = vadd.f32 0.0, %v577
    %v579 = vpop.f32.mrf.mxu0
    %580 = vmatprep.mubr.f32.mxu0 0.0
    %581 = vmatmul.mubr.f32.gmra.mxu0 %v245
    %v582 = vpop.f32.mrf.mxu0
    %v583 = vadd.f32 0.0, %v582
    %v584 = vpop.f32.mrf.mxu0
    %585 = vmatprep.mubr.f32.mxu0 0.0
    %586 = vmatmul.mubr.f32.gmra.mxu0 %v248
    %v587 = vpop.f32.mrf.mxu0
    %v588 = vadd.f32 0.0, %v587
    %v589 = vpop.f32.mrf.mxu0
    %590 = vmatprep.mubr.f32.mxu0 0.0
    %591 = vmatmul.mubr.f32.gmra.mxu0 %v251
    %v592 = vpop.f32.mrf.mxu0
    %v593 = vadd.f32 0.0, %v592
    %v594 = vpop.f32.mrf.mxu0
    %595 = vmatprep.mubr.f32.mxu0 0.0
    %596 = vmatmul.mubr.f32.gmra.mxu0 %v254
    %v597 = vpop.f32.mrf.mxu0
    %v598 = vadd.f32 0.0, %v597
    %v599 = vpop.f32.mrf.mxu0
    %600 = vmatprep.mubr.f32.mxu0 0.0
    %601 = vmatmul.mubr.f32.gmra.mxu0 %v257
    %v602 = vpop.f32.mrf.mxu0
    %v603 = vadd.f32 0.0, %v602
    %v604 = vpop.f32.mrf.mxu0
    %605 = vmatprep.mubr.f32.mxu0 0.0
    %606 = vmatmul.mubr.f32.gmra.mxu0 %v260
    %v607 = vpop.f32.mrf.mxu0
    %v608 = vadd.f32 0.0, %v607
    %v609 = vpop.f32.mrf.mxu0
    %610 = vmatprep.mubr.f32.mxu0 0.0
    %611 = vmatmul.mubr.f32.gmra.mxu0 %v263
    %v612 = vpop.f32.mrf.mxu0
    %v613 = vadd.f32 0.0, %v612
    %v614 = vpop.f32.mrf.mxu0
    %615 = vmatprep.mubr.f32.mxu0 0.0
    %616 = vmatmul.mubr.f32.gmra.mxu0 %v266
    %v617 = vpop.f32.mrf.mxu0
    %v618 = vadd.f32 0.0, %v617
    %v619 = vpop.f32.mrf.mxu0
    %620 = vmatprep.mubr.f32.mxu0 0.0
    %621 = vmatmul.mubr.f32.gmra.mxu0 %v269
    %v622 = vpop.f32.mrf.mxu0
    %v623 = vadd.f32 0.0, %v622
    %v624 = vpop.f32.mrf.mxu0
    %625 = vmatprep.mubr.f32.mxu0 0.0
    %626 = vmatmul.mubr.f32.gmra.mxu0 %v272
    %v627 = vpop.f32.mrf.mxu0
    %v628 = vadd.f32 0.0, %v627
    %v629 = vpop.f32.mrf.mxu0
    %630 = vmatprep.mubr.f32.mxu0 0.0
    %631 = vmatmul.mubr.f32.gmra.mxu0 %v275
    %v632 = vpop.f32.mrf.mxu0
    %v633 = vadd.f32 0.0, %v632
    %v634 = vpop.f32.mrf.mxu0
    %635 = vmatprep.mubr.f32.mxu0 0.0
    %636 = vmatmul.mubr.f32.gmra.mxu0 %v278
    %v637 = vpop.f32.mrf.mxu0
    %v638 = vadd.f32 0.0, %v637
    %v639 = vpop.f32.mrf.mxu0
    %640 = vmatprep.mubr.f32.mxu0 0.0
    %641 = vmatmul.mubr.f32.gmra.mxu0 %v281
    %v642 = vpop.f32.mrf.mxu0
    %v643 = vadd.f32 0.0, %v642
    %v644 = vpop.f32.mrf.mxu0
    %645 = vmatprep.mubr.f32.mxu0 0.0
    %646 = vmatmul.mubr.f32.gmra.mxu0 %v284
    %v647 = vpop.f32.mrf.mxu0
    %v648 = vadd.f32 0.0, %v647
    %v649 = vpop.f32.mrf.mxu0
    %650 = vmatprep.mubr.f32.mxu0 0.0
    %651 = vmatmul.mubr.f32.gmra.mxu0 %v287
    %v652 = vpop.f32.mrf.mxu0
    %v653 = vadd.f32 0.0, %v652
    %v654 = vpop.f32.mrf.mxu0
    %655 = vmatprep.mubr.f32.mxu0 0.0
    %656 = vmatmul.mubr.f32.gmra.mxu0 %v290
    %v657 = vpop.f32.mrf.mxu0
    %v658 = vadd.f32 0.0, %v657
    %v659 = vpop.f32.mrf.mxu0
    %660 = vmatprep.mubr.f32.mxu0 0.0
    %661 = vmatmul.mubr.f32.gmra.mxu0 %v293
    %v662 = vpop.f32.mrf.mxu0
    %v663 = vadd.f32 0.0, %v662
    %v664 = vpop.f32.mrf.mxu0
    %665 = vmatprep.mubr.f32.mxu0 0.0
    %666 = vmatmul.mubr.f32.gmra.mxu0 %v296
    %v667 = vpop.f32.mrf.mxu0
    %v668 = vadd.f32 0.0, %v667
    %v669 = vpop.f32.mrf.mxu0
    %670 = vmatprep.mubr.f32.mxu0 0.0
    %671 = vmatmul.mubr.f32.gmra.mxu0 %v299
    %v672 = vpop.f32.mrf.mxu0
    %v673 = vadd.f32 0.0, %v672
    %v674 = vpop.f32.mrf.mxu0
    %675 = vmatprep.mubr.f32.mxu0 0.0
    %676 = vmatmul.mubr.f32.gmra.mxu0 %v302
    %v677 = vpop.f32.mrf.mxu0
    %v678 = vadd.f32 0.0, %v677
    %v679 = vpop.f32.mrf.mxu0
    %680 = vmatprep.mubr.f32.mxu0 0.0
    %681 = vmatmul.mubr.f32.gmra.mxu0 %v305
    %v682 = vpop.f32.mrf.mxu0
    %v683 = vadd.f32 0.0, %v682
    %v684 = vpop.f32.mrf.mxu0
    %685 = vmatprep.mubr.f32.mxu0 0.0
    %686 = vmatmul.mubr.f32.gmra.mxu0 %v308
    %v687 = vpop.f32.mrf.mxu0
    %v688 = vadd.f32 0.0, %v687
    %v689 = vpop.f32.mrf.mxu0
    %690 = vmatprep.mubr.f32.mxu0 0.0
    %691 = vmatmul.mubr.f32.gmra.mxu0 %v311
    %v692 = vpop.f32.mrf.mxu0
    %v693 = vadd.f32 0.0, %v692
    %v694 = vpop.f32.mrf.mxu0
    %695 = vmatprep.mubr.f32.mxu0 0.0
    %696 = vmatmul.mubr.f32.gmra.mxu0 %v314
    %v697 = vpop.f32.mrf.mxu0
    %v698 = vadd.f32 0.0, %v697
    %v699 = vpop.f32.mrf.mxu0
    %700 = vmatprep.mubr.f32.mxu0 0.0
    %701 = vmatmul.mubr.f32.gmra.mxu0 %v317
    %v702 = vpop.f32.mrf.mxu0
    %v703 = vadd.f32 0.0, %v702
    %v704 = vpop.f32.mrf.mxu0
    %705 = vmatprep.mubr.f32.mxu0 0.0
    %706 = vmatmul.mubr.f32.gmra.mxu0 %v320
    %v707 = vpop.f32.mrf.mxu0
    %v708 = vadd.f32 0.0, %v707
    %v709 = vpop.f32.mrf.mxu0
    %710 = vmatprep.mubr.f32.mxu0 0.0
    %711 = vmatmul.mubr.f32.gmra.mxu0 %v323
    %v712 = vpop.f32.mrf.mxu0
    %v713 = vadd.f32 0.0, %v712
    %v714 = vpop.f32.mrf.mxu0
    %715 = vmatprep.mubr.f32.mxu0 0.0
    %716 = vmatmul.mubr.f32.gmra.mxu0 %v326
    %v717 = vpop.f32.mrf.mxu0
    %v718 = vadd.f32 0.0, %v717
    %v719 = vpop.f32.mrf.mxu0
    %720 = vmatprep.mubr.f32.mxu0 0.0
    %721 = vmatmul.mubr.f32.gmra.mxu0 %v329
    %v722 = vpop.f32.mrf.mxu0
    %v723 = vadd.f32 0.0, %v722
    %v724 = vpop.f32.mrf.mxu0
    %725 = vmatprep.mubr.f32.mxu0 0.0
    %726 = vmatmul.mubr.f32.gmra.mxu0 %v332
    %v727 = vpop.f32.mrf.mxu0
    %v728 = vadd.f32 0.0, %v727
    %v729 = vpop.f32.mrf.mxu0
    %730 = vmatprep.mubr.f32.mxu0 0.0
    %731 = vmatmul.mubr.f32.gmra.mxu0 %v335
    %v732 = vpop.f32.mrf.mxu0
    %v733 = vadd.f32 0.0, %v732
    %v734 = vpop.f32.mrf.mxu0
    %735 = vmatprep.mubr.f32.mxu0 0.0
    %736 = vmatmul.mubr.f32.gmra.mxu0 %v338
    %v737 = vpop.f32.mrf.mxu0
    %v738 = vadd.f32 0.0, %v737
    %v739 = vpop.f32.mrf.mxu0
    %740 = vmatprep.mubr.f32.mxu0 0.0
    %741 = vmatmul.mubr.f32.gmra.mxu0 %v341
    %v742 = vpop.f32.mrf.mxu0
    %v743 = vadd.f32 0.0, %v742
    %v744 = vpop.f32.mrf.mxu0
    %745 = vmatprep.mubr.f32.mxu0 0.0
    %746 = vmatmul.mubr.f32.gmra.mxu0 %v344
    %v747 = vpop.f32.mrf.mxu0
    %v748 = vadd.f32 0.0, %v747
    %v749 = vpop.f32.mrf.mxu0
    %750 = vmatprep.mubr.f32.mxu0 0.0
    %751 = vmatmul.mubr.f32.gmra.mxu0 %v347
    %v752 = vpop.f32.mrf.mxu0
    %v753 = vadd.f32 0.0, %v752
    %v754 = vpop.f32.mrf.mxu0
    %755 = vmatprep.mubr.f32.mxu0 0.0
    %756 = vmatmul.mubr.f32.gmra.mxu0 %v350
    %v757 = vpop.f32.mrf.mxu0
    %v758 = vadd.f32 0.0, %v757
    %v759 = vpop.f32.mrf.mxu0
    %760 = vmatprep.mubr.f32.mxu0 0.0
    %761 = vmatmul.mubr.f32.gmra.mxu0 %v353
    %v762 = vpop.f32.mrf.mxu0
    %v763 = vadd.f32 0.0, %v762
    %v764 = vpop.f32.mrf.mxu0
    %765 = vmatprep.mubr.f32.mxu0 0.0
    %766 = vmatmul.mubr.f32.gmra.mxu0 %v356
    %v767 = vpop.f32.mrf.mxu0
    %v768 = vadd.f32 0.0, %v767
    %v769 = vpop.f32.mrf.mxu0
    %770 = vmatprep.mubr.f32.mxu0 0.0
    %771 = vmatmul.mubr.f32.gmra.mxu0 %v359
    %v772 = vpop.f32.mrf.mxu0
    %v773 = vadd.f32 0.0, %v772
    %v774 = vpop.f32.mrf.mxu0
    %775 = vmatprep.mubr.f32.mxu0 0.0
    %776 = vmatmul.mubr.f32.gmra.mxu0 %v362
    %v777 = vpop.f32.mrf.mxu0
    %v778 = vadd.f32 0.0, %v777
    %v779 = vpop.f32.mrf.mxu0
    %780 = vmatprep.mubr.f32.mxu0 0.0
    %781 = vmatmul.mubr.f32.gmra.mxu0 %v365
    %v782 = vpop.f32.mrf.mxu0
    %v783 = vadd.f32 0.0, %v782
    %v784 = vpop.f32.mrf.mxu0
    %785 = vmatprep.mubr.f32.mxu0 0.0
    %786 = vmatmul.mubr.f32.gmra.mxu0 %v368
    %v787 = vpop.f32.mrf.mxu0
    %v788 = vadd.f32 0.0, %v787
    %v789 = vpop.f32.mrf.mxu0
    %790 = vmatprep.mubr.f32.mxu0 0.0
    %791 = vmatmul.mubr.f32.gmra.mxu0 %v371
    %v792 = vpop.f32.mrf.mxu0
    %v793 = vadd.f32 0.0, %v792
    %v794 = vpop.f32.mrf.mxu0
    %795 = vmatprep.mubr.f32.mxu0 0.0
    %796 = vmatmul.mubr.f32.gmra.mxu0 %v374
    %v797 = vpop.f32.mrf.mxu0
    %v798 = vadd.f32 0.0, %v797
    %v799 = vpop.f32.mrf.mxu0
    %800 = vmatprep.mubr.f32.mxu0 0.0
    %801 = vmatmul.mubr.f32.gmra.mxu0 %v377
    %v802 = vpop.f32.mrf.mxu0
    %v803 = vadd.f32 0.0, %v802
    %v804 = vpop.f32.mrf.mxu0
    %805 = vmatprep.mubr.f32.mxu0 0.0
    %806 = vmatmul.mubr.f32.gmra.mxu0 %v380
    %v807 = vpop.f32.mrf.mxu0
    %v808 = vadd.f32 0.0, %v807
    %v809 = vpop.f32.mrf.mxu0
    %810 = vmatprep.mubr.f32.mxu0 0.0
    %811 = vmatmul.mubr.f32.gmra.mxu0 %v383
    %v812 = vpop.f32.mrf.mxu0
    %v813 = vadd.f32 0.0, %v812
    %v814 = vpop.f32.mrf.mxu0
    %815 = vmatprep.mubr.f32.mxu0 0.0
    %816 = vmatmul.mubr.f32.gmra.mxu0 %v386
    %v817 = vpop.f32.mrf.mxu0
    %v818 = vadd.f32 0.0, %v817
    %v819 = vpop.f32.mrf.mxu0
    %820 = vmatprep.mubr.f32.mxu0 0.0
    %821 = vmatmul.mubr.f32.gmra.mxu0 %v389
    %v822 = vpop.f32.mrf.mxu0
    %v823 = vadd.f32 0.0, %v822
    %v824 = vpop.f32.mrf.mxu0
    %825 = vmatprep.mubr.f32.mxu0 0.0
    %826 = vmatmul.mubr.f32.gmra.mxu0 %v392
    %v827 = vpop.f32.mrf.mxu0
    %v828 = vadd.f32 0.0, %v827
    %v829 = vpop.f32.mrf.mxu0
    %830 = vmatprep.mubr.f32.mxu0 0.0
    %831 = vmatmul.mubr.f32.gmra.mxu0 %v395
    %v832 = vpop.f32.mrf.mxu0
    %v833 = vadd.f32 0.0, %v832
    %v834 = vpop.f32.mrf.mxu0
    %835 = vmatprep.mubr.f32.mxu0 0.0
    %836 = vmatmul.mubr.f32.gmra.mxu0 %v398
    %v837 = vpop.f32.mrf.mxu0
    %v838 = vadd.f32 0.0, %v837
    %v839 = vpop.f32.mrf.mxu0
    %840 = vmatprep.mubr.f32.mxu0 0.0
    %841 = vmatmul.mubr.f32.gmra.mxu0 %v401
    %v842 = vpop.f32.mrf.mxu0
    %v843 = vadd.f32 0.0, %v842
    %v844 = vpop.f32.mrf.mxu0
    %845 = vmatprep.mubr.f32.mxu0 0.0
    %846 = vmatmul.mubr.f32.gmra.mxu0 %v404
    %v847 = vpop.f32.mrf.mxu0
    %v848 = vadd.f32 0.0, %v847
    %v849 = vpop.f32.mrf.mxu0
    %850 = vmatprep.mubr.f32.mxu0 0.0
    %851 = vmatmul.mubr.f32.gmra.mxu0 %v407
    %v852 = vpop.f32.mrf.mxu0
    %v853 = vadd.f32 0.0, %v852
    %v854 = vpop.f32.mrf.mxu0
    %855 = vmatprep.mubr.f32.mxu0 0.0
    %856 = vmatmul.mubr.f32.gmra.mxu0 %v410
    %v857 = vpop.f32.mrf.mxu0
    %v858 = vadd.f32 0.0, %v857
    %v859 = vpop.f32.mrf.mxu0
    %860 = vmatprep.mubr.f32.mxu0 0.0
    %861 = vmatmul.mubr.f32.gmra.mxu0 %v413
    %v862 = vpop.f32.mrf.mxu0
    %v863 = vadd.f32 0.0, %v862
    %v864 = vpop.f32.mrf.mxu0
    %865 = vmatprep.mubr.f32.mxu0 0.0
    %866 = vmatmul.mubr.f32.gmra.mxu0 %v416
    %v867 = vpop.f32.mrf.mxu0
    %v868 = vadd.f32 0.0, %v867
    %v869 = vpop.f32.mrf.mxu0
    %870 = vmatprep.mubr.f32.mxu0 0.0
    %871 = vmatmul.mubr.f32.gmra.mxu0 %v419
    %v872 = vpop.f32.mrf.mxu0
    %v873 = vadd.f32 0.0, %v872
    %v874 = vpop.f32.mrf.mxu0
    %875 = vmatprep.mubr.f32.mxu0 0.0
    %876 = vmatmul.mubr.f32.gmra.mxu0 %v422
    %v877 = vpop.f32.mrf.mxu0
    %v878 = vadd.f32 0.0, %v877
    %v879 = vpop.f32.mrf.mxu0
    %880 = vmatprep.mubr.f32.mxu0 0.0
    %881 = vmatmul.mubr.f32.gmra.mxu0 %v425
    %v882 = vpop.f32.mrf.mxu0
    %v883 = vadd.f32 0.0, %v882
    %v884 = vpop.f32.mrf.mxu0
    %885 = vmatprep.mubr.f32.mxu0 0.0
    %886 = vmatmul.mubr.f32.gmra.mxu0 %v428
    %v887 = vpop.f32.mrf.mxu0
    %v888 = vadd.f32 0.0, %v887
    %v889 = vpop.f32.mrf.mxu0
    %890 = vmatprep.mubr.f32.mxu0 0.0
    %891 = vmatmul.mubr.f32.gmra.mxu0 %v431
    %v892 = vpop.f32.mrf.mxu0
    %v893 = vadd.f32 0.0, %v892
    %v894 = vpop.f32.mrf.mxu0
    %895 = vmatprep.mubr.f32.mxu0 0.0
    %896 = vmatmul.mubr.f32.gmra.mxu0 %v434
    %v897 = vpop.f32.mrf.mxu0
    %v898 = vadd.f32 0.0, %v897
    %v899 = vpop.f32.mrf.mxu0
    %900 = vdwg.mxu0
    %vm901 = vcmask 130048
    %v903 = vsel %vm901, %v32, 0
    %v906 = vsel %vm901, %v33, 0
    %v909 = vsel %vm901, %v34, 0
    %v912 = vsel %vm901, %v35, 0
    %v915 = vsel %vm901, %v36, 0
    %v918 = vsel %vm901, %v37, 0
    %v921 = vsel %vm901, %v38, 0
    %v924 = vsel %vm901, %v39, 0
    %v927 = vsel %vm901, %v40, 0
    %v930 = vsel %vm901, %v41, 0
    %v933 = vsel %vm901, %v42, 0
    %v936 = vsel %vm901, %v43, 0
    %v939 = vsel %vm901, %v44, 0
    %v942 = vsel %vm901, %v45, 0
    %v945 = vsel %vm901, %v46, 0
    %v948 = vsel %vm901, %v47, 0
    %v951 = vsel %vm901, %v48, 0
    %v954 = vsel %vm901, %v49, 0
    %v957 = vsel %vm901, %v50, 0
    %v960 = vsel %vm901, %v51, 0
    %v963 = vsel %vm901, %v52, 0
    %v966 = vsel %vm901, %v53, 0
    %v969 = vsel %vm901, %v54, 0
    %v972 = vsel %vm901, %v55, 0
    %v975 = vsel %vm901, %v56, 0
    %v978 = vsel %vm901, %v57, 0
    %v981 = vsel %vm901, %v58, 0
    %v984 = vsel %vm901, %v59, 0
    %v987 = vsel %vm901, %v60, 0
    %v990 = vsel %vm901, %v61, 0
    %v993 = vsel %vm901, %v62, 0
    %v996 = vsel %vm901, %v63, 0
    %v999 = vsel %vm901, %v64, 0
    %v1002 = vsel %vm901, %v65, 0
    %v1005 = vsel %vm901, %v66, 0
    %v1008 = vsel %vm901, %v67, 0
    %v1011 = vsel %vm901, %v68, 0
    %v1014 = vsel %vm901, %v69, 0
    %v1017 = vsel %vm901, %v70, 0
    %v1020 = vsel %vm901, %v71, 0
    %v1023 = vsel %vm901, %v72, 0
    %v1026 = vsel %vm901, %v73, 0
    %v1029 = vsel %vm901, %v74, 0
    %v1032 = vsel %vm901, %v75, 0
    %v1035 = vsel %vm901, %v76, 0
    %v1038 = vsel %vm901, %v77, 0
    %v1041 = vsel %vm901, %v78, 0
    %v1044 = vsel %vm901, %v79, 0
    %v1047 = vsel %vm901, %v80, 0
    %v1050 = vsel %vm901, %v81, 0
    %v1053 = vsel %vm901, %v82, 0
    %v1056 = vsel %vm901, %v83, 0
    %v1059 = vsel %vm901, %v84, 0
    %v1062 = vsel %vm901, %v85, 0
    %v1065 = vsel %vm901, %v86, 0
    %v1068 = vsel %vm901, %v87, 0
    %v1071 = vsel %vm901, %v88, 0
    %v1074 = vsel %vm901, %v89, 0
    %v1077 = vsel %vm901, %v90, 0
    %v1080 = vsel %vm901, %v91, 0
    %v1083 = vsel %vm901, %v92, 0
    %v1086 = vsel %vm901, %v93, 0
    %v1089 = vsel %vm901, %v94, 0
    %v1092 = vsel %vm901, %v95, 0
    %v1095 = vsel %vm901, %v96, 0
    %v1098 = vsel %vm901, %v97, 0
    %v1101 = vsel %vm901, %v98, 0
    %v1104 = vsel %vm901, %v99, 0
    %v1107 = vsel %vm901, %v100, 0
    %v1110 = vsel %vm901, %v101, 0
    %v1113 = vsel %vm901, %v102, 0
    %v1116 = vsel %vm901, %v103, 0
    %v1119 = vsel %vm901, %v104, 0
    %v1122 = vsel %vm901, %v105, 0
    %v1125 = vsel %vm901, %v106, 0
    %v1128 = vsel %vm901, %v107, 0
    %v1131 = vsel %vm901, %v108, 0
    %v1134 = vsel %vm901, %v109, 0
    %v1137 = vsel %vm901, %v110, 0
    %v1140 = vsel %vm901, %v111, 0
    %1142 = vmatprep.subr.mxu0 0.0
    %1143 = vmatpush1.msra.mxu0 0.0
    %1144 = vmatprep.subr.mxu0 0.0
    %1145 = vmatpush1.msra.mxu0 0.0
    %1146 = vmatprep.subr.mxu0 0.0
    %1147 = vmatpush1.msra.mxu0 0.0
    %1148 = vmatprep.subr.mxu0 0.0
    %1149 = vmatpush1.msra.mxu0 0.0
    %1150 = vmatprep.subr.mxu0 0.0
    %1151 = vmatpush1.msra.mxu0 0.0
    %1152 = vmatprep.subr.mxu0 0.0
    %1153 = vmatpush1.msra.mxu0 0.0
    %1154 = vmatprep.subr.mxu0 0.0
    %1155 = vmatpush1.msra.mxu0 0.0
    %1156 = vmatprep.subr.mxu0 0.0
    %1157 = vmatpush1.msra.mxu0 0.0
    %1158 = vmatprep.subr.mxu0 0.0
    %1159 = vmatpush1.msra.mxu0 0.0
    %1160 = vmatprep.subr.mxu0 0.0
    %1161 = vmatpush1.msra.mxu0 0.0
    %1162 = vmatprep.subr.mxu0 0.0
    %1163 = vmatpush1.msra.mxu0 0.0
    %1164 = vmatprep.subr.mxu0 0.0
    %1165 = vmatpush1.msra.mxu0 0.0
    %1166 = vmatprep.subr.mxu0 0.0
    %1167 = vmatpush1.msra.mxu0 0.0
    %1168 = vmatprep.subr.mxu0 0.0
    %1169 = vmatpush1.msra.mxu0 0.0
    %1170 = vmatprep.subr.mxu0 0.0
    %1171 = vmatpush1.msra.mxu0 %v113
    %1172 = vmatprep.subr.mxu0 0.0
    %1173 = vmatpush1.msra.mxu0 %v112
    %1174 = vmatprep.subr.mxu0 0.0
    %1175 = vmatpush2.msra.mxu0 0.0
    %1176 = vmatprep.subr.mxu0 0.0
    %1177 = vmatpush2.msra.mxu0 0.0
    %1178 = vmatprep.subr.mxu0 0.0
    %1179 = vmatpush2.msra.mxu0 0.0
    %1180 = vmatprep.subr.mxu0 0.0
    %1181 = vmatpush2.msra.mxu0 0.0
    %1182 = vmatprep.subr.mxu0 0.0
    %1183 = vmatpush2.msra.mxu0 0.0
    %1184 = vmatprep.subr.mxu0 0.0
    %1185 = vmatpush2.msra.mxu0 0.0
    %1186 = vmatprep.subr.mxu0 0.0
    %1187 = vmatpush2.msra.mxu0 0.0
    %1188 = vmatprep.subr.mxu0 0.0
    %1189 = vmatpush2.msra.mxu0 0.0
    %1190 = vmatprep.subr.mxu0 0.0
    %1191 = vmatpush2.msra.mxu0 0.0
    %1192 = vmatprep.subr.mxu0 0.0
    %1193 = vmatpush2.msra.mxu0 0.0
    %1194 = vmatprep.subr.mxu0 0.0
    %1195 = vmatpush2.msra.mxu0 0.0
    %1196 = vmatprep.subr.mxu0 0.0
    %1197 = vmatpush2.msra.mxu0 0.0
    %1198 = vmatprep.subr.mxu0 0.0
    %1199 = vmatpush2.msra.mxu0 0.0
    %1200 = vmatprep.subr.mxu0 0.0
    %1201 = vmatpush2.msra.mxu0 0.0
    %1202 = vmatprep.subr.mxu0 0.0
    %1203 = vmatpush2.msra.mxu0 0.0
    %1204 = vmatprep.subr.mxu0 0.0
    %1205 = vmatpush2.msra.mxu0 0.0
    %1206 = vmatprep.mubr.f32.mxu0 0.0
    %1207 = vmatmul.mubr.f32.gmra.mxu0 %v903
    %v1208 = vpop.f32.mrf.mxu0
    %v1209 = vadd.f32 %v503, %v1208
    %v1210 = vpop.f32.mrf.mxu0
    %1211 = vmatprep.mubr.f32.mxu0 0.0
    %1212 = vmatmul.mubr.f32.gmra.mxu0 %v906
    %v1213 = vpop.f32.mrf.mxu0
    %v1214 = vadd.f32 %v508, %v1213
    %v1215 = vpop.f32.mrf.mxu0
    %1216 = vmatprep.mubr.f32.mxu0 0.0
    %1217 = vmatmul.mubr.f32.gmra.mxu0 %v909
    %v1218 = vpop.f32.mrf.mxu0
    %v1219 = vadd.f32 %v513, %v1218
    %v1220 = vpop.f32.mrf.mxu0
    %1221 = vmatprep.mubr.f32.mxu0 0.0
    %1222 = vmatmul.mubr.f32.gmra.mxu0 %v912
    %v1223 = vpop.f32.mrf.mxu0
    %v1224 = vadd.f32 %v518, %v1223
    %v1225 = vpop.f32.mrf.mxu0
    %1226 = vmatprep.mubr.f32.mxu0 0.0
    %1227 = vmatmul.mubr.f32.gmra.mxu0 %v915
    %v1228 = vpop.f32.mrf.mxu0
    %v1229 = vadd.f32 %v523, %v1228
    %v1230 = vpop.f32.mrf.mxu0
    %1231 = vmatprep.mubr.f32.mxu0 0.0
    %1232 = vmatmul.mubr.f32.gmra.mxu0 %v918
    %v1233 = vpop.f32.mrf.mxu0
    %v1234 = vadd.f32 %v528, %v1233
    %v1235 = vpop.f32.mrf.mxu0
    %1236 = vmatprep.mubr.f32.mxu0 0.0
    %1237 = vmatmul.mubr.f32.gmra.mxu0 %v921
    %v1238 = vpop.f32.mrf.mxu0
    %v1239 = vadd.f32 %v533, %v1238
    %v1240 = vpop.f32.mrf.mxu0
    %1241 = vmatprep.mubr.f32.mxu0 0.0
    %1242 = vmatmul.mubr.f32.gmra.mxu0 %v924
    %v1243 = vpop.f32.mrf.mxu0
    %v1244 = vadd.f32 %v538, %v1243
    %v1245 = vpop.f32.mrf.mxu0
    %1246 = vmatprep.mubr.f32.mxu0 0.0
    %1247 = vmatmul.mubr.f32.gmra.mxu0 %v927
    %v1248 = vpop.f32.mrf.mxu0
    %v1249 = vadd.f32 %v543, %v1248
    %v1250 = vpop.f32.mrf.mxu0
    %1251 = vmatprep.mubr.f32.mxu0 0.0
    %1252 = vmatmul.mubr.f32.gmra.mxu0 %v930
    %v1253 = vpop.f32.mrf.mxu0
    %v1254 = vadd.f32 %v548, %v1253
    %v1255 = vpop.f32.mrf.mxu0
    %1256 = vmatprep.mubr.f32.mxu0 0.0
    %1257 = vmatmul.mubr.f32.gmra.mxu0 %v933
    %v1258 = vpop.f32.mrf.mxu0
    %v1259 = vadd.f32 %v553, %v1258
    %v1260 = vpop.f32.mrf.mxu0
    %1261 = vmatprep.mubr.f32.mxu0 0.0
    %1262 = vmatmul.mubr.f32.gmra.mxu0 %v936
    %v1263 = vpop.f32.mrf.mxu0
    %v1264 = vadd.f32 %v558, %v1263
    %v1265 = vpop.f32.mrf.mxu0
    %1266 = vmatprep.mubr.f32.mxu0 0.0
    %1267 = vmatmul.mubr.f32.gmra.mxu0 %v939
    %v1268 = vpop.f32.mrf.mxu0
    %v1269 = vadd.f32 %v563, %v1268
    %v1270 = vpop.f32.mrf.mxu0
    %1271 = vmatprep.mubr.f32.mxu0 0.0
    %1272 = vmatmul.mubr.f32.gmra.mxu0 %v942
    %v1273 = vpop.f32.mrf.mxu0
    %v1274 = vadd.f32 %v568, %v1273
    %v1275 = vpop.f32.mrf.mxu0
    %1276 = vmatprep.mubr.f32.mxu0 0.0
    %1277 = vmatmul.mubr.f32.gmra.mxu0 %v945
    %v1278 = vpop.f32.mrf.mxu0
    %v1279 = vadd.f32 %v573, %v1278
    %v1280 = vpop.f32.mrf.mxu0
    %1281 = vmatprep.mubr.f32.mxu0 0.0
    %1282 = vmatmul.mubr.f32.gmra.mxu0 %v948
    %v1283 = vpop.f32.mrf.mxu0
    %v1284 = vadd.f32 %v578, %v1283
    %v1285 = vpop.f32.mrf.mxu0
    %1286 = vmatprep.mubr.f32.mxu0 0.0
    %1287 = vmatmul.mubr.f32.gmra.mxu0 %v951
    %v1288 = vpop.f32.mrf.mxu0
    %v1289 = vadd.f32 %v583, %v1288
    %v1290 = vpop.f32.mrf.mxu0
    %1291 = vmatprep.mubr.f32.mxu0 0.0
    %1292 = vmatmul.mubr.f32.gmra.mxu0 %v954
    %v1293 = vpop.f32.mrf.mxu0
    %v1294 = vadd.f32 %v588, %v1293
    %v1295 = vpop.f32.mrf.mxu0
    %1296 = vmatprep.mubr.f32.mxu0 0.0
    %1297 = vmatmul.mubr.f32.gmra.mxu0 %v957
    %v1298 = vpop.f32.mrf.mxu0
    %v1299 = vadd.f32 %v593, %v1298
    %v1300 = vpop.f32.mrf.mxu0
    %1301 = vmatprep.mubr.f32.mxu0 0.0
    %1302 = vmatmul.mubr.f32.gmra.mxu0 %v960
    %v1303 = vpop.f32.mrf.mxu0
    %v1304 = vadd.f32 %v598, %v1303
    %v1305 = vpop.f32.mrf.mxu0
    %1306 = vmatprep.mubr.f32.mxu0 0.0
    %1307 = vmatmul.mubr.f32.gmra.mxu0 %v963
    %v1308 = vpop.f32.mrf.mxu0
    %v1309 = vadd.f32 %v603, %v1308
    %v1310 = vpop.f32.mrf.mxu0
    %1311 = vmatprep.mubr.f32.mxu0 0.0
    %1312 = vmatmul.mubr.f32.gmra.mxu0 %v966
    %v1313 = vpop.f32.mrf.mxu0
    %v1314 = vadd.f32 %v608, %v1313
    %v1315 = vpop.f32.mrf.mxu0
    %1316 = vmatprep.mubr.f32.mxu0 0.0
    %1317 = vmatmul.mubr.f32.gmra.mxu0 %v969
    %v1318 = vpop.f32.mrf.mxu0
    %v1319 = vadd.f32 %v613, %v1318
    %v1320 = vpop.f32.mrf.mxu0
    %1321 = vmatprep.mubr.f32.mxu0 0.0
    %1322 = vmatmul.mubr.f32.gmra.mxu0 %v972
    %v1323 = vpop.f32.mrf.mxu0
    %v1324 = vadd.f32 %v618, %v1323
    %v1325 = vpop.f32.mrf.mxu0
    %1326 = vmatprep.mubr.f32.mxu0 0.0
    %1327 = vmatmul.mubr.f32.gmra.mxu0 %v975
    %v1328 = vpop.f32.mrf.mxu0
    %v1329 = vadd.f32 %v623, %v1328
    %v1330 = vpop.f32.mrf.mxu0
    %1331 = vmatprep.mubr.f32.mxu0 0.0
    %1332 = vmatmul.mubr.f32.gmra.mxu0 %v978
    %v1333 = vpop.f32.mrf.mxu0
    %v1334 = vadd.f32 %v628, %v1333
    %v1335 = vpop.f32.mrf.mxu0
    %1336 = vmatprep.mubr.f32.mxu0 0.0
    %1337 = vmatmul.mubr.f32.gmra.mxu0 %v981
    %v1338 = vpop.f32.mrf.mxu0
    %v1339 = vadd.f32 %v633, %v1338
    %v1340 = vpop.f32.mrf.mxu0
    %1341 = vmatprep.mubr.f32.mxu0 0.0
    %1342 = vmatmul.mubr.f32.gmra.mxu0 %v984
    %v1343 = vpop.f32.mrf.mxu0
    %v1344 = vadd.f32 %v638, %v1343
    %v1345 = vpop.f32.mrf.mxu0
    %1346 = vmatprep.mubr.f32.mxu0 0.0
    %1347 = vmatmul.mubr.f32.gmra.mxu0 %v987
    %v1348 = vpop.f32.mrf.mxu0
    %v1349 = vadd.f32 %v643, %v1348
    %v1350 = vpop.f32.mrf.mxu0
    %1351 = vmatprep.mubr.f32.mxu0 0.0
    %1352 = vmatmul.mubr.f32.gmra.mxu0 %v990
    %v1353 = vpop.f32.mrf.mxu0
    %v1354 = vadd.f32 %v648, %v1353
    %v1355 = vpop.f32.mrf.mxu0
    %1356 = vmatprep.mubr.f32.mxu0 0.0
    %1357 = vmatmul.mubr.f32.gmra.mxu0 %v993
    %v1358 = vpop.f32.mrf.mxu0
    %v1359 = vadd.f32 %v653, %v1358
    %v1360 = vpop.f32.mrf.mxu0
    %1361 = vmatprep.mubr.f32.mxu0 0.0
    %1362 = vmatmul.mubr.f32.gmra.mxu0 %v996
    %v1363 = vpop.f32.mrf.mxu0
    %v1364 = vadd.f32 %v658, %v1363
    %v1365 = vpop.f32.mrf.mxu0
    %1366 = vmatprep.mubr.f32.mxu0 0.0
    %1367 = vmatmul.mubr.f32.gmra.mxu0 %v999
    %v1368 = vpop.f32.mrf.mxu0
    %v1369 = vadd.f32 %v663, %v1368
    %v1370 = vpop.f32.mrf.mxu0
    %1371 = vmatprep.mubr.f32.mxu0 0.0
    %1372 = vmatmul.mubr.f32.gmra.mxu0 %v1002
    %v1373 = vpop.f32.mrf.mxu0
    %v1374 = vadd.f32 %v668, %v1373
    %v1375 = vpop.f32.mrf.mxu0
    %1376 = vmatprep.mubr.f32.mxu0 0.0
    %1377 = vmatmul.mubr.f32.gmra.mxu0 %v1005
    %v1378 = vpop.f32.mrf.mxu0
    %v1379 = vadd.f32 %v673, %v1378
    %v1380 = vpop.f32.mrf.mxu0
    %1381 = vmatprep.mubr.f32.mxu0 0.0
    %1382 = vmatmul.mubr.f32.gmra.mxu0 %v1008
    %v1383 = vpop.f32.mrf.mxu0
    %v1384 = vadd.f32 %v678, %v1383
    %v1385 = vpop.f32.mrf.mxu0
    %1386 = vmatprep.mubr.f32.mxu0 0.0
    %1387 = vmatmul.mubr.f32.gmra.mxu0 %v1011
    %v1388 = vpop.f32.mrf.mxu0
    %v1389 = vadd.f32 %v683, %v1388
    %v1390 = vpop.f32.mrf.mxu0
    %1391 = vmatprep.mubr.f32.mxu0 0.0
    %1392 = vmatmul.mubr.f32.gmra.mxu0 %v1014
    %v1393 = vpop.f32.mrf.mxu0
    %v1394 = vadd.f32 %v688, %v1393
    %v1395 = vpop.f32.mrf.mxu0
    %1396 = vmatprep.mubr.f32.mxu0 0.0
    %1397 = vmatmul.mubr.f32.gmra.mxu0 %v1017
    %v1398 = vpop.f32.mrf.mxu0
    %v1399 = vadd.f32 %v693, %v1398
    %v1400 = vpop.f32.mrf.mxu0
    %1401 = vmatprep.mubr.f32.mxu0 0.0
    %1402 = vmatmul.mubr.f32.gmra.mxu0 %v1020
    %v1403 = vpop.f32.mrf.mxu0
    %v1404 = vadd.f32 %v698, %v1403
    %v1405 = vpop.f32.mrf.mxu0
    %1406 = vmatprep.mubr.f32.mxu0 0.0
    %1407 = vmatmul.mubr.f32.gmra.mxu0 %v1023
    %v1408 = vpop.f32.mrf.mxu0
    %v1409 = vadd.f32 %v703, %v1408
    %v1410 = vpop.f32.mrf.mxu0
    %1411 = vmatprep.mubr.f32.mxu0 0.0
    %1412 = vmatmul.mubr.f32.gmra.mxu0 %v1026
    %v1413 = vpop.f32.mrf.mxu0
    %v1414 = vadd.f32 %v708, %v1413
    %v1415 = vpop.f32.mrf.mxu0
    %1416 = vmatprep.mubr.f32.mxu0 0.0
    %1417 = vmatmul.mubr.f32.gmra.mxu0 %v1029
    %v1418 = vpop.f32.mrf.mxu0
    %v1419 = vadd.f32 %v713, %v1418
    %v1420 = vpop.f32.mrf.mxu0
    %1421 = vmatprep.mubr.f32.mxu0 0.0
    %1422 = vmatmul.mubr.f32.gmra.mxu0 %v1032
    %v1423 = vpop.f32.mrf.mxu0
    %v1424 = vadd.f32 %v718, %v1423
    %v1425 = vpop.f32.mrf.mxu0
    %1426 = vmatprep.mubr.f32.mxu0 0.0
    %1427 = vmatmul.mubr.f32.gmra.mxu0 %v1035
    %v1428 = vpop.f32.mrf.mxu0
    %v1429 = vadd.f32 %v723, %v1428
    %v1430 = vpop.f32.mrf.mxu0
    %1431 = vmatprep.mubr.f32.mxu0 0.0
    %1432 = vmatmul.mubr.f32.gmra.mxu0 %v1038
    %v1433 = vpop.f32.mrf.mxu0
    %v1434 = vadd.f32 %v728, %v1433
    %v1435 = vpop.f32.mrf.mxu0
    %1436 = vmatprep.mubr.f32.mxu0 0.0
    %1437 = vmatmul.mubr.f32.gmra.mxu0 %v1041
    %v1438 = vpop.f32.mrf.mxu0
    %v1439 = vadd.f32 %v733, %v1438
    %v1440 = vpop.f32.mrf.mxu0
    %1441 = vmatprep.mubr.f32.mxu0 0.0
    %1442 = vmatmul.mubr.f32.gmra.mxu0 %v1044
    %v1443 = vpop.f32.mrf.mxu0
    %v1444 = vadd.f32 %v738, %v1443
    %v1445 = vpop.f32.mrf.mxu0
    %1446 = vmatprep.mubr.f32.mxu0 0.0
    %1447 = vmatmul.mubr.f32.gmra.mxu0 %v1047
    %v1448 = vpop.f32.mrf.mxu0
    %v1449 = vadd.f32 %v743, %v1448
    %v1450 = vpop.f32.mrf.mxu0
    %1451 = vmatprep.mubr.f32.mxu0 0.0
    %1452 = vmatmul.mubr.f32.gmra.mxu0 %v1050
    %v1453 = vpop.f32.mrf.mxu0
    %v1454 = vadd.f32 %v748, %v1453
    %v1455 = vpop.f32.mrf.mxu0
    %1456 = vmatprep.mubr.f32.mxu0 0.0
    %1457 = vmatmul.mubr.f32.gmra.mxu0 %v1053
    %v1458 = vpop.f32.mrf.mxu0
    %v1459 = vadd.f32 %v753, %v1458
    %v1460 = vpop.f32.mrf.mxu0
    %1461 = vmatprep.mubr.f32.mxu0 0.0
    %1462 = vmatmul.mubr.f32.gmra.mxu0 %v1056
    %v1463 = vpop.f32.mrf.mxu0
    %v1464 = vadd.f32 %v758, %v1463
    %v1465 = vpop.f32.mrf.mxu0
    %1466 = vmatprep.mubr.f32.mxu0 0.0
    %1467 = vmatmul.mubr.f32.gmra.mxu0 %v1059
    %v1468 = vpop.f32.mrf.mxu0
    %v1469 = vadd.f32 %v763, %v1468
    %v1470 = vpop.f32.mrf.mxu0
    %1471 = vmatprep.mubr.f32.mxu0 0.0
    %1472 = vmatmul.mubr.f32.gmra.mxu0 %v1062
    %v1473 = vpop.f32.mrf.mxu0
    %v1474 = vadd.f32 %v768, %v1473
    %v1475 = vpop.f32.mrf.mxu0
    %1476 = vmatprep.mubr.f32.mxu0 0.0
    %1477 = vmatmul.mubr.f32.gmra.mxu0 %v1065
    %v1478 = vpop.f32.mrf.mxu0
    %v1479 = vadd.f32 %v773, %v1478
    %v1480 = vpop.f32.mrf.mxu0
    %1481 = vmatprep.mubr.f32.mxu0 0.0
    %1482 = vmatmul.mubr.f32.gmra.mxu0 %v1068
    %v1483 = vpop.f32.mrf.mxu0
    %v1484 = vadd.f32 %v778, %v1483
    %v1485 = vpop.f32.mrf.mxu0
    %1486 = vmatprep.mubr.f32.mxu0 0.0
    %1487 = vmatmul.mubr.f32.gmra.mxu0 %v1071
    %v1488 = vpop.f32.mrf.mxu0
    %v1489 = vadd.f32 %v783, %v1488
    %v1490 = vpop.f32.mrf.mxu0
    %1491 = vmatprep.mubr.f32.mxu0 0.0
    %1492 = vmatmul.mubr.f32.gmra.mxu0 %v1074
    %v1493 = vpop.f32.mrf.mxu0
    %v1494 = vadd.f32 %v788, %v1493
    %v1495 = vpop.f32.mrf.mxu0
    %1496 = vmatprep.mubr.f32.mxu0 0.0
    %1497 = vmatmul.mubr.f32.gmra.mxu0 %v1077
    %v1498 = vpop.f32.mrf.mxu0
    %v1499 = vadd.f32 %v793, %v1498
    %v1500 = vpop.f32.mrf.mxu0
    %1501 = vmatprep.mubr.f32.mxu0 0.0
    %1502 = vmatmul.mubr.f32.gmra.mxu0 %v1080
    %v1503 = vpop.f32.mrf.mxu0
    %v1504 = vadd.f32 %v798, %v1503
    %v1505 = vpop.f32.mrf.mxu0
    %1506 = vmatprep.mubr.f32.mxu0 0.0
    %1507 = vmatmul.mubr.f32.gmra.mxu0 %v1083
    %v1508 = vpop.f32.mrf.mxu0
    %v1509 = vadd.f32 %v803, %v1508
    %v1510 = vpop.f32.mrf.mxu0
    %1511 = vmatprep.mubr.f32.mxu0 0.0
    %1512 = vmatmul.mubr.f32.gmra.mxu0 %v1086
    %v1513 = vpop.f32.mrf.mxu0
    %v1514 = vadd.f32 %v808, %v1513
    %v1515 = vpop.f32.mrf.mxu0
    %1516 = vmatprep.mubr.f32.mxu0 0.0
    %1517 = vmatmul.mubr.f32.gmra.mxu0 %v1089
    %v1518 = vpop.f32.mrf.mxu0
    %v1519 = vadd.f32 %v813, %v1518
    %v1520 = vpop.f32.mrf.mxu0
    %1521 = vmatprep.mubr.f32.mxu0 0.0
    %1522 = vmatmul.mubr.f32.gmra.mxu0 %v1092
    %v1523 = vpop.f32.mrf.mxu0
    %v1524 = vadd.f32 %v818, %v1523
    %v1525 = vpop.f32.mrf.mxu0
    %1526 = vmatprep.mubr.f32.mxu0 0.0
    %1527 = vmatmul.mubr.f32.gmra.mxu0 %v1095
    %v1528 = vpop.f32.mrf.mxu0
    %v1529 = vadd.f32 %v823, %v1528
    %v1530 = vpop.f32.mrf.mxu0
    %1531 = vmatprep.mubr.f32.mxu0 0.0
    %1532 = vmatmul.mubr.f32.gmra.mxu0 %v1098
    %v1533 = vpop.f32.mrf.mxu0
    %v1534 = vadd.f32 %v828, %v1533
    %v1535 = vpop.f32.mrf.mxu0
    %1536 = vmatprep.mubr.f32.mxu0 0.0
    %1537 = vmatmul.mubr.f32.gmra.mxu0 %v1101
    %v1538 = vpop.f32.mrf.mxu0
    %v1539 = vadd.f32 %v833, %v1538
    %v1540 = vpop.f32.mrf.mxu0
    %1541 = vmatprep.mubr.f32.mxu0 0.0
    %1542 = vmatmul.mubr.f32.gmra.mxu0 %v1104
    %v1543 = vpop.f32.mrf.mxu0
    %v1544 = vadd.f32 %v838, %v1543
    %v1545 = vpop.f32.mrf.mxu0
    %1546 = vmatprep.mubr.f32.mxu0 0.0
    %1547 = vmatmul.mubr.f32.gmra.mxu0 %v1107
    %v1548 = vpop.f32.mrf.mxu0
    %v1549 = vadd.f32 %v843, %v1548
    %v1550 = vpop.f32.mrf.mxu0
    %1551 = vmatprep.mubr.f32.mxu0 0.0
    %1552 = vmatmul.mubr.f32.gmra.mxu0 %v1110
    %v1553 = vpop.f32.mrf.mxu0
    %v1554 = vadd.f32 %v848, %v1553
    %v1555 = vpop.f32.mrf.mxu0
    %1556 = vmatprep.mubr.f32.mxu0 0.0
    %1557 = vmatmul.mubr.f32.gmra.mxu0 %v1113
    %v1558 = vpop.f32.mrf.mxu0
    %v1559 = vadd.f32 %v853, %v1558
    %v1560 = vpop.f32.mrf.mxu0
    %1561 = vmatprep.mubr.f32.mxu0 0.0
    %1562 = vmatmul.mubr.f32.gmra.mxu0 %v1116
    %v1563 = vpop.f32.mrf.mxu0
    %v1564 = vadd.f32 %v858, %v1563
    %v1565 = vpop.f32.mrf.mxu0
    %1566 = vmatprep.mubr.f32.mxu0 0.0
    %1567 = vmatmul.mubr.f32.gmra.mxu0 %v1119
    %v1568 = vpop.f32.mrf.mxu0
    %v1569 = vadd.f32 %v863, %v1568
    %v1570 = vpop.f32.mrf.mxu0
    %1571 = vmatprep.mubr.f32.mxu0 0.0
    %1572 = vmatmul.mubr.f32.gmra.mxu0 %v1122
    %v1573 = vpop.f32.mrf.mxu0
    %v1574 = vadd.f32 %v868, %v1573
    %v1575 = vpop.f32.mrf.mxu0
    %1576 = vmatprep.mubr.f32.mxu0 0.0
    %1577 = vmatmul.mubr.f32.gmra.mxu0 %v1125
    %v1578 = vpop.f32.mrf.mxu0
    %v1579 = vadd.f32 %v873, %v1578
    %v1580 = vpop.f32.mrf.mxu0
    %1581 = vmatprep.mubr.f32.mxu0 0.0
    %1582 = vmatmul.mubr.f32.gmra.mxu0 %v1128
    %v1583 = vpop.f32.mrf.mxu0
    %v1584 = vadd.f32 %v878, %v1583
    %v1585 = vpop.f32.mrf.mxu0
    %1586 = vmatprep.mubr.f32.mxu0 0.0
    %1587 = vmatmul.mubr.f32.gmra.mxu0 %v1131
    %v1588 = vpop.f32.mrf.mxu0
    %v1589 = vadd.f32 %v883, %v1588
    %v1590 = vpop.f32.mrf.mxu0
    %1591 = vmatprep.mubr.f32.mxu0 0.0
    %1592 = vmatmul.mubr.f32.gmra.mxu0 %v1134
    %v1593 = vpop.f32.mrf.mxu0
    %v1594 = vadd.f32 %v888, %v1593
    %v1595 = vpop.f32.mrf.mxu0
    %1596 = vmatprep.mubr.f32.mxu0 0.0
    %1597 = vmatmul.mubr.f32.gmra.mxu0 %v1137
    %v1598 = vpop.f32.mrf.mxu0
    %v1599 = vadd.f32 %v893, %v1598
    %v1600 = vpop.f32.mrf.mxu0
    %1601 = vmatprep.mubr.f32.mxu0 0.0
    %1602 = vmatmul.mubr.f32.gmra.mxu0 %v1140
    %v1603 = vpop.f32.mrf.mxu0
    %v1604 = vadd.f32 %v898, %v1603
    %v1605 = vpop.f32.mrf.mxu0
    %1606 = vdwg.mxu0
    %v1607 = vlaneseq
    %v1608 = vshrl.u32 %v1607, 7
    %v1609 = vsub.s32 0, %v1608
    %v1610 = vrot.slane %v29, %v1609
    %v1611 = vadd.f32 %v1209, %v1610
    %v1612 = vadd.f32 %v1214, %v1610
    %v1613 = vadd.f32 %v1219, %v1610
    %v1614 = vadd.f32 %v1224, %v1610
    %v1615 = vadd.f32 %v1229, %v1610
    %v1616 = vadd.f32 %v1234, %v1610
    %v1617 = vadd.f32 %v1239, %v1610
    %v1618 = vadd.f32 %v1244, %v1610
    %v1619 = vadd.f32 %v1249, %v1610
    %v1620 = vadd.f32 %v1254, %v1610
    %v1621 = vadd.f32 %v1259, %v1610
    %v1622 = vadd.f32 %v1264, %v1610
    %v1623 = vadd.f32 %v1269, %v1610
    %v1624 = vadd.f32 %v1274, %v1610
    %v1625 = vadd.f32 %v1279, %v1610
    %v1626 = vadd.f32 %v1284, %v1610
    %v1627 = vadd.f32 %v1289, %v1610
    %v1628 = vadd.f32 %v1294, %v1610
    %v1629 = vadd.f32 %v1299, %v1610
    %v1630 = vadd.f32 %v1304, %v1610
    %v1631 = vadd.f32 %v1309, %v1610
    %v1632 = vadd.f32 %v1314, %v1610
    %v1633 = vadd.f32 %v1319, %v1610
    %v1634 = vadd.f32 %v1324, %v1610
    %v1635 = vadd.f32 %v1329, %v1610
    %v1636 = vadd.f32 %v1334, %v1610
    %v1637 = vadd.f32 %v1339, %v1610
    %v1638 = vadd.f32 %v1344, %v1610
    %v1639 = vadd.f32 %v1349, %v1610
    %v1640 = vadd.f32 %v1354, %v1610
    %v1641 = vadd.f32 %v1359, %v1610
    %v1642 = vadd.f32 %v1364, %v1610
    %v1643 = vadd.f32 %v1369, %v1610
    %v1644 = vadd.f32 %v1374, %v1610
    %v1645 = vadd.f32 %v1379, %v1610
    %v1646 = vadd.f32 %v1384, %v1610
    %v1647 = vadd.f32 %v1389, %v1610
    %v1648 = vadd.f32 %v1394, %v1610
    %v1649 = vadd.f32 %v1399, %v1610
    %v1650 = vadd.f32 %v1404, %v1610
    %v1651 = vadd.f32 %v1409, %v1610
    %v1652 = vadd.f32 %v1414, %v1610
    %v1653 = vadd.f32 %v1419, %v1610
    %v1654 = vadd.f32 %v1424, %v1610
    %v1655 = vadd.f32 %v1429, %v1610
    %v1656 = vadd.f32 %v1434, %v1610
    %v1657 = vadd.f32 %v1439, %v1610
    %v1658 = vadd.f32 %v1444, %v1610
    %v1659 = vadd.f32 %v1449, %v1610
    %v1660 = vadd.f32 %v1454, %v1610
    %v1661 = vadd.f32 %v1459, %v1610
    %v1662 = vadd.f32 %v1464, %v1610
    %v1663 = vadd.f32 %v1469, %v1610
    %v1664 = vadd.f32 %v1474, %v1610
    %v1665 = vadd.f32 %v1479, %v1610
    %v1666 = vadd.f32 %v1484, %v1610
    %v1667 = vadd.f32 %v1489, %v1610
    %v1668 = vadd.f32 %v1494, %v1610
    %v1669 = vadd.f32 %v1499, %v1610
    %v1670 = vadd.f32 %v1504, %v1610
    %v1671 = vadd.f32 %v1509, %v1610
    %v1672 = vadd.f32 %v1514, %v1610
    %v1673 = vadd.f32 %v1519, %v1610
    %v1674 = vadd.f32 %v1524, %v1610
    %v1675 = vadd.f32 %v1529, %v1610
    %v1676 = vadd.f32 %v1534, %v1610
    %v1677 = vadd.f32 %v1539, %v1610
    %v1678 = vadd.f32 %v1544, %v1610
    %v1679 = vadd.f32 %v1549, %v1610
    %v1680 = vadd.f32 %v1554, %v1610
    %v1681 = vadd.f32 %v1559, %v1610
    %v1682 = vadd.f32 %v1564, %v1610
    %v1683 = vadd.f32 %v1569, %v1610
    %v1684 = vadd.f32 %v1574, %v1610
    %v1685 = vadd.f32 %v1579, %v1610
    %v1686 = vadd.f32 %v1584, %v1610
    %v1687 = vadd.f32 %v1589, %v1610
    %v1688 = vadd.f32 %v1594, %v1610
    %v1689 = vadd.f32 %v1599, %v1610
    %v1690 = vadd.f32 %v1604, %v1610
    %v1691 = vmax.f32 %v1611, 0.0
    %v1692 = vmax.f32 %v1612, 0.0
    %v1693 = vmax.f32 %v1613, 0.0
    %v1694 = vmax.f32 %v1614, 0.0
    %v1695 = vmax.f32 %v1615, 0.0
    %v1696 = vmax.f32 %v1616, 0.0
    %v1697 = vmax.f32 %v1617, 0.0
    %v1698 = vmax.f32 %v1618, 0.0
    %v1699 = vmax.f32 %v1619, 0.0
    %v1700 = vmax.f32 %v1620, 0.0
    %v1701 = vmax.f32 %v1621, 0.0
    %v1702 = vmax.f32 %v1622, 0.0
    %v1703 = vmax.f32 %v1623, 0.0
    %v1704 = vmax.f32 %v1624, 0.0
    %v1705 = vmax.f32 %v1625, 0.0
    %v1706 = vmax.f32 %v1626, 0.0
    %v1707 = vmax.f32 %v1627, 0.0
    %v1708 = vmax.f32 %v1628, 0.0
    %v1709 = vmax.f32 %v1629, 0.0
    %v1710 = vmax.f32 %v1630, 0.0
    %v1711 = vmax.f32 %v1631, 0.0
    %v1712 = vmax.f32 %v1632, 0.0
    %v1713 = vmax.f32 %v1633, 0.0
    %v1714 = vmax.f32 %v1634, 0.0
    %v1715 = vmax.f32 %v1635, 0.0
    %v1716 = vmax.f32 %v1636, 0.0
    %v1717 = vmax.f32 %v1637, 0.0
    %v1718 = vmax.f32 %v1638, 0.0
    %v1719 = vmax.f32 %v1639, 0.0
    %v1720 = vmax.f32 %v1640, 0.0
    %v1721 = vmax.f32 %v1641, 0.0
    %v1722 = vmax.f32 %v1642, 0.0
    %v1723 = vmax.f32 %v1643, 0.0
    %v1724 = vmax.f32 %v1644, 0.0
    %v1725 = vmax.f32 %v1645, 0.0
    %v1726 = vmax.f32 %v1646, 0.0
    %v1727 = vmax.f32 %v1647, 0.0
    %v1728 = vmax.f32 %v1648, 0.0
    %v1729 = vmax.f32 %v1649, 0.0
    %v1730 = vmax.f32 %v1650, 0.0
    %v1731 = vmax.f32 %v1651, 0.0
    %v1732 = vmax.f32 %v1652, 0.0
    %v1733 = vmax.f32 %v1653, 0.0
    %v1734 = vmax.f32 %v1654, 0.0
    %v1735 = vmax.f32 %v1655, 0.0
    %v1736 = vmax.f32 %v1656, 0.0
    %v1737 = vmax.f32 %v1657, 0.0
    %v1738 = vmax.f32 %v1658, 0.0
    %v1739 = vmax.f32 %v1659, 0.0
    %v1740 = vmax.f32 %v1660, 0.0
    %v1741 = vmax.f32 %v1661, 0.0
    %v1742 = vmax.f32 %v1662, 0.0
    %v1743 = vmax.f32 %v1663, 0.0
    %v1744 = vmax.f32 %v1664, 0.0
    %v1745 = vmax.f32 %v1665, 0.0
    %v1746 = vmax.f32 %v1666, 0.0
    %v1747 = vmax.f32 %v1667, 0.0
    %v1748 = vmax.f32 %v1668, 0.0
    %v1749 = vmax.f32 %v1669, 0.0
    %v1750 = vmax.f32 %v1670, 0.0
    %v1751 = vmax.f32 %v1671, 0.0
    %v1752 = vmax.f32 %v1672, 0.0
    %v1753 = vmax.f32 %v1673, 0.0
    %v1754 = vmax.f32 %v1674, 0.0
    %v1755 = vmax.f32 %v1675, 0.0
    %v1756 = vmax.f32 %v1676, 0.0
    %v1757 = vmax.f32 %v1677, 0.0
    %v1758 = vmax.f32 %v1678, 0.0
    %v1759 = vmax.f32 %v1679, 0.0
    %v1760 = vmax.f32 %v1680, 0.0
    %v1761 = vmax.f32 %v1681, 0.0
    %v1762 = vmax.f32 %v1682, 0.0
    %v1763 = vmax.f32 %v1683, 0.0
    %v1764 = vmax.f32 %v1684, 0.0
    %v1765 = vmax.f32 %v1685, 0.0
    %v1766 = vmax.f32 %v1686, 0.0
    %v1767 = vmax.f32 %v1687, 0.0
    %v1768 = vmax.f32 %v1688, 0.0
    %v1769 = vmax.f32 %v1689, 0.0
    %v1770 = vmax.f32 %v1690, 0.0
    %v1771 = vld [vmem:[%s4] sm:$0xff]
    %v1772 = vld [vmem:[%s4 + $0x8] sm:$0xff]
    %v1773 = vld [vmem:[%s4 + $0x10] sm:$0xff]
    %v1774 = vld [vmem:[%s4 + $0x18] sm:$0xff]
    %v1775 = vlaneseq
    %v1776 = vshrl.u32 %v1775, 7
    %v1777 = vsub.s32 0, %v1776
    %v1778 = vrot.slane %v30, %v1777
    %vm1779 = vcmask 261120
    %v1781 = vsel %vm1779, %v1691, 0
    %v1784 = vsel %vm1779, %v1692, 0
    %v1787 = vsel %vm1779, %v1693, 0
    %v1790 = vsel %vm1779, %v1694, 0
    %v1793 = vsel %vm1779, %v1695, 0
    %v1796 = vsel %vm1779, %v1696, 0
    %v1799 = vsel %vm1779, %v1697, 0
    %v1802 = vsel %vm1779, %v1698, 0
    %v1805 = vsel %vm1779, %v1699, 0
    %v1808 = vsel %vm1779, %v1700, 0
    %v1811 = vsel %vm1779, %v1701, 0
    %v1814 = vsel %vm1779, %v1702, 0
    %v1817 = vsel %vm1779, %v1703, 0
    %v1820 = vsel %vm1779, %v1704, 0
    %v1823 = vsel %vm1779, %v1705, 0
    %v1826 = vsel %vm1779, %v1706, 0
    %v1829 = vsel %vm1779, %v1707, 0
    %v1832 = vsel %vm1779, %v1708, 0
    %v1835 = vsel %vm1779, %v1709, 0
    %v1838 = vsel %vm1779, %v1710, 0
    %v1841 = vsel %vm1779, %v1711, 0
    %v1844 = vsel %vm1779, %v1712, 0
    %v1847 = vsel %vm1779, %v1713, 0
    %v1850 = vsel %vm1779, %v1714, 0
    %v1853 = vsel %vm1779, %v1715, 0
    %v1856 = vsel %vm1779, %v1716, 0
    %v1859 = vsel %vm1779, %v1717, 0
    %v1862 = vsel %vm1779, %v1718, 0
    %v1865 = vsel %vm1779, %v1719, 0
    %v1868 = vsel %vm1779, %v1720, 0
    %v1871 = vsel %vm1779, %v1721, 0
    %v1874 = vsel %vm1779, %v1722, 0
    %v1877 = vsel %vm1779, %v1723, 0
    %v1880 = vsel %vm1779, %v1724, 0
    %v1883 = vsel %vm1779, %v1725, 0
    %v1886 = vsel %vm1779, %v1726, 0
    %v1889 = vsel %vm1779, %v1727, 0
    %v1892 = vsel %vm1779, %v1728, 0
    %v1895 = vsel %vm1779, %v1729, 0
    %v1898 = vsel %vm1779, %v1730, 0
    %v1901 = vsel %vm1779, %v1731, 0
    %v1904 = vsel %vm1779, %v1732, 0
    %v1907 = vsel %vm1779, %v1733, 0
    %v1910 = vsel %vm1779, %v1734, 0
    %v1913 = vsel %vm1779, %v1735, 0
    %v1916 = vsel %vm1779, %v1736, 0
    %v1919 = vsel %vm1779, %v1737, 0
    %v1922 = vsel %vm1779, %v1738, 0
    %v1925 = vsel %vm1779, %v1739, 0
    %v1928 = vsel %vm1779, %v1740, 0
    %v1931 = vsel %vm1779, %v1741, 0
    %v1934 = vsel %vm1779, %v1742, 0
    %v1937 = vsel %vm1779, %v1743, 0
    %v1940 = vsel %vm1779, %v1744, 0
    %v1943 = vsel %vm1779, %v1745, 0
    %v1946 = vsel %vm1779, %v1746, 0
    %v1949 = vsel %vm1779, %v1747, 0
    %v1952 = vsel %vm1779, %v1748, 0
    %v1955 = vsel %vm1779, %v1749, 0
    %v1958 = vsel %vm1779, %v1750, 0
    %v1961 = vsel %vm1779, %v1751, 0
    %v1964 = vsel %vm1779, %v1752, 0
    %v1967 = vsel %vm1779, %v1753, 0
    %v1970 = vsel %vm1779, %v1754, 0
    %v1973 = vsel %vm1779, %v1755, 0
    %v1976 = vsel %vm1779, %v1756, 0
    %v1979 = vsel %vm1779, %v1757, 0
    %v1982 = vsel %vm1779, %v1758, 0
    %v1985 = vsel %vm1779, %v1759, 0
    %v1988 = vsel %vm1779, %v1760, 0
    %v1991 = vsel %vm1779, %v1761, 0
    %v1994 = vsel %vm1779, %v1762, 0
    %v1997 = vsel %vm1779, %v1763, 0
    %v2000 = vsel %vm1779, %v1764, 0
    %v2003 = vsel %vm1779, %v1765, 0
    %v2006 = vsel %vm1779, %v1766, 0
    %v2009 = vsel %vm1779, %v1767, 0
    %v2012 = vsel %vm1779, %v1768, 0
    %v2015 = vsel %vm1779, %v1769, 0
    %v2018 = vsel %vm1779, %v1770, 0
    %2020 = vmatprep.subr.mxu0 0.0
    %2021 = vmatpush1.msra.mxu0 0.0
    %2022 = vmatprep.subr.mxu0 0.0
    %2023 = vmatpush1.msra.mxu0 0.0
    %2024 = vmatprep.subr.mxu0 0.0
    %2025 = vmatpush1.msra.mxu0 0.0
    %2026 = vmatprep.subr.mxu0 0.0
    %2027 = vmatpush1.msra.mxu0 0.0
    %2028 = vmatprep.subr.mxu0 0.0
    %2029 = vmatpush1.msra.mxu0 0.0
    %2030 = vmatprep.subr.mxu0 0.0
    %2031 = vmatpush1.msra.mxu0 0.0
    %2032 = vmatprep.subr.mxu0 0.0
    %2033 = vmatpush1.msra.mxu0 0.0
    %2034 = vmatprep.subr.mxu0 0.0
    %2035 = vmatpush1.msra.mxu0 0.0
    %2036 = vmatprep.subr.mxu0 0.0
    %2037 = vmatpush1.msra.mxu0 0.0
    %2038 = vmatprep.subr.mxu0 0.0
    %2039 = vmatpush1.msra.mxu0 0.0
    %2040 = vmatprep.subr.mxu0 0.0
    %2041 = vmatpush1.msra.mxu0 0.0
    %2042 = vmatprep.subr.mxu0 0.0
    %2043 = vmatpush1.msra.mxu0 0.0
    %2044 = vmatprep.subr.mxu0 0.0
    %2045 = vmatpush1.msra.mxu0 %v1774
    %2046 = vmatprep.subr.mxu0 0.0
    %2047 = vmatpush1.msra.mxu0 %v1773
    %2048 = vmatprep.subr.mxu0 0.0
    %2049 = vmatpush1.msra.mxu0 %v1772
    %2050 = vmatprep.subr.mxu0 0.0
    %2051 = vmatpush1.msra.mxu0 %v1771
    %2052 = vmatprep.subr.mxu0 0.0
    %2053 = vmatpush2.msra.mxu0 0.0
    %2054 = vmatprep.subr.mxu0 0.0
    %2055 = vmatpush2.msra.mxu0 0.0
    %2056 = vmatprep.subr.mxu0 0.0
    %2057 = vmatpush2.msra.mxu0 0.0
    %2058 = vmatprep.subr.mxu0 0.0
    %2059 = vmatpush2.msra.mxu0 0.0
    %2060 = vmatprep.subr.mxu0 0.0
    %2061 = vmatpush2.msra.mxu0 0.0
    %2062 = vmatprep.subr.mxu0 0.0
    %2063 = vmatpush2.msra.mxu0 0.0
    %2064 = vmatprep.subr.mxu0 0.0
    %2065 = vmatpush2.msra.mxu0 0.0
    %2066 = vmatprep.subr.mxu0 0.0
    %2067 = vmatpush2.msra.mxu0 0.0
    %2068 = vmatprep.subr.mxu0 0.0
    %2069 = vmatpush2.msra.mxu0 0.0
    %2070 = vmatprep.subr.mxu0 0.0
    %2071 = vmatpush2.msra.mxu0 0.0
    %2072 = vmatprep.subr.mxu0 0.0
    %2073 = vmatpush2.msra.mxu0 0.0
    %2074 = vmatprep.subr.mxu0 0.0
    %2075 = vmatpush2.msra.mxu0 0.0
    %2076 = vmatprep.subr.mxu0 0.0
    %2077 = vmatpush2.msra.mxu0 0.0
    %2078 = vmatprep.subr.mxu0 0.0
    %2079 = vmatpush2.msra.mxu0 0.0
    %2080 = vmatprep.subr.mxu0 0.0
    %2081 = vmatpush2.msra.mxu0 0.0
    %2082 = vmatprep.subr.mxu0 0.0
    %2083 = vmatpush2.msra.mxu0 0.0
    %2084 = vmatprep.mubr.f32.mxu0 0.0
    %2085 = vmatmul.mubr.f32.gmra.mxu0 %v1781
    %v2086 = vpop.f32.mrf.mxu0
    %v2087 = vadd.f32 %v1778, %v2086
    %v2088 = vpop.f32.mrf.mxu0
    %2089 = vmatprep.mubr.f32.mxu0 0.0
    %2090 = vmatmul.mubr.f32.gmra.mxu0 %v1784
    %v2091 = vpop.f32.mrf.mxu0
    %v2092 = vadd.f32 %v1778, %v2091
    %v2093 = vpop.f32.mrf.mxu0
    %2094 = vmatprep.mubr.f32.mxu0 0.0
    %2095 = vmatmul.mubr.f32.gmra.mxu0 %v1787
    %v2096 = vpop.f32.mrf.mxu0
    %v2097 = vadd.f32 %v1778, %v2096
    %v2098 = vpop.f32.mrf.mxu0
    %2099 = vmatprep.mubr.f32.mxu0 0.0
    %2100 = vmatmul.mubr.f32.gmra.mxu0 %v1790
    %v2101 = vpop.f32.mrf.mxu0
    %v2102 = vadd.f32 %v1778, %v2101
    %v2103 = vpop.f32.mrf.mxu0
    %2104 = vmatprep.mubr.f32.mxu0 0.0
    %2105 = vmatmul.mubr.f32.gmra.mxu0 %v1793
    %v2106 = vpop.f32.mrf.mxu0
    %v2107 = vadd.f32 %v1778, %v2106
    %v2108 = vpop.f32.mrf.mxu0
    %2109 = vmatprep.mubr.f32.mxu0 0.0
    %2110 = vmatmul.mubr.f32.gmra.mxu0 %v1796
    %v2111 = vpop.f32.mrf.mxu0
    %v2112 = vadd.f32 %v1778, %v2111
    %v2113 = vpop.f32.mrf.mxu0
    %2114 = vmatprep.mubr.f32.mxu0 0.0
    %2115 = vmatmul.mubr.f32.gmra.mxu0 %v1799
    %v2116 = vpop.f32.mrf.mxu0
    %v2117 = vadd.f32 %v1778, %v2116
    %v2118 = vpop.f32.mrf.mxu0
    %2119 = vmatprep.mubr.f32.mxu0 0.0
    %2120 = vmatmul.mubr.f32.gmra.mxu0 %v1802
    %v2121 = vpop.f32.mrf.mxu0
    %v2122 = vadd.f32 %v1778, %v2121
    %v2123 = vpop.f32.mrf.mxu0
    %2124 = vmatprep.mubr.f32.mxu0 0.0
    %2125 = vmatmul.mubr.f32.gmra.mxu0 %v1805
    %v2126 = vpop.f32.mrf.mxu0
    %v2127 = vadd.f32 %v1778, %v2126
    %v2128 = vpop.f32.mrf.mxu0
    %2129 = vmatprep.mubr.f32.mxu0 0.0
    %2130 = vmatmul.mubr.f32.gmra.mxu0 %v1808
    %v2131 = vpop.f32.mrf.mxu0
    %v2132 = vadd.f32 %v1778, %v2131
    %v2133 = vpop.f32.mrf.mxu0
    %2134 = vmatprep.mubr.f32.mxu0 0.0
    %2135 = vmatmul.mubr.f32.gmra.mxu0 %v1811
    %v2136 = vpop.f32.mrf.mxu0
    %v2137 = vadd.f32 %v1778, %v2136
    %v2138 = vpop.f32.mrf.mxu0
    %2139 = vmatprep.mubr.f32.mxu0 0.0
    %2140 = vmatmul.mubr.f32.gmra.mxu0 %v1814
    %v2141 = vpop.f32.mrf.mxu0
    %v2142 = vadd.f32 %v1778, %v2141
    %v2143 = vpop.f32.mrf.mxu0
    %2144 = vmatprep.mubr.f32.mxu0 0.0
    %2145 = vmatmul.mubr.f32.gmra.mxu0 %v1817
    %v2146 = vpop.f32.mrf.mxu0
    %v2147 = vadd.f32 %v1778, %v2146
    %v2148 = vpop.f32.mrf.mxu0
    %2149 = vmatprep.mubr.f32.mxu0 0.0
    %2150 = vmatmul.mubr.f32.gmra.mxu0 %v1820
    %v2151 = vpop.f32.mrf.mxu0
    %v2152 = vadd.f32 %v1778, %v2151
    %v2153 = vpop.f32.mrf.mxu0
    %2154 = vmatprep.mubr.f32.mxu0 0.0
    %2155 = vmatmul.mubr.f32.gmra.mxu0 %v1823
    %v2156 = vpop.f32.mrf.mxu0
    %v2157 = vadd.f32 %v1778, %v2156
    %v2158 = vpop.f32.mrf.mxu0
    %2159 = vmatprep.mubr.f32.mxu0 0.0
    %2160 = vmatmul.mubr.f32.gmra.mxu0 %v1826
    %v2161 = vpop.f32.mrf.mxu0
    %v2162 = vadd.f32 %v1778, %v2161
    %v2163 = vpop.f32.mrf.mxu0
    %2164 = vmatprep.mubr.f32.mxu0 0.0
    %2165 = vmatmul.mubr.f32.gmra.mxu0 %v1829
    %v2166 = vpop.f32.mrf.mxu0
    %v2167 = vadd.f32 %v1778, %v2166
    %v2168 = vpop.f32.mrf.mxu0
    %2169 = vmatprep.mubr.f32.mxu0 0.0
    %2170 = vmatmul.mubr.f32.gmra.mxu0 %v1832
    %v2171 = vpop.f32.mrf.mxu0
    %v2172 = vadd.f32 %v1778, %v2171
    %v2173 = vpop.f32.mrf.mxu0
    %2174 = vmatprep.mubr.f32.mxu0 0.0
    %2175 = vmatmul.mubr.f32.gmra.mxu0 %v1835
    %v2176 = vpop.f32.mrf.mxu0
    %v2177 = vadd.f32 %v1778, %v2176
    %v2178 = vpop.f32.mrf.mxu0
    %2179 = vmatprep.mubr.f32.mxu0 0.0
    %2180 = vmatmul.mubr.f32.gmra.mxu0 %v1838
    %v2181 = vpop.f32.mrf.mxu0
    %v2182 = vadd.f32 %v1778, %v2181
    %v2183 = vpop.f32.mrf.mxu0
    %2184 = vmatprep.mubr.f32.mxu0 0.0
    %2185 = vmatmul.mubr.f32.gmra.mxu0 %v1841
    %v2186 = vpop.f32.mrf.mxu0
    %v2187 = vadd.f32 %v1778, %v2186
    %v2188 = vpop.f32.mrf.mxu0
    %2189 = vmatprep.mubr.f32.mxu0 0.0
    %2190 = vmatmul.mubr.f32.gmra.mxu0 %v1844
    %v2191 = vpop.f32.mrf.mxu0
    %v2192 = vadd.f32 %v1778, %v2191
    %v2193 = vpop.f32.mrf.mxu0
    %2194 = vmatprep.mubr.f32.mxu0 0.0
    %2195 = vmatmul.mubr.f32.gmra.mxu0 %v1847
    %v2196 = vpop.f32.mrf.mxu0
    %v2197 = vadd.f32 %v1778, %v2196
    %v2198 = vpop.f32.mrf.mxu0
    %2199 = vmatprep.mubr.f32.mxu0 0.0
    %2200 = vmatmul.mubr.f32.gmra.mxu0 %v1850
    %v2201 = vpop.f32.mrf.mxu0
    %v2202 = vadd.f32 %v1778, %v2201
    %v2203 = vpop.f32.mrf.mxu0
    %2204 = vmatprep.mubr.f32.mxu0 0.0
    %2205 = vmatmul.mubr.f32.gmra.mxu0 %v1853
    %v2206 = vpop.f32.mrf.mxu0
    %v2207 = vadd.f32 %v1778, %v2206
    %v2208 = vpop.f32.mrf.mxu0
    %2209 = vmatprep.mubr.f32.mxu0 0.0
    %2210 = vmatmul.mubr.f32.gmra.mxu0 %v1856
    %v2211 = vpop.f32.mrf.mxu0
    %v2212 = vadd.f32 %v1778, %v2211
    %v2213 = vpop.f32.mrf.mxu0
    %2214 = vmatprep.mubr.f32.mxu0 0.0
    %2215 = vmatmul.mubr.f32.gmra.mxu0 %v1859
    %v2216 = vpop.f32.mrf.mxu0
    %v2217 = vadd.f32 %v1778, %v2216
    %v2218 = vpop.f32.mrf.mxu0
    %2219 = vmatprep.mubr.f32.mxu0 0.0
    %2220 = vmatmul.mubr.f32.gmra.mxu0 %v1862
    %v2221 = vpop.f32.mrf.mxu0
    %v2222 = vadd.f32 %v1778, %v2221
    %v2223 = vpop.f32.mrf.mxu0
    %2224 = vmatprep.mubr.f32.mxu0 0.0
    %2225 = vmatmul.mubr.f32.gmra.mxu0 %v1865
    %v2226 = vpop.f32.mrf.mxu0
    %v2227 = vadd.f32 %v1778, %v2226
    %v2228 = vpop.f32.mrf.mxu0
    %2229 = vmatprep.mubr.f32.mxu0 0.0
    %2230 = vmatmul.mubr.f32.gmra.mxu0 %v1868
    %v2231 = vpop.f32.mrf.mxu0
    %v2232 = vadd.f32 %v1778, %v2231
    %v2233 = vpop.f32.mrf.mxu0
    %2234 = vmatprep.mubr.f32.mxu0 0.0
    %2235 = vmatmul.mubr.f32.gmra.mxu0 %v1871
    %v2236 = vpop.f32.mrf.mxu0
    %v2237 = vadd.f32 %v1778, %v2236
    %v2238 = vpop.f32.mrf.mxu0
    %2239 = vmatprep.mubr.f32.mxu0 0.0
    %2240 = vmatmul.mubr.f32.gmra.mxu0 %v1874
    %v2241 = vpop.f32.mrf.mxu0
    %v2242 = vadd.f32 %v1778, %v2241
    %v2243 = vpop.f32.mrf.mxu0
    %2244 = vmatprep.mubr.f32.mxu0 0.0
    %2245 = vmatmul.mubr.f32.gmra.mxu0 %v1877
    %v2246 = vpop.f32.mrf.mxu0
    %v2247 = vadd.f32 %v1778, %v2246
    %v2248 = vpop.f32.mrf.mxu0
    %2249 = vmatprep.mubr.f32.mxu0 0.0
    %2250 = vmatmul.mubr.f32.gmra.mxu0 %v1880
    %v2251 = vpop.f32.mrf.mxu0
    %v2252 = vadd.f32 %v1778, %v2251
    %v2253 = vpop.f32.mrf.mxu0
    %2254 = vmatprep.mubr.f32.mxu0 0.0
    %2255 = vmatmul.mubr.f32.gmra.mxu0 %v1883
    %v2256 = vpop.f32.mrf.mxu0
    %v2257 = vadd.f32 %v1778, %v2256
    %v2258 = vpop.f32.mrf.mxu0
    %2259 = vmatprep.mubr.f32.mxu0 0.0
    %2260 = vmatmul.mubr.f32.gmra.mxu0 %v1886
    %v2261 = vpop.f32.mrf.mxu0
    %v2262 = vadd.f32 %v1778, %v2261
    %v2263 = vpop.f32.mrf.mxu0
    %2264 = vmatprep.mubr.f32.mxu0 0.0
    %2265 = vmatmul.mubr.f32.gmra.mxu0 %v1889
    %v2266 = vpop.f32.mrf.mxu0
    %v2267 = vadd.f32 %v1778, %v2266
    %v2268 = vpop.f32.mrf.mxu0
    %2269 = vmatprep.mubr.f32.mxu0 0.0
    %2270 = vmatmul.mubr.f32.gmra.mxu0 %v1892
    %v2271 = vpop.f32.mrf.mxu0
    %v2272 = vadd.f32 %v1778, %v2271
    %v2273 = vpop.f32.mrf.mxu0
    %2274 = vmatprep.mubr.f32.mxu0 0.0
    %2275 = vmatmul.mubr.f32.gmra.mxu0 %v1895
    %v2276 = vpop.f32.mrf.mxu0
    %v2277 = vadd.f32 %v1778, %v2276
    %v2278 = vpop.f32.mrf.mxu0
    %2279 = vmatprep.mubr.f32.mxu0 0.0
    %2280 = vmatmul.mubr.f32.gmra.mxu0 %v1898
    %v2281 = vpop.f32.mrf.mxu0
    %v2282 = vadd.f32 %v1778, %v2281
    %v2283 = vpop.f32.mrf.mxu0
    %2284 = vmatprep.mubr.f32.mxu0 0.0
    %2285 = vmatmul.mubr.f32.gmra.mxu0 %v1901
    %v2286 = vpop.f32.mrf.mxu0
    %v2287 = vadd.f32 %v1778, %v2286
    %v2288 = vpop.f32.mrf.mxu0
    %2289 = vmatprep.mubr.f32.mxu0 0.0
    %2290 = vmatmul.mubr.f32.gmra.mxu0 %v1904
    %v2291 = vpop.f32.mrf.mxu0
    %v2292 = vadd.f32 %v1778, %v2291
    %v2293 = vpop.f32.mrf.mxu0
    %2294 = vmatprep.mubr.f32.mxu0 0.0
    %2295 = vmatmul.mubr.f32.gmra.mxu0 %v1907
    %v2296 = vpop.f32.mrf.mxu0
    %v2297 = vadd.f32 %v1778, %v2296
    %v2298 = vpop.f32.mrf.mxu0
    %2299 = vmatprep.mubr.f32.mxu0 0.0
    %2300 = vmatmul.mubr.f32.gmra.mxu0 %v1910
    %v2301 = vpop.f32.mrf.mxu0
    %v2302 = vadd.f32 %v1778, %v2301
    %v2303 = vpop.f32.mrf.mxu0
    %2304 = vmatprep.mubr.f32.mxu0 0.0
    %2305 = vmatmul.mubr.f32.gmra.mxu0 %v1913
    %v2306 = vpop.f32.mrf.mxu0
    %v2307 = vadd.f32 %v1778, %v2306
    %v2308 = vpop.f32.mrf.mxu0
    %2309 = vmatprep.mubr.f32.mxu0 0.0
    %2310 = vmatmul.mubr.f32.gmra.mxu0 %v1916
    %v2311 = vpop.f32.mrf.mxu0
    %v2312 = vadd.f32 %v1778, %v2311
    %v2313 = vpop.f32.mrf.mxu0
    %2314 = vmatprep.mubr.f32.mxu0 0.0
    %2315 = vmatmul.mubr.f32.gmra.mxu0 %v1919
    %v2316 = vpop.f32.mrf.mxu0
    %v2317 = vadd.f32 %v1778, %v2316
    %v2318 = vpop.f32.mrf.mxu0
    %2319 = vmatprep.mubr.f32.mxu0 0.0
    %2320 = vmatmul.mubr.f32.gmra.mxu0 %v1922
    %v2321 = vpop.f32.mrf.mxu0
    %v2322 = vadd.f32 %v1778, %v2321
    %v2323 = vpop.f32.mrf.mxu0
    %2324 = vmatprep.mubr.f32.mxu0 0.0
    %2325 = vmatmul.mubr.f32.gmra.mxu0 %v1925
    %v2326 = vpop.f32.mrf.mxu0
    %v2327 = vadd.f32 %v1778, %v2326
    %v2328 = vpop.f32.mrf.mxu0
    %2329 = vmatprep.mubr.f32.mxu0 0.0
    %2330 = vmatmul.mubr.f32.gmra.mxu0 %v1928
    %v2331 = vpop.f32.mrf.mxu0
    %v2332 = vadd.f32 %v1778, %v2331
    %v2333 = vpop.f32.mrf.mxu0
    %2334 = vmatprep.mubr.f32.mxu0 0.0
    %2335 = vmatmul.mubr.f32.gmra.mxu0 %v1931
    %v2336 = vpop.f32.mrf.mxu0
    %v2337 = vadd.f32 %v1778, %v2336
    %v2338 = vpop.f32.mrf.mxu0
    %2339 = vmatprep.mubr.f32.mxu0 0.0
    %2340 = vmatmul.mubr.f32.gmra.mxu0 %v1934
    %v2341 = vpop.f32.mrf.mxu0
    %v2342 = vadd.f32 %v1778, %v2341
    %v2343 = vpop.f32.mrf.mxu0
    %2344 = vmatprep.mubr.f32.mxu0 0.0
    %2345 = vmatmul.mubr.f32.gmra.mxu0 %v1937
    %v2346 = vpop.f32.mrf.mxu0
    %v2347 = vadd.f32 %v1778, %v2346
    %v2348 = vpop.f32.mrf.mxu0
    %2349 = vmatprep.mubr.f32.mxu0 0.0
    %2350 = vmatmul.mubr.f32.gmra.mxu0 %v1940
    %v2351 = vpop.f32.mrf.mxu0
    %v2352 = vadd.f32 %v1778, %v2351
    %v2353 = vpop.f32.mrf.mxu0
    %2354 = vmatprep.mubr.f32.mxu0 0.0
    %2355 = vmatmul.mubr.f32.gmra.mxu0 %v1943
    %v2356 = vpop.f32.mrf.mxu0
    %v2357 = vadd.f32 %v1778, %v2356
    %v2358 = vpop.f32.mrf.mxu0
    %2359 = vmatprep.mubr.f32.mxu0 0.0
    %2360 = vmatmul.mubr.f32.gmra.mxu0 %v1946
    %v2361 = vpop.f32.mrf.mxu0
    %v2362 = vadd.f32 %v1778, %v2361
    %v2363 = vpop.f32.mrf.mxu0
    %2364 = vmatprep.mubr.f32.mxu0 0.0
    %2365 = vmatmul.mubr.f32.gmra.mxu0 %v1949
    %v2366 = vpop.f32.mrf.mxu0
    %v2367 = vadd.f32 %v1778, %v2366
    %v2368 = vpop.f32.mrf.mxu0
    %2369 = vmatprep.mubr.f32.mxu0 0.0
    %2370 = vmatmul.mubr.f32.gmra.mxu0 %v1952
    %v2371 = vpop.f32.mrf.mxu0
    %v2372 = vadd.f32 %v1778, %v2371
    %v2373 = vpop.f32.mrf.mxu0
    %2374 = vmatprep.mubr.f32.mxu0 0.0
    %2375 = vmatmul.mubr.f32.gmra.mxu0 %v1955
    %v2376 = vpop.f32.mrf.mxu0
    %v2377 = vadd.f32 %v1778, %v2376
    %v2378 = vpop.f32.mrf.mxu0
    %2379 = vmatprep.mubr.f32.mxu0 0.0
    %2380 = vmatmul.mubr.f32.gmra.mxu0 %v1958
    %v2381 = vpop.f32.mrf.mxu0
    %v2382 = vadd.f32 %v1778, %v2381
    %v2383 = vpop.f32.mrf.mxu0
    %2384 = vmatprep.mubr.f32.mxu0 0.0
    %2385 = vmatmul.mubr.f32.gmra.mxu0 %v1961
    %v2386 = vpop.f32.mrf.mxu0
    %v2387 = vadd.f32 %v1778, %v2386
    %v2388 = vpop.f32.mrf.mxu0
    %2389 = vmatprep.mubr.f32.mxu0 0.0
    %2390 = vmatmul.mubr.f32.gmra.mxu0 %v1964
    %v2391 = vpop.f32.mrf.mxu0
    %v2392 = vadd.f32 %v1778, %v2391
    %v2393 = vpop.f32.mrf.mxu0
    %2394 = vmatprep.mubr.f32.mxu0 0.0
    %2395 = vmatmul.mubr.f32.gmra.mxu0 %v1967
    %v2396 = vpop.f32.mrf.mxu0
    %v2397 = vadd.f32 %v1778, %v2396
    %v2398 = vpop.f32.mrf.mxu0
    %2399 = vmatprep.mubr.f32.mxu0 0.0
    %2400 = vmatmul.mubr.f32.gmra.mxu0 %v1970
    %v2401 = vpop.f32.mrf.mxu0
    %v2402 = vadd.f32 %v1778, %v2401
    %v2403 = vpop.f32.mrf.mxu0
    %2404 = vmatprep.mubr.f32.mxu0 0.0
    %2405 = vmatmul.mubr.f32.gmra.mxu0 %v1973
    %v2406 = vpop.f32.mrf.mxu0
    %v2407 = vadd.f32 %v1778, %v2406
    %v2408 = vpop.f32.mrf.mxu0
    %2409 = vmatprep.mubr.f32.mxu0 0.0
    %2410 = vmatmul.mubr.f32.gmra.mxu0 %v1976
    %v2411 = vpop.f32.mrf.mxu0
    %v2412 = vadd.f32 %v1778, %v2411
    %v2413 = vpop.f32.mrf.mxu0
    %2414 = vmatprep.mubr.f32.mxu0 0.0
    %2415 = vmatmul.mubr.f32.gmra.mxu0 %v1979
    %v2416 = vpop.f32.mrf.mxu0
    %v2417 = vadd.f32 %v1778, %v2416
    %v2418 = vpop.f32.mrf.mxu0
    %2419 = vmatprep.mubr.f32.mxu0 0.0
    %2420 = vmatmul.mubr.f32.gmra.mxu0 %v1982
    %v2421 = vpop.f32.mrf.mxu0
    %v2422 = vadd.f32 %v1778, %v2421
    %v2423 = vpop.f32.mrf.mxu0
    %2424 = vmatprep.mubr.f32.mxu0 0.0
    %2425 = vmatmul.mubr.f32.gmra.mxu0 %v1985
    %v2426 = vpop.f32.mrf.mxu0
    %v2427 = vadd.f32 %v1778, %v2426
    %v2428 = vpop.f32.mrf.mxu0
    %2429 = vmatprep.mubr.f32.mxu0 0.0
    %2430 = vmatmul.mubr.f32.gmra.mxu0 %v1988
    %v2431 = vpop.f32.mrf.mxu0
    %v2432 = vadd.f32 %v1778, %v2431
    %v2433 = vpop.f32.mrf.mxu0
    %2434 = vmatprep.mubr.f32.mxu0 0.0
    %2435 = vmatmul.mubr.f32.gmra.mxu0 %v1991
    %v2436 = vpop.f32.mrf.mxu0
    %v2437 = vadd.f32 %v1778, %v2436
    %v2438 = vpop.f32.mrf.mxu0
    %2439 = vmatprep.mubr.f32.mxu0 0.0
    %2440 = vmatmul.mubr.f32.gmra.mxu0 %v1994
    %v2441 = vpop.f32.mrf.mxu0
    %v2442 = vadd.f32 %v1778, %v2441
    %v2443 = vpop.f32.mrf.mxu0
    %2444 = vmatprep.mubr.f32.mxu0 0.0
    %2445 = vmatmul.mubr.f32.gmra.mxu0 %v1997
    %v2446 = vpop.f32.mrf.mxu0
    %v2447 = vadd.f32 %v1778, %v2446
    %v2448 = vpop.f32.mrf.mxu0
    %2449 = vmatprep.mubr.f32.mxu0 0.0
    %2450 = vmatmul.mubr.f32.gmra.mxu0 %v2000
    %v2451 = vpop.f32.mrf.mxu0
    %v2452 = vadd.f32 %v1778, %v2451
    %v2453 = vpop.f32.mrf.mxu0
    %2454 = vmatprep.mubr.f32.mxu0 0.0
    %2455 = vmatmul.mubr.f32.gmra.mxu0 %v2003
    %v2456 = vpop.f32.mrf.mxu0
    %v2457 = vadd.f32 %v1778, %v2456
    %v2458 = vpop.f32.mrf.mxu0
    %2459 = vmatprep.mubr.f32.mxu0 0.0
    %2460 = vmatmul.mubr.f32.gmra.mxu0 %v2006
    %v2461 = vpop.f32.mrf.mxu0
    %v2462 = vadd.f32 %v1778, %v2461
    %v2463 = vpop.f32.mrf.mxu0
    %2464 = vmatprep.mubr.f32.mxu0 0.0
    %2465 = vmatmul.mubr.f32.gmra.mxu0 %v2009
    %v2466 = vpop.f32.mrf.mxu0
    %v2467 = vadd.f32 %v1778, %v2466
    %v2468 = vpop.f32.mrf.mxu0
    %2469 = vmatprep.mubr.f32.mxu0 0.0
    %2470 = vmatmul.mubr.f32.gmra.mxu0 %v2012
    %v2471 = vpop.f32.mrf.mxu0
    %v2472 = vadd.f32 %v1778, %v2471
    %v2473 = vpop.f32.mrf.mxu0
    %2474 = vmatprep.mubr.f32.mxu0 0.0
    %2475 = vmatmul.mubr.f32.gmra.mxu0 %v2015
    %v2476 = vpop.f32.mrf.mxu0
    %v2477 = vadd.f32 %v1778, %v2476
    %v2478 = vpop.f32.mrf.mxu0
    %2479 = vmatprep.mubr.f32.mxu0 0.0
    %2480 = vmatmul.mubr.f32.gmra.mxu0 %v2018
    %v2481 = vpop.f32.mrf.mxu0
    %v2482 = vadd.f32 %v1778, %v2481
    %v2483 = vpop.f32.mrf.mxu0
    %2484 = vdwg.mxu0
    %v2485 = vmax.f32 %v2087, 0.0
    %v2486 = vmax.f32 %v2092, 0.0
    %v2487 = vmax.f32 %v2097, 0.0
    %v2488 = vmax.f32 %v2102, 0.0
    %v2489 = vmax.f32 %v2107, 0.0
    %v2490 = vmax.f32 %v2112, 0.0
    %v2491 = vmax.f32 %v2117, 0.0
    %v2492 = vmax.f32 %v2122, 0.0
    %v2493 = vmax.f32 %v2127, 0.0
    %v2494 = vmax.f32 %v2132, 0.0
    %v2495 = vmax.f32 %v2137, 0.0
    %v2496 = vmax.f32 %v2142, 0.0
    %v2497 = vmax.f32 %v2147, 0.0
    %v2498 = vmax.f32 %v2152, 0.0
    %v2499 = vmax.f32 %v2157, 0.0
    %v2500 = vmax.f32 %v2162, 0.0
    %v2501 = vmax.f32 %v2167, 0.0
    %v2502 = vmax.f32 %v2172, 0.0
    %v2503 = vmax.f32 %v2177, 0.0
    %v2504 = vmax.f32 %v2182, 0.0
    %v2505 = vmax.f32 %v2187, 0.0
    %v2506 = vmax.f32 %v2192, 0.0
    %v2507 = vmax.f32 %v2197, 0.0
    %v2508 = vmax.f32 %v2202, 0.0
    %v2509 = vmax.f32 %v2207, 0.0
    %v2510 = vmax.f32 %v2212, 0.0
    %v2511 = vmax.f32 %v2217, 0.0
    %v2512 = vmax.f32 %v2222, 0.0
    %v2513 = vmax.f32 %v2227, 0.0
    %v2514 = vmax.f32 %v2232, 0.0
    %v2515 = vmax.f32 %v2237, 0.0
    %v2516 = vmax.f32 %v2242, 0.0
    %v2517 = vmax.f32 %v2247, 0.0
    %v2518 = vmax.f32 %v2252, 0.0
    %v2519 = vmax.f32 %v2257, 0.0
    %v2520 = vmax.f32 %v2262, 0.0
    %v2521 = vmax.f32 %v2267, 0.0
    %v2522 = vmax.f32 %v2272, 0.0
    %v2523 = vmax.f32 %v2277, 0.0
    %v2524 = vmax.f32 %v2282, 0.0
    %v2525 = vmax.f32 %v2287, 0.0
    %v2526 = vmax.f32 %v2292, 0.0
    %v2527 = vmax.f32 %v2297, 0.0
    %v2528 = vmax.f32 %v2302, 0.0
    %v2529 = vmax.f32 %v2307, 0.0
    %v2530 = vmax.f32 %v2312, 0.0
    %v2531 = vmax.f32 %v2317, 0.0
    %v2532 = vmax.f32 %v2322, 0.0
    %v2533 = vmax.f32 %v2327, 0.0
    %v2534 = vmax.f32 %v2332, 0.0
    %v2535 = vmax.f32 %v2337, 0.0
    %v2536 = vmax.f32 %v2342, 0.0
    %v2537 = vmax.f32 %v2347, 0.0
    %v2538 = vmax.f32 %v2352, 0.0
    %v2539 = vmax.f32 %v2357, 0.0
    %v2540 = vmax.f32 %v2362, 0.0
    %v2541 = vmax.f32 %v2367, 0.0
    %v2542 = vmax.f32 %v2372, 0.0
    %v2543 = vmax.f32 %v2377, 0.0
    %v2544 = vmax.f32 %v2382, 0.0
    %v2545 = vmax.f32 %v2387, 0.0
    %v2546 = vmax.f32 %v2392, 0.0
    %v2547 = vmax.f32 %v2397, 0.0
    %v2548 = vmax.f32 %v2402, 0.0
    %v2549 = vmax.f32 %v2407, 0.0
    %v2550 = vmax.f32 %v2412, 0.0
    %v2551 = vmax.f32 %v2417, 0.0
    %v2552 = vmax.f32 %v2422, 0.0
    %v2553 = vmax.f32 %v2427, 0.0
    %v2554 = vmax.f32 %v2432, 0.0
    %v2555 = vmax.f32 %v2437, 0.0
    %v2556 = vmax.f32 %v2442, 0.0
    %v2557 = vmax.f32 %v2447, 0.0
    %v2558 = vmax.f32 %v2452, 0.0
    %v2559 = vmax.f32 %v2457, 0.0
    %v2560 = vmax.f32 %v2462, 0.0
    %v2561 = vmax.f32 %v2467, 0.0
    %v2562 = vmax.f32 %v2472, 0.0
    %v2563 = vmax.f32 %v2477, 0.0
    %v2564 = vmax.f32 %v2482, 0.0
    %v2565 = vlaneseq
    %v2566 = vshrl.u32 %v2565, 7
    %v2567 = vsub.s32 0, %v2566
    %v2568 = vrot.slane %v31, %v2567
    %v2569 = vmul.f32 %v2485, %v2568
    %v2570 = vmul.f32 %v2486, %v2568
    %v2571 = vmul.f32 %v2487, %v2568
    %v2572 = vmul.f32 %v2488, %v2568
    %v2573 = vmul.f32 %v2489, %v2568
    %v2574 = vmul.f32 %v2490, %v2568
    %v2575 = vmul.f32 %v2491, %v2568
    %v2576 = vmul.f32 %v2492, %v2568
    %v2577 = vmul.f32 %v2493, %v2568
    %v2578 = vmul.f32 %v2494, %v2568
    %v2579 = vmul.f32 %v2495, %v2568
    %v2580 = vmul.f32 %v2496, %v2568
    %v2581 = vmul.f32 %v2497, %v2568
    %v2582 = vmul.f32 %v2498, %v2568
    %v2583 = vmul.f32 %v2499, %v2568
    %v2584 = vmul.f32 %v2500, %v2568
    %v2585 = vmul.f32 %v2501, %v2568
    %v2586 = vmul.f32 %v2502, %v2568
    %v2587 = vmul.f32 %v2503, %v2568
    %v2588 = vmul.f32 %v2504, %v2568
    %v2589 = vmul.f32 %v2505, %v2568
    %v2590 = vmul.f32 %v2506, %v2568
    %v2591 = vmul.f32 %v2507, %v2568
    %v2592 = vmul.f32 %v2508, %v2568
    %v2593 = vmul.f32 %v2509, %v2568
    %v2594 = vmul.f32 %v2510, %v2568
    %v2595 = vmul.f32 %v2511, %v2568
    %v2596 = vmul.f32 %v2512, %v2568
    %v2597 = vmul.f32 %v2513, %v2568
    %v2598 = vmul.f32 %v2514, %v2568
    %v2599 = vmul.f32 %v2515, %v2568
    %v2600 = vmul.f32 %v2516, %v2568
    %v2601 = vmul.f32 %v2517, %v2568
    %v2602 = vmul.f32 %v2518, %v2568
    %v2603 = vmul.f32 %v2519, %v2568
    %v2604 = vmul.f32 %v2520, %v2568
    %v2605 = vmul.f32 %v2521, %v2568
    %v2606 = vmul.f32 %v2522, %v2568
    %v2607 = vmul.f32 %v2523, %v2568
    %v2608 = vmul.f32 %v2524, %v2568
    %v2609 = vmul.f32 %v2525, %v2568
    %v2610 = vmul.f32 %v2526, %v2568
    %v2611 = vmul.f32 %v2527, %v2568
    %v2612 = vmul.f32 %v2528, %v2568
    %v2613 = vmul.f32 %v2529, %v2568
    %v2614 = vmul.f32 %v2530, %v2568
    %v2615 = vmul.f32 %v2531, %v2568
    %v2616 = vmul.f32 %v2532, %v2568
    %v2617 = vmul.f32 %v2533, %v2568
    %v2618 = vmul.f32 %v2534, %v2568
    %v2619 = vmul.f32 %v2535, %v2568
    %v2620 = vmul.f32 %v2536, %v2568
    %v2621 = vmul.f32 %v2537, %v2568
    %v2622 = vmul.f32 %v2538, %v2568
    %v2623 = vmul.f32 %v2539, %v2568
    %v2624 = vmul.f32 %v2540, %v2568
    %v2625 = vmul.f32 %v2541, %v2568
    %v2626 = vmul.f32 %v2542, %v2568
    %v2627 = vmul.f32 %v2543, %v2568
    %v2628 = vmul.f32 %v2544, %v2568
    %v2629 = vmul.f32 %v2545, %v2568
    %v2630 = vmul.f32 %v2546, %v2568
    %v2631 = vmul.f32 %v2547, %v2568
    %v2632 = vmul.f32 %v2548, %v2568
    %v2633 = vmul.f32 %v2549, %v2568
    %v2634 = vmul.f32 %v2550, %v2568
    %v2635 = vmul.f32 %v2551, %v2568
    %v2636 = vmul.f32 %v2552, %v2568
    %v2637 = vmul.f32 %v2553, %v2568
    %v2638 = vmul.f32 %v2554, %v2568
    %v2639 = vmul.f32 %v2555, %v2568
    %v2640 = vmul.f32 %v2556, %v2568
    %v2641 = vmul.f32 %v2557, %v2568
    %v2642 = vmul.f32 %v2558, %v2568
    %v2643 = vmul.f32 %v2559, %v2568
    %v2644 = vmul.f32 %v2560, %v2568
    %v2645 = vmul.f32 %v2561, %v2568
    %v2646 = vmul.f32 %v2562, %v2568
    %v2647 = vmul.f32 %v2563, %v2568
    %v2648 = vmul.f32 %v2564, %v2568
    %v2649 = vsel %vm1779, %v2569, 0.0
    %2650 = vadd.xlane.f32.xlu0 %v2649
    %v2651 = vpop.xlane.xlu0 %2650
    %v2652 = vsel %vm1779, %v2570, 0.0
    %2653 = vadd.xlane.f32.xlu0 %v2652
    %v2654 = vpop.xlane.xlu0 %2653
    %v2655 = vsel %vm1779, %v2571, 0.0
    %2656 = vadd.xlane.f32.xlu0 %v2655
    %v2657 = vpop.xlane.xlu0 %2656
    %v2658 = vsel %vm1779, %v2572, 0.0
    %2659 = vadd.xlane.f32.xlu0 %v2658
    %v2660 = vpop.xlane.xlu0 %2659
    %v2661 = vsel %vm1779, %v2573, 0.0
    %2662 = vadd.xlane.f32.xlu0 %v2661
    %v2663 = vpop.xlane.xlu0 %2662
    %v2664 = vsel %vm1779, %v2574, 0.0
    %2665 = vadd.xlane.f32.xlu0 %v2664
    %v2666 = vpop.xlane.xlu0 %2665
    %v2667 = vsel %vm1779, %v2575, 0.0
    %2668 = vadd.xlane.f32.xlu0 %v2667
    %v2669 = vpop.xlane.xlu0 %2668
    %v2670 = vsel %vm1779, %v2576, 0.0
    %2671 = vadd.xlane.f32.xlu0 %v2670
    %v2672 = vpop.xlane.xlu0 %2671
    %v2673 = vsel %vm1779, %v2577, 0.0
    %2674 = vadd.xlane.f32.xlu0 %v2673
    %v2675 = vpop.xlane.xlu0 %2674
    %v2676 = vsel %vm1779, %v2578, 0.0
    %2677 = vadd.xlane.f32.xlu0 %v2676
    %v2678 = vpop.xlane.xlu0 %2677
    %v2679 = vsel %vm1779, %v2579, 0.0
    %2680 = vadd.xlane.f32.xlu0 %v2679
    %v2681 = vpop.xlane.xlu0 %2680
    %v2682 = vsel %vm1779, %v2580, 0.0
    %2683 = vadd.xlane.f32.xlu0 %v2682
    %v2684 = vpop.xlane.xlu0 %2683
    %v2685 = vsel %vm1779, %v2581, 0.0
    %2686 = vadd.xlane.f32.xlu0 %v2685
    %v2687 = vpop.xlane.xlu0 %2686
    %v2688 = vsel %vm1779, %v2582, 0.0
    %2689 = vadd.xlane.f32.xlu0 %v2688
    %v2690 = vpop.xlane.xlu0 %2689
    %v2691 = vsel %vm1779, %v2583, 0.0
    %2692 = vadd.xlane.f32.xlu0 %v2691
    %v2693 = vpop.xlane.xlu0 %2692
    %v2694 = vsel %vm1779, %v2584, 0.0
    %2695 = vadd.xlane.f32.xlu0 %v2694
    %v2696 = vpop.xlane.xlu0 %2695
    %v2697 = vsel %vm1779, %v2585, 0.0
    %2698 = vadd.xlane.f32.xlu0 %v2697
    %v2699 = vpop.xlane.xlu0 %2698
    %v2700 = vsel %vm1779, %v2586, 0.0
    %2701 = vadd.xlane.f32.xlu0 %v2700
    %v2702 = vpop.xlane.xlu0 %2701
    %v2703 = vsel %vm1779, %v2587, 0.0
    %2704 = vadd.xlane.f32.xlu0 %v2703
    %v2705 = vpop.xlane.xlu0 %2704
    %v2706 = vsel %vm1779, %v2588, 0.0
    %2707 = vadd.xlane.f32.xlu0 %v2706
    %v2708 = vpop.xlane.xlu0 %2707
    %v2709 = vsel %vm1779, %v2589, 0.0
    %2710 = vadd.xlane.f32.xlu0 %v2709
    %v2711 = vpop.xlane.xlu0 %2710
    %v2712 = vsel %vm1779, %v2590, 0.0
    %2713 = vadd.xlane.f32.xlu0 %v2712
    %v2714 = vpop.xlane.xlu0 %2713
    %v2715 = vsel %vm1779, %v2591, 0.0
    %2716 = vadd.xlane.f32.xlu0 %v2715
    %v2717 = vpop.xlane.xlu0 %2716
    %v2718 = vsel %vm1779, %v2592, 0.0
    %2719 = vadd.xlane.f32.xlu0 %v2718
    %v2720 = vpop.xlane.xlu0 %2719
    %v2721 = vsel %vm1779, %v2593, 0.0
    %2722 = vadd.xlane.f32.xlu0 %v2721
    %v2723 = vpop.xlane.xlu0 %2722
    %v2724 = vsel %vm1779, %v2594, 0.0
    %2725 = vadd.xlane.f32.xlu0 %v2724
    %v2726 = vpop.xlane.xlu0 %2725
    %v2727 = vsel %vm1779, %v2595, 0.0
    %2728 = vadd.xlane.f32.xlu0 %v2727
    %v2729 = vpop.xlane.xlu0 %2728
    %v2730 = vsel %vm1779, %v2596, 0.0
    %2731 = vadd.xlane.f32.xlu0 %v2730
    %v2732 = vpop.xlane.xlu0 %2731
    %v2733 = vsel %vm1779, %v2597, 0.0
    %2734 = vadd.xlane.f32.xlu0 %v2733
    %v2735 = vpop.xlane.xlu0 %2734
    %v2736 = vsel %vm1779, %v2598, 0.0
    %2737 = vadd.xlane.f32.xlu0 %v2736
    %v2738 = vpop.xlane.xlu0 %2737
    %v2739 = vsel %vm1779, %v2599, 0.0
    %2740 = vadd.xlane.f32.xlu0 %v2739
    %v2741 = vpop.xlane.xlu0 %2740
    %v2742 = vsel %vm1779, %v2600, 0.0
    %2743 = vadd.xlane.f32.xlu0 %v2742
    %v2744 = vpop.xlane.xlu0 %2743
    %v2745 = vsel %vm1779, %v2601, 0.0
    %2746 = vadd.xlane.f32.xlu0 %v2745
    %v2747 = vpop.xlane.xlu0 %2746
    %v2748 = vsel %vm1779, %v2602, 0.0
    %2749 = vadd.xlane.f32.xlu0 %v2748
    %v2750 = vpop.xlane.xlu0 %2749
    %v2751 = vsel %vm1779, %v2603, 0.0
    %2752 = vadd.xlane.f32.xlu0 %v2751
    %v2753 = vpop.xlane.xlu0 %2752
    %v2754 = vsel %vm1779, %v2604, 0.0
    %2755 = vadd.xlane.f32.xlu0 %v2754
    %v2756 = vpop.xlane.xlu0 %2755
    %v2757 = vsel %vm1779, %v2605, 0.0
    %2758 = vadd.xlane.f32.xlu0 %v2757
    %v2759 = vpop.xlane.xlu0 %2758
    %v2760 = vsel %vm1779, %v2606, 0.0
    %2761 = vadd.xlane.f32.xlu0 %v2760
    %v2762 = vpop.xlane.xlu0 %2761
    %v2763 = vsel %vm1779, %v2607, 0.0
    %2764 = vadd.xlane.f32.xlu0 %v2763
    %v2765 = vpop.xlane.xlu0 %2764
    %v2766 = vsel %vm1779, %v2608, 0.0
    %2767 = vadd.xlane.f32.xlu0 %v2766
    %v2768 = vpop.xlane.xlu0 %2767
    %v2769 = vsel %vm1779, %v2609, 0.0
    %2770 = vadd.xlane.f32.xlu0 %v2769
    %v2771 = vpop.xlane.xlu0 %2770
    %v2772 = vsel %vm1779, %v2610, 0.0
    %2773 = vadd.xlane.f32.xlu0 %v2772
    %v2774 = vpop.xlane.xlu0 %2773
    %v2775 = vsel %vm1779, %v2611, 0.0
    %2776 = vadd.xlane.f32.xlu0 %v2775
    %v2777 = vpop.xlane.xlu0 %2776
    %v2778 = vsel %vm1779, %v2612, 0.0
    %2779 = vadd.xlane.f32.xlu0 %v2778
    %v2780 = vpop.xlane.xlu0 %2779
    %v2781 = vsel %vm1779, %v2613, 0.0
    %2782 = vadd.xlane.f32.xlu0 %v2781
    %v2783 = vpop.xlane.xlu0 %2782
    %v2784 = vsel %vm1779, %v2614, 0.0
    %2785 = vadd.xlane.f32.xlu0 %v2784
    %v2786 = vpop.xlane.xlu0 %2785
    %v2787 = vsel %vm1779, %v2615, 0.0
    %2788 = vadd.xlane.f32.xlu0 %v2787
    %v2789 = vpop.xlane.xlu0 %2788
    %v2790 = vsel %vm1779, %v2616, 0.0
    %2791 = vadd.xlane.f32.xlu0 %v2790
    %v2792 = vpop.xlane.xlu0 %2791
    %v2793 = vsel %vm1779, %v2617, 0.0
    %2794 = vadd.xlane.f32.xlu0 %v2793
    %v2795 = vpop.xlane.xlu0 %2794
    %v2796 = vsel %vm1779, %v2618, 0.0
    %2797 = vadd.xlane.f32.xlu0 %v2796
    %v2798 = vpop.xlane.xlu0 %2797
    %v2799 = vsel %vm1779, %v2619, 0.0
    %2800 = vadd.xlane.f32.xlu0 %v2799
    %v2801 = vpop.xlane.xlu0 %2800
    %v2802 = vsel %vm1779, %v2620, 0.0
    %2803 = vadd.xlane.f32.xlu0 %v2802
    %v2804 = vpop.xlane.xlu0 %2803
    %v2805 = vsel %vm1779, %v2621, 0.0
    %2806 = vadd.xlane.f32.xlu0 %v2805
    %v2807 = vpop.xlane.xlu0 %2806
    %v2808 = vsel %vm1779, %v2622, 0.0
    %2809 = vadd.xlane.f32.xlu0 %v2808
    %v2810 = vpop.xlane.xlu0 %2809
    %v2811 = vsel %vm1779, %v2623, 0.0
    %2812 = vadd.xlane.f32.xlu0 %v2811
    %v2813 = vpop.xlane.xlu0 %2812
    %v2814 = vsel %vm1779, %v2624, 0.0
    %2815 = vadd.xlane.f32.xlu0 %v2814
    %v2816 = vpop.xlane.xlu0 %2815
    %v2817 = vsel %vm1779, %v2625, 0.0
    %2818 = vadd.xlane.f32.xlu0 %v2817
    %v2819 = vpop.xlane.xlu0 %2818
    %v2820 = vsel %vm1779, %v2626, 0.0
    %2821 = vadd.xlane.f32.xlu0 %v2820
    %v2822 = vpop.xlane.xlu0 %2821
    %v2823 = vsel %vm1779, %v2627, 0.0
    %2824 = vadd.xlane.f32.xlu0 %v2823
    %v2825 = vpop.xlane.xlu0 %2824
    %v2826 = vsel %vm1779, %v2628, 0.0
    %2827 = vadd.xlane.f32.xlu0 %v2826
    %v2828 = vpop.xlane.xlu0 %2827
    %v2829 = vsel %vm1779, %v2629, 0.0
    %2830 = vadd.xlane.f32.xlu0 %v2829
    %v2831 = vpop.xlane.xlu0 %2830
    %v2832 = vsel %vm1779, %v2630, 0.0
    %2833 = vadd.xlane.f32.xlu0 %v2832
    %v2834 = vpop.xlane.xlu0 %2833
    %v2835 = vsel %vm1779, %v2631, 0.0
    %2836 = vadd.xlane.f32.xlu0 %v2835
    %v2837 = vpop.xlane.xlu0 %2836
    %v2838 = vsel %vm1779, %v2632, 0.0
    %2839 = vadd.xlane.f32.xlu0 %v2838
    %v2840 = vpop.xlane.xlu0 %2839
    %v2841 = vsel %vm1779, %v2633, 0.0
    %2842 = vadd.xlane.f32.xlu0 %v2841
    %v2843 = vpop.xlane.xlu0 %2842
    %v2844 = vsel %vm1779, %v2634, 0.0
    %2845 = vadd.xlane.f32.xlu0 %v2844
    %v2846 = vpop.xlane.xlu0 %2845
    %v2847 = vsel %vm1779, %v2635, 0.0
    %2848 = vadd.xlane.f32.xlu0 %v2847
    %v2849 = vpop.xlane.xlu0 %2848
    %v2850 = vsel %vm1779, %v2636, 0.0
    %2851 = vadd.xlane.f32.xlu0 %v2850
    %v2852 = vpop.xlane.xlu0 %2851
    %v2853 = vsel %vm1779, %v2637, 0.0
    %2854 = vadd.xlane.f32.xlu0 %v2853
    %v2855 = vpop.xlane.xlu0 %2854
    %v2856 = vsel %vm1779, %v2638, 0.0
    %2857 = vadd.xlane.f32.xlu0 %v2856
    %v2858 = vpop.xlane.xlu0 %2857
    %v2859 = vsel %vm1779, %v2639, 0.0
    %2860 = vadd.xlane.f32.xlu0 %v2859
    %v2861 = vpop.xlane.xlu0 %2860
    %v2862 = vsel %vm1779, %v2640, 0.0
    %2863 = vadd.xlane.f32.xlu0 %v2862
    %v2864 = vpop.xlane.xlu0 %2863
    %v2865 = vsel %vm1779, %v2641, 0.0
    %2866 = vadd.xlane.f32.xlu0 %v2865
    %v2867 = vpop.xlane.xlu0 %2866
    %v2868 = vsel %vm1779, %v2642, 0.0
    %2869 = vadd.xlane.f32.xlu0 %v2868
    %v2870 = vpop.xlane.xlu0 %2869
    %v2871 = vsel %vm1779, %v2643, 0.0
    %2872 = vadd.xlane.f32.xlu0 %v2871
    %v2873 = vpop.xlane.xlu0 %2872
    %v2874 = vsel %vm1779, %v2644, 0.0
    %2875 = vadd.xlane.f32.xlu0 %v2874
    %v2876 = vpop.xlane.xlu0 %2875
    %v2877 = vsel %vm1779, %v2645, 0.0
    %2878 = vadd.xlane.f32.xlu0 %v2877
    %v2879 = vpop.xlane.xlu0 %2878
    %v2880 = vsel %vm1779, %v2646, 0.0
    %2881 = vadd.xlane.f32.xlu0 %v2880
    %v2882 = vpop.xlane.xlu0 %2881
    %v2883 = vsel %vm1779, %v2647, 0.0
    %2884 = vadd.xlane.f32.xlu0 %v2883
    %v2885 = vpop.xlane.xlu0 %2884
    %v2886 = vsel %vm1779, %v2648, 0.0
    %2887 = vadd.xlane.f32.xlu0 %v2886
    %v2888 = vpop.xlane.xlu0 %2887
    %v2889 = vld [vmem:[#allocation2] sm:$0x1]
    %2891 = vset.pattern.permute.xlu0 0
    %2892 = vperm.xlu0 %2891, %v2889
    %v2893 = vpop.permute.xlu0 %2892
    %v2895 = vlaneseq
    %v2896 = vshrl.u32 %v2895, 7
    %v2897 = vsub.s32 0, %v2896
    %v2898 = vrot.slane %v2893, %v2897
    %v2899 = vadd.f32 %v2651, %v2898
    %v2900 = vadd.f32 %v2654, %v2898
    %v2901 = vadd.f32 %v2657, %v2898
    %v2902 = vadd.f32 %v2660, %v2898
    %v2903 = vadd.f32 %v2663, %v2898
    %v2904 = vadd.f32 %v2666, %v2898
    %v2905 = vadd.f32 %v2669, %v2898
    %v2906 = vadd.f32 %v2672, %v2898
    %v2907 = vadd.f32 %v2675, %v2898
    %v2908 = vadd.f32 %v2678, %v2898
    %v2909 = vadd.f32 %v2681, %v2898
    %v2910 = vadd.f32 %v2684, %v2898
    %v2911 = vadd.f32 %v2687, %v2898
    %v2912 = vadd.f32 %v2690, %v2898
    %v2913 = vadd.f32 %v2693, %v2898
    %v2914 = vadd.f32 %v2696, %v2898
    %v2915 = vadd.f32 %v2699, %v2898
    %v2916 = vadd.f32 %v2702, %v2898
    %v2917 = vadd.f32 %v2705, %v2898
    %v2918 = vadd.f32 %v2708, %v2898
    %v2919 = vadd.f32 %v2711, %v2898
    %v2920 = vadd.f32 %v2714, %v2898
    %v2921 = vadd.f32 %v2717, %v2898
    %v2922 = vadd.f32 %v2720, %v2898
    %v2923 = vadd.f32 %v2723, %v2898
    %v2924 = vadd.f32 %v2726, %v2898
    %v2925 = vadd.f32 %v2729, %v2898
    %v2926 = vadd.f32 %v2732, %v2898
    %v2927 = vadd.f32 %v2735, %v2898
    %v2928 = vadd.f32 %v2738, %v2898
    %v2929 = vadd.f32 %v2741, %v2898
    %v2930 = vadd.f32 %v2744, %v2898
    %v2931 = vadd.f32 %v2747, %v2898
    %v2932 = vadd.f32 %v2750, %v2898
    %v2933 = vadd.f32 %v2753, %v2898
    %v2934 = vadd.f32 %v2756, %v2898
    %v2935 = vadd.f32 %v2759, %v2898
    %v2936 = vadd.f32 %v2762, %v2898
    %v2937 = vadd.f32 %v2765, %v2898
    %v2938 = vadd.f32 %v2768, %v2898
    %v2939 = vadd.f32 %v2771, %v2898
    %v2940 = vadd.f32 %v2774, %v2898
    %v2941 = vadd.f32 %v2777, %v2898
    %v2942 = vadd.f32 %v2780, %v2898
    %v2943 = vadd.f32 %v2783, %v2898
    %v2944 = vadd.f32 %v2786, %v2898
    %v2945 = vadd.f32 %v2789, %v2898
    %v2946 = vadd.f32 %v2792, %v2898
    %v2947 = vadd.f32 %v2795, %v2898
    %v2948 = vadd.f32 %v2798, %v2898
    %v2949 = vadd.f32 %v2801, %v2898
    %v2950 = vadd.f32 %v2804, %v2898
    %v2951 = vadd.f32 %v2807, %v2898
    %v2952 = vadd.f32 %v2810, %v2898
    %v2953 = vadd.f32 %v2813, %v2898
    %v2954 = vadd.f32 %v2816, %v2898
    %v2955 = vadd.f32 %v2819, %v2898
    %v2956 = vadd.f32 %v2822, %v2898
    %v2957 = vadd.f32 %v2825, %v2898
    %v2958 = vadd.f32 %v2828, %v2898
    %v2959 = vadd.f32 %v2831, %v2898
    %v2960 = vadd.f32 %v2834, %v2898
    %v2961 = vadd.f32 %v2837, %v2898
    %v2962 = vadd.f32 %v2840, %v2898
    %v2963 = vadd.f32 %v2843, %v2898
    %v2964 = vadd.f32 %v2846, %v2898
    %v2965 = vadd.f32 %v2849, %v2898
    %v2966 = vadd.f32 %v2852, %v2898
    %v2967 = vadd.f32 %v2855, %v2898
    %v2968 = vadd.f32 %v2858, %v2898
    %v2969 = vadd.f32 %v2861, %v2898
    %v2970 = vadd.f32 %v2864, %v2898
    %v2971 = vadd.f32 %v2867, %v2898
    %v2972 = vadd.f32 %v2870, %v2898
    %v2973 = vadd.f32 %v2873, %v2898
    %v2974 = vadd.f32 %v2876, %v2898
    %v2975 = vadd.f32 %v2879, %v2898
    %v2976 = vadd.f32 %v2882, %v2898
    %v2977 = vadd.f32 %v2885, %v2898
    %v2978 = vadd.f32 %v2888, %v2898
    %v3059 = vlaneseq
    %v3060 = vshrl.u32 %v3059, 7
    %v3061 = vsub.s32 0, %v3060
    %v3062 = vrot.slane %v2899, %v3061
    %v3063 = vlaneseq
    %v3064 = vshrl.u32 %v3063, 7
    %v3065 = vsub.s32 1, %v3064
    %v3066 = vrot.slane %v2899, %v3065
    %v3067 = vlaneseq
    %v3068 = vshrl.u32 %v3067, 7
    %v3069 = vsub.s32 2, %v3068
    %v3070 = vrot.slane %v2899, %v3069
    %v3071 = vlaneseq
    %v3072 = vshrl.u32 %v3071, 7
    %v3073 = vsub.s32 3, %v3072
    %v3074 = vrot.slane %v2899, %v3073
    %v3075 = vlaneseq
    %v3076 = vshrl.u32 %v3075, 7
    %v3077 = vsub.s32 4, %v3076
    %v3078 = vrot.slane %v2899, %v3077
    %v3079 = vlaneseq
    %v3080 = vshrl.u32 %v3079, 7
    %v3081 = vsub.s32 5, %v3080
    %v3082 = vrot.slane %v2899, %v3081
    %v3083 = vlaneseq
    %v3084 = vshrl.u32 %v3083, 7
    %v3085 = vsub.s32 6, %v3084
    %v3086 = vrot.slane %v2899, %v3085
    %v3087 = vlaneseq
    %v3088 = vshrl.u32 %v3087, 7
    %v3089 = vsub.s32 7, %v3088
    %v3090 = vrot.slane %v2899, %v3089
    %v3091 = vlaneseq
    %v3092 = vshrl.u32 %v3091, 7
    %v3093 = vsub.s32 0, %v3092
    %v3094 = vrot.slane %v2900, %v3093
    %v3095 = vlaneseq
    %v3096 = vshrl.u32 %v3095, 7
    %v3097 = vsub.s32 1, %v3096
    %v3098 = vrot.slane %v2900, %v3097
    %v3099 = vlaneseq
    %v3100 = vshrl.u32 %v3099, 7
    %v3101 = vsub.s32 2, %v3100
    %v3102 = vrot.slane %v2900, %v3101
    %v3103 = vlaneseq
    %v3104 = vshrl.u32 %v3103, 7
    %v3105 = vsub.s32 3, %v3104
    %v3106 = vrot.slane %v2900, %v3105
    %v3107 = vlaneseq
    %v3108 = vshrl.u32 %v3107, 7
    %v3109 = vsub.s32 4, %v3108
    %v3110 = vrot.slane %v2900, %v3109
    %v3111 = vlaneseq
    %v3112 = vshrl.u32 %v3111, 7
    %v3113 = vsub.s32 5, %v3112
    %v3114 = vrot.slane %v2900, %v3113
    %v3115 = vlaneseq
    %v3116 = vshrl.u32 %v3115, 7
    %v3117 = vsub.s32 6, %v3116
    %v3118 = vrot.slane %v2900, %v3117
    %v3119 = vlaneseq
    %v3120 = vshrl.u32 %v3119, 7
    %v3121 = vsub.s32 7, %v3120
    %v3122 = vrot.slane %v2900, %v3121
    %v3123 = vlaneseq
    %v3124 = vshrl.u32 %v3123, 7
    %v3125 = vsub.s32 0, %v3124
    %v3126 = vrot.slane %v2901, %v3125
    %v3127 = vlaneseq
    %v3128 = vshrl.u32 %v3127, 7
    %v3129 = vsub.s32 1, %v3128
    %v3130 = vrot.slane %v2901, %v3129
    %v3131 = vlaneseq
    %v3132 = vshrl.u32 %v3131, 7
    %v3133 = vsub.s32 2, %v3132
    %v3134 = vrot.slane %v2901, %v3133
    %v3135 = vlaneseq
    %v3136 = vshrl.u32 %v3135, 7
    %v3137 = vsub.s32 3, %v3136
    %v3138 = vrot.slane %v2901, %v3137
    %v3139 = vlaneseq
    %v3140 = vshrl.u32 %v3139, 7
    %v3141 = vsub.s32 4, %v3140
    %v3142 = vrot.slane %v2901, %v3141
    %v3143 = vlaneseq
    %v3144 = vshrl.u32 %v3143, 7
    %v3145 = vsub.s32 5, %v3144
    %v3146 = vrot.slane %v2901, %v3145
    %v3147 = vlaneseq
    %v3148 = vshrl.u32 %v3147, 7
    %v3149 = vsub.s32 6, %v3148
    %v3150 = vrot.slane %v2901, %v3149
    %v3151 = vlaneseq
    %v3152 = vshrl.u32 %v3151, 7
    %v3153 = vsub.s32 7, %v3152
    %v3154 = vrot.slane %v2901, %v3153
    %v3155 = vlaneseq
    %v3156 = vshrl.u32 %v3155, 7
    %v3157 = vsub.s32 0, %v3156
    %v3158 = vrot.slane %v2902, %v3157
    %v3159 = vlaneseq
    %v3160 = vshrl.u32 %v3159, 7
    %v3161 = vsub.s32 1, %v3160
    %v3162 = vrot.slane %v2902, %v3161
    %v3163 = vlaneseq
    %v3164 = vshrl.u32 %v3163, 7
    %v3165 = vsub.s32 2, %v3164
    %v3166 = vrot.slane %v2902, %v3165
    %v3167 = vlaneseq
    %v3168 = vshrl.u32 %v3167, 7
    %v3169 = vsub.s32 3, %v3168
    %v3170 = vrot.slane %v2902, %v3169
    %v3171 = vlaneseq
    %v3172 = vshrl.u32 %v3171, 7
    %v3173 = vsub.s32 4, %v3172
    %v3174 = vrot.slane %v2902, %v3173
    %v3175 = vlaneseq
    %v3176 = vshrl.u32 %v3175, 7
    %v3177 = vsub.s32 5, %v3176
    %v3178 = vrot.slane %v2902, %v3177
    %v3179 = vlaneseq
    %v3180 = vshrl.u32 %v3179, 7
    %v3181 = vsub.s32 6, %v3180
    %v3182 = vrot.slane %v2902, %v3181
    %v3183 = vlaneseq
    %v3184 = vshrl.u32 %v3183, 7
    %v3185 = vsub.s32 7, %v3184
    %v3186 = vrot.slane %v2902, %v3185
    %v3187 = vlaneseq
    %v3188 = vshrl.u32 %v3187, 7
    %v3189 = vsub.s32 0, %v3188
    %v3190 = vrot.slane %v2903, %v3189
    %v3191 = vlaneseq
    %v3192 = vshrl.u32 %v3191, 7
    %v3193 = vsub.s32 1, %v3192
    %v3194 = vrot.slane %v2903, %v3193
    %v3195 = vlaneseq
    %v3196 = vshrl.u32 %v3195, 7
    %v3197 = vsub.s32 2, %v3196
    %v3198 = vrot.slane %v2903, %v3197
    %v3199 = vlaneseq
    %v3200 = vshrl.u32 %v3199, 7
    %v3201 = vsub.s32 3, %v3200
    %v3202 = vrot.slane %v2903, %v3201
    %v3203 = vlaneseq
    %v3204 = vshrl.u32 %v3203, 7
    %v3205 = vsub.s32 4, %v3204
    %v3206 = vrot.slane %v2903, %v3205
    %v3207 = vlaneseq
    %v3208 = vshrl.u32 %v3207, 7
    %v3209 = vsub.s32 5, %v3208
    %v3210 = vrot.slane %v2903, %v3209
    %v3211 = vlaneseq
    %v3212 = vshrl.u32 %v3211, 7
    %v3213 = vsub.s32 6, %v3212
    %v3214 = vrot.slane %v2903, %v3213
    %v3215 = vlaneseq
    %v3216 = vshrl.u32 %v3215, 7
    %v3217 = vsub.s32 7, %v3216
    %v3218 = vrot.slane %v2903, %v3217
    %v3219 = vlaneseq
    %v3220 = vshrl.u32 %v3219, 7
    %v3221 = vsub.s32 0, %v3220
    %v3222 = vrot.slane %v2904, %v3221
    %v3223 = vlaneseq
    %v3224 = vshrl.u32 %v3223, 7
    %v3225 = vsub.s32 1, %v3224
    %v3226 = vrot.slane %v2904, %v3225
    %v3227 = vlaneseq
    %v3228 = vshrl.u32 %v3227, 7
    %v3229 = vsub.s32 2, %v3228
    %v3230 = vrot.slane %v2904, %v3229
    %v3231 = vlaneseq
    %v3232 = vshrl.u32 %v3231, 7
    %v3233 = vsub.s32 3, %v3232
    %v3234 = vrot.slane %v2904, %v3233
    %v3235 = vlaneseq
    %v3236 = vshrl.u32 %v3235, 7
    %v3237 = vsub.s32 4, %v3236
    %v3238 = vrot.slane %v2904, %v3237
    %v3239 = vlaneseq
    %v3240 = vshrl.u32 %v3239, 7
    %v3241 = vsub.s32 5, %v3240
    %v3242 = vrot.slane %v2904, %v3241
    %v3243 = vlaneseq
    %v3244 = vshrl.u32 %v3243, 7
    %v3245 = vsub.s32 6, %v3244
    %v3246 = vrot.slane %v2904, %v3245
    %v3247 = vlaneseq
    %v3248 = vshrl.u32 %v3247, 7
    %v3249 = vsub.s32 7, %v3248
    %v3250 = vrot.slane %v2904, %v3249
    %v3251 = vlaneseq
    %v3252 = vshrl.u32 %v3251, 7
    %v3253 = vsub.s32 0, %v3252
    %v3254 = vrot.slane %v2905, %v3253
    %v3255 = vlaneseq
    %v3256 = vshrl.u32 %v3255, 7
    %v3257 = vsub.s32 1, %v3256
    %v3258 = vrot.slane %v2905, %v3257
    %v3259 = vlaneseq
    %v3260 = vshrl.u32 %v3259, 7
    %v3261 = vsub.s32 2, %v3260
    %v3262 = vrot.slane %v2905, %v3261
    %v3263 = vlaneseq
    %v3264 = vshrl.u32 %v3263, 7
    %v3265 = vsub.s32 3, %v3264
    %v3266 = vrot.slane %v2905, %v3265
    %v3267 = vlaneseq
    %v3268 = vshrl.u32 %v3267, 7
    %v3269 = vsub.s32 4, %v3268
    %v3270 = vrot.slane %v2905, %v3269
    %v3271 = vlaneseq
    %v3272 = vshrl.u32 %v3271, 7
    %v3273 = vsub.s32 5, %v3272
    %v3274 = vrot.slane %v2905, %v3273
    %v3275 = vlaneseq
    %v3276 = vshrl.u32 %v3275, 7
    %v3277 = vsub.s32 6, %v3276
    %v3278 = vrot.slane %v2905, %v3277
    %v3279 = vlaneseq
    %v3280 = vshrl.u32 %v3279, 7
    %v3281 = vsub.s32 7, %v3280
    %v3282 = vrot.slane %v2905, %v3281
    %v3283 = vlaneseq
    %v3284 = vshrl.u32 %v3283, 7
    %v3285 = vsub.s32 0, %v3284
    %v3286 = vrot.slane %v2906, %v3285
    %v3287 = vlaneseq
    %v3288 = vshrl.u32 %v3287, 7
    %v3289 = vsub.s32 1, %v3288
    %v3290 = vrot.slane %v2906, %v3289
    %v3291 = vlaneseq
    %v3292 = vshrl.u32 %v3291, 7
    %v3293 = vsub.s32 2, %v3292
    %v3294 = vrot.slane %v2906, %v3293
    %v3295 = vlaneseq
    %v3296 = vshrl.u32 %v3295, 7
    %v3297 = vsub.s32 3, %v3296
    %v3298 = vrot.slane %v2906, %v3297
    %v3299 = vlaneseq
    %v3300 = vshrl.u32 %v3299, 7
    %v3301 = vsub.s32 4, %v3300
    %v3302 = vrot.slane %v2906, %v3301
    %v3303 = vlaneseq
    %v3304 = vshrl.u32 %v3303, 7
    %v3305 = vsub.s32 5, %v3304
    %v3306 = vrot.slane %v2906, %v3305
    %v3307 = vlaneseq
    %v3308 = vshrl.u32 %v3307, 7
    %v3309 = vsub.s32 6, %v3308
    %v3310 = vrot.slane %v2906, %v3309
    %v3311 = vlaneseq
    %v3312 = vshrl.u32 %v3311, 7
    %v3313 = vsub.s32 7, %v3312
    %v3314 = vrot.slane %v2906, %v3313
    %v3315 = vlaneseq
    %v3316 = vshrl.u32 %v3315, 7
    %v3317 = vsub.s32 0, %v3316
    %v3318 = vrot.slane %v2907, %v3317
    %v3319 = vlaneseq
    %v3320 = vshrl.u32 %v3319, 7
    %v3321 = vsub.s32 1, %v3320
    %v3322 = vrot.slane %v2907, %v3321
    %v3323 = vlaneseq
    %v3324 = vshrl.u32 %v3323, 7
    %v3325 = vsub.s32 2, %v3324
    %v3326 = vrot.slane %v2907, %v3325
    %v3327 = vlaneseq
    %v3328 = vshrl.u32 %v3327, 7
    %v3329 = vsub.s32 3, %v3328
    %v3330 = vrot.slane %v2907, %v3329
    %v3331 = vlaneseq
    %v3332 = vshrl.u32 %v3331, 7
    %v3333 = vsub.s32 4, %v3332
    %v3334 = vrot.slane %v2907, %v3333
    %v3335 = vlaneseq
    %v3336 = vshrl.u32 %v3335, 7
    %v3337 = vsub.s32 5, %v3336
    %v3338 = vrot.slane %v2907, %v3337
    %v3339 = vlaneseq
    %v3340 = vshrl.u32 %v3339, 7
    %v3341 = vsub.s32 6, %v3340
    %v3342 = vrot.slane %v2907, %v3341
    %v3343 = vlaneseq
    %v3344 = vshrl.u32 %v3343, 7
    %v3345 = vsub.s32 7, %v3344
    %v3346 = vrot.slane %v2907, %v3345
    %v3347 = vlaneseq
    %v3348 = vshrl.u32 %v3347, 7
    %v3349 = vsub.s32 0, %v3348
    %v3350 = vrot.slane %v2908, %v3349
    %v3351 = vlaneseq
    %v3352 = vshrl.u32 %v3351, 7
    %v3353 = vsub.s32 1, %v3352
    %v3354 = vrot.slane %v2908, %v3353
    %v3355 = vlaneseq
    %v3356 = vshrl.u32 %v3355, 7
    %v3357 = vsub.s32 2, %v3356
    %v3358 = vrot.slane %v2908, %v3357
    %v3359 = vlaneseq
    %v3360 = vshrl.u32 %v3359, 7
    %v3361 = vsub.s32 3, %v3360
    %v3362 = vrot.slane %v2908, %v3361
    %v3363 = vlaneseq
    %v3364 = vshrl.u32 %v3363, 7
    %v3365 = vsub.s32 4, %v3364
    %v3366 = vrot.slane %v2908, %v3365
    %v3367 = vlaneseq
    %v3368 = vshrl.u32 %v3367, 7
    %v3369 = vsub.s32 5, %v3368
    %v3370 = vrot.slane %v2908, %v3369
    %v3371 = vlaneseq
    %v3372 = vshrl.u32 %v3371, 7
    %v3373 = vsub.s32 6, %v3372
    %v3374 = vrot.slane %v2908, %v3373
    %v3375 = vlaneseq
    %v3376 = vshrl.u32 %v3375, 7
    %v3377 = vsub.s32 7, %v3376
    %v3378 = vrot.slane %v2908, %v3377
    %v3379 = vlaneseq
    %v3380 = vshrl.u32 %v3379, 7
    %v3381 = vsub.s32 0, %v3380
    %v3382 = vrot.slane %v2909, %v3381
    %v3383 = vlaneseq
    %v3384 = vshrl.u32 %v3383, 7
    %v3385 = vsub.s32 1, %v3384
    %v3386 = vrot.slane %v2909, %v3385
    %v3387 = vlaneseq
    %v3388 = vshrl.u32 %v3387, 7
    %v3389 = vsub.s32 2, %v3388
    %v3390 = vrot.slane %v2909, %v3389
    %v3391 = vlaneseq
    %v3392 = vshrl.u32 %v3391, 7
    %v3393 = vsub.s32 3, %v3392
    %v3394 = vrot.slane %v2909, %v3393
    %v3395 = vlaneseq
    %v3396 = vshrl.u32 %v3395, 7
    %v3397 = vsub.s32 4, %v3396
    %v3398 = vrot.slane %v2909, %v3397
    %v3399 = vlaneseq
    %v3400 = vshrl.u32 %v3399, 7
    %v3401 = vsub.s32 5, %v3400
    %v3402 = vrot.slane %v2909, %v3401
    %v3403 = vlaneseq
    %v3404 = vshrl.u32 %v3403, 7
    %v3405 = vsub.s32 6, %v3404
    %v3406 = vrot.slane %v2909, %v3405
    %v3407 = vlaneseq
    %v3408 = vshrl.u32 %v3407, 7
    %v3409 = vsub.s32 7, %v3408
    %v3410 = vrot.slane %v2909, %v3409
    %v3411 = vlaneseq
    %v3412 = vshrl.u32 %v3411, 7
    %v3413 = vsub.s32 0, %v3412
    %v3414 = vrot.slane %v2910, %v3413
    %v3415 = vlaneseq
    %v3416 = vshrl.u32 %v3415, 7
    %v3417 = vsub.s32 1, %v3416
    %v3418 = vrot.slane %v2910, %v3417
    %v3419 = vlaneseq
    %v3420 = vshrl.u32 %v3419, 7
    %v3421 = vsub.s32 2, %v3420
    %v3422 = vrot.slane %v2910, %v3421
    %v3423 = vlaneseq
    %v3424 = vshrl.u32 %v3423, 7
    %v3425 = vsub.s32 3, %v3424
    %v3426 = vrot.slane %v2910, %v3425
    %v3427 = vlaneseq
    %v3428 = vshrl.u32 %v3427, 7
    %v3429 = vsub.s32 4, %v3428
    %v3430 = vrot.slane %v2910, %v3429
    %v3431 = vlaneseq
    %v3432 = vshrl.u32 %v3431, 7
    %v3433 = vsub.s32 5, %v3432
    %v3434 = vrot.slane %v2910, %v3433
    %v3435 = vlaneseq
    %v3436 = vshrl.u32 %v3435, 7
    %v3437 = vsub.s32 6, %v3436
    %v3438 = vrot.slane %v2910, %v3437
    %v3439 = vlaneseq
    %v3440 = vshrl.u32 %v3439, 7
    %v3441 = vsub.s32 7, %v3440
    %v3442 = vrot.slane %v2910, %v3441
    %v3443 = vlaneseq
    %v3444 = vshrl.u32 %v3443, 7
    %v3445 = vsub.s32 0, %v3444
    %v3446 = vrot.slane %v2911, %v3445
    %v3447 = vlaneseq
    %v3448 = vshrl.u32 %v3447, 7
    %v3449 = vsub.s32 1, %v3448
    %v3450 = vrot.slane %v2911, %v3449
    %v3451 = vlaneseq
    %v3452 = vshrl.u32 %v3451, 7
    %v3453 = vsub.s32 2, %v3452
    %v3454 = vrot.slane %v2911, %v3453
    %v3455 = vlaneseq
    %v3456 = vshrl.u32 %v3455, 7
    %v3457 = vsub.s32 3, %v3456
    %v3458 = vrot.slane %v2911, %v3457
    %v3459 = vlaneseq
    %v3460 = vshrl.u32 %v3459, 7
    %v3461 = vsub.s32 4, %v3460
    %v3462 = vrot.slane %v2911, %v3461
    %v3463 = vlaneseq
    %v3464 = vshrl.u32 %v3463, 7
    %v3465 = vsub.s32 5, %v3464
    %v3466 = vrot.slane %v2911, %v3465
    %v3467 = vlaneseq
    %v3468 = vshrl.u32 %v3467, 7
    %v3469 = vsub.s32 6, %v3468
    %v3470 = vrot.slane %v2911, %v3469
    %v3471 = vlaneseq
    %v3472 = vshrl.u32 %v3471, 7
    %v3473 = vsub.s32 7, %v3472
    %v3474 = vrot.slane %v2911, %v3473
    %v3475 = vlaneseq
    %v3476 = vshrl.u32 %v3475, 7
    %v3477 = vsub.s32 0, %v3476
    %v3478 = vrot.slane %v2912, %v3477
    %v3479 = vlaneseq
    %v3480 = vshrl.u32 %v3479, 7
    %v3481 = vsub.s32 1, %v3480
    %v3482 = vrot.slane %v2912, %v3481
    %v3483 = vlaneseq
    %v3484 = vshrl.u32 %v3483, 7
    %v3485 = vsub.s32 2, %v3484
    %v3486 = vrot.slane %v2912, %v3485
    %v3487 = vlaneseq
    %v3488 = vshrl.u32 %v3487, 7
    %v3489 = vsub.s32 3, %v3488
    %v3490 = vrot.slane %v2912, %v3489
    %v3491 = vlaneseq
    %v3492 = vshrl.u32 %v3491, 7
    %v3493 = vsub.s32 4, %v3492
    %v3494 = vrot.slane %v2912, %v3493
    %v3495 = vlaneseq
    %v3496 = vshrl.u32 %v3495, 7
    %v3497 = vsub.s32 5, %v3496
    %v3498 = vrot.slane %v2912, %v3497
    %v3499 = vlaneseq
    %v3500 = vshrl.u32 %v3499, 7
    %v3501 = vsub.s32 6, %v3500
    %v3502 = vrot.slane %v2912, %v3501
    %v3503 = vlaneseq
    %v3504 = vshrl.u32 %v3503, 7
    %v3505 = vsub.s32 7, %v3504
    %v3506 = vrot.slane %v2912, %v3505
    %v3507 = vlaneseq
    %v3508 = vshrl.u32 %v3507, 7
    %v3509 = vsub.s32 0, %v3508
    %v3510 = vrot.slane %v2913, %v3509
    %v3511 = vlaneseq
    %v3512 = vshrl.u32 %v3511, 7
    %v3513 = vsub.s32 1, %v3512
    %v3514 = vrot.slane %v2913, %v3513
    %v3515 = vlaneseq
    %v3516 = vshrl.u32 %v3515, 7
    %v3517 = vsub.s32 2, %v3516
    %v3518 = vrot.slane %v2913, %v3517
    %v3519 = vlaneseq
    %v3520 = vshrl.u32 %v3519, 7
    %v3521 = vsub.s32 3, %v3520
    %v3522 = vrot.slane %v2913, %v3521
    %v3523 = vlaneseq
    %v3524 = vshrl.u32 %v3523, 7
    %v3525 = vsub.s32 4, %v3524
    %v3526 = vrot.slane %v2913, %v3525
    %v3527 = vlaneseq
    %v3528 = vshrl.u32 %v3527, 7
    %v3529 = vsub.s32 5, %v3528
    %v3530 = vrot.slane %v2913, %v3529
    %v3531 = vlaneseq
    %v3532 = vshrl.u32 %v3531, 7
    %v3533 = vsub.s32 6, %v3532
    %v3534 = vrot.slane %v2913, %v3533
    %v3535 = vlaneseq
    %v3536 = vshrl.u32 %v3535, 7
    %v3537 = vsub.s32 7, %v3536
    %v3538 = vrot.slane %v2913, %v3537
    %v3539 = vlaneseq
    %v3540 = vshrl.u32 %v3539, 7
    %v3541 = vsub.s32 0, %v3540
    %v3542 = vrot.slane %v2914, %v3541
    %v3543 = vlaneseq
    %v3544 = vshrl.u32 %v3543, 7
    %v3545 = vsub.s32 1, %v3544
    %v3546 = vrot.slane %v2914, %v3545
    %v3547 = vlaneseq
    %v3548 = vshrl.u32 %v3547, 7
    %v3549 = vsub.s32 2, %v3548
    %v3550 = vrot.slane %v2914, %v3549
    %v3551 = vlaneseq
    %v3552 = vshrl.u32 %v3551, 7
    %v3553 = vsub.s32 3, %v3552
    %v3554 = vrot.slane %v2914, %v3553
    %v3555 = vlaneseq
    %v3556 = vshrl.u32 %v3555, 7
    %v3557 = vsub.s32 4, %v3556
    %v3558 = vrot.slane %v2914, %v3557
    %v3559 = vlaneseq
    %v3560 = vshrl.u32 %v3559, 7
    %v3561 = vsub.s32 5, %v3560
    %v3562 = vrot.slane %v2914, %v3561
    %v3563 = vlaneseq
    %v3564 = vshrl.u32 %v3563, 7
    %v3565 = vsub.s32 6, %v3564
    %v3566 = vrot.slane %v2914, %v3565
    %v3567 = vlaneseq
    %v3568 = vshrl.u32 %v3567, 7
    %v3569 = vsub.s32 7, %v3568
    %v3570 = vrot.slane %v2914, %v3569
    %v3571 = vlaneseq
    %v3572 = vshrl.u32 %v3571, 7
    %v3573 = vsub.s32 0, %v3572
    %v3574 = vrot.slane %v2915, %v3573
    %v3575 = vlaneseq
    %v3576 = vshrl.u32 %v3575, 7
    %v3577 = vsub.s32 1, %v3576
    %v3578 = vrot.slane %v2915, %v3577
    %v3579 = vlaneseq
    %v3580 = vshrl.u32 %v3579, 7
    %v3581 = vsub.s32 2, %v3580
    %v3582 = vrot.slane %v2915, %v3581
    %v3583 = vlaneseq
    %v3584 = vshrl.u32 %v3583, 7
    %v3585 = vsub.s32 3, %v3584
    %v3586 = vrot.slane %v2915, %v3585
    %v3587 = vlaneseq
    %v3588 = vshrl.u32 %v3587, 7
    %v3589 = vsub.s32 4, %v3588
    %v3590 = vrot.slane %v2915, %v3589
    %v3591 = vlaneseq
    %v3592 = vshrl.u32 %v3591, 7
    %v3593 = vsub.s32 5, %v3592
    %v3594 = vrot.slane %v2915, %v3593
    %v3595 = vlaneseq
    %v3596 = vshrl.u32 %v3595, 7
    %v3597 = vsub.s32 6, %v3596
    %v3598 = vrot.slane %v2915, %v3597
    %v3599 = vlaneseq
    %v3600 = vshrl.u32 %v3599, 7
    %v3601 = vsub.s32 7, %v3600
    %v3602 = vrot.slane %v2915, %v3601
    %v3603 = vlaneseq
    %v3604 = vshrl.u32 %v3603, 7
    %v3605 = vsub.s32 0, %v3604
    %v3606 = vrot.slane %v2916, %v3605
    %v3607 = vlaneseq
    %v3608 = vshrl.u32 %v3607, 7
    %v3609 = vsub.s32 1, %v3608
    %v3610 = vrot.slane %v2916, %v3609
    %v3611 = vlaneseq
    %v3612 = vshrl.u32 %v3611, 7
    %v3613 = vsub.s32 2, %v3612
    %v3614 = vrot.slane %v2916, %v3613
    %v3615 = vlaneseq
    %v3616 = vshrl.u32 %v3615, 7
    %v3617 = vsub.s32 3, %v3616
    %v3618 = vrot.slane %v2916, %v3617
    %v3619 = vlaneseq
    %v3620 = vshrl.u32 %v3619, 7
    %v3621 = vsub.s32 4, %v3620
    %v3622 = vrot.slane %v2916, %v3621
    %v3623 = vlaneseq
    %v3624 = vshrl.u32 %v3623, 7
    %v3625 = vsub.s32 5, %v3624
    %v3626 = vrot.slane %v2916, %v3625
    %v3627 = vlaneseq
    %v3628 = vshrl.u32 %v3627, 7
    %v3629 = vsub.s32 6, %v3628
    %v3630 = vrot.slane %v2916, %v3629
    %v3631 = vlaneseq
    %v3632 = vshrl.u32 %v3631, 7
    %v3633 = vsub.s32 7, %v3632
    %v3634 = vrot.slane %v2916, %v3633
    %v3635 = vlaneseq
    %v3636 = vshrl.u32 %v3635, 7
    %v3637 = vsub.s32 0, %v3636
    %v3638 = vrot.slane %v2917, %v3637
    %v3639 = vlaneseq
    %v3640 = vshrl.u32 %v3639, 7
    %v3641 = vsub.s32 1, %v3640
    %v3642 = vrot.slane %v2917, %v3641
    %v3643 = vlaneseq
    %v3644 = vshrl.u32 %v3643, 7
    %v3645 = vsub.s32 2, %v3644
    %v3646 = vrot.slane %v2917, %v3645
    %v3647 = vlaneseq
    %v3648 = vshrl.u32 %v3647, 7
    %v3649 = vsub.s32 3, %v3648
    %v3650 = vrot.slane %v2917, %v3649
    %v3651 = vlaneseq
    %v3652 = vshrl.u32 %v3651, 7
    %v3653 = vsub.s32 4, %v3652
    %v3654 = vrot.slane %v2917, %v3653
    %v3655 = vlaneseq
    %v3656 = vshrl.u32 %v3655, 7
    %v3657 = vsub.s32 5, %v3656
    %v3658 = vrot.slane %v2917, %v3657
    %v3659 = vlaneseq
    %v3660 = vshrl.u32 %v3659, 7
    %v3661 = vsub.s32 6, %v3660
    %v3662 = vrot.slane %v2917, %v3661
    %v3663 = vlaneseq
    %v3664 = vshrl.u32 %v3663, 7
    %v3665 = vsub.s32 7, %v3664
    %v3666 = vrot.slane %v2917, %v3665
    %v3667 = vlaneseq
    %v3668 = vshrl.u32 %v3667, 7
    %v3669 = vsub.s32 0, %v3668
    %v3670 = vrot.slane %v2918, %v3669
    %v3671 = vlaneseq
    %v3672 = vshrl.u32 %v3671, 7
    %v3673 = vsub.s32 1, %v3672
    %v3674 = vrot.slane %v2918, %v3673
    %v3675 = vlaneseq
    %v3676 = vshrl.u32 %v3675, 7
    %v3677 = vsub.s32 2, %v3676
    %v3678 = vrot.slane %v2918, %v3677
    %v3679 = vlaneseq
    %v3680 = vshrl.u32 %v3679, 7
    %v3681 = vsub.s32 3, %v3680
    %v3682 = vrot.slane %v2918, %v3681
    %v3683 = vlaneseq
    %v3684 = vshrl.u32 %v3683, 7
    %v3685 = vsub.s32 4, %v3684
    %v3686 = vrot.slane %v2918, %v3685
    %v3687 = vlaneseq
    %v3688 = vshrl.u32 %v3687, 7
    %v3689 = vsub.s32 5, %v3688
    %v3690 = vrot.slane %v2918, %v3689
    %v3691 = vlaneseq
    %v3692 = vshrl.u32 %v3691, 7
    %v3693 = vsub.s32 6, %v3692
    %v3694 = vrot.slane %v2918, %v3693
    %v3695 = vlaneseq
    %v3696 = vshrl.u32 %v3695, 7
    %v3697 = vsub.s32 7, %v3696
    %v3698 = vrot.slane %v2918, %v3697
    %v3699 = vlaneseq
    %v3700 = vshrl.u32 %v3699, 7
    %v3701 = vsub.s32 0, %v3700
    %v3702 = vrot.slane %v2919, %v3701
    %v3703 = vlaneseq
    %v3704 = vshrl.u32 %v3703, 7
    %v3705 = vsub.s32 1, %v3704
    %v3706 = vrot.slane %v2919, %v3705
    %v3707 = vlaneseq
    %v3708 = vshrl.u32 %v3707, 7
    %v3709 = vsub.s32 2, %v3708
    %v3710 = vrot.slane %v2919, %v3709
    %v3711 = vlaneseq
    %v3712 = vshrl.u32 %v3711, 7
    %v3713 = vsub.s32 3, %v3712
    %v3714 = vrot.slane %v2919, %v3713
    %v3715 = vlaneseq
    %v3716 = vshrl.u32 %v3715, 7
    %v3717 = vsub.s32 4, %v3716
    %v3718 = vrot.slane %v2919, %v3717
    %v3719 = vlaneseq
    %v3720 = vshrl.u32 %v3719, 7
    %v3721 = vsub.s32 5, %v3720
    %v3722 = vrot.slane %v2919, %v3721
    %v3723 = vlaneseq
    %v3724 = vshrl.u32 %v3723, 7
    %v3725 = vsub.s32 6, %v3724
    %v3726 = vrot.slane %v2919, %v3725
    %v3727 = vlaneseq
    %v3728 = vshrl.u32 %v3727, 7
    %v3729 = vsub.s32 7, %v3728
    %v3730 = vrot.slane %v2919, %v3729
    %v3731 = vlaneseq
    %v3732 = vshrl.u32 %v3731, 7
    %v3733 = vsub.s32 0, %v3732
    %v3734 = vrot.slane %v2920, %v3733
    %v3735 = vlaneseq
    %v3736 = vshrl.u32 %v3735, 7
    %v3737 = vsub.s32 1, %v3736
    %v3738 = vrot.slane %v2920, %v3737
    %v3739 = vlaneseq
    %v3740 = vshrl.u32 %v3739, 7
    %v3741 = vsub.s32 2, %v3740
    %v3742 = vrot.slane %v2920, %v3741
    %v3743 = vlaneseq
    %v3744 = vshrl.u32 %v3743, 7
    %v3745 = vsub.s32 3, %v3744
    %v3746 = vrot.slane %v2920, %v3745
    %v3747 = vlaneseq
    %v3748 = vshrl.u32 %v3747, 7
    %v3749 = vsub.s32 4, %v3748
    %v3750 = vrot.slane %v2920, %v3749
    %v3751 = vlaneseq
    %v3752 = vshrl.u32 %v3751, 7
    %v3753 = vsub.s32 5, %v3752
    %v3754 = vrot.slane %v2920, %v3753
    %v3755 = vlaneseq
    %v3756 = vshrl.u32 %v3755, 7
    %v3757 = vsub.s32 6, %v3756
    %v3758 = vrot.slane %v2920, %v3757
    %v3759 = vlaneseq
    %v3760 = vshrl.u32 %v3759, 7
    %v3761 = vsub.s32 7, %v3760
    %v3762 = vrot.slane %v2920, %v3761
    %v3763 = vlaneseq
    %v3764 = vshrl.u32 %v3763, 7
    %v3765 = vsub.s32 0, %v3764
    %v3766 = vrot.slane %v2921, %v3765
    %v3767 = vlaneseq
    %v3768 = vshrl.u32 %v3767, 7
    %v3769 = vsub.s32 1, %v3768
    %v3770 = vrot.slane %v2921, %v3769
    %v3771 = vlaneseq
    %v3772 = vshrl.u32 %v3771, 7
    %v3773 = vsub.s32 2, %v3772
    %v3774 = vrot.slane %v2921, %v3773
    %v3775 = vlaneseq
    %v3776 = vshrl.u32 %v3775, 7
    %v3777 = vsub.s32 3, %v3776
    %v3778 = vrot.slane %v2921, %v3777
    %v3779 = vlaneseq
    %v3780 = vshrl.u32 %v3779, 7
    %v3781 = vsub.s32 4, %v3780
    %v3782 = vrot.slane %v2921, %v3781
    %v3783 = vlaneseq
    %v3784 = vshrl.u32 %v3783, 7
    %v3785 = vsub.s32 5, %v3784
    %v3786 = vrot.slane %v2921, %v3785
    %v3787 = vlaneseq
    %v3788 = vshrl.u32 %v3787, 7
    %v3789 = vsub.s32 6, %v3788
    %v3790 = vrot.slane %v2921, %v3789
    %v3791 = vlaneseq
    %v3792 = vshrl.u32 %v3791, 7
    %v3793 = vsub.s32 7, %v3792
    %v3794 = vrot.slane %v2921, %v3793
    %v3795 = vlaneseq
    %v3796 = vshrl.u32 %v3795, 7
    %v3797 = vsub.s32 0, %v3796
    %v3798 = vrot.slane %v2922, %v3797
    %v3799 = vlaneseq
    %v3800 = vshrl.u32 %v3799, 7
    %v3801 = vsub.s32 1, %v3800
    %v3802 = vrot.slane %v2922, %v3801
    %v3803 = vlaneseq
    %v3804 = vshrl.u32 %v3803, 7
    %v3805 = vsub.s32 2, %v3804
    %v3806 = vrot.slane %v2922, %v3805
    %v3807 = vlaneseq
    %v3808 = vshrl.u32 %v3807, 7
    %v3809 = vsub.s32 3, %v3808
    %v3810 = vrot.slane %v2922, %v3809
    %v3811 = vlaneseq
    %v3812 = vshrl.u32 %v3811, 7
    %v3813 = vsub.s32 4, %v3812
    %v3814 = vrot.slane %v2922, %v3813
    %v3815 = vlaneseq
    %v3816 = vshrl.u32 %v3815, 7
    %v3817 = vsub.s32 5, %v3816
    %v3818 = vrot.slane %v2922, %v3817
    %v3819 = vlaneseq
    %v3820 = vshrl.u32 %v3819, 7
    %v3821 = vsub.s32 6, %v3820
    %v3822 = vrot.slane %v2922, %v3821
    %v3823 = vlaneseq
    %v3824 = vshrl.u32 %v3823, 7
    %v3825 = vsub.s32 7, %v3824
    %v3826 = vrot.slane %v2922, %v3825
    %v3827 = vlaneseq
    %v3828 = vshrl.u32 %v3827, 7
    %v3829 = vsub.s32 0, %v3828
    %v3830 = vrot.slane %v2923, %v3829
    %v3831 = vlaneseq
    %v3832 = vshrl.u32 %v3831, 7
    %v3833 = vsub.s32 1, %v3832
    %v3834 = vrot.slane %v2923, %v3833
    %v3835 = vlaneseq
    %v3836 = vshrl.u32 %v3835, 7
    %v3837 = vsub.s32 2, %v3836
    %v3838 = vrot.slane %v2923, %v3837
    %v3839 = vlaneseq
    %v3840 = vshrl.u32 %v3839, 7
    %v3841 = vsub.s32 3, %v3840
    %v3842 = vrot.slane %v2923, %v3841
    %v3843 = vlaneseq
    %v3844 = vshrl.u32 %v3843, 7
    %v3845 = vsub.s32 4, %v3844
    %v3846 = vrot.slane %v2923, %v3845
    %v3847 = vlaneseq
    %v3848 = vshrl.u32 %v3847, 7
    %v3849 = vsub.s32 5, %v3848
    %v3850 = vrot.slane %v2923, %v3849
    %v3851 = vlaneseq
    %v3852 = vshrl.u32 %v3851, 7
    %v3853 = vsub.s32 6, %v3852
    %v3854 = vrot.slane %v2923, %v3853
    %v3855 = vlaneseq
    %v3856 = vshrl.u32 %v3855, 7
    %v3857 = vsub.s32 7, %v3856
    %v3858 = vrot.slane %v2923, %v3857
    %v3859 = vlaneseq
    %v3860 = vshrl.u32 %v3859, 7
    %v3861 = vsub.s32 0, %v3860
    %v3862 = vrot.slane %v2924, %v3861
    %v3863 = vlaneseq
    %v3864 = vshrl.u32 %v3863, 7
    %v3865 = vsub.s32 1, %v3864
    %v3866 = vrot.slane %v2924, %v3865
    %v3867 = vlaneseq
    %v3868 = vshrl.u32 %v3867, 7
    %v3869 = vsub.s32 2, %v3868
    %v3870 = vrot.slane %v2924, %v3869
    %v3871 = vlaneseq
    %v3872 = vshrl.u32 %v3871, 7
    %v3873 = vsub.s32 3, %v3872
    %v3874 = vrot.slane %v2924, %v3873
    %v3875 = vlaneseq
    %v3876 = vshrl.u32 %v3875, 7
    %v3877 = vsub.s32 4, %v3876
    %v3878 = vrot.slane %v2924, %v3877
    %v3879 = vlaneseq
    %v3880 = vshrl.u32 %v3879, 7
    %v3881 = vsub.s32 5, %v3880
    %v3882 = vrot.slane %v2924, %v3881
    %v3883 = vlaneseq
    %v3884 = vshrl.u32 %v3883, 7
    %v3885 = vsub.s32 6, %v3884
    %v3886 = vrot.slane %v2924, %v3885
    %v3887 = vlaneseq
    %v3888 = vshrl.u32 %v3887, 7
    %v3889 = vsub.s32 7, %v3888
    %v3890 = vrot.slane %v2924, %v3889
    %v3891 = vlaneseq
    %v3892 = vshrl.u32 %v3891, 7
    %v3893 = vsub.s32 0, %v3892
    %v3894 = vrot.slane %v2925, %v3893
    %v3895 = vlaneseq
    %v3896 = vshrl.u32 %v3895, 7
    %v3897 = vsub.s32 1, %v3896
    %v3898 = vrot.slane %v2925, %v3897
    %v3899 = vlaneseq
    %v3900 = vshrl.u32 %v3899, 7
    %v3901 = vsub.s32 2, %v3900
    %v3902 = vrot.slane %v2925, %v3901
    %v3903 = vlaneseq
    %v3904 = vshrl.u32 %v3903, 7
    %v3905 = vsub.s32 3, %v3904
    %v3906 = vrot.slane %v2925, %v3905
    %v3907 = vlaneseq
    %v3908 = vshrl.u32 %v3907, 7
    %v3909 = vsub.s32 4, %v3908
    %v3910 = vrot.slane %v2925, %v3909
    %v3911 = vlaneseq
    %v3912 = vshrl.u32 %v3911, 7
    %v3913 = vsub.s32 5, %v3912
    %v3914 = vrot.slane %v2925, %v3913
    %v3915 = vlaneseq
    %v3916 = vshrl.u32 %v3915, 7
    %v3917 = vsub.s32 6, %v3916
    %v3918 = vrot.slane %v2925, %v3917
    %v3919 = vlaneseq
    %v3920 = vshrl.u32 %v3919, 7
    %v3921 = vsub.s32 7, %v3920
    %v3922 = vrot.slane %v2925, %v3921
    %v3923 = vlaneseq
    %v3924 = vshrl.u32 %v3923, 7
    %v3925 = vsub.s32 0, %v3924
    %v3926 = vrot.slane %v2926, %v3925
    %v3927 = vlaneseq
    %v3928 = vshrl.u32 %v3927, 7
    %v3929 = vsub.s32 1, %v3928
    %v3930 = vrot.slane %v2926, %v3929
    %v3931 = vlaneseq
    %v3932 = vshrl.u32 %v3931, 7
    %v3933 = vsub.s32 2, %v3932
    %v3934 = vrot.slane %v2926, %v3933
    %v3935 = vlaneseq
    %v3936 = vshrl.u32 %v3935, 7
    %v3937 = vsub.s32 3, %v3936
    %v3938 = vrot.slane %v2926, %v3937
    %v3939 = vlaneseq
    %v3940 = vshrl.u32 %v3939, 7
    %v3941 = vsub.s32 4, %v3940
    %v3942 = vrot.slane %v2926, %v3941
    %v3943 = vlaneseq
    %v3944 = vshrl.u32 %v3943, 7
    %v3945 = vsub.s32 5, %v3944
    %v3946 = vrot.slane %v2926, %v3945
    %v3947 = vlaneseq
    %v3948 = vshrl.u32 %v3947, 7
    %v3949 = vsub.s32 6, %v3948
    %v3950 = vrot.slane %v2926, %v3949
    %v3951 = vlaneseq
    %v3952 = vshrl.u32 %v3951, 7
    %v3953 = vsub.s32 7, %v3952
    %v3954 = vrot.slane %v2926, %v3953
    %v3955 = vlaneseq
    %v3956 = vshrl.u32 %v3955, 7
    %v3957 = vsub.s32 0, %v3956
    %v3958 = vrot.slane %v2927, %v3957
    %v3959 = vlaneseq
    %v3960 = vshrl.u32 %v3959, 7
    %v3961 = vsub.s32 1, %v3960
    %v3962 = vrot.slane %v2927, %v3961
    %v3963 = vlaneseq
    %v3964 = vshrl.u32 %v3963, 7
    %v3965 = vsub.s32 2, %v3964
    %v3966 = vrot.slane %v2927, %v3965
    %v3967 = vlaneseq
    %v3968 = vshrl.u32 %v3967, 7
    %v3969 = vsub.s32 3, %v3968
    %v3970 = vrot.slane %v2927, %v3969
    %v3971 = vlaneseq
    %v3972 = vshrl.u32 %v3971, 7
    %v3973 = vsub.s32 4, %v3972
    %v3974 = vrot.slane %v2927, %v3973
    %v3975 = vlaneseq
    %v3976 = vshrl.u32 %v3975, 7
    %v3977 = vsub.s32 5, %v3976
    %v3978 = vrot.slane %v2927, %v3977
    %v3979 = vlaneseq
    %v3980 = vshrl.u32 %v3979, 7
    %v3981 = vsub.s32 6, %v3980
    %v3982 = vrot.slane %v2927, %v3981
    %v3983 = vlaneseq
    %v3984 = vshrl.u32 %v3983, 7
    %v3985 = vsub.s32 7, %v3984
    %v3986 = vrot.slane %v2927, %v3985
    %v3987 = vlaneseq
    %v3988 = vshrl.u32 %v3987, 7
    %v3989 = vsub.s32 0, %v3988
    %v3990 = vrot.slane %v2928, %v3989
    %v3991 = vlaneseq
    %v3992 = vshrl.u32 %v3991, 7
    %v3993 = vsub.s32 1, %v3992
    %v3994 = vrot.slane %v2928, %v3993
    %v3995 = vlaneseq
    %v3996 = vshrl.u32 %v3995, 7
    %v3997 = vsub.s32 2, %v3996
    %v3998 = vrot.slane %v2928, %v3997
    %v3999 = vlaneseq
    %v4000 = vshrl.u32 %v3999, 7
    %v4001 = vsub.s32 3, %v4000
    %v4002 = vrot.slane %v2928, %v4001
    %v4003 = vlaneseq
    %v4004 = vshrl.u32 %v4003, 7
    %v4005 = vsub.s32 4, %v4004
    %v4006 = vrot.slane %v2928, %v4005
    %v4007 = vlaneseq
    %v4008 = vshrl.u32 %v4007, 7
    %v4009 = vsub.s32 5, %v4008
    %v4010 = vrot.slane %v2928, %v4009
    %v4011 = vlaneseq
    %v4012 = vshrl.u32 %v4011, 7
    %v4013 = vsub.s32 6, %v4012
    %v4014 = vrot.slane %v2928, %v4013
    %v4015 = vlaneseq
    %v4016 = vshrl.u32 %v4015, 7
    %v4017 = vsub.s32 7, %v4016
    %v4018 = vrot.slane %v2928, %v4017
    %v4019 = vlaneseq
    %v4020 = vshrl.u32 %v4019, 7
    %v4021 = vsub.s32 0, %v4020
    %v4022 = vrot.slane %v2929, %v4021
    %v4023 = vlaneseq
    %v4024 = vshrl.u32 %v4023, 7
    %v4025 = vsub.s32 1, %v4024
    %v4026 = vrot.slane %v2929, %v4025
    %v4027 = vlaneseq
    %v4028 = vshrl.u32 %v4027, 7
    %v4029 = vsub.s32 2, %v4028
    %v4030 = vrot.slane %v2929, %v4029
    %v4031 = vlaneseq
    %v4032 = vshrl.u32 %v4031, 7
    %v4033 = vsub.s32 3, %v4032
    %v4034 = vrot.slane %v2929, %v4033
    %v4035 = vlaneseq
    %v4036 = vshrl.u32 %v4035, 7
    %v4037 = vsub.s32 4, %v4036
    %v4038 = vrot.slane %v2929, %v4037
    %v4039 = vlaneseq
    %v4040 = vshrl.u32 %v4039, 7
    %v4041 = vsub.s32 5, %v4040
    %v4042 = vrot.slane %v2929, %v4041
    %v4043 = vlaneseq
    %v4044 = vshrl.u32 %v4043, 7
    %v4045 = vsub.s32 6, %v4044
    %v4046 = vrot.slane %v2929, %v4045
    %v4047 = vlaneseq
    %v4048 = vshrl.u32 %v4047, 7
    %v4049 = vsub.s32 7, %v4048
    %v4050 = vrot.slane %v2929, %v4049
    %v4051 = vlaneseq
    %v4052 = vshrl.u32 %v4051, 7
    %v4053 = vsub.s32 0, %v4052
    %v4054 = vrot.slane %v2930, %v4053
    %v4055 = vlaneseq
    %v4056 = vshrl.u32 %v4055, 7
    %v4057 = vsub.s32 1, %v4056
    %v4058 = vrot.slane %v2930, %v4057
    %v4059 = vlaneseq
    %v4060 = vshrl.u32 %v4059, 7
    %v4061 = vsub.s32 2, %v4060
    %v4062 = vrot.slane %v2930, %v4061
    %v4063 = vlaneseq
    %v4064 = vshrl.u32 %v4063, 7
    %v4065 = vsub.s32 3, %v4064
    %v4066 = vrot.slane %v2930, %v4065
    %v4067 = vlaneseq
    %v4068 = vshrl.u32 %v4067, 7
    %v4069 = vsub.s32 4, %v4068
    %v4070 = vrot.slane %v2930, %v4069
    %v4071 = vlaneseq
    %v4072 = vshrl.u32 %v4071, 7
    %v4073 = vsub.s32 5, %v4072
    %v4074 = vrot.slane %v2930, %v4073
    %v4075 = vlaneseq
    %v4076 = vshrl.u32 %v4075, 7
    %v4077 = vsub.s32 6, %v4076
    %v4078 = vrot.slane %v2930, %v4077
    %v4079 = vlaneseq
    %v4080 = vshrl.u32 %v4079, 7
    %v4081 = vsub.s32 7, %v4080
    %v4082 = vrot.slane %v2930, %v4081
    %v4083 = vlaneseq
    %v4084 = vshrl.u32 %v4083, 7
    %v4085 = vsub.s32 0, %v4084
    %v4086 = vrot.slane %v2931, %v4085
    %v4087 = vlaneseq
    %v4088 = vshrl.u32 %v4087, 7
    %v4089 = vsub.s32 1, %v4088
    %v4090 = vrot.slane %v2931, %v4089
    %v4091 = vlaneseq
    %v4092 = vshrl.u32 %v4091, 7
    %v4093 = vsub.s32 2, %v4092
    %v4094 = vrot.slane %v2931, %v4093
    %v4095 = vlaneseq
    %v4096 = vshrl.u32 %v4095, 7
    %v4097 = vsub.s32 3, %v4096
    %v4098 = vrot.slane %v2931, %v4097
    %v4099 = vlaneseq
    %v4100 = vshrl.u32 %v4099, 7
    %v4101 = vsub.s32 4, %v4100
    %v4102 = vrot.slane %v2931, %v4101
    %v4103 = vlaneseq
    %v4104 = vshrl.u32 %v4103, 7
    %v4105 = vsub.s32 5, %v4104
    %v4106 = vrot.slane %v2931, %v4105
    %v4107 = vlaneseq
    %v4108 = vshrl.u32 %v4107, 7
    %v4109 = vsub.s32 6, %v4108
    %v4110 = vrot.slane %v2931, %v4109
    %v4111 = vlaneseq
    %v4112 = vshrl.u32 %v4111, 7
    %v4113 = vsub.s32 7, %v4112
    %v4114 = vrot.slane %v2931, %v4113
    %v4115 = vlaneseq
    %v4116 = vshrl.u32 %v4115, 7
    %v4117 = vsub.s32 0, %v4116
    %v4118 = vrot.slane %v2932, %v4117
    %v4119 = vlaneseq
    %v4120 = vshrl.u32 %v4119, 7
    %v4121 = vsub.s32 1, %v4120
    %v4122 = vrot.slane %v2932, %v4121
    %v4123 = vlaneseq
    %v4124 = vshrl.u32 %v4123, 7
    %v4125 = vsub.s32 2, %v4124
    %v4126 = vrot.slane %v2932, %v4125
    %v4127 = vlaneseq
    %v4128 = vshrl.u32 %v4127, 7
    %v4129 = vsub.s32 3, %v4128
    %v4130 = vrot.slane %v2932, %v4129
    %v4131 = vlaneseq
    %v4132 = vshrl.u32 %v4131, 7
    %v4133 = vsub.s32 4, %v4132
    %v4134 = vrot.slane %v2932, %v4133
    %v4135 = vlaneseq
    %v4136 = vshrl.u32 %v4135, 7
    %v4137 = vsub.s32 5, %v4136
    %v4138 = vrot.slane %v2932, %v4137
    %v4139 = vlaneseq
    %v4140 = vshrl.u32 %v4139, 7
    %v4141 = vsub.s32 6, %v4140
    %v4142 = vrot.slane %v2932, %v4141
    %v4143 = vlaneseq
    %v4144 = vshrl.u32 %v4143, 7
    %v4145 = vsub.s32 7, %v4144
    %v4146 = vrot.slane %v2932, %v4145
    %v4147 = vlaneseq
    %v4148 = vshrl.u32 %v4147, 7
    %v4149 = vsub.s32 0, %v4148
    %v4150 = vrot.slane %v2933, %v4149
    %v4151 = vlaneseq
    %v4152 = vshrl.u32 %v4151, 7
    %v4153 = vsub.s32 1, %v4152
    %v4154 = vrot.slane %v2933, %v4153
    %v4155 = vlaneseq
    %v4156 = vshrl.u32 %v4155, 7
    %v4157 = vsub.s32 2, %v4156
    %v4158 = vrot.slane %v2933, %v4157
    %v4159 = vlaneseq
    %v4160 = vshrl.u32 %v4159, 7
    %v4161 = vsub.s32 3, %v4160
    %v4162 = vrot.slane %v2933, %v4161
    %v4163 = vlaneseq
    %v4164 = vshrl.u32 %v4163, 7
    %v4165 = vsub.s32 4, %v4164
    %v4166 = vrot.slane %v2933, %v4165
    %v4167 = vlaneseq
    %v4168 = vshrl.u32 %v4167, 7
    %v4169 = vsub.s32 5, %v4168
    %v4170 = vrot.slane %v2933, %v4169
    %v4171 = vlaneseq
    %v4172 = vshrl.u32 %v4171, 7
    %v4173 = vsub.s32 6, %v4172
    %v4174 = vrot.slane %v2933, %v4173
    %v4175 = vlaneseq
    %v4176 = vshrl.u32 %v4175, 7
    %v4177 = vsub.s32 7, %v4176
    %v4178 = vrot.slane %v2933, %v4177
    %v4179 = vlaneseq
    %v4180 = vshrl.u32 %v4179, 7
    %v4181 = vsub.s32 0, %v4180
    %v4182 = vrot.slane %v2934, %v4181
    %v4183 = vlaneseq
    %v4184 = vshrl.u32 %v4183, 7
    %v4185 = vsub.s32 1, %v4184
    %v4186 = vrot.slane %v2934, %v4185
    %v4187 = vlaneseq
    %v4188 = vshrl.u32 %v4187, 7
    %v4189 = vsub.s32 2, %v4188
    %v4190 = vrot.slane %v2934, %v4189
    %v4191 = vlaneseq
    %v4192 = vshrl.u32 %v4191, 7
    %v4193 = vsub.s32 3, %v4192
    %v4194 = vrot.slane %v2934, %v4193
    %v4195 = vlaneseq
    %v4196 = vshrl.u32 %v4195, 7
    %v4197 = vsub.s32 4, %v4196
    %v4198 = vrot.slane %v2934, %v4197
    %v4199 = vlaneseq
    %v4200 = vshrl.u32 %v4199, 7
    %v4201 = vsub.s32 5, %v4200
    %v4202 = vrot.slane %v2934, %v4201
    %v4203 = vlaneseq
    %v4204 = vshrl.u32 %v4203, 7
    %v4205 = vsub.s32 6, %v4204
    %v4206 = vrot.slane %v2934, %v4205
    %v4207 = vlaneseq
    %v4208 = vshrl.u32 %v4207, 7
    %v4209 = vsub.s32 7, %v4208
    %v4210 = vrot.slane %v2934, %v4209
    %v4211 = vlaneseq
    %v4212 = vshrl.u32 %v4211, 7
    %v4213 = vsub.s32 0, %v4212
    %v4214 = vrot.slane %v2935, %v4213
    %v4215 = vlaneseq
    %v4216 = vshrl.u32 %v4215, 7
    %v4217 = vsub.s32 1, %v4216
    %v4218 = vrot.slane %v2935, %v4217
    %v4219 = vlaneseq
    %v4220 = vshrl.u32 %v4219, 7
    %v4221 = vsub.s32 2, %v4220
    %v4222 = vrot.slane %v2935, %v4221
    %v4223 = vlaneseq
    %v4224 = vshrl.u32 %v4223, 7
    %v4225 = vsub.s32 3, %v4224
    %v4226 = vrot.slane %v2935, %v4225
    %v4227 = vlaneseq
    %v4228 = vshrl.u32 %v4227, 7
    %v4229 = vsub.s32 4, %v4228
    %v4230 = vrot.slane %v2935, %v4229
    %v4231 = vlaneseq
    %v4232 = vshrl.u32 %v4231, 7
    %v4233 = vsub.s32 5, %v4232
    %v4234 = vrot.slane %v2935, %v4233
    %v4235 = vlaneseq
    %v4236 = vshrl.u32 %v4235, 7
    %v4237 = vsub.s32 6, %v4236
    %v4238 = vrot.slane %v2935, %v4237
    %v4239 = vlaneseq
    %v4240 = vshrl.u32 %v4239, 7
    %v4241 = vsub.s32 7, %v4240
    %v4242 = vrot.slane %v2935, %v4241
    %v4243 = vlaneseq
    %v4244 = vshrl.u32 %v4243, 7
    %v4245 = vsub.s32 0, %v4244
    %v4246 = vrot.slane %v2936, %v4245
    %v4247 = vlaneseq
    %v4248 = vshrl.u32 %v4247, 7
    %v4249 = vsub.s32 1, %v4248
    %v4250 = vrot.slane %v2936, %v4249
    %v4251 = vlaneseq
    %v4252 = vshrl.u32 %v4251, 7
    %v4253 = vsub.s32 2, %v4252
    %v4254 = vrot.slane %v2936, %v4253
    %v4255 = vlaneseq
    %v4256 = vshrl.u32 %v4255, 7
    %v4257 = vsub.s32 3, %v4256
    %v4258 = vrot.slane %v2936, %v4257
    %v4259 = vlaneseq
    %v4260 = vshrl.u32 %v4259, 7
    %v4261 = vsub.s32 4, %v4260
    %v4262 = vrot.slane %v2936, %v4261
    %v4263 = vlaneseq
    %v4264 = vshrl.u32 %v4263, 7
    %v4265 = vsub.s32 5, %v4264
    %v4266 = vrot.slane %v2936, %v4265
    %v4267 = vlaneseq
    %v4268 = vshrl.u32 %v4267, 7
    %v4269 = vsub.s32 6, %v4268
    %v4270 = vrot.slane %v2936, %v4269
    %v4271 = vlaneseq
    %v4272 = vshrl.u32 %v4271, 7
    %v4273 = vsub.s32 7, %v4272
    %v4274 = vrot.slane %v2936, %v4273
    %v4275 = vlaneseq
    %v4276 = vshrl.u32 %v4275, 7
    %v4277 = vsub.s32 0, %v4276
    %v4278 = vrot.slane %v2937, %v4277
    %v4279 = vlaneseq
    %v4280 = vshrl.u32 %v4279, 7
    %v4281 = vsub.s32 1, %v4280
    %v4282 = vrot.slane %v2937, %v4281
    %v4283 = vlaneseq
    %v4284 = vshrl.u32 %v4283, 7
    %v4285 = vsub.s32 2, %v4284
    %v4286 = vrot.slane %v2937, %v4285
    %v4287 = vlaneseq
    %v4288 = vshrl.u32 %v4287, 7
    %v4289 = vsub.s32 3, %v4288
    %v4290 = vrot.slane %v2937, %v4289
    %v4291 = vlaneseq
    %v4292 = vshrl.u32 %v4291, 7
    %v4293 = vsub.s32 4, %v4292
    %v4294 = vrot.slane %v2937, %v4293
    %v4295 = vlaneseq
    %v4296 = vshrl.u32 %v4295, 7
    %v4297 = vsub.s32 5, %v4296
    %v4298 = vrot.slane %v2937, %v4297
    %v4299 = vlaneseq
    %v4300 = vshrl.u32 %v4299, 7
    %v4301 = vsub.s32 6, %v4300
    %v4302 = vrot.slane %v2937, %v4301
    %v4303 = vlaneseq
    %v4304 = vshrl.u32 %v4303, 7
    %v4305 = vsub.s32 7, %v4304
    %v4306 = vrot.slane %v2937, %v4305
    %v4307 = vlaneseq
    %v4308 = vshrl.u32 %v4307, 7
    %v4309 = vsub.s32 0, %v4308
    %v4310 = vrot.slane %v2938, %v4309
    %v4311 = vlaneseq
    %v4312 = vshrl.u32 %v4311, 7
    %v4313 = vsub.s32 1, %v4312
    %v4314 = vrot.slane %v2938, %v4313
    %v4315 = vlaneseq
    %v4316 = vshrl.u32 %v4315, 7
    %v4317 = vsub.s32 2, %v4316
    %v4318 = vrot.slane %v2938, %v4317
    %v4319 = vlaneseq
    %v4320 = vshrl.u32 %v4319, 7
    %v4321 = vsub.s32 3, %v4320
    %v4322 = vrot.slane %v2938, %v4321
    %v4323 = vlaneseq
    %v4324 = vshrl.u32 %v4323, 7
    %v4325 = vsub.s32 4, %v4324
    %v4326 = vrot.slane %v2938, %v4325
    %v4327 = vlaneseq
    %v4328 = vshrl.u32 %v4327, 7
    %v4329 = vsub.s32 5, %v4328
    %v4330 = vrot.slane %v2938, %v4329
    %v4331 = vlaneseq
    %v4332 = vshrl.u32 %v4331, 7
    %v4333 = vsub.s32 6, %v4332
    %v4334 = vrot.slane %v2938, %v4333
    %v4335 = vlaneseq
    %v4336 = vshrl.u32 %v4335, 7
    %v4337 = vsub.s32 7, %v4336
    %v4338 = vrot.slane %v2938, %v4337
    %v4339 = vlaneseq
    %v4340 = vshrl.u32 %v4339, 7
    %v4341 = vsub.s32 0, %v4340
    %v4342 = vrot.slane %v2939, %v4341
    %v4343 = vlaneseq
    %v4344 = vshrl.u32 %v4343, 7
    %v4345 = vsub.s32 1, %v4344
    %v4346 = vrot.slane %v2939, %v4345
    %v4347 = vlaneseq
    %v4348 = vshrl.u32 %v4347, 7
    %v4349 = vsub.s32 2, %v4348
    %v4350 = vrot.slane %v2939, %v4349
    %v4351 = vlaneseq
    %v4352 = vshrl.u32 %v4351, 7
    %v4353 = vsub.s32 3, %v4352
    %v4354 = vrot.slane %v2939, %v4353
    %v4355 = vlaneseq
    %v4356 = vshrl.u32 %v4355, 7
    %v4357 = vsub.s32 4, %v4356
    %v4358 = vrot.slane %v2939, %v4357
    %v4359 = vlaneseq
    %v4360 = vshrl.u32 %v4359, 7
    %v4361 = vsub.s32 5, %v4360
    %v4362 = vrot.slane %v2939, %v4361
    %v4363 = vlaneseq
    %v4364 = vshrl.u32 %v4363, 7
    %v4365 = vsub.s32 6, %v4364
    %v4366 = vrot.slane %v2939, %v4365
    %v4367 = vlaneseq
    %v4368 = vshrl.u32 %v4367, 7
    %v4369 = vsub.s32 7, %v4368
    %v4370 = vrot.slane %v2939, %v4369
    %v4371 = vlaneseq
    %v4372 = vshrl.u32 %v4371, 7
    %v4373 = vsub.s32 0, %v4372
    %v4374 = vrot.slane %v2940, %v4373
    %v4375 = vlaneseq
    %v4376 = vshrl.u32 %v4375, 7
    %v4377 = vsub.s32 1, %v4376
    %v4378 = vrot.slane %v2940, %v4377
    %v4379 = vlaneseq
    %v4380 = vshrl.u32 %v4379, 7
    %v4381 = vsub.s32 2, %v4380
    %v4382 = vrot.slane %v2940, %v4381
    %v4383 = vlaneseq
    %v4384 = vshrl.u32 %v4383, 7
    %v4385 = vsub.s32 3, %v4384
    %v4386 = vrot.slane %v2940, %v4385
    %v4387 = vlaneseq
    %v4388 = vshrl.u32 %v4387, 7
    %v4389 = vsub.s32 4, %v4388
    %v4390 = vrot.slane %v2940, %v4389
    %v4391 = vlaneseq
    %v4392 = vshrl.u32 %v4391, 7
    %v4393 = vsub.s32 5, %v4392
    %v4394 = vrot.slane %v2940, %v4393
    %v4395 = vlaneseq
    %v4396 = vshrl.u32 %v4395, 7
    %v4397 = vsub.s32 6, %v4396
    %v4398 = vrot.slane %v2940, %v4397
    %v4399 = vlaneseq
    %v4400 = vshrl.u32 %v4399, 7
    %v4401 = vsub.s32 7, %v4400
    %v4402 = vrot.slane %v2940, %v4401
    %v4403 = vlaneseq
    %v4404 = vshrl.u32 %v4403, 7
    %v4405 = vsub.s32 0, %v4404
    %v4406 = vrot.slane %v2941, %v4405
    %v4407 = vlaneseq
    %v4408 = vshrl.u32 %v4407, 7
    %v4409 = vsub.s32 1, %v4408
    %v4410 = vrot.slane %v2941, %v4409
    %v4411 = vlaneseq
    %v4412 = vshrl.u32 %v4411, 7
    %v4413 = vsub.s32 2, %v4412
    %v4414 = vrot.slane %v2941, %v4413
    %v4415 = vlaneseq
    %v4416 = vshrl.u32 %v4415, 7
    %v4417 = vsub.s32 3, %v4416
    %v4418 = vrot.slane %v2941, %v4417
    %v4419 = vlaneseq
    %v4420 = vshrl.u32 %v4419, 7
    %v4421 = vsub.s32 4, %v4420
    %v4422 = vrot.slane %v2941, %v4421
    %v4423 = vlaneseq
    %v4424 = vshrl.u32 %v4423, 7
    %v4425 = vsub.s32 5, %v4424
    %v4426 = vrot.slane %v2941, %v4425
    %v4427 = vlaneseq
    %v4428 = vshrl.u32 %v4427, 7
    %v4429 = vsub.s32 6, %v4428
    %v4430 = vrot.slane %v2941, %v4429
    %v4431 = vlaneseq
    %v4432 = vshrl.u32 %v4431, 7
    %v4433 = vsub.s32 7, %v4432
    %v4434 = vrot.slane %v2941, %v4433
    %v4435 = vlaneseq
    %v4436 = vshrl.u32 %v4435, 7
    %v4437 = vsub.s32 0, %v4436
    %v4438 = vrot.slane %v2942, %v4437
    %v4439 = vlaneseq
    %v4440 = vshrl.u32 %v4439, 7
    %v4441 = vsub.s32 1, %v4440
    %v4442 = vrot.slane %v2942, %v4441
    %v4443 = vlaneseq
    %v4444 = vshrl.u32 %v4443, 7
    %v4445 = vsub.s32 2, %v4444
    %v4446 = vrot.slane %v2942, %v4445
    %v4447 = vlaneseq
    %v4448 = vshrl.u32 %v4447, 7
    %v4449 = vsub.s32 3, %v4448
    %v4450 = vrot.slane %v2942, %v4449
    %v4451 = vlaneseq
    %v4452 = vshrl.u32 %v4451, 7
    %v4453 = vsub.s32 4, %v4452
    %v4454 = vrot.slane %v2942, %v4453
    %v4455 = vlaneseq
    %v4456 = vshrl.u32 %v4455, 7
    %v4457 = vsub.s32 5, %v4456
    %v4458 = vrot.slane %v2942, %v4457
    %v4459 = vlaneseq
    %v4460 = vshrl.u32 %v4459, 7
    %v4461 = vsub.s32 6, %v4460
    %v4462 = vrot.slane %v2942, %v4461
    %v4463 = vlaneseq
    %v4464 = vshrl.u32 %v4463, 7
    %v4465 = vsub.s32 7, %v4464
    %v4466 = vrot.slane %v2942, %v4465
    %v4467 = vlaneseq
    %v4468 = vshrl.u32 %v4467, 7
    %v4469 = vsub.s32 0, %v4468
    %v4470 = vrot.slane %v2943, %v4469
    %v4471 = vlaneseq
    %v4472 = vshrl.u32 %v4471, 7
    %v4473 = vsub.s32 1, %v4472
    %v4474 = vrot.slane %v2943, %v4473
    %v4475 = vlaneseq
    %v4476 = vshrl.u32 %v4475, 7
    %v4477 = vsub.s32 2, %v4476
    %v4478 = vrot.slane %v2943, %v4477
    %v4479 = vlaneseq
    %v4480 = vshrl.u32 %v4479, 7
    %v4481 = vsub.s32 3, %v4480
    %v4482 = vrot.slane %v2943, %v4481
    %v4483 = vlaneseq
    %v4484 = vshrl.u32 %v4483, 7
    %v4485 = vsub.s32 4, %v4484
    %v4486 = vrot.slane %v2943, %v4485
    %v4487 = vlaneseq
    %v4488 = vshrl.u32 %v4487, 7
    %v4489 = vsub.s32 5, %v4488
    %v4490 = vrot.slane %v2943, %v4489
    %v4491 = vlaneseq
    %v4492 = vshrl.u32 %v4491, 7
    %v4493 = vsub.s32 6, %v4492
    %v4494 = vrot.slane %v2943, %v4493
    %v4495 = vlaneseq
    %v4496 = vshrl.u32 %v4495, 7
    %v4497 = vsub.s32 7, %v4496
    %v4498 = vrot.slane %v2943, %v4497
    %v4499 = vlaneseq
    %v4500 = vshrl.u32 %v4499, 7
    %v4501 = vsub.s32 0, %v4500
    %v4502 = vrot.slane %v2944, %v4501
    %v4503 = vlaneseq
    %v4504 = vshrl.u32 %v4503, 7
    %v4505 = vsub.s32 1, %v4504
    %v4506 = vrot.slane %v2944, %v4505
    %v4507 = vlaneseq
    %v4508 = vshrl.u32 %v4507, 7
    %v4509 = vsub.s32 2, %v4508
    %v4510 = vrot.slane %v2944, %v4509
    %v4511 = vlaneseq
    %v4512 = vshrl.u32 %v4511, 7
    %v4513 = vsub.s32 3, %v4512
    %v4514 = vrot.slane %v2944, %v4513
    %v4515 = vlaneseq
    %v4516 = vshrl.u32 %v4515, 7
    %v4517 = vsub.s32 4, %v4516
    %v4518 = vrot.slane %v2944, %v4517
    %v4519 = vlaneseq
    %v4520 = vshrl.u32 %v4519, 7
    %v4521 = vsub.s32 5, %v4520
    %v4522 = vrot.slane %v2944, %v4521
    %v4523 = vlaneseq
    %v4524 = vshrl.u32 %v4523, 7
    %v4525 = vsub.s32 6, %v4524
    %v4526 = vrot.slane %v2944, %v4525
    %v4527 = vlaneseq
    %v4528 = vshrl.u32 %v4527, 7
    %v4529 = vsub.s32 7, %v4528
    %v4530 = vrot.slane %v2944, %v4529
    %v4531 = vlaneseq
    %v4532 = vshrl.u32 %v4531, 7
    %v4533 = vsub.s32 0, %v4532
    %v4534 = vrot.slane %v2945, %v4533
    %v4535 = vlaneseq
    %v4536 = vshrl.u32 %v4535, 7
    %v4537 = vsub.s32 1, %v4536
    %v4538 = vrot.slane %v2945, %v4537
    %v4539 = vlaneseq
    %v4540 = vshrl.u32 %v4539, 7
    %v4541 = vsub.s32 2, %v4540
    %v4542 = vrot.slane %v2945, %v4541
    %v4543 = vlaneseq
    %v4544 = vshrl.u32 %v4543, 7
    %v4545 = vsub.s32 3, %v4544
    %v4546 = vrot.slane %v2945, %v4545
    %v4547 = vlaneseq
    %v4548 = vshrl.u32 %v4547, 7
    %v4549 = vsub.s32 4, %v4548
    %v4550 = vrot.slane %v2945, %v4549
    %v4551 = vlaneseq
    %v4552 = vshrl.u32 %v4551, 7
    %v4553 = vsub.s32 5, %v4552
    %v4554 = vrot.slane %v2945, %v4553
    %v4555 = vlaneseq
    %v4556 = vshrl.u32 %v4555, 7
    %v4557 = vsub.s32 6, %v4556
    %v4558 = vrot.slane %v2945, %v4557
    %v4559 = vlaneseq
    %v4560 = vshrl.u32 %v4559, 7
    %v4561 = vsub.s32 7, %v4560
    %v4562 = vrot.slane %v2945, %v4561
    %v4563 = vlaneseq
    %v4564 = vshrl.u32 %v4563, 7
    %v4565 = vsub.s32 0, %v4564
    %v4566 = vrot.slane %v2946, %v4565
    %v4567 = vlaneseq
    %v4568 = vshrl.u32 %v4567, 7
    %v4569 = vsub.s32 1, %v4568
    %v4570 = vrot.slane %v2946, %v4569
    %v4571 = vlaneseq
    %v4572 = vshrl.u32 %v4571, 7
    %v4573 = vsub.s32 2, %v4572
    %v4574 = vrot.slane %v2946, %v4573
    %v4575 = vlaneseq
    %v4576 = vshrl.u32 %v4575, 7
    %v4577 = vsub.s32 3, %v4576
    %v4578 = vrot.slane %v2946, %v4577
    %v4579 = vlaneseq
    %v4580 = vshrl.u32 %v4579, 7
    %v4581 = vsub.s32 4, %v4580
    %v4582 = vrot.slane %v2946, %v4581
    %v4583 = vlaneseq
    %v4584 = vshrl.u32 %v4583, 7
    %v4585 = vsub.s32 5, %v4584
    %v4586 = vrot.slane %v2946, %v4585
    %v4587 = vlaneseq
    %v4588 = vshrl.u32 %v4587, 7
    %v4589 = vsub.s32 6, %v4588
    %v4590 = vrot.slane %v2946, %v4589
    %v4591 = vlaneseq
    %v4592 = vshrl.u32 %v4591, 7
    %v4593 = vsub.s32 7, %v4592
    %v4594 = vrot.slane %v2946, %v4593
    %v4595 = vlaneseq
    %v4596 = vshrl.u32 %v4595, 7
    %v4597 = vsub.s32 0, %v4596
    %v4598 = vrot.slane %v2947, %v4597
    %v4599 = vlaneseq
    %v4600 = vshrl.u32 %v4599, 7
    %v4601 = vsub.s32 1, %v4600
    %v4602 = vrot.slane %v2947, %v4601
    %v4603 = vlaneseq
    %v4604 = vshrl.u32 %v4603, 7
    %v4605 = vsub.s32 2, %v4604
    %v4606 = vrot.slane %v2947, %v4605
    %v4607 = vlaneseq
    %v4608 = vshrl.u32 %v4607, 7
    %v4609 = vsub.s32 3, %v4608
    %v4610 = vrot.slane %v2947, %v4609
    %v4611 = vlaneseq
    %v4612 = vshrl.u32 %v4611, 7
    %v4613 = vsub.s32 4, %v4612
    %v4614 = vrot.slane %v2947, %v4613
    %v4615 = vlaneseq
    %v4616 = vshrl.u32 %v4615, 7
    %v4617 = vsub.s32 5, %v4616
    %v4618 = vrot.slane %v2947, %v4617
    %v4619 = vlaneseq
    %v4620 = vshrl.u32 %v4619, 7
    %v4621 = vsub.s32 6, %v4620
    %v4622 = vrot.slane %v2947, %v4621
    %v4623 = vlaneseq
    %v4624 = vshrl.u32 %v4623, 7
    %v4625 = vsub.s32 7, %v4624
    %v4626 = vrot.slane %v2947, %v4625
    %v4627 = vlaneseq
    %v4628 = vshrl.u32 %v4627, 7
    %v4629 = vsub.s32 0, %v4628
    %v4630 = vrot.slane %v2948, %v4629
    %v4631 = vlaneseq
    %v4632 = vshrl.u32 %v4631, 7
    %v4633 = vsub.s32 1, %v4632
    %v4634 = vrot.slane %v2948, %v4633
    %v4635 = vlaneseq
    %v4636 = vshrl.u32 %v4635, 7
    %v4637 = vsub.s32 2, %v4636
    %v4638 = vrot.slane %v2948, %v4637
    %v4639 = vlaneseq
    %v4640 = vshrl.u32 %v4639, 7
    %v4641 = vsub.s32 3, %v4640
    %v4642 = vrot.slane %v2948, %v4641
    %v4643 = vlaneseq
    %v4644 = vshrl.u32 %v4643, 7
    %v4645 = vsub.s32 4, %v4644
    %v4646 = vrot.slane %v2948, %v4645
    %v4647 = vlaneseq
    %v4648 = vshrl.u32 %v4647, 7
    %v4649 = vsub.s32 5, %v4648
    %v4650 = vrot.slane %v2948, %v4649
    %v4651 = vlaneseq
    %v4652 = vshrl.u32 %v4651, 7
    %v4653 = vsub.s32 6, %v4652
    %v4654 = vrot.slane %v2948, %v4653
    %v4655 = vlaneseq
    %v4656 = vshrl.u32 %v4655, 7
    %v4657 = vsub.s32 7, %v4656
    %v4658 = vrot.slane %v2948, %v4657
    %v4659 = vlaneseq
    %v4660 = vshrl.u32 %v4659, 7
    %v4661 = vsub.s32 0, %v4660
    %v4662 = vrot.slane %v2949, %v4661
    %v4663 = vlaneseq
    %v4664 = vshrl.u32 %v4663, 7
    %v4665 = vsub.s32 1, %v4664
    %v4666 = vrot.slane %v2949, %v4665
    %v4667 = vlaneseq
    %v4668 = vshrl.u32 %v4667, 7
    %v4669 = vsub.s32 2, %v4668
    %v4670 = vrot.slane %v2949, %v4669
    %v4671 = vlaneseq
    %v4672 = vshrl.u32 %v4671, 7
    %v4673 = vsub.s32 3, %v4672
    %v4674 = vrot.slane %v2949, %v4673
    %v4675 = vlaneseq
    %v4676 = vshrl.u32 %v4675, 7
    %v4677 = vsub.s32 4, %v4676
    %v4678 = vrot.slane %v2949, %v4677
    %v4679 = vlaneseq
    %v4680 = vshrl.u32 %v4679, 7
    %v4681 = vsub.s32 5, %v4680
    %v4682 = vrot.slane %v2949, %v4681
    %v4683 = vlaneseq
    %v4684 = vshrl.u32 %v4683, 7
    %v4685 = vsub.s32 6, %v4684
    %v4686 = vrot.slane %v2949, %v4685
    %v4687 = vlaneseq
    %v4688 = vshrl.u32 %v4687, 7
    %v4689 = vsub.s32 7, %v4688
    %v4690 = vrot.slane %v2949, %v4689
    %v4691 = vlaneseq
    %v4692 = vshrl.u32 %v4691, 7
    %v4693 = vsub.s32 0, %v4692
    %v4694 = vrot.slane %v2950, %v4693
    %v4695 = vlaneseq
    %v4696 = vshrl.u32 %v4695, 7
    %v4697 = vsub.s32 1, %v4696
    %v4698 = vrot.slane %v2950, %v4697
    %v4699 = vlaneseq
    %v4700 = vshrl.u32 %v4699, 7
    %v4701 = vsub.s32 2, %v4700
    %v4702 = vrot.slane %v2950, %v4701
    %v4703 = vlaneseq
    %v4704 = vshrl.u32 %v4703, 7
    %v4705 = vsub.s32 3, %v4704
    %v4706 = vrot.slane %v2950, %v4705
    %v4707 = vlaneseq
    %v4708 = vshrl.u32 %v4707, 7
    %v4709 = vsub.s32 4, %v4708
    %v4710 = vrot.slane %v2950, %v4709
    %v4711 = vlaneseq
    %v4712 = vshrl.u32 %v4711, 7
    %v4713 = vsub.s32 5, %v4712
    %v4714 = vrot.slane %v2950, %v4713
    %v4715 = vlaneseq
    %v4716 = vshrl.u32 %v4715, 7
    %v4717 = vsub.s32 6, %v4716
    %v4718 = vrot.slane %v2950, %v4717
    %v4719 = vlaneseq
    %v4720 = vshrl.u32 %v4719, 7
    %v4721 = vsub.s32 7, %v4720
    %v4722 = vrot.slane %v2950, %v4721
    %v4723 = vlaneseq
    %v4724 = vshrl.u32 %v4723, 7
    %v4725 = vsub.s32 0, %v4724
    %v4726 = vrot.slane %v2951, %v4725
    %v4727 = vlaneseq
    %v4728 = vshrl.u32 %v4727, 7
    %v4729 = vsub.s32 1, %v4728
    %v4730 = vrot.slane %v2951, %v4729
    %v4731 = vlaneseq
    %v4732 = vshrl.u32 %v4731, 7
    %v4733 = vsub.s32 2, %v4732
    %v4734 = vrot.slane %v2951, %v4733
    %v4735 = vlaneseq
    %v4736 = vshrl.u32 %v4735, 7
    %v4737 = vsub.s32 3, %v4736
    %v4738 = vrot.slane %v2951, %v4737
    %v4739 = vlaneseq
    %v4740 = vshrl.u32 %v4739, 7
    %v4741 = vsub.s32 4, %v4740
    %v4742 = vrot.slane %v2951, %v4741
    %v4743 = vlaneseq
    %v4744 = vshrl.u32 %v4743, 7
    %v4745 = vsub.s32 5, %v4744
    %v4746 = vrot.slane %v2951, %v4745
    %v4747 = vlaneseq
    %v4748 = vshrl.u32 %v4747, 7
    %v4749 = vsub.s32 6, %v4748
    %v4750 = vrot.slane %v2951, %v4749
    %v4751 = vlaneseq
    %v4752 = vshrl.u32 %v4751, 7
    %v4753 = vsub.s32 7, %v4752
    %v4754 = vrot.slane %v2951, %v4753
    %v4755 = vlaneseq
    %v4756 = vshrl.u32 %v4755, 7
    %v4757 = vsub.s32 0, %v4756
    %v4758 = vrot.slane %v2952, %v4757
    %v4759 = vlaneseq
    %v4760 = vshrl.u32 %v4759, 7
    %v4761 = vsub.s32 1, %v4760
    %v4762 = vrot.slane %v2952, %v4761
    %v4763 = vlaneseq
    %v4764 = vshrl.u32 %v4763, 7
    %v4765 = vsub.s32 2, %v4764
    %v4766 = vrot.slane %v2952, %v4765
    %v4767 = vlaneseq
    %v4768 = vshrl.u32 %v4767, 7
    %v4769 = vsub.s32 3, %v4768
    %v4770 = vrot.slane %v2952, %v4769
    %v4771 = vlaneseq
    %v4772 = vshrl.u32 %v4771, 7
    %v4773 = vsub.s32 4, %v4772
    %v4774 = vrot.slane %v2952, %v4773
    %v4775 = vlaneseq
    %v4776 = vshrl.u32 %v4775, 7
    %v4777 = vsub.s32 5, %v4776
    %v4778 = vrot.slane %v2952, %v4777
    %v4779 = vlaneseq
    %v4780 = vshrl.u32 %v4779, 7
    %v4781 = vsub.s32 6, %v4780
    %v4782 = vrot.slane %v2952, %v4781
    %v4783 = vlaneseq
    %v4784 = vshrl.u32 %v4783, 7
    %v4785 = vsub.s32 7, %v4784
    %v4786 = vrot.slane %v2952, %v4785
    %v4787 = vlaneseq
    %v4788 = vshrl.u32 %v4787, 7
    %v4789 = vsub.s32 0, %v4788
    %v4790 = vrot.slane %v2953, %v4789
    %v4791 = vlaneseq
    %v4792 = vshrl.u32 %v4791, 7
    %v4793 = vsub.s32 1, %v4792
    %v4794 = vrot.slane %v2953, %v4793
    %v4795 = vlaneseq
    %v4796 = vshrl.u32 %v4795, 7
    %v4797 = vsub.s32 2, %v4796
    %v4798 = vrot.slane %v2953, %v4797
    %v4799 = vlaneseq
    %v4800 = vshrl.u32 %v4799, 7
    %v4801 = vsub.s32 3, %v4800
    %v4802 = vrot.slane %v2953, %v4801
    %v4803 = vlaneseq
    %v4804 = vshrl.u32 %v4803, 7
    %v4805 = vsub.s32 4, %v4804
    %v4806 = vrot.slane %v2953, %v4805
    %v4807 = vlaneseq
    %v4808 = vshrl.u32 %v4807, 7
    %v4809 = vsub.s32 5, %v4808
    %v4810 = vrot.slane %v2953, %v4809
    %v4811 = vlaneseq
    %v4812 = vshrl.u32 %v4811, 7
    %v4813 = vsub.s32 6, %v4812
    %v4814 = vrot.slane %v2953, %v4813
    %v4815 = vlaneseq
    %v4816 = vshrl.u32 %v4815, 7
    %v4817 = vsub.s32 7, %v4816
    %v4818 = vrot.slane %v2953, %v4817
    %v4819 = vlaneseq
    %v4820 = vshrl.u32 %v4819, 7
    %v4821 = vsub.s32 0, %v4820
    %v4822 = vrot.slane %v2954, %v4821
    %v4823 = vlaneseq
    %v4824 = vshrl.u32 %v4823, 7
    %v4825 = vsub.s32 1, %v4824
    %v4826 = vrot.slane %v2954, %v4825
    %v4827 = vlaneseq
    %v4828 = vshrl.u32 %v4827, 7
    %v4829 = vsub.s32 2, %v4828
    %v4830 = vrot.slane %v2954, %v4829
    %v4831 = vlaneseq
    %v4832 = vshrl.u32 %v4831, 7
    %v4833 = vsub.s32 3, %v4832
    %v4834 = vrot.slane %v2954, %v4833
    %v4835 = vlaneseq
    %v4836 = vshrl.u32 %v4835, 7
    %v4837 = vsub.s32 4, %v4836
    %v4838 = vrot.slane %v2954, %v4837
    %v4839 = vlaneseq
    %v4840 = vshrl.u32 %v4839, 7
    %v4841 = vsub.s32 5, %v4840
    %v4842 = vrot.slane %v2954, %v4841
    %v4843 = vlaneseq
    %v4844 = vshrl.u32 %v4843, 7
    %v4845 = vsub.s32 6, %v4844
    %v4846 = vrot.slane %v2954, %v4845
    %v4847 = vlaneseq
    %v4848 = vshrl.u32 %v4847, 7
    %v4849 = vsub.s32 7, %v4848
    %v4850 = vrot.slane %v2954, %v4849
    %v4851 = vlaneseq
    %v4852 = vshrl.u32 %v4851, 7
    %v4853 = vsub.s32 0, %v4852
    %v4854 = vrot.slane %v2955, %v4853
    %v4855 = vlaneseq
    %v4856 = vshrl.u32 %v4855, 7
    %v4857 = vsub.s32 1, %v4856
    %v4858 = vrot.slane %v2955, %v4857
    %v4859 = vlaneseq
    %v4860 = vshrl.u32 %v4859, 7
    %v4861 = vsub.s32 2, %v4860
    %v4862 = vrot.slane %v2955, %v4861
    %v4863 = vlaneseq
    %v4864 = vshrl.u32 %v4863, 7
    %v4865 = vsub.s32 3, %v4864
    %v4866 = vrot.slane %v2955, %v4865
    %v4867 = vlaneseq
    %v4868 = vshrl.u32 %v4867, 7
    %v4869 = vsub.s32 4, %v4868
    %v4870 = vrot.slane %v2955, %v4869
    %v4871 = vlaneseq
    %v4872 = vshrl.u32 %v4871, 7
    %v4873 = vsub.s32 5, %v4872
    %v4874 = vrot.slane %v2955, %v4873
    %v4875 = vlaneseq
    %v4876 = vshrl.u32 %v4875, 7
    %v4877 = vsub.s32 6, %v4876
    %v4878 = vrot.slane %v2955, %v4877
    %v4879 = vlaneseq
    %v4880 = vshrl.u32 %v4879, 7
    %v4881 = vsub.s32 7, %v4880
    %v4882 = vrot.slane %v2955, %v4881
    %v4883 = vlaneseq
    %v4884 = vshrl.u32 %v4883, 7
    %v4885 = vsub.s32 0, %v4884
    %v4886 = vrot.slane %v2956, %v4885
    %v4887 = vlaneseq
    %v4888 = vshrl.u32 %v4887, 7
    %v4889 = vsub.s32 1, %v4888
    %v4890 = vrot.slane %v2956, %v4889
    %v4891 = vlaneseq
    %v4892 = vshrl.u32 %v4891, 7
    %v4893 = vsub.s32 2, %v4892
    %v4894 = vrot.slane %v2956, %v4893
    %v4895 = vlaneseq
    %v4896 = vshrl.u32 %v4895, 7
    %v4897 = vsub.s32 3, %v4896
    %v4898 = vrot.slane %v2956, %v4897
    %v4899 = vlaneseq
    %v4900 = vshrl.u32 %v4899, 7
    %v4901 = vsub.s32 4, %v4900
    %v4902 = vrot.slane %v2956, %v4901
    %v4903 = vlaneseq
    %v4904 = vshrl.u32 %v4903, 7
    %v4905 = vsub.s32 5, %v4904
    %v4906 = vrot.slane %v2956, %v4905
    %v4907 = vlaneseq
    %v4908 = vshrl.u32 %v4907, 7
    %v4909 = vsub.s32 6, %v4908
    %v4910 = vrot.slane %v2956, %v4909
    %v4911 = vlaneseq
    %v4912 = vshrl.u32 %v4911, 7
    %v4913 = vsub.s32 7, %v4912
    %v4914 = vrot.slane %v2956, %v4913
    %v4915 = vlaneseq
    %v4916 = vshrl.u32 %v4915, 7
    %v4917 = vsub.s32 0, %v4916
    %v4918 = vrot.slane %v2957, %v4917
    %v4919 = vlaneseq
    %v4920 = vshrl.u32 %v4919, 7
    %v4921 = vsub.s32 1, %v4920
    %v4922 = vrot.slane %v2957, %v4921
    %v4923 = vlaneseq
    %v4924 = vshrl.u32 %v4923, 7
    %v4925 = vsub.s32 2, %v4924
    %v4926 = vrot.slane %v2957, %v4925
    %v4927 = vlaneseq
    %v4928 = vshrl.u32 %v4927, 7
    %v4929 = vsub.s32 3, %v4928
    %v4930 = vrot.slane %v2957, %v4929
    %v4931 = vlaneseq
    %v4932 = vshrl.u32 %v4931, 7
    %v4933 = vsub.s32 4, %v4932
    %v4934 = vrot.slane %v2957, %v4933
    %v4935 = vlaneseq
    %v4936 = vshrl.u32 %v4935, 7
    %v4937 = vsub.s32 5, %v4936
    %v4938 = vrot.slane %v2957, %v4937
    %v4939 = vlaneseq
    %v4940 = vshrl.u32 %v4939, 7
    %v4941 = vsub.s32 6, %v4940
    %v4942 = vrot.slane %v2957, %v4941
    %v4943 = vlaneseq
    %v4944 = vshrl.u32 %v4943, 7
    %v4945 = vsub.s32 7, %v4944
    %v4946 = vrot.slane %v2957, %v4945
    %v4947 = vlaneseq
    %v4948 = vshrl.u32 %v4947, 7
    %v4949 = vsub.s32 0, %v4948
    %v4950 = vrot.slane %v2958, %v4949
    %v4951 = vlaneseq
    %v4952 = vshrl.u32 %v4951, 7
    %v4953 = vsub.s32 1, %v4952
    %v4954 = vrot.slane %v2958, %v4953
    %v4955 = vlaneseq
    %v4956 = vshrl.u32 %v4955, 7
    %v4957 = vsub.s32 2, %v4956
    %v4958 = vrot.slane %v2958, %v4957
    %v4959 = vlaneseq
    %v4960 = vshrl.u32 %v4959, 7
    %v4961 = vsub.s32 3, %v4960
    %v4962 = vrot.slane %v2958, %v4961
    %v4963 = vlaneseq
    %v4964 = vshrl.u32 %v4963, 7
    %v4965 = vsub.s32 4, %v4964
    %v4966 = vrot.slane %v2958, %v4965
    %v4967 = vlaneseq
    %v4968 = vshrl.u32 %v4967, 7
    %v4969 = vsub.s32 5, %v4968
    %v4970 = vrot.slane %v2958, %v4969
    %v4971 = vlaneseq
    %v4972 = vshrl.u32 %v4971, 7
    %v4973 = vsub.s32 6, %v4972
    %v4974 = vrot.slane %v2958, %v4973
    %v4975 = vlaneseq
    %v4976 = vshrl.u32 %v4975, 7
    %v4977 = vsub.s32 7, %v4976
    %v4978 = vrot.slane %v2958, %v4977
    %v4979 = vlaneseq
    %v4980 = vshrl.u32 %v4979, 7
    %v4981 = vsub.s32 0, %v4980
    %v4982 = vrot.slane %v2959, %v4981
    %v4983 = vlaneseq
    %v4984 = vshrl.u32 %v4983, 7
    %v4985 = vsub.s32 1, %v4984
    %v4986 = vrot.slane %v2959, %v4985
    %v4987 = vlaneseq
    %v4988 = vshrl.u32 %v4987, 7
    %v4989 = vsub.s32 2, %v4988
    %v4990 = vrot.slane %v2959, %v4989
    %v4991 = vlaneseq
    %v4992 = vshrl.u32 %v4991, 7
    %v4993 = vsub.s32 3, %v4992
    %v4994 = vrot.slane %v2959, %v4993
    %v4995 = vlaneseq
    %v4996 = vshrl.u32 %v4995, 7
    %v4997 = vsub.s32 4, %v4996
    %v4998 = vrot.slane %v2959, %v4997
    %v4999 = vlaneseq
    %v5000 = vshrl.u32 %v4999, 7
    %v5001 = vsub.s32 5, %v5000
    %v5002 = vrot.slane %v2959, %v5001
    %v5003 = vlaneseq
    %v5004 = vshrl.u32 %v5003, 7
    %v5005 = vsub.s32 6, %v5004
    %v5006 = vrot.slane %v2959, %v5005
    %v5007 = vlaneseq
    %v5008 = vshrl.u32 %v5007, 7
    %v5009 = vsub.s32 7, %v5008
    %v5010 = vrot.slane %v2959, %v5009
    %v5011 = vlaneseq
    %v5012 = vshrl.u32 %v5011, 7
    %v5013 = vsub.s32 0, %v5012
    %v5014 = vrot.slane %v2960, %v5013
    %v5015 = vlaneseq
    %v5016 = vshrl.u32 %v5015, 7
    %v5017 = vsub.s32 1, %v5016
    %v5018 = vrot.slane %v2960, %v5017
    %v5019 = vlaneseq
    %v5020 = vshrl.u32 %v5019, 7
    %v5021 = vsub.s32 2, %v5020
    %v5022 = vrot.slane %v2960, %v5021
    %v5023 = vlaneseq
    %v5024 = vshrl.u32 %v5023, 7
    %v5025 = vsub.s32 3, %v5024
    %v5026 = vrot.slane %v2960, %v5025
    %v5027 = vlaneseq
    %v5028 = vshrl.u32 %v5027, 7
    %v5029 = vsub.s32 4, %v5028
    %v5030 = vrot.slane %v2960, %v5029
    %v5031 = vlaneseq
    %v5032 = vshrl.u32 %v5031, 7
    %v5033 = vsub.s32 5, %v5032
    %v5034 = vrot.slane %v2960, %v5033
    %v5035 = vlaneseq
    %v5036 = vshrl.u32 %v5035, 7
    %v5037 = vsub.s32 6, %v5036
    %v5038 = vrot.slane %v2960, %v5037
    %v5039 = vlaneseq
    %v5040 = vshrl.u32 %v5039, 7
    %v5041 = vsub.s32 7, %v5040
    %v5042 = vrot.slane %v2960, %v5041
    %v5043 = vlaneseq
    %v5044 = vshrl.u32 %v5043, 7
    %v5045 = vsub.s32 0, %v5044
    %v5046 = vrot.slane %v2961, %v5045
    %v5047 = vlaneseq
    %v5048 = vshrl.u32 %v5047, 7
    %v5049 = vsub.s32 1, %v5048
    %v5050 = vrot.slane %v2961, %v5049
    %v5051 = vlaneseq
    %v5052 = vshrl.u32 %v5051, 7
    %v5053 = vsub.s32 2, %v5052
    %v5054 = vrot.slane %v2961, %v5053
    %v5055 = vlaneseq
    %v5056 = vshrl.u32 %v5055, 7
    %v5057 = vsub.s32 3, %v5056
    %v5058 = vrot.slane %v2961, %v5057
    %v5059 = vlaneseq
    %v5060 = vshrl.u32 %v5059, 7
    %v5061 = vsub.s32 4, %v5060
    %v5062 = vrot.slane %v2961, %v5061
    %v5063 = vlaneseq
    %v5064 = vshrl.u32 %v5063, 7
    %v5065 = vsub.s32 5, %v5064
    %v5066 = vrot.slane %v2961, %v5065
    %v5067 = vlaneseq
    %v5068 = vshrl.u32 %v5067, 7
    %v5069 = vsub.s32 6, %v5068
    %v5070 = vrot.slane %v2961, %v5069
    %v5071 = vlaneseq
    %v5072 = vshrl.u32 %v5071, 7
    %v5073 = vsub.s32 7, %v5072
    %v5074 = vrot.slane %v2961, %v5073
    %v5075 = vlaneseq
    %v5076 = vshrl.u32 %v5075, 7
    %v5077 = vsub.s32 0, %v5076
    %v5078 = vrot.slane %v2962, %v5077
    %v5079 = vlaneseq
    %v5080 = vshrl.u32 %v5079, 7
    %v5081 = vsub.s32 1, %v5080
    %v5082 = vrot.slane %v2962, %v5081
    %v5083 = vlaneseq
    %v5084 = vshrl.u32 %v5083, 7
    %v5085 = vsub.s32 2, %v5084
    %v5086 = vrot.slane %v2962, %v5085
    %v5087 = vlaneseq
    %v5088 = vshrl.u32 %v5087, 7
    %v5089 = vsub.s32 3, %v5088
    %v5090 = vrot.slane %v2962, %v5089
    %v5091 = vlaneseq
    %v5092 = vshrl.u32 %v5091, 7
    %v5093 = vsub.s32 4, %v5092
    %v5094 = vrot.slane %v2962, %v5093
    %v5095 = vlaneseq
    %v5096 = vshrl.u32 %v5095, 7
    %v5097 = vsub.s32 5, %v5096
    %v5098 = vrot.slane %v2962, %v5097
    %v5099 = vlaneseq
    %v5100 = vshrl.u32 %v5099, 7
    %v5101 = vsub.s32 6, %v5100
    %v5102 = vrot.slane %v2962, %v5101
    %v5103 = vlaneseq
    %v5104 = vshrl.u32 %v5103, 7
    %v5105 = vsub.s32 7, %v5104
    %v5106 = vrot.slane %v2962, %v5105
    %v5107 = vlaneseq
    %v5108 = vshrl.u32 %v5107, 7
    %v5109 = vsub.s32 0, %v5108
    %v5110 = vrot.slane %v2963, %v5109
    %v5111 = vlaneseq
    %v5112 = vshrl.u32 %v5111, 7
    %v5113 = vsub.s32 1, %v5112
    %v5114 = vrot.slane %v2963, %v5113
    %v5115 = vlaneseq
    %v5116 = vshrl.u32 %v5115, 7
    %v5117 = vsub.s32 2, %v5116
    %v5118 = vrot.slane %v2963, %v5117
    %v5119 = vlaneseq
    %v5120 = vshrl.u32 %v5119, 7
    %v5121 = vsub.s32 3, %v5120
    %v5122 = vrot.slane %v2963, %v5121
    %v5123 = vlaneseq
    %v5124 = vshrl.u32 %v5123, 7
    %v5125 = vsub.s32 4, %v5124
    %v5126 = vrot.slane %v2963, %v5125
    %v5127 = vlaneseq
    %v5128 = vshrl.u32 %v5127, 7
    %v5129 = vsub.s32 5, %v5128
    %v5130 = vrot.slane %v2963, %v5129
    %v5131 = vlaneseq
    %v5132 = vshrl.u32 %v5131, 7
    %v5133 = vsub.s32 6, %v5132
    %v5134 = vrot.slane %v2963, %v5133
    %v5135 = vlaneseq
    %v5136 = vshrl.u32 %v5135, 7
    %v5137 = vsub.s32 7, %v5136
    %v5138 = vrot.slane %v2963, %v5137
    %v5139 = vlaneseq
    %v5140 = vshrl.u32 %v5139, 7
    %v5141 = vsub.s32 0, %v5140
    %v5142 = vrot.slane %v2964, %v5141
    %v5143 = vlaneseq
    %v5144 = vshrl.u32 %v5143, 7
    %v5145 = vsub.s32 1, %v5144
    %v5146 = vrot.slane %v2964, %v5145
    %v5147 = vlaneseq
    %v5148 = vshrl.u32 %v5147, 7
    %v5149 = vsub.s32 2, %v5148
    %v5150 = vrot.slane %v2964, %v5149
    %v5151 = vlaneseq
    %v5152 = vshrl.u32 %v5151, 7
    %v5153 = vsub.s32 3, %v5152
    %v5154 = vrot.slane %v2964, %v5153
    %v5155 = vlaneseq
    %v5156 = vshrl.u32 %v5155, 7
    %v5157 = vsub.s32 4, %v5156
    %v5158 = vrot.slane %v2964, %v5157
    %v5159 = vlaneseq
    %v5160 = vshrl.u32 %v5159, 7
    %v5161 = vsub.s32 5, %v5160
    %v5162 = vrot.slane %v2964, %v5161
    %v5163 = vlaneseq
    %v5164 = vshrl.u32 %v5163, 7
    %v5165 = vsub.s32 6, %v5164
    %v5166 = vrot.slane %v2964, %v5165
    %v5167 = vlaneseq
    %v5168 = vshrl.u32 %v5167, 7
    %v5169 = vsub.s32 7, %v5168
    %v5170 = vrot.slane %v2964, %v5169
    %v5171 = vlaneseq
    %v5172 = vshrl.u32 %v5171, 7
    %v5173 = vsub.s32 0, %v5172
    %v5174 = vrot.slane %v2965, %v5173
    %v5175 = vlaneseq
    %v5176 = vshrl.u32 %v5175, 7
    %v5177 = vsub.s32 1, %v5176
    %v5178 = vrot.slane %v2965, %v5177
    %v5179 = vlaneseq
    %v5180 = vshrl.u32 %v5179, 7
    %v5181 = vsub.s32 2, %v5180
    %v5182 = vrot.slane %v2965, %v5181
    %v5183 = vlaneseq
    %v5184 = vshrl.u32 %v5183, 7
    %v5185 = vsub.s32 3, %v5184
    %v5186 = vrot.slane %v2965, %v5185
    %v5187 = vlaneseq
    %v5188 = vshrl.u32 %v5187, 7
    %v5189 = vsub.s32 4, %v5188
    %v5190 = vrot.slane %v2965, %v5189
    %v5191 = vlaneseq
    %v5192 = vshrl.u32 %v5191, 7
    %v5193 = vsub.s32 5, %v5192
    %v5194 = vrot.slane %v2965, %v5193
    %v5195 = vlaneseq
    %v5196 = vshrl.u32 %v5195, 7
    %v5197 = vsub.s32 6, %v5196
    %v5198 = vrot.slane %v2965, %v5197
    %v5199 = vlaneseq
    %v5200 = vshrl.u32 %v5199, 7
    %v5201 = vsub.s32 7, %v5200
    %v5202 = vrot.slane %v2965, %v5201
    %v5203 = vlaneseq
    %v5204 = vshrl.u32 %v5203, 7
    %v5205 = vsub.s32 0, %v5204
    %v5206 = vrot.slane %v2966, %v5205
    %v5207 = vlaneseq
    %v5208 = vshrl.u32 %v5207, 7
    %v5209 = vsub.s32 1, %v5208
    %v5210 = vrot.slane %v2966, %v5209
    %v5211 = vlaneseq
    %v5212 = vshrl.u32 %v5211, 7
    %v5213 = vsub.s32 2, %v5212
    %v5214 = vrot.slane %v2966, %v5213
    %v5215 = vlaneseq
    %v5216 = vshrl.u32 %v5215, 7
    %v5217 = vsub.s32 3, %v5216
    %v5218 = vrot.slane %v2966, %v5217
    %v5219 = vlaneseq
    %v5220 = vshrl.u32 %v5219, 7
    %v5221 = vsub.s32 4, %v5220
    %v5222 = vrot.slane %v2966, %v5221
    %v5223 = vlaneseq
    %v5224 = vshrl.u32 %v5223, 7
    %v5225 = vsub.s32 5, %v5224
    %v5226 = vrot.slane %v2966, %v5225
    %v5227 = vlaneseq
    %v5228 = vshrl.u32 %v5227, 7
    %v5229 = vsub.s32 6, %v5228
    %v5230 = vrot.slane %v2966, %v5229
    %v5231 = vlaneseq
    %v5232 = vshrl.u32 %v5231, 7
    %v5233 = vsub.s32 7, %v5232
    %v5234 = vrot.slane %v2966, %v5233
    %v5235 = vlaneseq
    %v5236 = vshrl.u32 %v5235, 7
    %v5237 = vsub.s32 0, %v5236
    %v5238 = vrot.slane %v2967, %v5237
    %v5239 = vlaneseq
    %v5240 = vshrl.u32 %v5239, 7
    %v5241 = vsub.s32 1, %v5240
    %v5242 = vrot.slane %v2967, %v5241
    %v5243 = vlaneseq
    %v5244 = vshrl.u32 %v5243, 7
    %v5245 = vsub.s32 2, %v5244
    %v5246 = vrot.slane %v2967, %v5245
    %v5247 = vlaneseq
    %v5248 = vshrl.u32 %v5247, 7
    %v5249 = vsub.s32 3, %v5248
    %v5250 = vrot.slane %v2967, %v5249
    %v5251 = vlaneseq
    %v5252 = vshrl.u32 %v5251, 7
    %v5253 = vsub.s32 4, %v5252
    %v5254 = vrot.slane %v2967, %v5253
    %v5255 = vlaneseq
    %v5256 = vshrl.u32 %v5255, 7
    %v5257 = vsub.s32 5, %v5256
    %v5258 = vrot.slane %v2967, %v5257
    %v5259 = vlaneseq
    %v5260 = vshrl.u32 %v5259, 7
    %v5261 = vsub.s32 6, %v5260
    %v5262 = vrot.slane %v2967, %v5261
    %v5263 = vlaneseq
    %v5264 = vshrl.u32 %v5263, 7
    %v5265 = vsub.s32 7, %v5264
    %v5266 = vrot.slane %v2967, %v5265
    %v5267 = vlaneseq
    %v5268 = vshrl.u32 %v5267, 7
    %v5269 = vsub.s32 0, %v5268
    %v5270 = vrot.slane %v2968, %v5269
    %v5271 = vlaneseq
    %v5272 = vshrl.u32 %v5271, 7
    %v5273 = vsub.s32 1, %v5272
    %v5274 = vrot.slane %v2968, %v5273
    %v5275 = vlaneseq
    %v5276 = vshrl.u32 %v5275, 7
    %v5277 = vsub.s32 2, %v5276
    %v5278 = vrot.slane %v2968, %v5277
    %v5279 = vlaneseq
    %v5280 = vshrl.u32 %v5279, 7
    %v5281 = vsub.s32 3, %v5280
    %v5282 = vrot.slane %v2968, %v5281
    %v5283 = vlaneseq
    %v5284 = vshrl.u32 %v5283, 7
    %v5285 = vsub.s32 4, %v5284
    %v5286 = vrot.slane %v2968, %v5285
    %v5287 = vlaneseq
    %v5288 = vshrl.u32 %v5287, 7
    %v5289 = vsub.s32 5, %v5288
    %v5290 = vrot.slane %v2968, %v5289
    %v5291 = vlaneseq
    %v5292 = vshrl.u32 %v5291, 7
    %v5293 = vsub.s32 6, %v5292
    %v5294 = vrot.slane %v2968, %v5293
    %v5295 = vlaneseq
    %v5296 = vshrl.u32 %v5295, 7
    %v5297 = vsub.s32 7, %v5296
    %v5298 = vrot.slane %v2968, %v5297
    %v5299 = vlaneseq
    %v5300 = vshrl.u32 %v5299, 7
    %v5301 = vsub.s32 0, %v5300
    %v5302 = vrot.slane %v2969, %v5301
    %v5303 = vlaneseq
    %v5304 = vshrl.u32 %v5303, 7
    %v5305 = vsub.s32 1, %v5304
    %v5306 = vrot.slane %v2969, %v5305
    %v5307 = vlaneseq
    %v5308 = vshrl.u32 %v5307, 7
    %v5309 = vsub.s32 2, %v5308
    %v5310 = vrot.slane %v2969, %v5309
    %v5311 = vlaneseq
    %v5312 = vshrl.u32 %v5311, 7
    %v5313 = vsub.s32 3, %v5312
    %v5314 = vrot.slane %v2969, %v5313
    %v5315 = vlaneseq
    %v5316 = vshrl.u32 %v5315, 7
    %v5317 = vsub.s32 4, %v5316
    %v5318 = vrot.slane %v2969, %v5317
    %v5319 = vlaneseq
    %v5320 = vshrl.u32 %v5319, 7
    %v5321 = vsub.s32 5, %v5320
    %v5322 = vrot.slane %v2969, %v5321
    %v5323 = vlaneseq
    %v5324 = vshrl.u32 %v5323, 7
    %v5325 = vsub.s32 6, %v5324
    %v5326 = vrot.slane %v2969, %v5325
    %v5327 = vlaneseq
    %v5328 = vshrl.u32 %v5327, 7
    %v5329 = vsub.s32 7, %v5328
    %v5330 = vrot.slane %v2969, %v5329
    %v5331 = vlaneseq
    %v5332 = vshrl.u32 %v5331, 7
    %v5333 = vsub.s32 0, %v5332
    %v5334 = vrot.slane %v2970, %v5333
    %v5335 = vlaneseq
    %v5336 = vshrl.u32 %v5335, 7
    %v5337 = vsub.s32 1, %v5336
    %v5338 = vrot.slane %v2970, %v5337
    %v5339 = vlaneseq
    %v5340 = vshrl.u32 %v5339, 7
    %v5341 = vsub.s32 2, %v5340
    %v5342 = vrot.slane %v2970, %v5341
    %v5343 = vlaneseq
    %v5344 = vshrl.u32 %v5343, 7
    %v5345 = vsub.s32 3, %v5344
    %v5346 = vrot.slane %v2970, %v5345
    %v5347 = vlaneseq
    %v5348 = vshrl.u32 %v5347, 7
    %v5349 = vsub.s32 4, %v5348
    %v5350 = vrot.slane %v2970, %v5349
    %v5351 = vlaneseq
    %v5352 = vshrl.u32 %v5351, 7
    %v5353 = vsub.s32 5, %v5352
    %v5354 = vrot.slane %v2970, %v5353
    %v5355 = vlaneseq
    %v5356 = vshrl.u32 %v5355, 7
    %v5357 = vsub.s32 6, %v5356
    %v5358 = vrot.slane %v2970, %v5357
    %v5359 = vlaneseq
    %v5360 = vshrl.u32 %v5359, 7
    %v5361 = vsub.s32 7, %v5360
    %v5362 = vrot.slane %v2970, %v5361
    %v5363 = vlaneseq
    %v5364 = vshrl.u32 %v5363, 7
    %v5365 = vsub.s32 0, %v5364
    %v5366 = vrot.slane %v2971, %v5365
    %v5367 = vlaneseq
    %v5368 = vshrl.u32 %v5367, 7
    %v5369 = vsub.s32 1, %v5368
    %v5370 = vrot.slane %v2971, %v5369
    %v5371 = vlaneseq
    %v5372 = vshrl.u32 %v5371, 7
    %v5373 = vsub.s32 2, %v5372
    %v5374 = vrot.slane %v2971, %v5373
    %v5375 = vlaneseq
    %v5376 = vshrl.u32 %v5375, 7
    %v5377 = vsub.s32 3, %v5376
    %v5378 = vrot.slane %v2971, %v5377
    %v5379 = vlaneseq
    %v5380 = vshrl.u32 %v5379, 7
    %v5381 = vsub.s32 4, %v5380
    %v5382 = vrot.slane %v2971, %v5381
    %v5383 = vlaneseq
    %v5384 = vshrl.u32 %v5383, 7
    %v5385 = vsub.s32 5, %v5384
    %v5386 = vrot.slane %v2971, %v5385
    %v5387 = vlaneseq
    %v5388 = vshrl.u32 %v5387, 7
    %v5389 = vsub.s32 6, %v5388
    %v5390 = vrot.slane %v2971, %v5389
    %v5391 = vlaneseq
    %v5392 = vshrl.u32 %v5391, 7
    %v5393 = vsub.s32 7, %v5392
    %v5394 = vrot.slane %v2971, %v5393
    %v5395 = vlaneseq
    %v5396 = vshrl.u32 %v5395, 7
    %v5397 = vsub.s32 0, %v5396
    %v5398 = vrot.slane %v2972, %v5397
    %v5399 = vlaneseq
    %v5400 = vshrl.u32 %v5399, 7
    %v5401 = vsub.s32 1, %v5400
    %v5402 = vrot.slane %v2972, %v5401
    %v5403 = vlaneseq
    %v5404 = vshrl.u32 %v5403, 7
    %v5405 = vsub.s32 2, %v5404
    %v5406 = vrot.slane %v2972, %v5405
    %v5407 = vlaneseq
    %v5408 = vshrl.u32 %v5407, 7
    %v5409 = vsub.s32 3, %v5408
    %v5410 = vrot.slane %v2972, %v5409
    %v5411 = vlaneseq
    %v5412 = vshrl.u32 %v5411, 7
    %v5413 = vsub.s32 4, %v5412
    %v5414 = vrot.slane %v2972, %v5413
    %v5415 = vlaneseq
    %v5416 = vshrl.u32 %v5415, 7
    %v5417 = vsub.s32 5, %v5416
    %v5418 = vrot.slane %v2972, %v5417
    %v5419 = vlaneseq
    %v5420 = vshrl.u32 %v5419, 7
    %v5421 = vsub.s32 6, %v5420
    %v5422 = vrot.slane %v2972, %v5421
    %v5423 = vlaneseq
    %v5424 = vshrl.u32 %v5423, 7
    %v5425 = vsub.s32 7, %v5424
    %v5426 = vrot.slane %v2972, %v5425
    %v5427 = vlaneseq
    %v5428 = vshrl.u32 %v5427, 7
    %v5429 = vsub.s32 0, %v5428
    %v5430 = vrot.slane %v2973, %v5429
    %v5431 = vlaneseq
    %v5432 = vshrl.u32 %v5431, 7
    %v5433 = vsub.s32 1, %v5432
    %v5434 = vrot.slane %v2973, %v5433
    %v5435 = vlaneseq
    %v5436 = vshrl.u32 %v5435, 7
    %v5437 = vsub.s32 2, %v5436
    %v5438 = vrot.slane %v2973, %v5437
    %v5439 = vlaneseq
    %v5440 = vshrl.u32 %v5439, 7
    %v5441 = vsub.s32 3, %v5440
    %v5442 = vrot.slane %v2973, %v5441
    %v5443 = vlaneseq
    %v5444 = vshrl.u32 %v5443, 7
    %v5445 = vsub.s32 4, %v5444
    %v5446 = vrot.slane %v2973, %v5445
    %v5447 = vlaneseq
    %v5448 = vshrl.u32 %v5447, 7
    %v5449 = vsub.s32 5, %v5448
    %v5450 = vrot.slane %v2973, %v5449
    %v5451 = vlaneseq
    %v5452 = vshrl.u32 %v5451, 7
    %v5453 = vsub.s32 6, %v5452
    %v5454 = vrot.slane %v2973, %v5453
    %v5455 = vlaneseq
    %v5456 = vshrl.u32 %v5455, 7
    %v5457 = vsub.s32 7, %v5456
    %v5458 = vrot.slane %v2973, %v5457
    %v5459 = vlaneseq
    %v5460 = vshrl.u32 %v5459, 7
    %v5461 = vsub.s32 0, %v5460
    %v5462 = vrot.slane %v2974, %v5461
    %v5463 = vlaneseq
    %v5464 = vshrl.u32 %v5463, 7
    %v5465 = vsub.s32 1, %v5464
    %v5466 = vrot.slane %v2974, %v5465
    %v5467 = vlaneseq
    %v5468 = vshrl.u32 %v5467, 7
    %v5469 = vsub.s32 2, %v5468
    %v5470 = vrot.slane %v2974, %v5469
    %v5471 = vlaneseq
    %v5472 = vshrl.u32 %v5471, 7
    %v5473 = vsub.s32 3, %v5472
    %v5474 = vrot.slane %v2974, %v5473
    %v5475 = vlaneseq
    %v5476 = vshrl.u32 %v5475, 7
    %v5477 = vsub.s32 4, %v5476
    %v5478 = vrot.slane %v2974, %v5477
    %v5479 = vlaneseq
    %v5480 = vshrl.u32 %v5479, 7
    %v5481 = vsub.s32 5, %v5480
    %v5482 = vrot.slane %v2974, %v5481
    %v5483 = vlaneseq
    %v5484 = vshrl.u32 %v5483, 7
    %v5485 = vsub.s32 6, %v5484
    %v5486 = vrot.slane %v2974, %v5485
    %v5487 = vlaneseq
    %v5488 = vshrl.u32 %v5487, 7
    %v5489 = vsub.s32 7, %v5488
    %v5490 = vrot.slane %v2974, %v5489
    %v5491 = vlaneseq
    %v5492 = vshrl.u32 %v5491, 7
    %v5493 = vsub.s32 0, %v5492
    %v5494 = vrot.slane %v2975, %v5493
    %v5495 = vlaneseq
    %v5496 = vshrl.u32 %v5495, 7
    %v5497 = vsub.s32 1, %v5496
    %v5498 = vrot.slane %v2975, %v5497
    %v5499 = vlaneseq
    %v5500 = vshrl.u32 %v5499, 7
    %v5501 = vsub.s32 2, %v5500
    %v5502 = vrot.slane %v2975, %v5501
    %v5503 = vlaneseq
    %v5504 = vshrl.u32 %v5503, 7
    %v5505 = vsub.s32 3, %v5504
    %v5506 = vrot.slane %v2975, %v5505
    %v5507 = vlaneseq
    %v5508 = vshrl.u32 %v5507, 7
    %v5509 = vsub.s32 4, %v5508
    %v5510 = vrot.slane %v2975, %v5509
    %v5511 = vlaneseq
    %v5512 = vshrl.u32 %v5511, 7
    %v5513 = vsub.s32 5, %v5512
    %v5514 = vrot.slane %v2975, %v5513
    %v5515 = vlaneseq
    %v5516 = vshrl.u32 %v5515, 7
    %v5517 = vsub.s32 6, %v5516
    %v5518 = vrot.slane %v2975, %v5517
    %v5519 = vlaneseq
    %v5520 = vshrl.u32 %v5519, 7
    %v5521 = vsub.s32 7, %v5520
    %v5522 = vrot.slane %v2975, %v5521
    %v5523 = vlaneseq
    %v5524 = vshrl.u32 %v5523, 7
    %v5525 = vsub.s32 0, %v5524
    %v5526 = vrot.slane %v2976, %v5525
    %v5527 = vlaneseq
    %v5528 = vshrl.u32 %v5527, 7
    %v5529 = vsub.s32 1, %v5528
    %v5530 = vrot.slane %v2976, %v5529
    %v5531 = vlaneseq
    %v5532 = vshrl.u32 %v5531, 7
    %v5533 = vsub.s32 2, %v5532
    %v5534 = vrot.slane %v2976, %v5533
    %v5535 = vlaneseq
    %v5536 = vshrl.u32 %v5535, 7
    %v5537 = vsub.s32 3, %v5536
    %v5538 = vrot.slane %v2976, %v5537
    %v5539 = vlaneseq
    %v5540 = vshrl.u32 %v5539, 7
    %v5541 = vsub.s32 4, %v5540
    %v5542 = vrot.slane %v2976, %v5541
    %v5543 = vlaneseq
    %v5544 = vshrl.u32 %v5543, 7
    %v5545 = vsub.s32 5, %v5544
    %v5546 = vrot.slane %v2976, %v5545
    %v5547 = vlaneseq
    %v5548 = vshrl.u32 %v5547, 7
    %v5549 = vsub.s32 6, %v5548
    %v5550 = vrot.slane %v2976, %v5549
    %v5551 = vlaneseq
    %v5552 = vshrl.u32 %v5551, 7
    %v5553 = vsub.s32 7, %v5552
    %v5554 = vrot.slane %v2976, %v5553
    %v5555 = vlaneseq
    %v5556 = vshrl.u32 %v5555, 7
    %v5557 = vsub.s32 0, %v5556
    %v5558 = vrot.slane %v2977, %v5557
    %v5559 = vlaneseq
    %v5560 = vshrl.u32 %v5559, 7
    %v5561 = vsub.s32 1, %v5560
    %v5562 = vrot.slane %v2977, %v5561
    %v5563 = vlaneseq
    %v5564 = vshrl.u32 %v5563, 7
    %v5565 = vsub.s32 2, %v5564
    %v5566 = vrot.slane %v2977, %v5565
    %v5567 = vlaneseq
    %v5568 = vshrl.u32 %v5567, 7
    %v5569 = vsub.s32 3, %v5568
    %v5570 = vrot.slane %v2977, %v5569
    %v5571 = vlaneseq
    %v5572 = vshrl.u32 %v5571, 7
    %v5573 = vsub.s32 4, %v5572
    %v5574 = vrot.slane %v2977, %v5573
    %v5575 = vlaneseq
    %v5576 = vshrl.u32 %v5575, 7
    %v5577 = vsub.s32 5, %v5576
    %v5578 = vrot.slane %v2977, %v5577
    %v5579 = vlaneseq
    %v5580 = vshrl.u32 %v5579, 7
    %v5581 = vsub.s32 6, %v5580
    %v5582 = vrot.slane %v2977, %v5581
    %v5583 = vlaneseq
    %v5584 = vshrl.u32 %v5583, 7
    %v5585 = vsub.s32 7, %v5584
    %v5586 = vrot.slane %v2977, %v5585
    %v5587 = vlaneseq
    %v5588 = vshrl.u32 %v5587, 7
    %v5589 = vsub.s32 0, %v5588
    %v5590 = vrot.slane %v2978, %v5589
    %v5591 = vlaneseq
    %v5592 = vshrl.u32 %v5591, 7
    %v5593 = vsub.s32 1, %v5592
    %v5594 = vrot.slane %v2978, %v5593
    %v5595 = vlaneseq
    %v5596 = vshrl.u32 %v5595, 7
    %v5597 = vsub.s32 2, %v5596
    %v5598 = vrot.slane %v2978, %v5597
    %v5599 = vlaneseq
    %v5600 = vshrl.u32 %v5599, 7
    %v5601 = vsub.s32 3, %v5600
    %v5602 = vrot.slane %v2978, %v5601
    %v5603 = vlaneseq
    %v5604 = vshrl.u32 %v5603, 7
    %v5605 = vsub.s32 4, %v5604
    %v5606 = vrot.slane %v2978, %v5605
    %v5607 = vlaneseq
    %v5608 = vshrl.u32 %v5607, 7
    %v5609 = vsub.s32 5, %v5608
    %v5610 = vrot.slane %v2978, %v5609
    %v5611 = vlaneseq
    %v5612 = vshrl.u32 %v5611, 7
    %v5613 = vsub.s32 6, %v5612
    %v5614 = vrot.slane %v2978, %v5613
    %v5615 = vlaneseq
    %v5616 = vshrl.u32 %v5615, 7
    %v5617 = vsub.s32 7, %v5616
    %v5618 = vrot.slane %v2978, %v5617
    %v5619 = vcombine.low %v3062, %v3066
    %v5620 = vcombine.low %v3070, %v3074
    %v5621 = vcombine.low %v3078, %v3082
    %v5622 = vcombine.low %v3086, %v3090
    %v5624 = vunpack.c.l.s4 1966171168
    %v5625 = vunpack.c.0.s8 %v5624
    %v5626 = vlaneseq
    %v5627 = vshrl.u32 %v5626, 7
    %v5628 = vsub.s32 %v5625, %v5627
    %v5629 = vrot.slane %v5619, %v5628
    %v5631 = vunpack.c.l.s4 1966171168
    %v5632 = vunpack.c.0.s8 %v5631
    %v5633 = vlaneseq
    %v5634 = vshrl.u32 %v5633, 7
    %v5635 = vsub.s32 %v5632, %v5634
    %v5636 = vrot.slane %v5620, %v5635
    %v5638 = vunpack.c.l.s4 1966171168
    %v5639 = vunpack.c.0.s8 %v5638
    %v5640 = vlaneseq
    %v5641 = vshrl.u32 %v5640, 7
    %v5642 = vsub.s32 %v5639, %v5641
    %v5643 = vrot.slane %v5621, %v5642
    %v5645 = vunpack.c.l.s4 1966171168
    %v5646 = vunpack.c.0.s8 %v5645
    %v5647 = vlaneseq
    %v5648 = vshrl.u32 %v5647, 7
    %v5649 = vsub.s32 %v5646, %v5648
    %v5650 = vrot.slane %v5622, %v5649
    %v5651 = vcombine.low %v5629, %v5636
    %v5652 = vcombine.low %v5643, %v5650
    %v5654 = vunpack.c.l.s4 1966171168
    %v5655 = vunpack.c.0.s8 %v5654
    %v5656 = vlaneseq
    %v5657 = vshrl.u32 %v5656, 7
    %v5658 = vsub.s32 %v5655, %v5657
    %v5659 = vrot.slane %v5651, %v5658
    %v5661 = vunpack.c.l.s4 1966171168
    %v5662 = vunpack.c.0.s8 %v5661
    %v5663 = vlaneseq
    %v5664 = vshrl.u32 %v5663, 7
    %v5665 = vsub.s32 %v5662, %v5664
    %v5666 = vrot.slane %v5652, %v5665
    %v5667 = vcombine.low %v5659, %v5666
    %v5668 = vcombine.low %v3094, %v3098
    %v5669 = vcombine.low %v3102, %v3106
    %v5670 = vcombine.low %v3110, %v3114
    %v5671 = vcombine.low %v3118, %v3122
    %v5673 = vunpack.c.l.s4 1966171168
    %v5674 = vunpack.c.0.s8 %v5673
    %v5675 = vlaneseq
    %v5676 = vshrl.u32 %v5675, 7
    %v5677 = vsub.s32 %v5674, %v5676
    %v5678 = vrot.slane %v5668, %v5677
    %v5680 = vunpack.c.l.s4 1966171168
    %v5681 = vunpack.c.0.s8 %v5680
    %v5682 = vlaneseq
    %v5683 = vshrl.u32 %v5682, 7
    %v5684 = vsub.s32 %v5681, %v5683
    %v5685 = vrot.slane %v5669, %v5684
    %v5687 = vunpack.c.l.s4 1966171168
    %v5688 = vunpack.c.0.s8 %v5687
    %v5689 = vlaneseq
    %v5690 = vshrl.u32 %v5689, 7
    %v5691 = vsub.s32 %v5688, %v5690
    %v5692 = vrot.slane %v5670, %v5691
    %v5694 = vunpack.c.l.s4 1966171168
    %v5695 = vunpack.c.0.s8 %v5694
    %v5696 = vlaneseq
    %v5697 = vshrl.u32 %v5696, 7
    %v5698 = vsub.s32 %v5695, %v5697
    %v5699 = vrot.slane %v5671, %v5698
    %v5700 = vcombine.low %v5678, %v5685
    %v5701 = vcombine.low %v5692, %v5699
    %v5703 = vunpack.c.l.s4 1966171168
    %v5704 = vunpack.c.0.s8 %v5703
    %v5705 = vlaneseq
    %v5706 = vshrl.u32 %v5705, 7
    %v5707 = vsub.s32 %v5704, %v5706
    %v5708 = vrot.slane %v5700, %v5707
    %v5710 = vunpack.c.l.s4 1966171168
    %v5711 = vunpack.c.0.s8 %v5710
    %v5712 = vlaneseq
    %v5713 = vshrl.u32 %v5712, 7
    %v5714 = vsub.s32 %v5711, %v5713
    %v5715 = vrot.slane %v5701, %v5714
    %v5716 = vcombine.low %v5708, %v5715
    %v5717 = vcombine.low %v3126, %v3130
    %v5718 = vcombine.low %v3134, %v3138
    %v5719 = vcombine.low %v3142, %v3146
    %v5720 = vcombine.low %v3150, %v3154
    %v5722 = vunpack.c.l.s4 1966171168
    %v5723 = vunpack.c.0.s8 %v5722
    %v5724 = vlaneseq
    %v5725 = vshrl.u32 %v5724, 7
    %v5726 = vsub.s32 %v5723, %v5725
    %v5727 = vrot.slane %v5717, %v5726
    %v5729 = vunpack.c.l.s4 1966171168
    %v5730 = vunpack.c.0.s8 %v5729
    %v5731 = vlaneseq
    %v5732 = vshrl.u32 %v5731, 7
    %v5733 = vsub.s32 %v5730, %v5732
    %v5734 = vrot.slane %v5718, %v5733
    %v5736 = vunpack.c.l.s4 1966171168
    %v5737 = vunpack.c.0.s8 %v5736
    %v5738 = vlaneseq
    %v5739 = vshrl.u32 %v5738, 7
    %v5740 = vsub.s32 %v5737, %v5739
    %v5741 = vrot.slane %v5719, %v5740
    %v5743 = vunpack.c.l.s4 1966171168
    %v5744 = vunpack.c.0.s8 %v5743
    %v5745 = vlaneseq
    %v5746 = vshrl.u32 %v5745, 7
    %v5747 = vsub.s32 %v5744, %v5746
    %v5748 = vrot.slane %v5720, %v5747
    %v5749 = vcombine.low %v5727, %v5734
    %v5750 = vcombine.low %v5741, %v5748
    %v5752 = vunpack.c.l.s4 1966171168
    %v5753 = vunpack.c.0.s8 %v5752
    %v5754 = vlaneseq
    %v5755 = vshrl.u32 %v5754, 7
    %v5756 = vsub.s32 %v5753, %v5755
    %v5757 = vrot.slane %v5749, %v5756
    %v5759 = vunpack.c.l.s4 1966171168
    %v5760 = vunpack.c.0.s8 %v5759
    %v5761 = vlaneseq
    %v5762 = vshrl.u32 %v5761, 7
    %v5763 = vsub.s32 %v5760, %v5762
    %v5764 = vrot.slane %v5750, %v5763
    %v5765 = vcombine.low %v5757, %v5764
    %v5766 = vcombine.low %v3158, %v3162
    %v5767 = vcombine.low %v3166, %v3170
    %v5768 = vcombine.low %v3174, %v3178
    %v5769 = vcombine.low %v3182, %v3186
    %v5771 = vunpack.c.l.s4 1966171168
    %v5772 = vunpack.c.0.s8 %v5771
    %v5773 = vlaneseq
    %v5774 = vshrl.u32 %v5773, 7
    %v5775 = vsub.s32 %v5772, %v5774
    %v5776 = vrot.slane %v5766, %v5775
    %v5778 = vunpack.c.l.s4 1966171168
    %v5779 = vunpack.c.0.s8 %v5778
    %v5780 = vlaneseq
    %v5781 = vshrl.u32 %v5780, 7
    %v5782 = vsub.s32 %v5779, %v5781
    %v5783 = vrot.slane %v5767, %v5782
    %v5785 = vunpack.c.l.s4 1966171168
    %v5786 = vunpack.c.0.s8 %v5785
    %v5787 = vlaneseq
    %v5788 = vshrl.u32 %v5787, 7
    %v5789 = vsub.s32 %v5786, %v5788
    %v5790 = vrot.slane %v5768, %v5789
    %v5792 = vunpack.c.l.s4 1966171168
    %v5793 = vunpack.c.0.s8 %v5792
    %v5794 = vlaneseq
    %v5795 = vshrl.u32 %v5794, 7
    %v5796 = vsub.s32 %v5793, %v5795
    %v5797 = vrot.slane %v5769, %v5796
    %v5798 = vcombine.low %v5776, %v5783
    %v5799 = vcombine.low %v5790, %v5797
    %v5801 = vunpack.c.l.s4 1966171168
    %v5802 = vunpack.c.0.s8 %v5801
    %v5803 = vlaneseq
    %v5804 = vshrl.u32 %v5803, 7
    %v5805 = vsub.s32 %v5802, %v5804
    %v5806 = vrot.slane %v5798, %v5805
    %v5808 = vunpack.c.l.s4 1966171168
    %v5809 = vunpack.c.0.s8 %v5808
    %v5810 = vlaneseq
    %v5811 = vshrl.u32 %v5810, 7
    %v5812 = vsub.s32 %v5809, %v5811
    %v5813 = vrot.slane %v5799, %v5812
    %v5814 = vcombine.low %v5806, %v5813
    %v5815 = vcombine.low %v3190, %v3194
    %v5816 = vcombine.low %v3198, %v3202
    %v5817 = vcombine.low %v3206, %v3210
    %v5818 = vcombine.low %v3214, %v3218
    %v5820 = vunpack.c.l.s4 1966171168
    %v5821 = vunpack.c.0.s8 %v5820
    %v5822 = vlaneseq
    %v5823 = vshrl.u32 %v5822, 7
    %v5824 = vsub.s32 %v5821, %v5823
    %v5825 = vrot.slane %v5815, %v5824
    %v5827 = vunpack.c.l.s4 1966171168
    %v5828 = vunpack.c.0.s8 %v5827
    %v5829 = vlaneseq
    %v5830 = vshrl.u32 %v5829, 7
    %v5831 = vsub.s32 %v5828, %v5830
    %v5832 = vrot.slane %v5816, %v5831
    %v5834 = vunpack.c.l.s4 1966171168
    %v5835 = vunpack.c.0.s8 %v5834
    %v5836 = vlaneseq
    %v5837 = vshrl.u32 %v5836, 7
    %v5838 = vsub.s32 %v5835, %v5837
    %v5839 = vrot.slane %v5817, %v5838
    %v5841 = vunpack.c.l.s4 1966171168
    %v5842 = vunpack.c.0.s8 %v5841
    %v5843 = vlaneseq
    %v5844 = vshrl.u32 %v5843, 7
    %v5845 = vsub.s32 %v5842, %v5844
    %v5846 = vrot.slane %v5818, %v5845
    %v5847 = vcombine.low %v5825, %v5832
    %v5848 = vcombine.low %v5839, %v5846
    %v5850 = vunpack.c.l.s4 1966171168
    %v5851 = vunpack.c.0.s8 %v5850
    %v5852 = vlaneseq
    %v5853 = vshrl.u32 %v5852, 7
    %v5854 = vsub.s32 %v5851, %v5853
    %v5855 = vrot.slane %v5847, %v5854
    %v5857 = vunpack.c.l.s4 1966171168
    %v5858 = vunpack.c.0.s8 %v5857
    %v5859 = vlaneseq
    %v5860 = vshrl.u32 %v5859, 7
    %v5861 = vsub.s32 %v5858, %v5860
    %v5862 = vrot.slane %v5848, %v5861
    %v5863 = vcombine.low %v5855, %v5862
    %v5864 = vcombine.low %v3222, %v3226
    %v5865 = vcombine.low %v3230, %v3234
    %v5866 = vcombine.low %v3238, %v3242
    %v5867 = vcombine.low %v3246, %v3250
    %v5869 = vunpack.c.l.s4 1966171168
    %v5870 = vunpack.c.0.s8 %v5869
    %v5871 = vlaneseq
    %v5872 = vshrl.u32 %v5871, 7
    %v5873 = vsub.s32 %v5870, %v5872
    %v5874 = vrot.slane %v5864, %v5873
    %v5876 = vunpack.c.l.s4 1966171168
    %v5877 = vunpack.c.0.s8 %v5876
    %v5878 = vlaneseq
    %v5879 = vshrl.u32 %v5878, 7
    %v5880 = vsub.s32 %v5877, %v5879
    %v5881 = vrot.slane %v5865, %v5880
    %v5883 = vunpack.c.l.s4 1966171168
    %v5884 = vunpack.c.0.s8 %v5883
    %v5885 = vlaneseq
    %v5886 = vshrl.u32 %v5885, 7
    %v5887 = vsub.s32 %v5884, %v5886
    %v5888 = vrot.slane %v5866, %v5887
    %v5890 = vunpack.c.l.s4 1966171168
    %v5891 = vunpack.c.0.s8 %v5890
    %v5892 = vlaneseq
    %v5893 = vshrl.u32 %v5892, 7
    %v5894 = vsub.s32 %v5891, %v5893
    %v5895 = vrot.slane %v5867, %v5894
    %v5896 = vcombine.low %v5874, %v5881
    %v5897 = vcombine.low %v5888, %v5895
    %v5899 = vunpack.c.l.s4 1966171168
    %v5900 = vunpack.c.0.s8 %v5899
    %v5901 = vlaneseq
    %v5902 = vshrl.u32 %v5901, 7
    %v5903 = vsub.s32 %v5900, %v5902
    %v5904 = vrot.slane %v5896, %v5903
    %v5906 = vunpack.c.l.s4 1966171168
    %v5907 = vunpack.c.0.s8 %v5906
    %v5908 = vlaneseq
    %v5909 = vshrl.u32 %v5908, 7
    %v5910 = vsub.s32 %v5907, %v5909
    %v5911 = vrot.slane %v5897, %v5910
    %v5912 = vcombine.low %v5904, %v5911
    %v5913 = vcombine.low %v3254, %v3258
    %v5914 = vcombine.low %v3262, %v3266
    %v5915 = vcombine.low %v3270, %v3274
    %v5916 = vcombine.low %v3278, %v3282
    %v5918 = vunpack.c.l.s4 1966171168
    %v5919 = vunpack.c.0.s8 %v5918
    %v5920 = vlaneseq
    %v5921 = vshrl.u32 %v5920, 7
    %v5922 = vsub.s32 %v5919, %v5921
    %v5923 = vrot.slane %v5913, %v5922
    %v5925 = vunpack.c.l.s4 1966171168
    %v5926 = vunpack.c.0.s8 %v5925
    %v5927 = vlaneseq
    %v5928 = vshrl.u32 %v5927, 7
    %v5929 = vsub.s32 %v5926, %v5928
    %v5930 = vrot.slane %v5914, %v5929
    %v5932 = vunpack.c.l.s4 1966171168
    %v5933 = vunpack.c.0.s8 %v5932
    %v5934 = vlaneseq
    %v5935 = vshrl.u32 %v5934, 7
    %v5936 = vsub.s32 %v5933, %v5935
    %v5937 = vrot.slane %v5915, %v5936
    %v5939 = vunpack.c.l.s4 1966171168
    %v5940 = vunpack.c.0.s8 %v5939
    %v5941 = vlaneseq
    %v5942 = vshrl.u32 %v5941, 7
    %v5943 = vsub.s32 %v5940, %v5942
    %v5944 = vrot.slane %v5916, %v5943
    %v5945 = vcombine.low %v5923, %v5930
    %v5946 = vcombine.low %v5937, %v5944
    %v5948 = vunpack.c.l.s4 1966171168
    %v5949 = vunpack.c.0.s8 %v5948
    %v5950 = vlaneseq
    %v5951 = vshrl.u32 %v5950, 7
    %v5952 = vsub.s32 %v5949, %v5951
    %v5953 = vrot.slane %v5945, %v5952
    %v5955 = vunpack.c.l.s4 1966171168
    %v5956 = vunpack.c.0.s8 %v5955
    %v5957 = vlaneseq
    %v5958 = vshrl.u32 %v5957, 7
    %v5959 = vsub.s32 %v5956, %v5958
    %v5960 = vrot.slane %v5946, %v5959
    %v5961 = vcombine.low %v5953, %v5960
    %v5962 = vcombine.low %v3286, %v3290
    %v5963 = vcombine.low %v3294, %v3298
    %v5964 = vcombine.low %v3302, %v3306
    %v5965 = vcombine.low %v3310, %v3314
    %v5967 = vunpack.c.l.s4 1966171168
    %v5968 = vunpack.c.0.s8 %v5967
    %v5969 = vlaneseq
    %v5970 = vshrl.u32 %v5969, 7
    %v5971 = vsub.s32 %v5968, %v5970
    %v5972 = vrot.slane %v5962, %v5971
    %v5974 = vunpack.c.l.s4 1966171168
    %v5975 = vunpack.c.0.s8 %v5974
    %v5976 = vlaneseq
    %v5977 = vshrl.u32 %v5976, 7
    %v5978 = vsub.s32 %v5975, %v5977
    %v5979 = vrot.slane %v5963, %v5978
    %v5981 = vunpack.c.l.s4 1966171168
    %v5982 = vunpack.c.0.s8 %v5981
    %v5983 = vlaneseq
    %v5984 = vshrl.u32 %v5983, 7
    %v5985 = vsub.s32 %v5982, %v5984
    %v5986 = vrot.slane %v5964, %v5985
    %v5988 = vunpack.c.l.s4 1966171168
    %v5989 = vunpack.c.0.s8 %v5988
    %v5990 = vlaneseq
    %v5991 = vshrl.u32 %v5990, 7
    %v5992 = vsub.s32 %v5989, %v5991
    %v5993 = vrot.slane %v5965, %v5992
    %v5994 = vcombine.low %v5972, %v5979
    %v5995 = vcombine.low %v5986, %v5993
    %v5997 = vunpack.c.l.s4 1966171168
    %v5998 = vunpack.c.0.s8 %v5997
    %v5999 = vlaneseq
    %v6000 = vshrl.u32 %v5999, 7
    %v6001 = vsub.s32 %v5998, %v6000
    %v6002 = vrot.slane %v5994, %v6001
    %v6004 = vunpack.c.l.s4 1966171168
    %v6005 = vunpack.c.0.s8 %v6004
    %v6006 = vlaneseq
    %v6007 = vshrl.u32 %v6006, 7
    %v6008 = vsub.s32 %v6005, %v6007
    %v6009 = vrot.slane %v5995, %v6008
    %v6010 = vcombine.low %v6002, %v6009
    %v6011 = vcombine.low %v3318, %v3322
    %v6012 = vcombine.low %v3326, %v3330
    %v6013 = vcombine.low %v3334, %v3338
    %v6014 = vcombine.low %v3342, %v3346
    %v6016 = vunpack.c.l.s4 1966171168
    %v6017 = vunpack.c.0.s8 %v6016
    %v6018 = vlaneseq
    %v6019 = vshrl.u32 %v6018, 7
    %v6020 = vsub.s32 %v6017, %v6019
    %v6021 = vrot.slane %v6011, %v6020
    %v6023 = vunpack.c.l.s4 1966171168
    %v6024 = vunpack.c.0.s8 %v6023
    %v6025 = vlaneseq
    %v6026 = vshrl.u32 %v6025, 7
    %v6027 = vsub.s32 %v6024, %v6026
    %v6028 = vrot.slane %v6012, %v6027
    %v6030 = vunpack.c.l.s4 1966171168
    %v6031 = vunpack.c.0.s8 %v6030
    %v6032 = vlaneseq
    %v6033 = vshrl.u32 %v6032, 7
    %v6034 = vsub.s32 %v6031, %v6033
    %v6035 = vrot.slane %v6013, %v6034
    %v6037 = vunpack.c.l.s4 1966171168
    %v6038 = vunpack.c.0.s8 %v6037
    %v6039 = vlaneseq
    %v6040 = vshrl.u32 %v6039, 7
    %v6041 = vsub.s32 %v6038, %v6040
    %v6042 = vrot.slane %v6014, %v6041
    %v6043 = vcombine.low %v6021, %v6028
    %v6044 = vcombine.low %v6035, %v6042
    %v6046 = vunpack.c.l.s4 1966171168
    %v6047 = vunpack.c.0.s8 %v6046
    %v6048 = vlaneseq
    %v6049 = vshrl.u32 %v6048, 7
    %v6050 = vsub.s32 %v6047, %v6049
    %v6051 = vrot.slane %v6043, %v6050
    %v6053 = vunpack.c.l.s4 1966171168
    %v6054 = vunpack.c.0.s8 %v6053
    %v6055 = vlaneseq
    %v6056 = vshrl.u32 %v6055, 7
    %v6057 = vsub.s32 %v6054, %v6056
    %v6058 = vrot.slane %v6044, %v6057
    %v6059 = vcombine.low %v6051, %v6058
    %v6060 = vcombine.low %v3350, %v3354
    %v6061 = vcombine.low %v3358, %v3362
    %v6062 = vcombine.low %v3366, %v3370
    %v6063 = vcombine.low %v3374, %v3378
    %v6065 = vunpack.c.l.s4 1966171168
    %v6066 = vunpack.c.0.s8 %v6065
    %v6067 = vlaneseq
    %v6068 = vshrl.u32 %v6067, 7
    %v6069 = vsub.s32 %v6066, %v6068
    %v6070 = vrot.slane %v6060, %v6069
    %v6072 = vunpack.c.l.s4 1966171168
    %v6073 = vunpack.c.0.s8 %v6072
    %v6074 = vlaneseq
    %v6075 = vshrl.u32 %v6074, 7
    %v6076 = vsub.s32 %v6073, %v6075
    %v6077 = vrot.slane %v6061, %v6076
    %v6079 = vunpack.c.l.s4 1966171168
    %v6080 = vunpack.c.0.s8 %v6079
    %v6081 = vlaneseq
    %v6082 = vshrl.u32 %v6081, 7
    %v6083 = vsub.s32 %v6080, %v6082
    %v6084 = vrot.slane %v6062, %v6083
    %v6086 = vunpack.c.l.s4 1966171168
    %v6087 = vunpack.c.0.s8 %v6086
    %v6088 = vlaneseq
    %v6089 = vshrl.u32 %v6088, 7
    %v6090 = vsub.s32 %v6087, %v6089
    %v6091 = vrot.slane %v6063, %v6090
    %v6092 = vcombine.low %v6070, %v6077
    %v6093 = vcombine.low %v6084, %v6091
    %v6095 = vunpack.c.l.s4 1966171168
    %v6096 = vunpack.c.0.s8 %v6095
    %v6097 = vlaneseq
    %v6098 = vshrl.u32 %v6097, 7
    %v6099 = vsub.s32 %v6096, %v6098
    %v6100 = vrot.slane %v6092, %v6099
    %v6102 = vunpack.c.l.s4 1966171168
    %v6103 = vunpack.c.0.s8 %v6102
    %v6104 = vlaneseq
    %v6105 = vshrl.u32 %v6104, 7
    %v6106 = vsub.s32 %v6103, %v6105
    %v6107 = vrot.slane %v6093, %v6106
    %v6108 = vcombine.low %v6100, %v6107
    %v6109 = vcombine.low %v3382, %v3386
    %v6110 = vcombine.low %v3390, %v3394
    %v6111 = vcombine.low %v3398, %v3402
    %v6112 = vcombine.low %v3406, %v3410
    %v6114 = vunpack.c.l.s4 1966171168
    %v6115 = vunpack.c.0.s8 %v6114
    %v6116 = vlaneseq
    %v6117 = vshrl.u32 %v6116, 7
    %v6118 = vsub.s32 %v6115, %v6117
    %v6119 = vrot.slane %v6109, %v6118
    %v6121 = vunpack.c.l.s4 1966171168
    %v6122 = vunpack.c.0.s8 %v6121
    %v6123 = vlaneseq
    %v6124 = vshrl.u32 %v6123, 7
    %v6125 = vsub.s32 %v6122, %v6124
    %v6126 = vrot.slane %v6110, %v6125
    %v6128 = vunpack.c.l.s4 1966171168
    %v6129 = vunpack.c.0.s8 %v6128
    %v6130 = vlaneseq
    %v6131 = vshrl.u32 %v6130, 7
    %v6132 = vsub.s32 %v6129, %v6131
    %v6133 = vrot.slane %v6111, %v6132
    %v6135 = vunpack.c.l.s4 1966171168
    %v6136 = vunpack.c.0.s8 %v6135
    %v6137 = vlaneseq
    %v6138 = vshrl.u32 %v6137, 7
    %v6139 = vsub.s32 %v6136, %v6138
    %v6140 = vrot.slane %v6112, %v6139
    %v6141 = vcombine.low %v6119, %v6126
    %v6142 = vcombine.low %v6133, %v6140
    %v6144 = vunpack.c.l.s4 1966171168
    %v6145 = vunpack.c.0.s8 %v6144
    %v6146 = vlaneseq
    %v6147 = vshrl.u32 %v6146, 7
    %v6148 = vsub.s32 %v6145, %v6147
    %v6149 = vrot.slane %v6141, %v6148
    %v6151 = vunpack.c.l.s4 1966171168
    %v6152 = vunpack.c.0.s8 %v6151
    %v6153 = vlaneseq
    %v6154 = vshrl.u32 %v6153, 7
    %v6155 = vsub.s32 %v6152, %v6154
    %v6156 = vrot.slane %v6142, %v6155
    %v6157 = vcombine.low %v6149, %v6156
    %v6158 = vcombine.low %v3414, %v3418
    %v6159 = vcombine.low %v3422, %v3426
    %v6160 = vcombine.low %v3430, %v3434
    %v6161 = vcombine.low %v3438, %v3442
    %v6163 = vunpack.c.l.s4 1966171168
    %v6164 = vunpack.c.0.s8 %v6163
    %v6165 = vlaneseq
    %v6166 = vshrl.u32 %v6165, 7
    %v6167 = vsub.s32 %v6164, %v6166
    %v6168 = vrot.slane %v6158, %v6167
    %v6170 = vunpack.c.l.s4 1966171168
    %v6171 = vunpack.c.0.s8 %v6170
    %v6172 = vlaneseq
    %v6173 = vshrl.u32 %v6172, 7
    %v6174 = vsub.s32 %v6171, %v6173
    %v6175 = vrot.slane %v6159, %v6174
    %v6177 = vunpack.c.l.s4 1966171168
    %v6178 = vunpack.c.0.s8 %v6177
    %v6179 = vlaneseq
    %v6180 = vshrl.u32 %v6179, 7
    %v6181 = vsub.s32 %v6178, %v6180
    %v6182 = vrot.slane %v6160, %v6181
    %v6184 = vunpack.c.l.s4 1966171168
    %v6185 = vunpack.c.0.s8 %v6184
    %v6186 = vlaneseq
    %v6187 = vshrl.u32 %v6186, 7
    %v6188 = vsub.s32 %v6185, %v6187
    %v6189 = vrot.slane %v6161, %v6188
    %v6190 = vcombine.low %v6168, %v6175
    %v6191 = vcombine.low %v6182, %v6189
    %v6193 = vunpack.c.l.s4 1966171168
    %v6194 = vunpack.c.0.s8 %v6193
    %v6195 = vlaneseq
    %v6196 = vshrl.u32 %v6195, 7
    %v6197 = vsub.s32 %v6194, %v6196
    %v6198 = vrot.slane %v6190, %v6197
    %v6200 = vunpack.c.l.s4 1966171168
    %v6201 = vunpack.c.0.s8 %v6200
    %v6202 = vlaneseq
    %v6203 = vshrl.u32 %v6202, 7
    %v6204 = vsub.s32 %v6201, %v6203
    %v6205 = vrot.slane %v6191, %v6204
    %v6206 = vcombine.low %v6198, %v6205
    %v6207 = vcombine.low %v3446, %v3450
    %v6208 = vcombine.low %v3454, %v3458
    %v6209 = vcombine.low %v3462, %v3466
    %v6210 = vcombine.low %v3470, %v3474
    %v6212 = vunpack.c.l.s4 1966171168
    %v6213 = vunpack.c.0.s8 %v6212
    %v6214 = vlaneseq
    %v6215 = vshrl.u32 %v6214, 7
    %v6216 = vsub.s32 %v6213, %v6215
    %v6217 = vrot.slane %v6207, %v6216
    %v6219 = vunpack.c.l.s4 1966171168
    %v6220 = vunpack.c.0.s8 %v6219
    %v6221 = vlaneseq
    %v6222 = vshrl.u32 %v6221, 7
    %v6223 = vsub.s32 %v6220, %v6222
    %v6224 = vrot.slane %v6208, %v6223
    %v6226 = vunpack.c.l.s4 1966171168
    %v6227 = vunpack.c.0.s8 %v6226
    %v6228 = vlaneseq
    %v6229 = vshrl.u32 %v6228, 7
    %v6230 = vsub.s32 %v6227, %v6229
    %v6231 = vrot.slane %v6209, %v6230
    %v6233 = vunpack.c.l.s4 1966171168
    %v6234 = vunpack.c.0.s8 %v6233
    %v6235 = vlaneseq
    %v6236 = vshrl.u32 %v6235, 7
    %v6237 = vsub.s32 %v6234, %v6236
    %v6238 = vrot.slane %v6210, %v6237
    %v6239 = vcombine.low %v6217, %v6224
    %v6240 = vcombine.low %v6231, %v6238
    %v6242 = vunpack.c.l.s4 1966171168
    %v6243 = vunpack.c.0.s8 %v6242
    %v6244 = vlaneseq
    %v6245 = vshrl.u32 %v6244, 7
    %v6246 = vsub.s32 %v6243, %v6245
    %v6247 = vrot.slane %v6239, %v6246
    %v6249 = vunpack.c.l.s4 1966171168
    %v6250 = vunpack.c.0.s8 %v6249
    %v6251 = vlaneseq
    %v6252 = vshrl.u32 %v6251, 7
    %v6253 = vsub.s32 %v6250, %v6252
    %v6254 = vrot.slane %v6240, %v6253
    %v6255 = vcombine.low %v6247, %v6254
    %v6256 = vcombine.low %v3478, %v3482
    %v6257 = vcombine.low %v3486, %v3490
    %v6258 = vcombine.low %v3494, %v3498
    %v6259 = vcombine.low %v3502, %v3506
    %v6261 = vunpack.c.l.s4 1966171168
    %v6262 = vunpack.c.0.s8 %v6261
    %v6263 = vlaneseq
    %v6264 = vshrl.u32 %v6263, 7
    %v6265 = vsub.s32 %v6262, %v6264
    %v6266 = vrot.slane %v6256, %v6265
    %v6268 = vunpack.c.l.s4 1966171168
    %v6269 = vunpack.c.0.s8 %v6268
    %v6270 = vlaneseq
    %v6271 = vshrl.u32 %v6270, 7
    %v6272 = vsub.s32 %v6269, %v6271
    %v6273 = vrot.slane %v6257, %v6272
    %v6275 = vunpack.c.l.s4 1966171168
    %v6276 = vunpack.c.0.s8 %v6275
    %v6277 = vlaneseq
    %v6278 = vshrl.u32 %v6277, 7
    %v6279 = vsub.s32 %v6276, %v6278
    %v6280 = vrot.slane %v6258, %v6279
    %v6282 = vunpack.c.l.s4 1966171168
    %v6283 = vunpack.c.0.s8 %v6282
    %v6284 = vlaneseq
    %v6285 = vshrl.u32 %v6284, 7
    %v6286 = vsub.s32 %v6283, %v6285
    %v6287 = vrot.slane %v6259, %v6286
    %v6288 = vcombine.low %v6266, %v6273
    %v6289 = vcombine.low %v6280, %v6287
    %v6291 = vunpack.c.l.s4 1966171168
    %v6292 = vunpack.c.0.s8 %v6291
    %v6293 = vlaneseq
    %v6294 = vshrl.u32 %v6293, 7
    %v6295 = vsub.s32 %v6292, %v6294
    %v6296 = vrot.slane %v6288, %v6295
    %v6298 = vunpack.c.l.s4 1966171168
    %v6299 = vunpack.c.0.s8 %v6298
    %v6300 = vlaneseq
    %v6301 = vshrl.u32 %v6300, 7
    %v6302 = vsub.s32 %v6299, %v6301
    %v6303 = vrot.slane %v6289, %v6302
    %v6304 = vcombine.low %v6296, %v6303
    %v6305 = vcombine.low %v3510, %v3514
    %v6306 = vcombine.low %v3518, %v3522
    %v6307 = vcombine.low %v3526, %v3530
    %v6308 = vcombine.low %v3534, %v3538
    %v6310 = vunpack.c.l.s4 1966171168
    %v6311 = vunpack.c.0.s8 %v6310
    %v6312 = vlaneseq
    %v6313 = vshrl.u32 %v6312, 7
    %v6314 = vsub.s32 %v6311, %v6313
    %v6315 = vrot.slane %v6305, %v6314
    %v6317 = vunpack.c.l.s4 1966171168
    %v6318 = vunpack.c.0.s8 %v6317
    %v6319 = vlaneseq
    %v6320 = vshrl.u32 %v6319, 7
    %v6321 = vsub.s32 %v6318, %v6320
    %v6322 = vrot.slane %v6306, %v6321
    %v6324 = vunpack.c.l.s4 1966171168
    %v6325 = vunpack.c.0.s8 %v6324
    %v6326 = vlaneseq
    %v6327 = vshrl.u32 %v6326, 7
    %v6328 = vsub.s32 %v6325, %v6327
    %v6329 = vrot.slane %v6307, %v6328
    %v6331 = vunpack.c.l.s4 1966171168
    %v6332 = vunpack.c.0.s8 %v6331
    %v6333 = vlaneseq
    %v6334 = vshrl.u32 %v6333, 7
    %v6335 = vsub.s32 %v6332, %v6334
    %v6336 = vrot.slane %v6308, %v6335
    %v6337 = vcombine.low %v6315, %v6322
    %v6338 = vcombine.low %v6329, %v6336
    %v6340 = vunpack.c.l.s4 1966171168
    %v6341 = vunpack.c.0.s8 %v6340
    %v6342 = vlaneseq
    %v6343 = vshrl.u32 %v6342, 7
    %v6344 = vsub.s32 %v6341, %v6343
    %v6345 = vrot.slane %v6337, %v6344
    %v6347 = vunpack.c.l.s4 1966171168
    %v6348 = vunpack.c.0.s8 %v6347
    %v6349 = vlaneseq
    %v6350 = vshrl.u32 %v6349, 7
    %v6351 = vsub.s32 %v6348, %v6350
    %v6352 = vrot.slane %v6338, %v6351
    %v6353 = vcombine.low %v6345, %v6352
    %v6354 = vcombine.low %v3542, %v3546
    %v6355 = vcombine.low %v3550, %v3554
    %v6356 = vcombine.low %v3558, %v3562
    %v6357 = vcombine.low %v3566, %v3570
    %v6359 = vunpack.c.l.s4 1966171168
    %v6360 = vunpack.c.0.s8 %v6359
    %v6361 = vlaneseq
    %v6362 = vshrl.u32 %v6361, 7
    %v6363 = vsub.s32 %v6360, %v6362
    %v6364 = vrot.slane %v6354, %v6363
    %v6366 = vunpack.c.l.s4 1966171168
    %v6367 = vunpack.c.0.s8 %v6366
    %v6368 = vlaneseq
    %v6369 = vshrl.u32 %v6368, 7
    %v6370 = vsub.s32 %v6367, %v6369
    %v6371 = vrot.slane %v6355, %v6370
    %v6373 = vunpack.c.l.s4 1966171168
    %v6374 = vunpack.c.0.s8 %v6373
    %v6375 = vlaneseq
    %v6376 = vshrl.u32 %v6375, 7
    %v6377 = vsub.s32 %v6374, %v6376
    %v6378 = vrot.slane %v6356, %v6377
    %v6380 = vunpack.c.l.s4 1966171168
    %v6381 = vunpack.c.0.s8 %v6380
    %v6382 = vlaneseq
    %v6383 = vshrl.u32 %v6382, 7
    %v6384 = vsub.s32 %v6381, %v6383
    %v6385 = vrot.slane %v6357, %v6384
    %v6386 = vcombine.low %v6364, %v6371
    %v6387 = vcombine.low %v6378, %v6385
    %v6389 = vunpack.c.l.s4 1966171168
    %v6390 = vunpack.c.0.s8 %v6389
    %v6391 = vlaneseq
    %v6392 = vshrl.u32 %v6391, 7
    %v6393 = vsub.s32 %v6390, %v6392
    %v6394 = vrot.slane %v6386, %v6393
    %v6396 = vunpack.c.l.s4 1966171168
    %v6397 = vunpack.c.0.s8 %v6396
    %v6398 = vlaneseq
    %v6399 = vshrl.u32 %v6398, 7
    %v6400 = vsub.s32 %v6397, %v6399
    %v6401 = vrot.slane %v6387, %v6400
    %v6402 = vcombine.low %v6394, %v6401
    %v6403 = vcombine.low %v3574, %v3578
    %v6404 = vcombine.low %v3582, %v3586
    %v6405 = vcombine.low %v3590, %v3594
    %v6406 = vcombine.low %v3598, %v3602
    %v6408 = vunpack.c.l.s4 1966171168
    %v6409 = vunpack.c.0.s8 %v6408
    %v6410 = vlaneseq
    %v6411 = vshrl.u32 %v6410, 7
    %v6412 = vsub.s32 %v6409, %v6411
    %v6413 = vrot.slane %v6403, %v6412
    %v6415 = vunpack.c.l.s4 1966171168
    %v6416 = vunpack.c.0.s8 %v6415
    %v6417 = vlaneseq
    %v6418 = vshrl.u32 %v6417, 7
    %v6419 = vsub.s32 %v6416, %v6418
    %v6420 = vrot.slane %v6404, %v6419
    %v6422 = vunpack.c.l.s4 1966171168
    %v6423 = vunpack.c.0.s8 %v6422
    %v6424 = vlaneseq
    %v6425 = vshrl.u32 %v6424, 7
    %v6426 = vsub.s32 %v6423, %v6425
    %v6427 = vrot.slane %v6405, %v6426
    %v6429 = vunpack.c.l.s4 1966171168
    %v6430 = vunpack.c.0.s8 %v6429
    %v6431 = vlaneseq
    %v6432 = vshrl.u32 %v6431, 7
    %v6433 = vsub.s32 %v6430, %v6432
    %v6434 = vrot.slane %v6406, %v6433
    %v6435 = vcombine.low %v6413, %v6420
    %v6436 = vcombine.low %v6427, %v6434
    %v6438 = vunpack.c.l.s4 1966171168
    %v6439 = vunpack.c.0.s8 %v6438
    %v6440 = vlaneseq
    %v6441 = vshrl.u32 %v6440, 7
    %v6442 = vsub.s32 %v6439, %v6441
    %v6443 = vrot.slane %v6435, %v6442
    %v6445 = vunpack.c.l.s4 1966171168
    %v6446 = vunpack.c.0.s8 %v6445
    %v6447 = vlaneseq
    %v6448 = vshrl.u32 %v6447, 7
    %v6449 = vsub.s32 %v6446, %v6448
    %v6450 = vrot.slane %v6436, %v6449
    %v6451 = vcombine.low %v6443, %v6450
    %v6452 = vcombine.low %v3606, %v3610
    %v6453 = vcombine.low %v3614, %v3618
    %v6454 = vcombine.low %v3622, %v3626
    %v6455 = vcombine.low %v3630, %v3634
    %v6457 = vunpack.c.l.s4 1966171168
    %v6458 = vunpack.c.0.s8 %v6457
    %v6459 = vlaneseq
    %v6460 = vshrl.u32 %v6459, 7
    %v6461 = vsub.s32 %v6458, %v6460
    %v6462 = vrot.slane %v6452, %v6461
    %v6464 = vunpack.c.l.s4 1966171168
    %v6465 = vunpack.c.0.s8 %v6464
    %v6466 = vlaneseq
    %v6467 = vshrl.u32 %v6466, 7
    %v6468 = vsub.s32 %v6465, %v6467
    %v6469 = vrot.slane %v6453, %v6468
    %v6471 = vunpack.c.l.s4 1966171168
    %v6472 = vunpack.c.0.s8 %v6471
    %v6473 = vlaneseq
    %v6474 = vshrl.u32 %v6473, 7
    %v6475 = vsub.s32 %v6472, %v6474
    %v6476 = vrot.slane %v6454, %v6475
    %v6478 = vunpack.c.l.s4 1966171168
    %v6479 = vunpack.c.0.s8 %v6478
    %v6480 = vlaneseq
    %v6481 = vshrl.u32 %v6480, 7
    %v6482 = vsub.s32 %v6479, %v6481
    %v6483 = vrot.slane %v6455, %v6482
    %v6484 = vcombine.low %v6462, %v6469
    %v6485 = vcombine.low %v6476, %v6483
    %v6487 = vunpack.c.l.s4 1966171168
    %v6488 = vunpack.c.0.s8 %v6487
    %v6489 = vlaneseq
    %v6490 = vshrl.u32 %v6489, 7
    %v6491 = vsub.s32 %v6488, %v6490
    %v6492 = vrot.slane %v6484, %v6491
    %v6494 = vunpack.c.l.s4 1966171168
    %v6495 = vunpack.c.0.s8 %v6494
    %v6496 = vlaneseq
    %v6497 = vshrl.u32 %v6496, 7
    %v6498 = vsub.s32 %v6495, %v6497
    %v6499 = vrot.slane %v6485, %v6498
    %v6500 = vcombine.low %v6492, %v6499
    %v6501 = vcombine.low %v3638, %v3642
    %v6502 = vcombine.low %v3646, %v3650
    %v6503 = vcombine.low %v3654, %v3658
    %v6504 = vcombine.low %v3662, %v3666
    %v6506 = vunpack.c.l.s4 1966171168
    %v6507 = vunpack.c.0.s8 %v6506
    %v6508 = vlaneseq
    %v6509 = vshrl.u32 %v6508, 7
    %v6510 = vsub.s32 %v6507, %v6509
    %v6511 = vrot.slane %v6501, %v6510
    %v6513 = vunpack.c.l.s4 1966171168
    %v6514 = vunpack.c.0.s8 %v6513
    %v6515 = vlaneseq
    %v6516 = vshrl.u32 %v6515, 7
    %v6517 = vsub.s32 %v6514, %v6516
    %v6518 = vrot.slane %v6502, %v6517
    %v6520 = vunpack.c.l.s4 1966171168
    %v6521 = vunpack.c.0.s8 %v6520
    %v6522 = vlaneseq
    %v6523 = vshrl.u32 %v6522, 7
    %v6524 = vsub.s32 %v6521, %v6523
    %v6525 = vrot.slane %v6503, %v6524
    %v6527 = vunpack.c.l.s4 1966171168
    %v6528 = vunpack.c.0.s8 %v6527
    %v6529 = vlaneseq
    %v6530 = vshrl.u32 %v6529, 7
    %v6531 = vsub.s32 %v6528, %v6530
    %v6532 = vrot.slane %v6504, %v6531
    %v6533 = vcombine.low %v6511, %v6518
    %v6534 = vcombine.low %v6525, %v6532
    %v6536 = vunpack.c.l.s4 1966171168
    %v6537 = vunpack.c.0.s8 %v6536
    %v6538 = vlaneseq
    %v6539 = vshrl.u32 %v6538, 7
    %v6540 = vsub.s32 %v6537, %v6539
    %v6541 = vrot.slane %v6533, %v6540
    %v6543 = vunpack.c.l.s4 1966171168
    %v6544 = vunpack.c.0.s8 %v6543
    %v6545 = vlaneseq
    %v6546 = vshrl.u32 %v6545, 7
    %v6547 = vsub.s32 %v6544, %v6546
    %v6548 = vrot.slane %v6534, %v6547
    %v6549 = vcombine.low %v6541, %v6548
    %v6550 = vcombine.low %v3670, %v3674
    %v6551 = vcombine.low %v3678, %v3682
    %v6552 = vcombine.low %v3686, %v3690
    %v6553 = vcombine.low %v3694, %v3698
    %v6555 = vunpack.c.l.s4 1966171168
    %v6556 = vunpack.c.0.s8 %v6555
    %v6557 = vlaneseq
    %v6558 = vshrl.u32 %v6557, 7
    %v6559 = vsub.s32 %v6556, %v6558
    %v6560 = vrot.slane %v6550, %v6559
    %v6562 = vunpack.c.l.s4 1966171168
    %v6563 = vunpack.c.0.s8 %v6562
    %v6564 = vlaneseq
    %v6565 = vshrl.u32 %v6564, 7
    %v6566 = vsub.s32 %v6563, %v6565
    %v6567 = vrot.slane %v6551, %v6566
    %v6569 = vunpack.c.l.s4 1966171168
    %v6570 = vunpack.c.0.s8 %v6569
    %v6571 = vlaneseq
    %v6572 = vshrl.u32 %v6571, 7
    %v6573 = vsub.s32 %v6570, %v6572
    %v6574 = vrot.slane %v6552, %v6573
    %v6576 = vunpack.c.l.s4 1966171168
    %v6577 = vunpack.c.0.s8 %v6576
    %v6578 = vlaneseq
    %v6579 = vshrl.u32 %v6578, 7
    %v6580 = vsub.s32 %v6577, %v6579
    %v6581 = vrot.slane %v6553, %v6580
    %v6582 = vcombine.low %v6560, %v6567
    %v6583 = vcombine.low %v6574, %v6581
    %v6585 = vunpack.c.l.s4 1966171168
    %v6586 = vunpack.c.0.s8 %v6585
    %v6587 = vlaneseq
    %v6588 = vshrl.u32 %v6587, 7
    %v6589 = vsub.s32 %v6586, %v6588
    %v6590 = vrot.slane %v6582, %v6589
    %v6592 = vunpack.c.l.s4 1966171168
    %v6593 = vunpack.c.0.s8 %v6592
    %v6594 = vlaneseq
    %v6595 = vshrl.u32 %v6594, 7
    %v6596 = vsub.s32 %v6593, %v6595
    %v6597 = vrot.slane %v6583, %v6596
    %v6598 = vcombine.low %v6590, %v6597
    %v6599 = vcombine.low %v3702, %v3706
    %v6600 = vcombine.low %v3710, %v3714
    %v6601 = vcombine.low %v3718, %v3722
    %v6602 = vcombine.low %v3726, %v3730
    %v6604 = vunpack.c.l.s4 1966171168
    %v6605 = vunpack.c.0.s8 %v6604
    %v6606 = vlaneseq
    %v6607 = vshrl.u32 %v6606, 7
    %v6608 = vsub.s32 %v6605, %v6607
    %v6609 = vrot.slane %v6599, %v6608
    %v6611 = vunpack.c.l.s4 1966171168
    %v6612 = vunpack.c.0.s8 %v6611
    %v6613 = vlaneseq
    %v6614 = vshrl.u32 %v6613, 7
    %v6615 = vsub.s32 %v6612, %v6614
    %v6616 = vrot.slane %v6600, %v6615
    %v6618 = vunpack.c.l.s4 1966171168
    %v6619 = vunpack.c.0.s8 %v6618
    %v6620 = vlaneseq
    %v6621 = vshrl.u32 %v6620, 7
    %v6622 = vsub.s32 %v6619, %v6621
    %v6623 = vrot.slane %v6601, %v6622
    %v6625 = vunpack.c.l.s4 1966171168
    %v6626 = vunpack.c.0.s8 %v6625
    %v6627 = vlaneseq
    %v6628 = vshrl.u32 %v6627, 7
    %v6629 = vsub.s32 %v6626, %v6628
    %v6630 = vrot.slane %v6602, %v6629
    %v6631 = vcombine.low %v6609, %v6616
    %v6632 = vcombine.low %v6623, %v6630
    %v6634 = vunpack.c.l.s4 1966171168
    %v6635 = vunpack.c.0.s8 %v6634
    %v6636 = vlaneseq
    %v6637 = vshrl.u32 %v6636, 7
    %v6638 = vsub.s32 %v6635, %v6637
    %v6639 = vrot.slane %v6631, %v6638
    %v6641 = vunpack.c.l.s4 1966171168
    %v6642 = vunpack.c.0.s8 %v6641
    %v6643 = vlaneseq
    %v6644 = vshrl.u32 %v6643, 7
    %v6645 = vsub.s32 %v6642, %v6644
    %v6646 = vrot.slane %v6632, %v6645
    %v6647 = vcombine.low %v6639, %v6646
    %v6648 = vcombine.low %v3734, %v3738
    %v6649 = vcombine.low %v3742, %v3746
    %v6650 = vcombine.low %v3750, %v3754
    %v6651 = vcombine.low %v3758, %v3762
    %v6653 = vunpack.c.l.s4 1966171168
    %v6654 = vunpack.c.0.s8 %v6653
    %v6655 = vlaneseq
    %v6656 = vshrl.u32 %v6655, 7
    %v6657 = vsub.s32 %v6654, %v6656
    %v6658 = vrot.slane %v6648, %v6657
    %v6660 = vunpack.c.l.s4 1966171168
    %v6661 = vunpack.c.0.s8 %v6660
    %v6662 = vlaneseq
    %v6663 = vshrl.u32 %v6662, 7
    %v6664 = vsub.s32 %v6661, %v6663
    %v6665 = vrot.slane %v6649, %v6664
    %v6667 = vunpack.c.l.s4 1966171168
    %v6668 = vunpack.c.0.s8 %v6667
    %v6669 = vlaneseq
    %v6670 = vshrl.u32 %v6669, 7
    %v6671 = vsub.s32 %v6668, %v6670
    %v6672 = vrot.slane %v6650, %v6671
    %v6674 = vunpack.c.l.s4 1966171168
    %v6675 = vunpack.c.0.s8 %v6674
    %v6676 = vlaneseq
    %v6677 = vshrl.u32 %v6676, 7
    %v6678 = vsub.s32 %v6675, %v6677
    %v6679 = vrot.slane %v6651, %v6678
    %v6680 = vcombine.low %v6658, %v6665
    %v6681 = vcombine.low %v6672, %v6679
    %v6683 = vunpack.c.l.s4 1966171168
    %v6684 = vunpack.c.0.s8 %v6683
    %v6685 = vlaneseq
    %v6686 = vshrl.u32 %v6685, 7
    %v6687 = vsub.s32 %v6684, %v6686
    %v6688 = vrot.slane %v6680, %v6687
    %v6690 = vunpack.c.l.s4 1966171168
    %v6691 = vunpack.c.0.s8 %v6690
    %v6692 = vlaneseq
    %v6693 = vshrl.u32 %v6692, 7
    %v6694 = vsub.s32 %v6691, %v6693
    %v6695 = vrot.slane %v6681, %v6694
    %v6696 = vcombine.low %v6688, %v6695
    %v6697 = vcombine.low %v3766, %v3770
    %v6698 = vcombine.low %v3774, %v3778
    %v6699 = vcombine.low %v3782, %v3786
    %v6700 = vcombine.low %v3790, %v3794
    %v6702 = vunpack.c.l.s4 1966171168
    %v6703 = vunpack.c.0.s8 %v6702
    %v6704 = vlaneseq
    %v6705 = vshrl.u32 %v6704, 7
    %v6706 = vsub.s32 %v6703, %v6705
    %v6707 = vrot.slane %v6697, %v6706
    %v6709 = vunpack.c.l.s4 1966171168
    %v6710 = vunpack.c.0.s8 %v6709
    %v6711 = vlaneseq
    %v6712 = vshrl.u32 %v6711, 7
    %v6713 = vsub.s32 %v6710, %v6712
    %v6714 = vrot.slane %v6698, %v6713
    %v6716 = vunpack.c.l.s4 1966171168
    %v6717 = vunpack.c.0.s8 %v6716
    %v6718 = vlaneseq
    %v6719 = vshrl.u32 %v6718, 7
    %v6720 = vsub.s32 %v6717, %v6719
    %v6721 = vrot.slane %v6699, %v6720
    %v6723 = vunpack.c.l.s4 1966171168
    %v6724 = vunpack.c.0.s8 %v6723
    %v6725 = vlaneseq
    %v6726 = vshrl.u32 %v6725, 7
    %v6727 = vsub.s32 %v6724, %v6726
    %v6728 = vrot.slane %v6700, %v6727
    %v6729 = vcombine.low %v6707, %v6714
    %v6730 = vcombine.low %v6721, %v6728
    %v6732 = vunpack.c.l.s4 1966171168
    %v6733 = vunpack.c.0.s8 %v6732
    %v6734 = vlaneseq
    %v6735 = vshrl.u32 %v6734, 7
    %v6736 = vsub.s32 %v6733, %v6735
    %v6737 = vrot.slane %v6729, %v6736
    %v6739 = vunpack.c.l.s4 1966171168
    %v6740 = vunpack.c.0.s8 %v6739
    %v6741 = vlaneseq
    %v6742 = vshrl.u32 %v6741, 7
    %v6743 = vsub.s32 %v6740, %v6742
    %v6744 = vrot.slane %v6730, %v6743
    %v6745 = vcombine.low %v6737, %v6744
    %v6746 = vcombine.low %v3798, %v3802
    %v6747 = vcombine.low %v3806, %v3810
    %v6748 = vcombine.low %v3814, %v3818
    %v6749 = vcombine.low %v3822, %v3826
    %v6751 = vunpack.c.l.s4 1966171168
    %v6752 = vunpack.c.0.s8 %v6751
    %v6753 = vlaneseq
    %v6754 = vshrl.u32 %v6753, 7
    %v6755 = vsub.s32 %v6752, %v6754
    %v6756 = vrot.slane %v6746, %v6755
    %v6758 = vunpack.c.l.s4 1966171168
    %v6759 = vunpack.c.0.s8 %v6758
    %v6760 = vlaneseq
    %v6761 = vshrl.u32 %v6760, 7
    %v6762 = vsub.s32 %v6759, %v6761
    %v6763 = vrot.slane %v6747, %v6762
    %v6765 = vunpack.c.l.s4 1966171168
    %v6766 = vunpack.c.0.s8 %v6765
    %v6767 = vlaneseq
    %v6768 = vshrl.u32 %v6767, 7
    %v6769 = vsub.s32 %v6766, %v6768
    %v6770 = vrot.slane %v6748, %v6769
    %v6772 = vunpack.c.l.s4 1966171168
    %v6773 = vunpack.c.0.s8 %v6772
    %v6774 = vlaneseq
    %v6775 = vshrl.u32 %v6774, 7
    %v6776 = vsub.s32 %v6773, %v6775
    %v6777 = vrot.slane %v6749, %v6776
    %v6778 = vcombine.low %v6756, %v6763
    %v6779 = vcombine.low %v6770, %v6777
    %v6781 = vunpack.c.l.s4 1966171168
    %v6782 = vunpack.c.0.s8 %v6781
    %v6783 = vlaneseq
    %v6784 = vshrl.u32 %v6783, 7
    %v6785 = vsub.s32 %v6782, %v6784
    %v6786 = vrot.slane %v6778, %v6785
    %v6788 = vunpack.c.l.s4 1966171168
    %v6789 = vunpack.c.0.s8 %v6788
    %v6790 = vlaneseq
    %v6791 = vshrl.u32 %v6790, 7
    %v6792 = vsub.s32 %v6789, %v6791
    %v6793 = vrot.slane %v6779, %v6792
    %v6794 = vcombine.low %v6786, %v6793
    %v6795 = vcombine.low %v3830, %v3834
    %v6796 = vcombine.low %v3838, %v3842
    %v6797 = vcombine.low %v3846, %v3850
    %v6798 = vcombine.low %v3854, %v3858
    %v6800 = vunpack.c.l.s4 1966171168
    %v6801 = vunpack.c.0.s8 %v6800
    %v6802 = vlaneseq
    %v6803 = vshrl.u32 %v6802, 7
    %v6804 = vsub.s32 %v6801, %v6803
    %v6805 = vrot.slane %v6795, %v6804
    %v6807 = vunpack.c.l.s4 1966171168
    %v6808 = vunpack.c.0.s8 %v6807
    %v6809 = vlaneseq
    %v6810 = vshrl.u32 %v6809, 7
    %v6811 = vsub.s32 %v6808, %v6810
    %v6812 = vrot.slane %v6796, %v6811
    %v6814 = vunpack.c.l.s4 1966171168
    %v6815 = vunpack.c.0.s8 %v6814
    %v6816 = vlaneseq
    %v6817 = vshrl.u32 %v6816, 7
    %v6818 = vsub.s32 %v6815, %v6817
    %v6819 = vrot.slane %v6797, %v6818
    %v6821 = vunpack.c.l.s4 1966171168
    %v6822 = vunpack.c.0.s8 %v6821
    %v6823 = vlaneseq
    %v6824 = vshrl.u32 %v6823, 7
    %v6825 = vsub.s32 %v6822, %v6824
    %v6826 = vrot.slane %v6798, %v6825
    %v6827 = vcombine.low %v6805, %v6812
    %v6828 = vcombine.low %v6819, %v6826
    %v6830 = vunpack.c.l.s4 1966171168
    %v6831 = vunpack.c.0.s8 %v6830
    %v6832 = vlaneseq
    %v6833 = vshrl.u32 %v6832, 7
    %v6834 = vsub.s32 %v6831, %v6833
    %v6835 = vrot.slane %v6827, %v6834
    %v6837 = vunpack.c.l.s4 1966171168
    %v6838 = vunpack.c.0.s8 %v6837
    %v6839 = vlaneseq
    %v6840 = vshrl.u32 %v6839, 7
    %v6841 = vsub.s32 %v6838, %v6840
    %v6842 = vrot.slane %v6828, %v6841
    %v6843 = vcombine.low %v6835, %v6842
    %v6844 = vcombine.low %v3862, %v3866
    %v6845 = vcombine.low %v3870, %v3874
    %v6846 = vcombine.low %v3878, %v3882
    %v6847 = vcombine.low %v3886, %v3890
    %v6849 = vunpack.c.l.s4 1966171168
    %v6850 = vunpack.c.0.s8 %v6849
    %v6851 = vlaneseq
    %v6852 = vshrl.u32 %v6851, 7
    %v6853 = vsub.s32 %v6850, %v6852
    %v6854 = vrot.slane %v6844, %v6853
    %v6856 = vunpack.c.l.s4 1966171168
    %v6857 = vunpack.c.0.s8 %v6856
    %v6858 = vlaneseq
    %v6859 = vshrl.u32 %v6858, 7
    %v6860 = vsub.s32 %v6857, %v6859
    %v6861 = vrot.slane %v6845, %v6860
    %v6863 = vunpack.c.l.s4 1966171168
    %v6864 = vunpack.c.0.s8 %v6863
    %v6865 = vlaneseq
    %v6866 = vshrl.u32 %v6865, 7
    %v6867 = vsub.s32 %v6864, %v6866
    %v6868 = vrot.slane %v6846, %v6867
    %v6870 = vunpack.c.l.s4 1966171168
    %v6871 = vunpack.c.0.s8 %v6870
    %v6872 = vlaneseq
    %v6873 = vshrl.u32 %v6872, 7
    %v6874 = vsub.s32 %v6871, %v6873
    %v6875 = vrot.slane %v6847, %v6874
    %v6876 = vcombine.low %v6854, %v6861
    %v6877 = vcombine.low %v6868, %v6875
    %v6879 = vunpack.c.l.s4 1966171168
    %v6880 = vunpack.c.0.s8 %v6879
    %v6881 = vlaneseq
    %v6882 = vshrl.u32 %v6881, 7
    %v6883 = vsub.s32 %v6880, %v6882
    %v6884 = vrot.slane %v6876, %v6883
    %v6886 = vunpack.c.l.s4 1966171168
    %v6887 = vunpack.c.0.s8 %v6886
    %v6888 = vlaneseq
    %v6889 = vshrl.u32 %v6888, 7
    %v6890 = vsub.s32 %v6887, %v6889
    %v6891 = vrot.slane %v6877, %v6890
    %v6892 = vcombine.low %v6884, %v6891
    %v6893 = vcombine.low %v3894, %v3898
    %v6894 = vcombine.low %v3902, %v3906
    %v6895 = vcombine.low %v3910, %v3914
    %v6896 = vcombine.low %v3918, %v3922
    %v6898 = vunpack.c.l.s4 1966171168
    %v6899 = vunpack.c.0.s8 %v6898
    %v6900 = vlaneseq
    %v6901 = vshrl.u32 %v6900, 7
    %v6902 = vsub.s32 %v6899, %v6901
    %v6903 = vrot.slane %v6893, %v6902
    %v6905 = vunpack.c.l.s4 1966171168
    %v6906 = vunpack.c.0.s8 %v6905
    %v6907 = vlaneseq
    %v6908 = vshrl.u32 %v6907, 7
    %v6909 = vsub.s32 %v6906, %v6908
    %v6910 = vrot.slane %v6894, %v6909
    %v6912 = vunpack.c.l.s4 1966171168
    %v6913 = vunpack.c.0.s8 %v6912
    %v6914 = vlaneseq
    %v6915 = vshrl.u32 %v6914, 7
    %v6916 = vsub.s32 %v6913, %v6915
    %v6917 = vrot.slane %v6895, %v6916
    %v6919 = vunpack.c.l.s4 1966171168
    %v6920 = vunpack.c.0.s8 %v6919
    %v6921 = vlaneseq
    %v6922 = vshrl.u32 %v6921, 7
    %v6923 = vsub.s32 %v6920, %v6922
    %v6924 = vrot.slane %v6896, %v6923
    %v6925 = vcombine.low %v6903, %v6910
    %v6926 = vcombine.low %v6917, %v6924
    %v6928 = vunpack.c.l.s4 1966171168
    %v6929 = vunpack.c.0.s8 %v6928
    %v6930 = vlaneseq
    %v6931 = vshrl.u32 %v6930, 7
    %v6932 = vsub.s32 %v6929, %v6931
    %v6933 = vrot.slane %v6925, %v6932
    %v6935 = vunpack.c.l.s4 1966171168
    %v6936 = vunpack.c.0.s8 %v6935
    %v6937 = vlaneseq
    %v6938 = vshrl.u32 %v6937, 7
    %v6939 = vsub.s32 %v6936, %v6938
    %v6940 = vrot.slane %v6926, %v6939
    %v6941 = vcombine.low %v6933, %v6940
    %v6942 = vcombine.low %v3926, %v3930
    %v6943 = vcombine.low %v3934, %v3938
    %v6944 = vcombine.low %v3942, %v3946
    %v6945 = vcombine.low %v3950, %v3954
    %v6947 = vunpack.c.l.s4 1966171168
    %v6948 = vunpack.c.0.s8 %v6947
    %v6949 = vlaneseq
    %v6950 = vshrl.u32 %v6949, 7
    %v6951 = vsub.s32 %v6948, %v6950
    %v6952 = vrot.slane %v6942, %v6951
    %v6954 = vunpack.c.l.s4 1966171168
    %v6955 = vunpack.c.0.s8 %v6954
    %v6956 = vlaneseq
    %v6957 = vshrl.u32 %v6956, 7
    %v6958 = vsub.s32 %v6955, %v6957
    %v6959 = vrot.slane %v6943, %v6958
    %v6961 = vunpack.c.l.s4 1966171168
    %v6962 = vunpack.c.0.s8 %v6961
    %v6963 = vlaneseq
    %v6964 = vshrl.u32 %v6963, 7
    %v6965 = vsub.s32 %v6962, %v6964
    %v6966 = vrot.slane %v6944, %v6965
    %v6968 = vunpack.c.l.s4 1966171168
    %v6969 = vunpack.c.0.s8 %v6968
    %v6970 = vlaneseq
    %v6971 = vshrl.u32 %v6970, 7
    %v6972 = vsub.s32 %v6969, %v6971
    %v6973 = vrot.slane %v6945, %v6972
    %v6974 = vcombine.low %v6952, %v6959
    %v6975 = vcombine.low %v6966, %v6973
    %v6977 = vunpack.c.l.s4 1966171168
    %v6978 = vunpack.c.0.s8 %v6977
    %v6979 = vlaneseq
    %v6980 = vshrl.u32 %v6979, 7
    %v6981 = vsub.s32 %v6978, %v6980
    %v6982 = vrot.slane %v6974, %v6981
    %v6984 = vunpack.c.l.s4 1966171168
    %v6985 = vunpack.c.0.s8 %v6984
    %v6986 = vlaneseq
    %v6987 = vshrl.u32 %v6986, 7
    %v6988 = vsub.s32 %v6985, %v6987
    %v6989 = vrot.slane %v6975, %v6988
    %v6990 = vcombine.low %v6982, %v6989
    %v6991 = vcombine.low %v3958, %v3962
    %v6992 = vcombine.low %v3966, %v3970
    %v6993 = vcombine.low %v3974, %v3978
    %v6994 = vcombine.low %v3982, %v3986
    %v6996 = vunpack.c.l.s4 1966171168
    %v6997 = vunpack.c.0.s8 %v6996
    %v6998 = vlaneseq
    %v6999 = vshrl.u32 %v6998, 7
    %v7000 = vsub.s32 %v6997, %v6999
    %v7001 = vrot.slane %v6991, %v7000
    %v7003 = vunpack.c.l.s4 1966171168
    %v7004 = vunpack.c.0.s8 %v7003
    %v7005 = vlaneseq
    %v7006 = vshrl.u32 %v7005, 7
    %v7007 = vsub.s32 %v7004, %v7006
    %v7008 = vrot.slane %v6992, %v7007
    %v7010 = vunpack.c.l.s4 1966171168
    %v7011 = vunpack.c.0.s8 %v7010
    %v7012 = vlaneseq
    %v7013 = vshrl.u32 %v7012, 7
    %v7014 = vsub.s32 %v7011, %v7013
    %v7015 = vrot.slane %v6993, %v7014
    %v7017 = vunpack.c.l.s4 1966171168
    %v7018 = vunpack.c.0.s8 %v7017
    %v7019 = vlaneseq
    %v7020 = vshrl.u32 %v7019, 7
    %v7021 = vsub.s32 %v7018, %v7020
    %v7022 = vrot.slane %v6994, %v7021
    %v7023 = vcombine.low %v7001, %v7008
    %v7024 = vcombine.low %v7015, %v7022
    %v7026 = vunpack.c.l.s4 1966171168
    %v7027 = vunpack.c.0.s8 %v7026
    %v7028 = vlaneseq
    %v7029 = vshrl.u32 %v7028, 7
    %v7030 = vsub.s32 %v7027, %v7029
    %v7031 = vrot.slane %v7023, %v7030
    %v7033 = vunpack.c.l.s4 1966171168
    %v7034 = vunpack.c.0.s8 %v7033
    %v7035 = vlaneseq
    %v7036 = vshrl.u32 %v7035, 7
    %v7037 = vsub.s32 %v7034, %v7036
    %v7038 = vrot.slane %v7024, %v7037
    %v7039 = vcombine.low %v7031, %v7038
    %v7040 = vcombine.low %v3990, %v3994
    %v7041 = vcombine.low %v3998, %v4002
    %v7042 = vcombine.low %v4006, %v4010
    %v7043 = vcombine.low %v4014, %v4018
    %v7045 = vunpack.c.l.s4 1966171168
    %v7046 = vunpack.c.0.s8 %v7045
    %v7047 = vlaneseq
    %v7048 = vshrl.u32 %v7047, 7
    %v7049 = vsub.s32 %v7046, %v7048
    %v7050 = vrot.slane %v7040, %v7049
    %v7052 = vunpack.c.l.s4 1966171168
    %v7053 = vunpack.c.0.s8 %v7052
    %v7054 = vlaneseq
    %v7055 = vshrl.u32 %v7054, 7
    %v7056 = vsub.s32 %v7053, %v7055
    %v7057 = vrot.slane %v7041, %v7056
    %v7059 = vunpack.c.l.s4 1966171168
    %v7060 = vunpack.c.0.s8 %v7059
    %v7061 = vlaneseq
    %v7062 = vshrl.u32 %v7061, 7
    %v7063 = vsub.s32 %v7060, %v7062
    %v7064 = vrot.slane %v7042, %v7063
    %v7066 = vunpack.c.l.s4 1966171168
    %v7067 = vunpack.c.0.s8 %v7066
    %v7068 = vlaneseq
    %v7069 = vshrl.u32 %v7068, 7
    %v7070 = vsub.s32 %v7067, %v7069
    %v7071 = vrot.slane %v7043, %v7070
    %v7072 = vcombine.low %v7050, %v7057
    %v7073 = vcombine.low %v7064, %v7071
    %v7075 = vunpack.c.l.s4 1966171168
    %v7076 = vunpack.c.0.s8 %v7075
    %v7077 = vlaneseq
    %v7078 = vshrl.u32 %v7077, 7
    %v7079 = vsub.s32 %v7076, %v7078
    %v7080 = vrot.slane %v7072, %v7079
    %v7082 = vunpack.c.l.s4 1966171168
    %v7083 = vunpack.c.0.s8 %v7082
    %v7084 = vlaneseq
    %v7085 = vshrl.u32 %v7084, 7
    %v7086 = vsub.s32 %v7083, %v7085
    %v7087 = vrot.slane %v7073, %v7086
    %v7088 = vcombine.low %v7080, %v7087
    %v7089 = vcombine.low %v4022, %v4026
    %v7090 = vcombine.low %v4030, %v4034
    %v7091 = vcombine.low %v4038, %v4042
    %v7092 = vcombine.low %v4046, %v4050
    %v7094 = vunpack.c.l.s4 1966171168
    %v7095 = vunpack.c.0.s8 %v7094
    %v7096 = vlaneseq
    %v7097 = vshrl.u32 %v7096, 7
    %v7098 = vsub.s32 %v7095, %v7097
    %v7099 = vrot.slane %v7089, %v7098
    %v7101 = vunpack.c.l.s4 1966171168
    %v7102 = vunpack.c.0.s8 %v7101
    %v7103 = vlaneseq
    %v7104 = vshrl.u32 %v7103, 7
    %v7105 = vsub.s32 %v7102, %v7104
    %v7106 = vrot.slane %v7090, %v7105
    %v7108 = vunpack.c.l.s4 1966171168
    %v7109 = vunpack.c.0.s8 %v7108
    %v7110 = vlaneseq
    %v7111 = vshrl.u32 %v7110, 7
    %v7112 = vsub.s32 %v7109, %v7111
    %v7113 = vrot.slane %v7091, %v7112
    %v7115 = vunpack.c.l.s4 1966171168
    %v7116 = vunpack.c.0.s8 %v7115
    %v7117 = vlaneseq
    %v7118 = vshrl.u32 %v7117, 7
    %v7119 = vsub.s32 %v7116, %v7118
    %v7120 = vrot.slane %v7092, %v7119
    %v7121 = vcombine.low %v7099, %v7106
    %v7122 = vcombine.low %v7113, %v7120
    %v7124 = vunpack.c.l.s4 1966171168
    %v7125 = vunpack.c.0.s8 %v7124
    %v7126 = vlaneseq
    %v7127 = vshrl.u32 %v7126, 7
    %v7128 = vsub.s32 %v7125, %v7127
    %v7129 = vrot.slane %v7121, %v7128
    %v7131 = vunpack.c.l.s4 1966171168
    %v7132 = vunpack.c.0.s8 %v7131
    %v7133 = vlaneseq
    %v7134 = vshrl.u32 %v7133, 7
    %v7135 = vsub.s32 %v7132, %v7134
    %v7136 = vrot.slane %v7122, %v7135
    %v7137 = vcombine.low %v7129, %v7136
    %v7138 = vcombine.low %v4054, %v4058
    %v7139 = vcombine.low %v4062, %v4066
    %v7140 = vcombine.low %v4070, %v4074
    %v7141 = vcombine.low %v4078, %v4082
    %v7143 = vunpack.c.l.s4 1966171168
    %v7144 = vunpack.c.0.s8 %v7143
    %v7145 = vlaneseq
    %v7146 = vshrl.u32 %v7145, 7
    %v7147 = vsub.s32 %v7144, %v7146
    %v7148 = vrot.slane %v7138, %v7147
    %v7150 = vunpack.c.l.s4 1966171168
    %v7151 = vunpack.c.0.s8 %v7150
    %v7152 = vlaneseq
    %v7153 = vshrl.u32 %v7152, 7
    %v7154 = vsub.s32 %v7151, %v7153
    %v7155 = vrot.slane %v7139, %v7154
    %v7157 = vunpack.c.l.s4 1966171168
    %v7158 = vunpack.c.0.s8 %v7157
    %v7159 = vlaneseq
    %v7160 = vshrl.u32 %v7159, 7
    %v7161 = vsub.s32 %v7158, %v7160
    %v7162 = vrot.slane %v7140, %v7161
    %v7164 = vunpack.c.l.s4 1966171168
    %v7165 = vunpack.c.0.s8 %v7164
    %v7166 = vlaneseq
    %v7167 = vshrl.u32 %v7166, 7
    %v7168 = vsub.s32 %v7165, %v7167
    %v7169 = vrot.slane %v7141, %v7168
    %v7170 = vcombine.low %v7148, %v7155
    %v7171 = vcombine.low %v7162, %v7169
    %v7173 = vunpack.c.l.s4 1966171168
    %v7174 = vunpack.c.0.s8 %v7173
    %v7175 = vlaneseq
    %v7176 = vshrl.u32 %v7175, 7
    %v7177 = vsub.s32 %v7174, %v7176
    %v7178 = vrot.slane %v7170, %v7177
    %v7180 = vunpack.c.l.s4 1966171168
    %v7181 = vunpack.c.0.s8 %v7180
    %v7182 = vlaneseq
    %v7183 = vshrl.u32 %v7182, 7
    %v7184 = vsub.s32 %v7181, %v7183
    %v7185 = vrot.slane %v7171, %v7184
    %v7186 = vcombine.low %v7178, %v7185
    %v7187 = vcombine.low %v4086, %v4090
    %v7188 = vcombine.low %v4094, %v4098
    %v7189 = vcombine.low %v4102, %v4106
    %v7190 = vcombine.low %v4110, %v4114
    %v7192 = vunpack.c.l.s4 1966171168
    %v7193 = vunpack.c.0.s8 %v7192
    %v7194 = vlaneseq
    %v7195 = vshrl.u32 %v7194, 7
    %v7196 = vsub.s32 %v7193, %v7195
    %v7197 = vrot.slane %v7187, %v7196
    %v7199 = vunpack.c.l.s4 1966171168
    %v7200 = vunpack.c.0.s8 %v7199
    %v7201 = vlaneseq
    %v7202 = vshrl.u32 %v7201, 7
    %v7203 = vsub.s32 %v7200, %v7202
    %v7204 = vrot.slane %v7188, %v7203
    %v7206 = vunpack.c.l.s4 1966171168
    %v7207 = vunpack.c.0.s8 %v7206
    %v7208 = vlaneseq
    %v7209 = vshrl.u32 %v7208, 7
    %v7210 = vsub.s32 %v7207, %v7209
    %v7211 = vrot.slane %v7189, %v7210
    %v7213 = vunpack.c.l.s4 1966171168
    %v7214 = vunpack.c.0.s8 %v7213
    %v7215 = vlaneseq
    %v7216 = vshrl.u32 %v7215, 7
    %v7217 = vsub.s32 %v7214, %v7216
    %v7218 = vrot.slane %v7190, %v7217
    %v7219 = vcombine.low %v7197, %v7204
    %v7220 = vcombine.low %v7211, %v7218
    %v7222 = vunpack.c.l.s4 1966171168
    %v7223 = vunpack.c.0.s8 %v7222
    %v7224 = vlaneseq
    %v7225 = vshrl.u32 %v7224, 7
    %v7226 = vsub.s32 %v7223, %v7225
    %v7227 = vrot.slane %v7219, %v7226
    %v7229 = vunpack.c.l.s4 1966171168
    %v7230 = vunpack.c.0.s8 %v7229
    %v7231 = vlaneseq
    %v7232 = vshrl.u32 %v7231, 7
    %v7233 = vsub.s32 %v7230, %v7232
    %v7234 = vrot.slane %v7220, %v7233
    %v7235 = vcombine.low %v7227, %v7234
    %v7236 = vcombine.low %v4118, %v4122
    %v7237 = vcombine.low %v4126, %v4130
    %v7238 = vcombine.low %v4134, %v4138
    %v7239 = vcombine.low %v4142, %v4146
    %v7241 = vunpack.c.l.s4 1966171168
    %v7242 = vunpack.c.0.s8 %v7241
    %v7243 = vlaneseq
    %v7244 = vshrl.u32 %v7243, 7
    %v7245 = vsub.s32 %v7242, %v7244
    %v7246 = vrot.slane %v7236, %v7245
    %v7248 = vunpack.c.l.s4 1966171168
    %v7249 = vunpack.c.0.s8 %v7248
    %v7250 = vlaneseq
    %v7251 = vshrl.u32 %v7250, 7
    %v7252 = vsub.s32 %v7249, %v7251
    %v7253 = vrot.slane %v7237, %v7252
    %v7255 = vunpack.c.l.s4 1966171168
    %v7256 = vunpack.c.0.s8 %v7255
    %v7257 = vlaneseq
    %v7258 = vshrl.u32 %v7257, 7
    %v7259 = vsub.s32 %v7256, %v7258
    %v7260 = vrot.slane %v7238, %v7259
    %v7262 = vunpack.c.l.s4 1966171168
    %v7263 = vunpack.c.0.s8 %v7262
    %v7264 = vlaneseq
    %v7265 = vshrl.u32 %v7264, 7
    %v7266 = vsub.s32 %v7263, %v7265
    %v7267 = vrot.slane %v7239, %v7266
    %v7268 = vcombine.low %v7246, %v7253
    %v7269 = vcombine.low %v7260, %v7267
    %v7271 = vunpack.c.l.s4 1966171168
    %v7272 = vunpack.c.0.s8 %v7271
    %v7273 = vlaneseq
    %v7274 = vshrl.u32 %v7273, 7
    %v7275 = vsub.s32 %v7272, %v7274
    %v7276 = vrot.slane %v7268, %v7275
    %v7278 = vunpack.c.l.s4 1966171168
    %v7279 = vunpack.c.0.s8 %v7278
    %v7280 = vlaneseq
    %v7281 = vshrl.u32 %v7280, 7
    %v7282 = vsub.s32 %v7279, %v7281
    %v7283 = vrot.slane %v7269, %v7282
    %v7284 = vcombine.low %v7276, %v7283
    %v7285 = vcombine.low %v4150, %v4154
    %v7286 = vcombine.low %v4158, %v4162
    %v7287 = vcombine.low %v4166, %v4170
    %v7288 = vcombine.low %v4174, %v4178
    %v7290 = vunpack.c.l.s4 1966171168
    %v7291 = vunpack.c.0.s8 %v7290
    %v7292 = vlaneseq
    %v7293 = vshrl.u32 %v7292, 7
    %v7294 = vsub.s32 %v7291, %v7293
    %v7295 = vrot.slane %v7285, %v7294
    %v7297 = vunpack.c.l.s4 1966171168
    %v7298 = vunpack.c.0.s8 %v7297
    %v7299 = vlaneseq
    %v7300 = vshrl.u32 %v7299, 7
    %v7301 = vsub.s32 %v7298, %v7300
    %v7302 = vrot.slane %v7286, %v7301
    %v7304 = vunpack.c.l.s4 1966171168
    %v7305 = vunpack.c.0.s8 %v7304
    %v7306 = vlaneseq
    %v7307 = vshrl.u32 %v7306, 7
    %v7308 = vsub.s32 %v7305, %v7307
    %v7309 = vrot.slane %v7287, %v7308
    %v7311 = vunpack.c.l.s4 1966171168
    %v7312 = vunpack.c.0.s8 %v7311
    %v7313 = vlaneseq
    %v7314 = vshrl.u32 %v7313, 7
    %v7315 = vsub.s32 %v7312, %v7314
    %v7316 = vrot.slane %v7288, %v7315
    %v7317 = vcombine.low %v7295, %v7302
    %v7318 = vcombine.low %v7309, %v7316
    %v7320 = vunpack.c.l.s4 1966171168
    %v7321 = vunpack.c.0.s8 %v7320
    %v7322 = vlaneseq
    %v7323 = vshrl.u32 %v7322, 7
    %v7324 = vsub.s32 %v7321, %v7323
    %v7325 = vrot.slane %v7317, %v7324
    %v7327 = vunpack.c.l.s4 1966171168
    %v7328 = vunpack.c.0.s8 %v7327
    %v7329 = vlaneseq
    %v7330 = vshrl.u32 %v7329, 7
    %v7331 = vsub.s32 %v7328, %v7330
    %v7332 = vrot.slane %v7318, %v7331
    %v7333 = vcombine.low %v7325, %v7332
    %v7334 = vcombine.low %v4182, %v4186
    %v7335 = vcombine.low %v4190, %v4194
    %v7336 = vcombine.low %v4198, %v4202
    %v7337 = vcombine.low %v4206, %v4210
    %v7339 = vunpack.c.l.s4 1966171168
    %v7340 = vunpack.c.0.s8 %v7339
    %v7341 = vlaneseq
    %v7342 = vshrl.u32 %v7341, 7
    %v7343 = vsub.s32 %v7340, %v7342
    %v7344 = vrot.slane %v7334, %v7343
    %v7346 = vunpack.c.l.s4 1966171168
    %v7347 = vunpack.c.0.s8 %v7346
    %v7348 = vlaneseq
    %v7349 = vshrl.u32 %v7348, 7
    %v7350 = vsub.s32 %v7347, %v7349
    %v7351 = vrot.slane %v7335, %v7350
    %v7353 = vunpack.c.l.s4 1966171168
    %v7354 = vunpack.c.0.s8 %v7353
    %v7355 = vlaneseq
    %v7356 = vshrl.u32 %v7355, 7
    %v7357 = vsub.s32 %v7354, %v7356
    %v7358 = vrot.slane %v7336, %v7357
    %v7360 = vunpack.c.l.s4 1966171168
    %v7361 = vunpack.c.0.s8 %v7360
    %v7362 = vlaneseq
    %v7363 = vshrl.u32 %v7362, 7
    %v7364 = vsub.s32 %v7361, %v7363
    %v7365 = vrot.slane %v7337, %v7364
    %v7366 = vcombine.low %v7344, %v7351
    %v7367 = vcombine.low %v7358, %v7365
    %v7369 = vunpack.c.l.s4 1966171168
    %v7370 = vunpack.c.0.s8 %v7369
    %v7371 = vlaneseq
    %v7372 = vshrl.u32 %v7371, 7
    %v7373 = vsub.s32 %v7370, %v7372
    %v7374 = vrot.slane %v7366, %v7373
    %v7376 = vunpack.c.l.s4 1966171168
    %v7377 = vunpack.c.0.s8 %v7376
    %v7378 = vlaneseq
    %v7379 = vshrl.u32 %v7378, 7
    %v7380 = vsub.s32 %v7377, %v7379
    %v7381 = vrot.slane %v7367, %v7380
    %v7382 = vcombine.low %v7374, %v7381
    %v7383 = vcombine.low %v4214, %v4218
    %v7384 = vcombine.low %v4222, %v4226
    %v7385 = vcombine.low %v4230, %v4234
    %v7386 = vcombine.low %v4238, %v4242
    %v7388 = vunpack.c.l.s4 1966171168
    %v7389 = vunpack.c.0.s8 %v7388
    %v7390 = vlaneseq
    %v7391 = vshrl.u32 %v7390, 7
    %v7392 = vsub.s32 %v7389, %v7391
    %v7393 = vrot.slane %v7383, %v7392
    %v7395 = vunpack.c.l.s4 1966171168
    %v7396 = vunpack.c.0.s8 %v7395
    %v7397 = vlaneseq
    %v7398 = vshrl.u32 %v7397, 7
    %v7399 = vsub.s32 %v7396, %v7398
    %v7400 = vrot.slane %v7384, %v7399
    %v7402 = vunpack.c.l.s4 1966171168
    %v7403 = vunpack.c.0.s8 %v7402
    %v7404 = vlaneseq
    %v7405 = vshrl.u32 %v7404, 7
    %v7406 = vsub.s32 %v7403, %v7405
    %v7407 = vrot.slane %v7385, %v7406
    %v7409 = vunpack.c.l.s4 1966171168
    %v7410 = vunpack.c.0.s8 %v7409
    %v7411 = vlaneseq
    %v7412 = vshrl.u32 %v7411, 7
    %v7413 = vsub.s32 %v7410, %v7412
    %v7414 = vrot.slane %v7386, %v7413
    %v7415 = vcombine.low %v7393, %v7400
    %v7416 = vcombine.low %v7407, %v7414
    %v7418 = vunpack.c.l.s4 1966171168
    %v7419 = vunpack.c.0.s8 %v7418
    %v7420 = vlaneseq
    %v7421 = vshrl.u32 %v7420, 7
    %v7422 = vsub.s32 %v7419, %v7421
    %v7423 = vrot.slane %v7415, %v7422
    %v7425 = vunpack.c.l.s4 1966171168
    %v7426 = vunpack.c.0.s8 %v7425
    %v7427 = vlaneseq
    %v7428 = vshrl.u32 %v7427, 7
    %v7429 = vsub.s32 %v7426, %v7428
    %v7430 = vrot.slane %v7416, %v7429
    %v7431 = vcombine.low %v7423, %v7430
    %v7432 = vcombine.low %v4246, %v4250
    %v7433 = vcombine.low %v4254, %v4258
    %v7434 = vcombine.low %v4262, %v4266
    %v7435 = vcombine.low %v4270, %v4274
    %v7437 = vunpack.c.l.s4 1966171168
    %v7438 = vunpack.c.0.s8 %v7437
    %v7439 = vlaneseq
    %v7440 = vshrl.u32 %v7439, 7
    %v7441 = vsub.s32 %v7438, %v7440
    %v7442 = vrot.slane %v7432, %v7441
    %v7444 = vunpack.c.l.s4 1966171168
    %v7445 = vunpack.c.0.s8 %v7444
    %v7446 = vlaneseq
    %v7447 = vshrl.u32 %v7446, 7
    %v7448 = vsub.s32 %v7445, %v7447
    %v7449 = vrot.slane %v7433, %v7448
    %v7451 = vunpack.c.l.s4 1966171168
    %v7452 = vunpack.c.0.s8 %v7451
    %v7453 = vlaneseq
    %v7454 = vshrl.u32 %v7453, 7
    %v7455 = vsub.s32 %v7452, %v7454
    %v7456 = vrot.slane %v7434, %v7455
    %v7458 = vunpack.c.l.s4 1966171168
    %v7459 = vunpack.c.0.s8 %v7458
    %v7460 = vlaneseq
    %v7461 = vshrl.u32 %v7460, 7
    %v7462 = vsub.s32 %v7459, %v7461
    %v7463 = vrot.slane %v7435, %v7462
    %v7464 = vcombine.low %v7442, %v7449
    %v7465 = vcombine.low %v7456, %v7463
    %v7467 = vunpack.c.l.s4 1966171168
    %v7468 = vunpack.c.0.s8 %v7467
    %v7469 = vlaneseq
    %v7470 = vshrl.u32 %v7469, 7
    %v7471 = vsub.s32 %v7468, %v7470
    %v7472 = vrot.slane %v7464, %v7471
    %v7474 = vunpack.c.l.s4 1966171168
    %v7475 = vunpack.c.0.s8 %v7474
    %v7476 = vlaneseq
    %v7477 = vshrl.u32 %v7476, 7
    %v7478 = vsub.s32 %v7475, %v7477
    %v7479 = vrot.slane %v7465, %v7478
    %v7480 = vcombine.low %v7472, %v7479
    %v7481 = vcombine.low %v4278, %v4282
    %v7482 = vcombine.low %v4286, %v4290
    %v7483 = vcombine.low %v4294, %v4298
    %v7484 = vcombine.low %v4302, %v4306
    %v7486 = vunpack.c.l.s4 1966171168
    %v7487 = vunpack.c.0.s8 %v7486
    %v7488 = vlaneseq
    %v7489 = vshrl.u32 %v7488, 7
    %v7490 = vsub.s32 %v7487, %v7489
    %v7491 = vrot.slane %v7481, %v7490
    %v7493 = vunpack.c.l.s4 1966171168
    %v7494 = vunpack.c.0.s8 %v7493
    %v7495 = vlaneseq
    %v7496 = vshrl.u32 %v7495, 7
    %v7497 = vsub.s32 %v7494, %v7496
    %v7498 = vrot.slane %v7482, %v7497
    %v7500 = vunpack.c.l.s4 1966171168
    %v7501 = vunpack.c.0.s8 %v7500
    %v7502 = vlaneseq
    %v7503 = vshrl.u32 %v7502, 7
    %v7504 = vsub.s32 %v7501, %v7503
    %v7505 = vrot.slane %v7483, %v7504
    %v7507 = vunpack.c.l.s4 1966171168
    %v7508 = vunpack.c.0.s8 %v7507
    %v7509 = vlaneseq
    %v7510 = vshrl.u32 %v7509, 7
    %v7511 = vsub.s32 %v7508, %v7510
    %v7512 = vrot.slane %v7484, %v7511
    %v7513 = vcombine.low %v7491, %v7498
    %v7514 = vcombine.low %v7505, %v7512
    %v7516 = vunpack.c.l.s4 1966171168
    %v7517 = vunpack.c.0.s8 %v7516
    %v7518 = vlaneseq
    %v7519 = vshrl.u32 %v7518, 7
    %v7520 = vsub.s32 %v7517, %v7519
    %v7521 = vrot.slane %v7513, %v7520
    %v7523 = vunpack.c.l.s4 1966171168
    %v7524 = vunpack.c.0.s8 %v7523
    %v7525 = vlaneseq
    %v7526 = vshrl.u32 %v7525, 7
    %v7527 = vsub.s32 %v7524, %v7526
    %v7528 = vrot.slane %v7514, %v7527
    %v7529 = vcombine.low %v7521, %v7528
    %v7530 = vcombine.low %v4310, %v4314
    %v7531 = vcombine.low %v4318, %v4322
    %v7532 = vcombine.low %v4326, %v4330
    %v7533 = vcombine.low %v4334, %v4338
    %v7535 = vunpack.c.l.s4 1966171168
    %v7536 = vunpack.c.0.s8 %v7535
    %v7537 = vlaneseq
    %v7538 = vshrl.u32 %v7537, 7
    %v7539 = vsub.s32 %v7536, %v7538
    %v7540 = vrot.slane %v7530, %v7539
    %v7542 = vunpack.c.l.s4 1966171168
    %v7543 = vunpack.c.0.s8 %v7542
    %v7544 = vlaneseq
    %v7545 = vshrl.u32 %v7544, 7
    %v7546 = vsub.s32 %v7543, %v7545
    %v7547 = vrot.slane %v7531, %v7546
    %v7549 = vunpack.c.l.s4 1966171168
    %v7550 = vunpack.c.0.s8 %v7549
    %v7551 = vlaneseq
    %v7552 = vshrl.u32 %v7551, 7
    %v7553 = vsub.s32 %v7550, %v7552
    %v7554 = vrot.slane %v7532, %v7553
    %v7556 = vunpack.c.l.s4 1966171168
    %v7557 = vunpack.c.0.s8 %v7556
    %v7558 = vlaneseq
    %v7559 = vshrl.u32 %v7558, 7
    %v7560 = vsub.s32 %v7557, %v7559
    %v7561 = vrot.slane %v7533, %v7560
    %v7562 = vcombine.low %v7540, %v7547
    %v7563 = vcombine.low %v7554, %v7561
    %v7565 = vunpack.c.l.s4 1966171168
    %v7566 = vunpack.c.0.s8 %v7565
    %v7567 = vlaneseq
    %v7568 = vshrl.u32 %v7567, 7
    %v7569 = vsub.s32 %v7566, %v7568
    %v7570 = vrot.slane %v7562, %v7569
    %v7572 = vunpack.c.l.s4 1966171168
    %v7573 = vunpack.c.0.s8 %v7572
    %v7574 = vlaneseq
    %v7575 = vshrl.u32 %v7574, 7
    %v7576 = vsub.s32 %v7573, %v7575
    %v7577 = vrot.slane %v7563, %v7576
    %v7578 = vcombine.low %v7570, %v7577
    %v7579 = vcombine.low %v4342, %v4346
    %v7580 = vcombine.low %v4350, %v4354
    %v7581 = vcombine.low %v4358, %v4362
    %v7582 = vcombine.low %v4366, %v4370
    %v7584 = vunpack.c.l.s4 1966171168
    %v7585 = vunpack.c.0.s8 %v7584
    %v7586 = vlaneseq
    %v7587 = vshrl.u32 %v7586, 7
    %v7588 = vsub.s32 %v7585, %v7587
    %v7589 = vrot.slane %v7579, %v7588
    %v7591 = vunpack.c.l.s4 1966171168
    %v7592 = vunpack.c.0.s8 %v7591
    %v7593 = vlaneseq
    %v7594 = vshrl.u32 %v7593, 7
    %v7595 = vsub.s32 %v7592, %v7594
    %v7596 = vrot.slane %v7580, %v7595
    %v7598 = vunpack.c.l.s4 1966171168
    %v7599 = vunpack.c.0.s8 %v7598
    %v7600 = vlaneseq
    %v7601 = vshrl.u32 %v7600, 7
    %v7602 = vsub.s32 %v7599, %v7601
    %v7603 = vrot.slane %v7581, %v7602
    %v7605 = vunpack.c.l.s4 1966171168
    %v7606 = vunpack.c.0.s8 %v7605
    %v7607 = vlaneseq
    %v7608 = vshrl.u32 %v7607, 7
    %v7609 = vsub.s32 %v7606, %v7608
    %v7610 = vrot.slane %v7582, %v7609
    %v7611 = vcombine.low %v7589, %v7596
    %v7612 = vcombine.low %v7603, %v7610
    %v7614 = vunpack.c.l.s4 1966171168
    %v7615 = vunpack.c.0.s8 %v7614
    %v7616 = vlaneseq
    %v7617 = vshrl.u32 %v7616, 7
    %v7618 = vsub.s32 %v7615, %v7617
    %v7619 = vrot.slane %v7611, %v7618
    %v7621 = vunpack.c.l.s4 1966171168
    %v7622 = vunpack.c.0.s8 %v7621
    %v7623 = vlaneseq
    %v7624 = vshrl.u32 %v7623, 7
    %v7625 = vsub.s32 %v7622, %v7624
    %v7626 = vrot.slane %v7612, %v7625
    %v7627 = vcombine.low %v7619, %v7626
    %v7628 = vcombine.low %v4374, %v4378
    %v7629 = vcombine.low %v4382, %v4386
    %v7630 = vcombine.low %v4390, %v4394
    %v7631 = vcombine.low %v4398, %v4402
    %v7633 = vunpack.c.l.s4 1966171168
    %v7634 = vunpack.c.0.s8 %v7633
    %v7635 = vlaneseq
    %v7636 = vshrl.u32 %v7635, 7
    %v7637 = vsub.s32 %v7634, %v7636
    %v7638 = vrot.slane %v7628, %v7637
    %v7640 = vunpack.c.l.s4 1966171168
    %v7641 = vunpack.c.0.s8 %v7640
    %v7642 = vlaneseq
    %v7643 = vshrl.u32 %v7642, 7
    %v7644 = vsub.s32 %v7641, %v7643
    %v7645 = vrot.slane %v7629, %v7644
    %v7647 = vunpack.c.l.s4 1966171168
    %v7648 = vunpack.c.0.s8 %v7647
    %v7649 = vlaneseq
    %v7650 = vshrl.u32 %v7649, 7
    %v7651 = vsub.s32 %v7648, %v7650
    %v7652 = vrot.slane %v7630, %v7651
    %v7654 = vunpack.c.l.s4 1966171168
    %v7655 = vunpack.c.0.s8 %v7654
    %v7656 = vlaneseq
    %v7657 = vshrl.u32 %v7656, 7
    %v7658 = vsub.s32 %v7655, %v7657
    %v7659 = vrot.slane %v7631, %v7658
    %v7660 = vcombine.low %v7638, %v7645
    %v7661 = vcombine.low %v7652, %v7659
    %v7663 = vunpack.c.l.s4 1966171168
    %v7664 = vunpack.c.0.s8 %v7663
    %v7665 = vlaneseq
    %v7666 = vshrl.u32 %v7665, 7
    %v7667 = vsub.s32 %v7664, %v7666
    %v7668 = vrot.slane %v7660, %v7667
    %v7670 = vunpack.c.l.s4 1966171168
    %v7671 = vunpack.c.0.s8 %v7670
    %v7672 = vlaneseq
    %v7673 = vshrl.u32 %v7672, 7
    %v7674 = vsub.s32 %v7671, %v7673
    %v7675 = vrot.slane %v7661, %v7674
    %v7676 = vcombine.low %v7668, %v7675
    %v7677 = vcombine.low %v4406, %v4410
    %v7678 = vcombine.low %v4414, %v4418
    %v7679 = vcombine.low %v4422, %v4426
    %v7680 = vcombine.low %v4430, %v4434
    %v7682 = vunpack.c.l.s4 1966171168
    %v7683 = vunpack.c.0.s8 %v7682
    %v7684 = vlaneseq
    %v7685 = vshrl.u32 %v7684, 7
    %v7686 = vsub.s32 %v7683, %v7685
    %v7687 = vrot.slane %v7677, %v7686
    %v7689 = vunpack.c.l.s4 1966171168
    %v7690 = vunpack.c.0.s8 %v7689
    %v7691 = vlaneseq
    %v7692 = vshrl.u32 %v7691, 7
    %v7693 = vsub.s32 %v7690, %v7692
    %v7694 = vrot.slane %v7678, %v7693
    %v7696 = vunpack.c.l.s4 1966171168
    %v7697 = vunpack.c.0.s8 %v7696
    %v7698 = vlaneseq
    %v7699 = vshrl.u32 %v7698, 7
    %v7700 = vsub.s32 %v7697, %v7699
    %v7701 = vrot.slane %v7679, %v7700
    %v7703 = vunpack.c.l.s4 1966171168
    %v7704 = vunpack.c.0.s8 %v7703
    %v7705 = vlaneseq
    %v7706 = vshrl.u32 %v7705, 7
    %v7707 = vsub.s32 %v7704, %v7706
    %v7708 = vrot.slane %v7680, %v7707
    %v7709 = vcombine.low %v7687, %v7694
    %v7710 = vcombine.low %v7701, %v7708
    %v7712 = vunpack.c.l.s4 1966171168
    %v7713 = vunpack.c.0.s8 %v7712
    %v7714 = vlaneseq
    %v7715 = vshrl.u32 %v7714, 7
    %v7716 = vsub.s32 %v7713, %v7715
    %v7717 = vrot.slane %v7709, %v7716
    %v7719 = vunpack.c.l.s4 1966171168
    %v7720 = vunpack.c.0.s8 %v7719
    %v7721 = vlaneseq
    %v7722 = vshrl.u32 %v7721, 7
    %v7723 = vsub.s32 %v7720, %v7722
    %v7724 = vrot.slane %v7710, %v7723
    %v7725 = vcombine.low %v7717, %v7724
    %v7726 = vcombine.low %v4438, %v4442
    %v7727 = vcombine.low %v4446, %v4450
    %v7728 = vcombine.low %v4454, %v4458
    %v7729 = vcombine.low %v4462, %v4466
    %v7731 = vunpack.c.l.s4 1966171168
    %v7732 = vunpack.c.0.s8 %v7731
    %v7733 = vlaneseq
    %v7734 = vshrl.u32 %v7733, 7
    %v7735 = vsub.s32 %v7732, %v7734
    %v7736 = vrot.slane %v7726, %v7735
    %v7738 = vunpack.c.l.s4 1966171168
    %v7739 = vunpack.c.0.s8 %v7738
    %v7740 = vlaneseq
    %v7741 = vshrl.u32 %v7740, 7
    %v7742 = vsub.s32 %v7739, %v7741
    %v7743 = vrot.slane %v7727, %v7742
    %v7745 = vunpack.c.l.s4 1966171168
    %v7746 = vunpack.c.0.s8 %v7745
    %v7747 = vlaneseq
    %v7748 = vshrl.u32 %v7747, 7
    %v7749 = vsub.s32 %v7746, %v7748
    %v7750 = vrot.slane %v7728, %v7749
    %v7752 = vunpack.c.l.s4 1966171168
    %v7753 = vunpack.c.0.s8 %v7752
    %v7754 = vlaneseq
    %v7755 = vshrl.u32 %v7754, 7
    %v7756 = vsub.s32 %v7753, %v7755
    %v7757 = vrot.slane %v7729, %v7756
    %v7758 = vcombine.low %v7736, %v7743
    %v7759 = vcombine.low %v7750, %v7757
    %v7761 = vunpack.c.l.s4 1966171168
    %v7762 = vunpack.c.0.s8 %v7761
    %v7763 = vlaneseq
    %v7764 = vshrl.u32 %v7763, 7
    %v7765 = vsub.s32 %v7762, %v7764
    %v7766 = vrot.slane %v7758, %v7765
    %v7768 = vunpack.c.l.s4 1966171168
    %v7769 = vunpack.c.0.s8 %v7768
    %v7770 = vlaneseq
    %v7771 = vshrl.u32 %v7770, 7
    %v7772 = vsub.s32 %v7769, %v7771
    %v7773 = vrot.slane %v7759, %v7772
    %v7774 = vcombine.low %v7766, %v7773
    %v7775 = vcombine.low %v4470, %v4474
    %v7776 = vcombine.low %v4478, %v4482
    %v7777 = vcombine.low %v4486, %v4490
    %v7778 = vcombine.low %v4494, %v4498
    %v7780 = vunpack.c.l.s4 1966171168
    %v7781 = vunpack.c.0.s8 %v7780
    %v7782 = vlaneseq
    %v7783 = vshrl.u32 %v7782, 7
    %v7784 = vsub.s32 %v7781, %v7783
    %v7785 = vrot.slane %v7775, %v7784
    %v7787 = vunpack.c.l.s4 1966171168
    %v7788 = vunpack.c.0.s8 %v7787
    %v7789 = vlaneseq
    %v7790 = vshrl.u32 %v7789, 7
    %v7791 = vsub.s32 %v7788, %v7790
    %v7792 = vrot.slane %v7776, %v7791
    %v7794 = vunpack.c.l.s4 1966171168
    %v7795 = vunpack.c.0.s8 %v7794
    %v7796 = vlaneseq
    %v7797 = vshrl.u32 %v7796, 7
    %v7798 = vsub.s32 %v7795, %v7797
    %v7799 = vrot.slane %v7777, %v7798
    %v7801 = vunpack.c.l.s4 1966171168
    %v7802 = vunpack.c.0.s8 %v7801
    %v7803 = vlaneseq
    %v7804 = vshrl.u32 %v7803, 7
    %v7805 = vsub.s32 %v7802, %v7804
    %v7806 = vrot.slane %v7778, %v7805
    %v7807 = vcombine.low %v7785, %v7792
    %v7808 = vcombine.low %v7799, %v7806
    %v7810 = vunpack.c.l.s4 1966171168
    %v7811 = vunpack.c.0.s8 %v7810
    %v7812 = vlaneseq
    %v7813 = vshrl.u32 %v7812, 7
    %v7814 = vsub.s32 %v7811, %v7813
    %v7815 = vrot.slane %v7807, %v7814
    %v7817 = vunpack.c.l.s4 1966171168
    %v7818 = vunpack.c.0.s8 %v7817
    %v7819 = vlaneseq
    %v7820 = vshrl.u32 %v7819, 7
    %v7821 = vsub.s32 %v7818, %v7820
    %v7822 = vrot.slane %v7808, %v7821
    %v7823 = vcombine.low %v7815, %v7822
    %v7824 = vcombine.low %v4502, %v4506
    %v7825 = vcombine.low %v4510, %v4514
    %v7826 = vcombine.low %v4518, %v4522
    %v7827 = vcombine.low %v4526, %v4530
    %v7829 = vunpack.c.l.s4 1966171168
    %v7830 = vunpack.c.0.s8 %v7829
    %v7831 = vlaneseq
    %v7832 = vshrl.u32 %v7831, 7
    %v7833 = vsub.s32 %v7830, %v7832
    %v7834 = vrot.slane %v7824, %v7833
    %v7836 = vunpack.c.l.s4 1966171168
    %v7837 = vunpack.c.0.s8 %v7836
    %v7838 = vlaneseq
    %v7839 = vshrl.u32 %v7838, 7
    %v7840 = vsub.s32 %v7837, %v7839
    %v7841 = vrot.slane %v7825, %v7840
    %v7843 = vunpack.c.l.s4 1966171168
    %v7844 = vunpack.c.0.s8 %v7843
    %v7845 = vlaneseq
    %v7846 = vshrl.u32 %v7845, 7
    %v7847 = vsub.s32 %v7844, %v7846
    %v7848 = vrot.slane %v7826, %v7847
    %v7850 = vunpack.c.l.s4 1966171168
    %v7851 = vunpack.c.0.s8 %v7850
    %v7852 = vlaneseq
    %v7853 = vshrl.u32 %v7852, 7
    %v7854 = vsub.s32 %v7851, %v7853
    %v7855 = vrot.slane %v7827, %v7854
    %v7856 = vcombine.low %v7834, %v7841
    %v7857 = vcombine.low %v7848, %v7855
    %v7859 = vunpack.c.l.s4 1966171168
    %v7860 = vunpack.c.0.s8 %v7859
    %v7861 = vlaneseq
    %v7862 = vshrl.u32 %v7861, 7
    %v7863 = vsub.s32 %v7860, %v7862
    %v7864 = vrot.slane %v7856, %v7863
    %v7866 = vunpack.c.l.s4 1966171168
    %v7867 = vunpack.c.0.s8 %v7866
    %v7868 = vlaneseq
    %v7869 = vshrl.u32 %v7868, 7
    %v7870 = vsub.s32 %v7867, %v7869
    %v7871 = vrot.slane %v7857, %v7870
    %v7872 = vcombine.low %v7864, %v7871
    %v7873 = vcombine.low %v4534, %v4538
    %v7874 = vcombine.low %v4542, %v4546
    %v7875 = vcombine.low %v4550, %v4554
    %v7876 = vcombine.low %v4558, %v4562
    %v7878 = vunpack.c.l.s4 1966171168
    %v7879 = vunpack.c.0.s8 %v7878
    %v7880 = vlaneseq
    %v7881 = vshrl.u32 %v7880, 7
    %v7882 = vsub.s32 %v7879, %v7881
    %v7883 = vrot.slane %v7873, %v7882
    %v7885 = vunpack.c.l.s4 1966171168
    %v7886 = vunpack.c.0.s8 %v7885
    %v7887 = vlaneseq
    %v7888 = vshrl.u32 %v7887, 7
    %v7889 = vsub.s32 %v7886, %v7888
    %v7890 = vrot.slane %v7874, %v7889
    %v7892 = vunpack.c.l.s4 1966171168
    %v7893 = vunpack.c.0.s8 %v7892
    %v7894 = vlaneseq
    %v7895 = vshrl.u32 %v7894, 7
    %v7896 = vsub.s32 %v7893, %v7895
    %v7897 = vrot.slane %v7875, %v7896
    %v7899 = vunpack.c.l.s4 1966171168
    %v7900 = vunpack.c.0.s8 %v7899
    %v7901 = vlaneseq
    %v7902 = vshrl.u32 %v7901, 7
    %v7903 = vsub.s32 %v7900, %v7902
    %v7904 = vrot.slane %v7876, %v7903
    %v7905 = vcombine.low %v7883, %v7890
    %v7906 = vcombine.low %v7897, %v7904
    %v7908 = vunpack.c.l.s4 1966171168
    %v7909 = vunpack.c.0.s8 %v7908
    %v7910 = vlaneseq
    %v7911 = vshrl.u32 %v7910, 7
    %v7912 = vsub.s32 %v7909, %v7911
    %v7913 = vrot.slane %v7905, %v7912
    %v7915 = vunpack.c.l.s4 1966171168
    %v7916 = vunpack.c.0.s8 %v7915
    %v7917 = vlaneseq
    %v7918 = vshrl.u32 %v7917, 7
    %v7919 = vsub.s32 %v7916, %v7918
    %v7920 = vrot.slane %v7906, %v7919
    %v7921 = vcombine.low %v7913, %v7920
    %v7922 = vcombine.low %v4566, %v4570
    %v7923 = vcombine.low %v4574, %v4578
    %v7924 = vcombine.low %v4582, %v4586
    %v7925 = vcombine.low %v4590, %v4594
    %v7927 = vunpack.c.l.s4 1966171168
    %v7928 = vunpack.c.0.s8 %v7927
    %v7929 = vlaneseq
    %v7930 = vshrl.u32 %v7929, 7
    %v7931 = vsub.s32 %v7928, %v7930
    %v7932 = vrot.slane %v7922, %v7931
    %v7934 = vunpack.c.l.s4 1966171168
    %v7935 = vunpack.c.0.s8 %v7934
    %v7936 = vlaneseq
    %v7937 = vshrl.u32 %v7936, 7
    %v7938 = vsub.s32 %v7935, %v7937
    %v7939 = vrot.slane %v7923, %v7938
    %v7941 = vunpack.c.l.s4 1966171168
    %v7942 = vunpack.c.0.s8 %v7941
    %v7943 = vlaneseq
    %v7944 = vshrl.u32 %v7943, 7
    %v7945 = vsub.s32 %v7942, %v7944
    %v7946 = vrot.slane %v7924, %v7945
    %v7948 = vunpack.c.l.s4 1966171168
    %v7949 = vunpack.c.0.s8 %v7948
    %v7950 = vlaneseq
    %v7951 = vshrl.u32 %v7950, 7
    %v7952 = vsub.s32 %v7949, %v7951
    %v7953 = vrot.slane %v7925, %v7952
    %v7954 = vcombine.low %v7932, %v7939
    %v7955 = vcombine.low %v7946, %v7953
    %v7957 = vunpack.c.l.s4 1966171168
    %v7958 = vunpack.c.0.s8 %v7957
    %v7959 = vlaneseq
    %v7960 = vshrl.u32 %v7959, 7
    %v7961 = vsub.s32 %v7958, %v7960
    %v7962 = vrot.slane %v7954, %v7961
    %v7964 = vunpack.c.l.s4 1966171168
    %v7965 = vunpack.c.0.s8 %v7964
    %v7966 = vlaneseq
    %v7967 = vshrl.u32 %v7966, 7
    %v7968 = vsub.s32 %v7965, %v7967
    %v7969 = vrot.slane %v7955, %v7968
    %v7970 = vcombine.low %v7962, %v7969
    %v7971 = vcombine.low %v4598, %v4602
    %v7972 = vcombine.low %v4606, %v4610
    %v7973 = vcombine.low %v4614, %v4618
    %v7974 = vcombine.low %v4622, %v4626
    %v7976 = vunpack.c.l.s4 1966171168
    %v7977 = vunpack.c.0.s8 %v7976
    %v7978 = vlaneseq
    %v7979 = vshrl.u32 %v7978, 7
    %v7980 = vsub.s32 %v7977, %v7979
    %v7981 = vrot.slane %v7971, %v7980
    %v7983 = vunpack.c.l.s4 1966171168
    %v7984 = vunpack.c.0.s8 %v7983
    %v7985 = vlaneseq
    %v7986 = vshrl.u32 %v7985, 7
    %v7987 = vsub.s32 %v7984, %v7986
    %v7988 = vrot.slane %v7972, %v7987
    %v7990 = vunpack.c.l.s4 1966171168
    %v7991 = vunpack.c.0.s8 %v7990
    %v7992 = vlaneseq
    %v7993 = vshrl.u32 %v7992, 7
    %v7994 = vsub.s32 %v7991, %v7993
    %v7995 = vrot.slane %v7973, %v7994
    %v7997 = vunpack.c.l.s4 1966171168
    %v7998 = vunpack.c.0.s8 %v7997
    %v7999 = vlaneseq
    %v8000 = vshrl.u32 %v7999, 7
    %v8001 = vsub.s32 %v7998, %v8000
    %v8002 = vrot.slane %v7974, %v8001
    %v8003 = vcombine.low %v7981, %v7988
    %v8004 = vcombine.low %v7995, %v8002
    %v8006 = vunpack.c.l.s4 1966171168
    %v8007 = vunpack.c.0.s8 %v8006
    %v8008 = vlaneseq
    %v8009 = vshrl.u32 %v8008, 7
    %v8010 = vsub.s32 %v8007, %v8009
    %v8011 = vrot.slane %v8003, %v8010
    %v8013 = vunpack.c.l.s4 1966171168
    %v8014 = vunpack.c.0.s8 %v8013
    %v8015 = vlaneseq
    %v8016 = vshrl.u32 %v8015, 7
    %v8017 = vsub.s32 %v8014, %v8016
    %v8018 = vrot.slane %v8004, %v8017
    %v8019 = vcombine.low %v8011, %v8018
    %v8020 = vcombine.low %v4630, %v4634
    %v8021 = vcombine.low %v4638, %v4642
    %v8022 = vcombine.low %v4646, %v4650
    %v8023 = vcombine.low %v4654, %v4658
    %v8025 = vunpack.c.l.s4 1966171168
    %v8026 = vunpack.c.0.s8 %v8025
    %v8027 = vlaneseq
    %v8028 = vshrl.u32 %v8027, 7
    %v8029 = vsub.s32 %v8026, %v8028
    %v8030 = vrot.slane %v8020, %v8029
    %v8032 = vunpack.c.l.s4 1966171168
    %v8033 = vunpack.c.0.s8 %v8032
    %v8034 = vlaneseq
    %v8035 = vshrl.u32 %v8034, 7
    %v8036 = vsub.s32 %v8033, %v8035
    %v8037 = vrot.slane %v8021, %v8036
    %v8039 = vunpack.c.l.s4 1966171168
    %v8040 = vunpack.c.0.s8 %v8039
    %v8041 = vlaneseq
    %v8042 = vshrl.u32 %v8041, 7
    %v8043 = vsub.s32 %v8040, %v8042
    %v8044 = vrot.slane %v8022, %v8043
    %v8046 = vunpack.c.l.s4 1966171168
    %v8047 = vunpack.c.0.s8 %v8046
    %v8048 = vlaneseq
    %v8049 = vshrl.u32 %v8048, 7
    %v8050 = vsub.s32 %v8047, %v8049
    %v8051 = vrot.slane %v8023, %v8050
    %v8052 = vcombine.low %v8030, %v8037
    %v8053 = vcombine.low %v8044, %v8051
    %v8055 = vunpack.c.l.s4 1966171168
    %v8056 = vunpack.c.0.s8 %v8055
    %v8057 = vlaneseq
    %v8058 = vshrl.u32 %v8057, 7
    %v8059 = vsub.s32 %v8056, %v8058
    %v8060 = vrot.slane %v8052, %v8059
    %v8062 = vunpack.c.l.s4 1966171168
    %v8063 = vunpack.c.0.s8 %v8062
    %v8064 = vlaneseq
    %v8065 = vshrl.u32 %v8064, 7
    %v8066 = vsub.s32 %v8063, %v8065
    %v8067 = vrot.slane %v8053, %v8066
    %v8068 = vcombine.low %v8060, %v8067
    %v8069 = vcombine.low %v4662, %v4666
    %v8070 = vcombine.low %v4670, %v4674
    %v8071 = vcombine.low %v4678, %v4682
    %v8072 = vcombine.low %v4686, %v4690
    %v8074 = vunpack.c.l.s4 1966171168
    %v8075 = vunpack.c.0.s8 %v8074
    %v8076 = vlaneseq
    %v8077 = vshrl.u32 %v8076, 7
    %v8078 = vsub.s32 %v8075, %v8077
    %v8079 = vrot.slane %v8069, %v8078
    %v8081 = vunpack.c.l.s4 1966171168
    %v8082 = vunpack.c.0.s8 %v8081
    %v8083 = vlaneseq
    %v8084 = vshrl.u32 %v8083, 7
    %v8085 = vsub.s32 %v8082, %v8084
    %v8086 = vrot.slane %v8070, %v8085
    %v8088 = vunpack.c.l.s4 1966171168
    %v8089 = vunpack.c.0.s8 %v8088
    %v8090 = vlaneseq
    %v8091 = vshrl.u32 %v8090, 7
    %v8092 = vsub.s32 %v8089, %v8091
    %v8093 = vrot.slane %v8071, %v8092
    %v8095 = vunpack.c.l.s4 1966171168
    %v8096 = vunpack.c.0.s8 %v8095
    %v8097 = vlaneseq
    %v8098 = vshrl.u32 %v8097, 7
    %v8099 = vsub.s32 %v8096, %v8098
    %v8100 = vrot.slane %v8072, %v8099
    %v8101 = vcombine.low %v8079, %v8086
    %v8102 = vcombine.low %v8093, %v8100
    %v8104 = vunpack.c.l.s4 1966171168
    %v8105 = vunpack.c.0.s8 %v8104
    %v8106 = vlaneseq
    %v8107 = vshrl.u32 %v8106, 7
    %v8108 = vsub.s32 %v8105, %v8107
    %v8109 = vrot.slane %v8101, %v8108
    %v8111 = vunpack.c.l.s4 1966171168
    %v8112 = vunpack.c.0.s8 %v8111
    %v8113 = vlaneseq
    %v8114 = vshrl.u32 %v8113, 7
    %v8115 = vsub.s32 %v8112, %v8114
    %v8116 = vrot.slane %v8102, %v8115
    %v8117 = vcombine.low %v8109, %v8116
    %v8118 = vcombine.low %v4694, %v4698
    %v8119 = vcombine.low %v4702, %v4706
    %v8120 = vcombine.low %v4710, %v4714
    %v8121 = vcombine.low %v4718, %v4722
    %v8123 = vunpack.c.l.s4 1966171168
    %v8124 = vunpack.c.0.s8 %v8123
    %v8125 = vlaneseq
    %v8126 = vshrl.u32 %v8125, 7
    %v8127 = vsub.s32 %v8124, %v8126
    %v8128 = vrot.slane %v8118, %v8127
    %v8130 = vunpack.c.l.s4 1966171168
    %v8131 = vunpack.c.0.s8 %v8130
    %v8132 = vlaneseq
    %v8133 = vshrl.u32 %v8132, 7
    %v8134 = vsub.s32 %v8131, %v8133
    %v8135 = vrot.slane %v8119, %v8134
    %v8137 = vunpack.c.l.s4 1966171168
    %v8138 = vunpack.c.0.s8 %v8137
    %v8139 = vlaneseq
    %v8140 = vshrl.u32 %v8139, 7
    %v8141 = vsub.s32 %v8138, %v8140
    %v8142 = vrot.slane %v8120, %v8141
    %v8144 = vunpack.c.l.s4 1966171168
    %v8145 = vunpack.c.0.s8 %v8144
    %v8146 = vlaneseq
    %v8147 = vshrl.u32 %v8146, 7
    %v8148 = vsub.s32 %v8145, %v8147
    %v8149 = vrot.slane %v8121, %v8148
    %v8150 = vcombine.low %v8128, %v8135
    %v8151 = vcombine.low %v8142, %v8149
    %v8153 = vunpack.c.l.s4 1966171168
    %v8154 = vunpack.c.0.s8 %v8153
    %v8155 = vlaneseq
    %v8156 = vshrl.u32 %v8155, 7
    %v8157 = vsub.s32 %v8154, %v8156
    %v8158 = vrot.slane %v8150, %v8157
    %v8160 = vunpack.c.l.s4 1966171168
    %v8161 = vunpack.c.0.s8 %v8160
    %v8162 = vlaneseq
    %v8163 = vshrl.u32 %v8162, 7
    %v8164 = vsub.s32 %v8161, %v8163
    %v8165 = vrot.slane %v8151, %v8164
    %v8166 = vcombine.low %v8158, %v8165
    %v8167 = vcombine.low %v4726, %v4730
    %v8168 = vcombine.low %v4734, %v4738
    %v8169 = vcombine.low %v4742, %v4746
    %v8170 = vcombine.low %v4750, %v4754
    %v8172 = vunpack.c.l.s4 1966171168
    %v8173 = vunpack.c.0.s8 %v8172
    %v8174 = vlaneseq
    %v8175 = vshrl.u32 %v8174, 7
    %v8176 = vsub.s32 %v8173, %v8175
    %v8177 = vrot.slane %v8167, %v8176
    %v8179 = vunpack.c.l.s4 1966171168
    %v8180 = vunpack.c.0.s8 %v8179
    %v8181 = vlaneseq
    %v8182 = vshrl.u32 %v8181, 7
    %v8183 = vsub.s32 %v8180, %v8182
    %v8184 = vrot.slane %v8168, %v8183
    %v8186 = vunpack.c.l.s4 1966171168
    %v8187 = vunpack.c.0.s8 %v8186
    %v8188 = vlaneseq
    %v8189 = vshrl.u32 %v8188, 7
    %v8190 = vsub.s32 %v8187, %v8189
    %v8191 = vrot.slane %v8169, %v8190
    %v8193 = vunpack.c.l.s4 1966171168
    %v8194 = vunpack.c.0.s8 %v8193
    %v8195 = vlaneseq
    %v8196 = vshrl.u32 %v8195, 7
    %v8197 = vsub.s32 %v8194, %v8196
    %v8198 = vrot.slane %v8170, %v8197
    %v8199 = vcombine.low %v8177, %v8184
    %v8200 = vcombine.low %v8191, %v8198
    %v8202 = vunpack.c.l.s4 1966171168
    %v8203 = vunpack.c.0.s8 %v8202
    %v8204 = vlaneseq
    %v8205 = vshrl.u32 %v8204, 7
    %v8206 = vsub.s32 %v8203, %v8205
    %v8207 = vrot.slane %v8199, %v8206
    %v8209 = vunpack.c.l.s4 1966171168
    %v8210 = vunpack.c.0.s8 %v8209
    %v8211 = vlaneseq
    %v8212 = vshrl.u32 %v8211, 7
    %v8213 = vsub.s32 %v8210, %v8212
    %v8214 = vrot.slane %v8200, %v8213
    %v8215 = vcombine.low %v8207, %v8214
    %v8216 = vcombine.low %v4758, %v4762
    %v8217 = vcombine.low %v4766, %v4770
    %v8218 = vcombine.low %v4774, %v4778
    %v8219 = vcombine.low %v4782, %v4786
    %v8221 = vunpack.c.l.s4 1966171168
    %v8222 = vunpack.c.0.s8 %v8221
    %v8223 = vlaneseq
    %v8224 = vshrl.u32 %v8223, 7
    %v8225 = vsub.s32 %v8222, %v8224
    %v8226 = vrot.slane %v8216, %v8225
    %v8228 = vunpack.c.l.s4 1966171168
    %v8229 = vunpack.c.0.s8 %v8228
    %v8230 = vlaneseq
    %v8231 = vshrl.u32 %v8230, 7
    %v8232 = vsub.s32 %v8229, %v8231
    %v8233 = vrot.slane %v8217, %v8232
    %v8235 = vunpack.c.l.s4 1966171168
    %v8236 = vunpack.c.0.s8 %v8235
    %v8237 = vlaneseq
    %v8238 = vshrl.u32 %v8237, 7
    %v8239 = vsub.s32 %v8236, %v8238
    %v8240 = vrot.slane %v8218, %v8239
    %v8242 = vunpack.c.l.s4 1966171168
    %v8243 = vunpack.c.0.s8 %v8242
    %v8244 = vlaneseq
    %v8245 = vshrl.u32 %v8244, 7
    %v8246 = vsub.s32 %v8243, %v8245
    %v8247 = vrot.slane %v8219, %v8246
    %v8248 = vcombine.low %v8226, %v8233
    %v8249 = vcombine.low %v8240, %v8247
    %v8251 = vunpack.c.l.s4 1966171168
    %v8252 = vunpack.c.0.s8 %v8251
    %v8253 = vlaneseq
    %v8254 = vshrl.u32 %v8253, 7
    %v8255 = vsub.s32 %v8252, %v8254
    %v8256 = vrot.slane %v8248, %v8255
    %v8258 = vunpack.c.l.s4 1966171168
    %v8259 = vunpack.c.0.s8 %v8258
    %v8260 = vlaneseq
    %v8261 = vshrl.u32 %v8260, 7
    %v8262 = vsub.s32 %v8259, %v8261
    %v8263 = vrot.slane %v8249, %v8262
    %v8264 = vcombine.low %v8256, %v8263
    %v8265 = vcombine.low %v4790, %v4794
    %v8266 = vcombine.low %v4798, %v4802
    %v8267 = vcombine.low %v4806, %v4810
    %v8268 = vcombine.low %v4814, %v4818
    %v8270 = vunpack.c.l.s4 1966171168
    %v8271 = vunpack.c.0.s8 %v8270
    %v8272 = vlaneseq
    %v8273 = vshrl.u32 %v8272, 7
    %v8274 = vsub.s32 %v8271, %v8273
    %v8275 = vrot.slane %v8265, %v8274
    %v8277 = vunpack.c.l.s4 1966171168
    %v8278 = vunpack.c.0.s8 %v8277
    %v8279 = vlaneseq
    %v8280 = vshrl.u32 %v8279, 7
    %v8281 = vsub.s32 %v8278, %v8280
    %v8282 = vrot.slane %v8266, %v8281
    %v8284 = vunpack.c.l.s4 1966171168
    %v8285 = vunpack.c.0.s8 %v8284
    %v8286 = vlaneseq
    %v8287 = vshrl.u32 %v8286, 7
    %v8288 = vsub.s32 %v8285, %v8287
    %v8289 = vrot.slane %v8267, %v8288
    %v8291 = vunpack.c.l.s4 1966171168
    %v8292 = vunpack.c.0.s8 %v8291
    %v8293 = vlaneseq
    %v8294 = vshrl.u32 %v8293, 7
    %v8295 = vsub.s32 %v8292, %v8294
    %v8296 = vrot.slane %v8268, %v8295
    %v8297 = vcombine.low %v8275, %v8282
    %v8298 = vcombine.low %v8289, %v8296
    %v8300 = vunpack.c.l.s4 1966171168
    %v8301 = vunpack.c.0.s8 %v8300
    %v8302 = vlaneseq
    %v8303 = vshrl.u32 %v8302, 7
    %v8304 = vsub.s32 %v8301, %v8303
    %v8305 = vrot.slane %v8297, %v8304
    %v8307 = vunpack.c.l.s4 1966171168
    %v8308 = vunpack.c.0.s8 %v8307
    %v8309 = vlaneseq
    %v8310 = vshrl.u32 %v8309, 7
    %v8311 = vsub.s32 %v8308, %v8310
    %v8312 = vrot.slane %v8298, %v8311
    %v8313 = vcombine.low %v8305, %v8312
    %v8314 = vcombine.low %v4822, %v4826
    %v8315 = vcombine.low %v4830, %v4834
    %v8316 = vcombine.low %v4838, %v4842
    %v8317 = vcombine.low %v4846, %v4850
    %v8319 = vunpack.c.l.s4 1966171168
    %v8320 = vunpack.c.0.s8 %v8319
    %v8321 = vlaneseq
    %v8322 = vshrl.u32 %v8321, 7
    %v8323 = vsub.s32 %v8320, %v8322
    %v8324 = vrot.slane %v8314, %v8323
    %v8326 = vunpack.c.l.s4 1966171168
    %v8327 = vunpack.c.0.s8 %v8326
    %v8328 = vlaneseq
    %v8329 = vshrl.u32 %v8328, 7
    %v8330 = vsub.s32 %v8327, %v8329
    %v8331 = vrot.slane %v8315, %v8330
    %v8333 = vunpack.c.l.s4 1966171168
    %v8334 = vunpack.c.0.s8 %v8333
    %v8335 = vlaneseq
    %v8336 = vshrl.u32 %v8335, 7
    %v8337 = vsub.s32 %v8334, %v8336
    %v8338 = vrot.slane %v8316, %v8337
    %v8340 = vunpack.c.l.s4 1966171168
    %v8341 = vunpack.c.0.s8 %v8340
    %v8342 = vlaneseq
    %v8343 = vshrl.u32 %v8342, 7
    %v8344 = vsub.s32 %v8341, %v8343
    %v8345 = vrot.slane %v8317, %v8344
    %v8346 = vcombine.low %v8324, %v8331
    %v8347 = vcombine.low %v8338, %v8345
    %v8349 = vunpack.c.l.s4 1966171168
    %v8350 = vunpack.c.0.s8 %v8349
    %v8351 = vlaneseq
    %v8352 = vshrl.u32 %v8351, 7
    %v8353 = vsub.s32 %v8350, %v8352
    %v8354 = vrot.slane %v8346, %v8353
    %v8356 = vunpack.c.l.s4 1966171168
    %v8357 = vunpack.c.0.s8 %v8356
    %v8358 = vlaneseq
    %v8359 = vshrl.u32 %v8358, 7
    %v8360 = vsub.s32 %v8357, %v8359
    %v8361 = vrot.slane %v8347, %v8360
    %v8362 = vcombine.low %v8354, %v8361
    %v8363 = vcombine.low %v4854, %v4858
    %v8364 = vcombine.low %v4862, %v4866
    %v8365 = vcombine.low %v4870, %v4874
    %v8366 = vcombine.low %v4878, %v4882
    %v8368 = vunpack.c.l.s4 1966171168
    %v8369 = vunpack.c.0.s8 %v8368
    %v8370 = vlaneseq
    %v8371 = vshrl.u32 %v8370, 7
    %v8372 = vsub.s32 %v8369, %v8371
    %v8373 = vrot.slane %v8363, %v8372
    %v8375 = vunpack.c.l.s4 1966171168
    %v8376 = vunpack.c.0.s8 %v8375
    %v8377 = vlaneseq
    %v8378 = vshrl.u32 %v8377, 7
    %v8379 = vsub.s32 %v8376, %v8378
    %v8380 = vrot.slane %v8364, %v8379
    %v8382 = vunpack.c.l.s4 1966171168
    %v8383 = vunpack.c.0.s8 %v8382
    %v8384 = vlaneseq
    %v8385 = vshrl.u32 %v8384, 7
    %v8386 = vsub.s32 %v8383, %v8385
    %v8387 = vrot.slane %v8365, %v8386
    %v8389 = vunpack.c.l.s4 1966171168
    %v8390 = vunpack.c.0.s8 %v8389
    %v8391 = vlaneseq
    %v8392 = vshrl.u32 %v8391, 7
    %v8393 = vsub.s32 %v8390, %v8392
    %v8394 = vrot.slane %v8366, %v8393
    %v8395 = vcombine.low %v8373, %v8380
    %v8396 = vcombine.low %v8387, %v8394
    %v8398 = vunpack.c.l.s4 1966171168
    %v8399 = vunpack.c.0.s8 %v8398
    %v8400 = vlaneseq
    %v8401 = vshrl.u32 %v8400, 7
    %v8402 = vsub.s32 %v8399, %v8401
    %v8403 = vrot.slane %v8395, %v8402
    %v8405 = vunpack.c.l.s4 1966171168
    %v8406 = vunpack.c.0.s8 %v8405
    %v8407 = vlaneseq
    %v8408 = vshrl.u32 %v8407, 7
    %v8409 = vsub.s32 %v8406, %v8408
    %v8410 = vrot.slane %v8396, %v8409
    %v8411 = vcombine.low %v8403, %v8410
    %v8412 = vcombine.low %v4886, %v4890
    %v8413 = vcombine.low %v4894, %v4898
    %v8414 = vcombine.low %v4902, %v4906
    %v8415 = vcombine.low %v4910, %v4914
    %v8417 = vunpack.c.l.s4 1966171168
    %v8418 = vunpack.c.0.s8 %v8417
    %v8419 = vlaneseq
    %v8420 = vshrl.u32 %v8419, 7
    %v8421 = vsub.s32 %v8418, %v8420
    %v8422 = vrot.slane %v8412, %v8421
    %v8424 = vunpack.c.l.s4 1966171168
    %v8425 = vunpack.c.0.s8 %v8424
    %v8426 = vlaneseq
    %v8427 = vshrl.u32 %v8426, 7
    %v8428 = vsub.s32 %v8425, %v8427
    %v8429 = vrot.slane %v8413, %v8428
    %v8431 = vunpack.c.l.s4 1966171168
    %v8432 = vunpack.c.0.s8 %v8431
    %v8433 = vlaneseq
    %v8434 = vshrl.u32 %v8433, 7
    %v8435 = vsub.s32 %v8432, %v8434
    %v8436 = vrot.slane %v8414, %v8435
    %v8438 = vunpack.c.l.s4 1966171168
    %v8439 = vunpack.c.0.s8 %v8438
    %v8440 = vlaneseq
    %v8441 = vshrl.u32 %v8440, 7
    %v8442 = vsub.s32 %v8439, %v8441
    %v8443 = vrot.slane %v8415, %v8442
    %v8444 = vcombine.low %v8422, %v8429
    %v8445 = vcombine.low %v8436, %v8443
    %v8447 = vunpack.c.l.s4 1966171168
    %v8448 = vunpack.c.0.s8 %v8447
    %v8449 = vlaneseq
    %v8450 = vshrl.u32 %v8449, 7
    %v8451 = vsub.s32 %v8448, %v8450
    %v8452 = vrot.slane %v8444, %v8451
    %v8454 = vunpack.c.l.s4 1966171168
    %v8455 = vunpack.c.0.s8 %v8454
    %v8456 = vlaneseq
    %v8457 = vshrl.u32 %v8456, 7
    %v8458 = vsub.s32 %v8455, %v8457
    %v8459 = vrot.slane %v8445, %v8458
    %v8460 = vcombine.low %v8452, %v8459
    %v8461 = vcombine.low %v4918, %v4922
    %v8462 = vcombine.low %v4926, %v4930
    %v8463 = vcombine.low %v4934, %v4938
    %v8464 = vcombine.low %v4942, %v4946
    %v8466 = vunpack.c.l.s4 1966171168
    %v8467 = vunpack.c.0.s8 %v8466
    %v8468 = vlaneseq
    %v8469 = vshrl.u32 %v8468, 7
    %v8470 = vsub.s32 %v8467, %v8469
    %v8471 = vrot.slane %v8461, %v8470
    %v8473 = vunpack.c.l.s4 1966171168
    %v8474 = vunpack.c.0.s8 %v8473
    %v8475 = vlaneseq
    %v8476 = vshrl.u32 %v8475, 7
    %v8477 = vsub.s32 %v8474, %v8476
    %v8478 = vrot.slane %v8462, %v8477
    %v8480 = vunpack.c.l.s4 1966171168
    %v8481 = vunpack.c.0.s8 %v8480
    %v8482 = vlaneseq
    %v8483 = vshrl.u32 %v8482, 7
    %v8484 = vsub.s32 %v8481, %v8483
    %v8485 = vrot.slane %v8463, %v8484
    %v8487 = vunpack.c.l.s4 1966171168
    %v8488 = vunpack.c.0.s8 %v8487
    %v8489 = vlaneseq
    %v8490 = vshrl.u32 %v8489, 7
    %v8491 = vsub.s32 %v8488, %v8490
    %v8492 = vrot.slane %v8464, %v8491
    %v8493 = vcombine.low %v8471, %v8478
    %v8494 = vcombine.low %v8485, %v8492
    %v8496 = vunpack.c.l.s4 1966171168
    %v8497 = vunpack.c.0.s8 %v8496
    %v8498 = vlaneseq
    %v8499 = vshrl.u32 %v8498, 7
    %v8500 = vsub.s32 %v8497, %v8499
    %v8501 = vrot.slane %v8493, %v8500
    %v8503 = vunpack.c.l.s4 1966171168
    %v8504 = vunpack.c.0.s8 %v8503
    %v8505 = vlaneseq
    %v8506 = vshrl.u32 %v8505, 7
    %v8507 = vsub.s32 %v8504, %v8506
    %v8508 = vrot.slane %v8494, %v8507
    %v8509 = vcombine.low %v8501, %v8508
    %v8510 = vcombine.low %v4950, %v4954
    %v8511 = vcombine.low %v4958, %v4962
    %v8512 = vcombine.low %v4966, %v4970
    %v8513 = vcombine.low %v4974, %v4978
    %v8515 = vunpack.c.l.s4 1966171168
    %v8516 = vunpack.c.0.s8 %v8515
    %v8517 = vlaneseq
    %v8518 = vshrl.u32 %v8517, 7
    %v8519 = vsub.s32 %v8516, %v8518
    %v8520 = vrot.slane %v8510, %v8519
    %v8522 = vunpack.c.l.s4 1966171168
    %v8523 = vunpack.c.0.s8 %v8522
    %v8524 = vlaneseq
    %v8525 = vshrl.u32 %v8524, 7
    %v8526 = vsub.s32 %v8523, %v8525
    %v8527 = vrot.slane %v8511, %v8526
    %v8529 = vunpack.c.l.s4 1966171168
    %v8530 = vunpack.c.0.s8 %v8529
    %v8531 = vlaneseq
    %v8532 = vshrl.u32 %v8531, 7
    %v8533 = vsub.s32 %v8530, %v8532
    %v8534 = vrot.slane %v8512, %v8533
    %v8536 = vunpack.c.l.s4 1966171168
    %v8537 = vunpack.c.0.s8 %v8536
    %v8538 = vlaneseq
    %v8539 = vshrl.u32 %v8538, 7
    %v8540 = vsub.s32 %v8537, %v8539
    %v8541 = vrot.slane %v8513, %v8540
    %v8542 = vcombine.low %v8520, %v8527
    %v8543 = vcombine.low %v8534, %v8541
    %v8545 = vunpack.c.l.s4 1966171168
    %v8546 = vunpack.c.0.s8 %v8545
    %v8547 = vlaneseq
    %v8548 = vshrl.u32 %v8547, 7
    %v8549 = vsub.s32 %v8546, %v8548
    %v8550 = vrot.slane %v8542, %v8549
    %v8552 = vunpack.c.l.s4 1966171168
    %v8553 = vunpack.c.0.s8 %v8552
    %v8554 = vlaneseq
    %v8555 = vshrl.u32 %v8554, 7
    %v8556 = vsub.s32 %v8553, %v8555
    %v8557 = vrot.slane %v8543, %v8556
    %v8558 = vcombine.low %v8550, %v8557
    %v8559 = vcombine.low %v4982, %v4986
    %v8560 = vcombine.low %v4990, %v4994
    %v8561 = vcombine.low %v4998, %v5002
    %v8562 = vcombine.low %v5006, %v5010
    %v8564 = vunpack.c.l.s4 1966171168
    %v8565 = vunpack.c.0.s8 %v8564
    %v8566 = vlaneseq
    %v8567 = vshrl.u32 %v8566, 7
    %v8568 = vsub.s32 %v8565, %v8567
    %v8569 = vrot.slane %v8559, %v8568
    %v8571 = vunpack.c.l.s4 1966171168
    %v8572 = vunpack.c.0.s8 %v8571
    %v8573 = vlaneseq
    %v8574 = vshrl.u32 %v8573, 7
    %v8575 = vsub.s32 %v8572, %v8574
    %v8576 = vrot.slane %v8560, %v8575
    %v8578 = vunpack.c.l.s4 1966171168
    %v8579 = vunpack.c.0.s8 %v8578
    %v8580 = vlaneseq
    %v8581 = vshrl.u32 %v8580, 7
    %v8582 = vsub.s32 %v8579, %v8581
    %v8583 = vrot.slane %v8561, %v8582
    %v8585 = vunpack.c.l.s4 1966171168
    %v8586 = vunpack.c.0.s8 %v8585
    %v8587 = vlaneseq
    %v8588 = vshrl.u32 %v8587, 7
    %v8589 = vsub.s32 %v8586, %v8588
    %v8590 = vrot.slane %v8562, %v8589
    %v8591 = vcombine.low %v8569, %v8576
    %v8592 = vcombine.low %v8583, %v8590
    %v8594 = vunpack.c.l.s4 1966171168
    %v8595 = vunpack.c.0.s8 %v8594
    %v8596 = vlaneseq
    %v8597 = vshrl.u32 %v8596, 7
    %v8598 = vsub.s32 %v8595, %v8597
    %v8599 = vrot.slane %v8591, %v8598
    %v8601 = vunpack.c.l.s4 1966171168
    %v8602 = vunpack.c.0.s8 %v8601
    %v8603 = vlaneseq
    %v8604 = vshrl.u32 %v8603, 7
    %v8605 = vsub.s32 %v8602, %v8604
    %v8606 = vrot.slane %v8592, %v8605
    %v8607 = vcombine.low %v8599, %v8606
    %v8608 = vcombine.low %v5014, %v5018
    %v8609 = vcombine.low %v5022, %v5026
    %v8610 = vcombine.low %v5030, %v5034
    %v8611 = vcombine.low %v5038, %v5042
    %v8613 = vunpack.c.l.s4 1966171168
    %v8614 = vunpack.c.0.s8 %v8613
    %v8615 = vlaneseq
    %v8616 = vshrl.u32 %v8615, 7
    %v8617 = vsub.s32 %v8614, %v8616
    %v8618 = vrot.slane %v8608, %v8617
    %v8620 = vunpack.c.l.s4 1966171168
    %v8621 = vunpack.c.0.s8 %v8620
    %v8622 = vlaneseq
    %v8623 = vshrl.u32 %v8622, 7
    %v8624 = vsub.s32 %v8621, %v8623
    %v8625 = vrot.slane %v8609, %v8624
    %v8627 = vunpack.c.l.s4 1966171168
    %v8628 = vunpack.c.0.s8 %v8627
    %v8629 = vlaneseq
    %v8630 = vshrl.u32 %v8629, 7
    %v8631 = vsub.s32 %v8628, %v8630
    %v8632 = vrot.slane %v8610, %v8631
    %v8634 = vunpack.c.l.s4 1966171168
    %v8635 = vunpack.c.0.s8 %v8634
    %v8636 = vlaneseq
    %v8637 = vshrl.u32 %v8636, 7
    %v8638 = vsub.s32 %v8635, %v8637
    %v8639 = vrot.slane %v8611, %v8638
    %v8640 = vcombine.low %v8618, %v8625
    %v8641 = vcombine.low %v8632, %v8639
    %v8643 = vunpack.c.l.s4 1966171168
    %v8644 = vunpack.c.0.s8 %v8643
    %v8645 = vlaneseq
    %v8646 = vshrl.u32 %v8645, 7
    %v8647 = vsub.s32 %v8644, %v8646
    %v8648 = vrot.slane %v8640, %v8647
    %v8650 = vunpack.c.l.s4 1966171168
    %v8651 = vunpack.c.0.s8 %v8650
    %v8652 = vlaneseq
    %v8653 = vshrl.u32 %v8652, 7
    %v8654 = vsub.s32 %v8651, %v8653
    %v8655 = vrot.slane %v8641, %v8654
    %v8656 = vcombine.low %v8648, %v8655
    %v8657 = vcombine.low %v5046, %v5050
    %v8658 = vcombine.low %v5054, %v5058
    %v8659 = vcombine.low %v5062, %v5066
    %v8660 = vcombine.low %v5070, %v5074
    %v8662 = vunpack.c.l.s4 1966171168
    %v8663 = vunpack.c.0.s8 %v8662
    %v8664 = vlaneseq
    %v8665 = vshrl.u32 %v8664, 7
    %v8666 = vsub.s32 %v8663, %v8665
    %v8667 = vrot.slane %v8657, %v8666
    %v8669 = vunpack.c.l.s4 1966171168
    %v8670 = vunpack.c.0.s8 %v8669
    %v8671 = vlaneseq
    %v8672 = vshrl.u32 %v8671, 7
    %v8673 = vsub.s32 %v8670, %v8672
    %v8674 = vrot.slane %v8658, %v8673
    %v8676 = vunpack.c.l.s4 1966171168
    %v8677 = vunpack.c.0.s8 %v8676
    %v8678 = vlaneseq
    %v8679 = vshrl.u32 %v8678, 7
    %v8680 = vsub.s32 %v8677, %v8679
    %v8681 = vrot.slane %v8659, %v8680
    %v8683 = vunpack.c.l.s4 1966171168
    %v8684 = vunpack.c.0.s8 %v8683
    %v8685 = vlaneseq
    %v8686 = vshrl.u32 %v8685, 7
    %v8687 = vsub.s32 %v8684, %v8686
    %v8688 = vrot.slane %v8660, %v8687
    %v8689 = vcombine.low %v8667, %v8674
    %v8690 = vcombine.low %v8681, %v8688
    %v8692 = vunpack.c.l.s4 1966171168
    %v8693 = vunpack.c.0.s8 %v8692
    %v8694 = vlaneseq
    %v8695 = vshrl.u32 %v8694, 7
    %v8696 = vsub.s32 %v8693, %v8695
    %v8697 = vrot.slane %v8689, %v8696
    %v8699 = vunpack.c.l.s4 1966171168
    %v8700 = vunpack.c.0.s8 %v8699
    %v8701 = vlaneseq
    %v8702 = vshrl.u32 %v8701, 7
    %v8703 = vsub.s32 %v8700, %v8702
    %v8704 = vrot.slane %v8690, %v8703
    %v8705 = vcombine.low %v8697, %v8704
    %v8706 = vcombine.low %v5078, %v5082
    %v8707 = vcombine.low %v5086, %v5090
    %v8708 = vcombine.low %v5094, %v5098
    %v8709 = vcombine.low %v5102, %v5106
    %v8711 = vunpack.c.l.s4 1966171168
    %v8712 = vunpack.c.0.s8 %v8711
    %v8713 = vlaneseq
    %v8714 = vshrl.u32 %v8713, 7
    %v8715 = vsub.s32 %v8712, %v8714
    %v8716 = vrot.slane %v8706, %v8715
    %v8718 = vunpack.c.l.s4 1966171168
    %v8719 = vunpack.c.0.s8 %v8718
    %v8720 = vlaneseq
    %v8721 = vshrl.u32 %v8720, 7
    %v8722 = vsub.s32 %v8719, %v8721
    %v8723 = vrot.slane %v8707, %v8722
    %v8725 = vunpack.c.l.s4 1966171168
    %v8726 = vunpack.c.0.s8 %v8725
    %v8727 = vlaneseq
    %v8728 = vshrl.u32 %v8727, 7
    %v8729 = vsub.s32 %v8726, %v8728
    %v8730 = vrot.slane %v8708, %v8729
    %v8732 = vunpack.c.l.s4 1966171168
    %v8733 = vunpack.c.0.s8 %v8732
    %v8734 = vlaneseq
    %v8735 = vshrl.u32 %v8734, 7
    %v8736 = vsub.s32 %v8733, %v8735
    %v8737 = vrot.slane %v8709, %v8736
    %v8738 = vcombine.low %v8716, %v8723
    %v8739 = vcombine.low %v8730, %v8737
    %v8741 = vunpack.c.l.s4 1966171168
    %v8742 = vunpack.c.0.s8 %v8741
    %v8743 = vlaneseq
    %v8744 = vshrl.u32 %v8743, 7
    %v8745 = vsub.s32 %v8742, %v8744
    %v8746 = vrot.slane %v8738, %v8745
    %v8748 = vunpack.c.l.s4 1966171168
    %v8749 = vunpack.c.0.s8 %v8748
    %v8750 = vlaneseq
    %v8751 = vshrl.u32 %v8750, 7
    %v8752 = vsub.s32 %v8749, %v8751
    %v8753 = vrot.slane %v8739, %v8752
    %v8754 = vcombine.low %v8746, %v8753
    %v8755 = vcombine.low %v5110, %v5114
    %v8756 = vcombine.low %v5118, %v5122
    %v8757 = vcombine.low %v5126, %v5130
    %v8758 = vcombine.low %v5134, %v5138
    %v8760 = vunpack.c.l.s4 1966171168
    %v8761 = vunpack.c.0.s8 %v8760
    %v8762 = vlaneseq
    %v8763 = vshrl.u32 %v8762, 7
    %v8764 = vsub.s32 %v8761, %v8763
    %v8765 = vrot.slane %v8755, %v8764
    %v8767 = vunpack.c.l.s4 1966171168
    %v8768 = vunpack.c.0.s8 %v8767
    %v8769 = vlaneseq
    %v8770 = vshrl.u32 %v8769, 7
    %v8771 = vsub.s32 %v8768, %v8770
    %v8772 = vrot.slane %v8756, %v8771
    %v8774 = vunpack.c.l.s4 1966171168
    %v8775 = vunpack.c.0.s8 %v8774
    %v8776 = vlaneseq
    %v8777 = vshrl.u32 %v8776, 7
    %v8778 = vsub.s32 %v8775, %v8777
    %v8779 = vrot.slane %v8757, %v8778
    %v8781 = vunpack.c.l.s4 1966171168
    %v8782 = vunpack.c.0.s8 %v8781
    %v8783 = vlaneseq
    %v8784 = vshrl.u32 %v8783, 7
    %v8785 = vsub.s32 %v8782, %v8784
    %v8786 = vrot.slane %v8758, %v8785
    %v8787 = vcombine.low %v8765, %v8772
    %v8788 = vcombine.low %v8779, %v8786
    %v8790 = vunpack.c.l.s4 1966171168
    %v8791 = vunpack.c.0.s8 %v8790
    %v8792 = vlaneseq
    %v8793 = vshrl.u32 %v8792, 7
    %v8794 = vsub.s32 %v8791, %v8793
    %v8795 = vrot.slane %v8787, %v8794
    %v8797 = vunpack.c.l.s4 1966171168
    %v8798 = vunpack.c.0.s8 %v8797
    %v8799 = vlaneseq
    %v8800 = vshrl.u32 %v8799, 7
    %v8801 = vsub.s32 %v8798, %v8800
    %v8802 = vrot.slane %v8788, %v8801
    %v8803 = vcombine.low %v8795, %v8802
    %v8804 = vcombine.low %v5142, %v5146
    %v8805 = vcombine.low %v5150, %v5154
    %v8806 = vcombine.low %v5158, %v5162
    %v8807 = vcombine.low %v5166, %v5170
    %v8809 = vunpack.c.l.s4 1966171168
    %v8810 = vunpack.c.0.s8 %v8809
    %v8811 = vlaneseq
    %v8812 = vshrl.u32 %v8811, 7
    %v8813 = vsub.s32 %v8810, %v8812
    %v8814 = vrot.slane %v8804, %v8813
    %v8816 = vunpack.c.l.s4 1966171168
    %v8817 = vunpack.c.0.s8 %v8816
    %v8818 = vlaneseq
    %v8819 = vshrl.u32 %v8818, 7
    %v8820 = vsub.s32 %v8817, %v8819
    %v8821 = vrot.slane %v8805, %v8820
    %v8823 = vunpack.c.l.s4 1966171168
    %v8824 = vunpack.c.0.s8 %v8823
    %v8825 = vlaneseq
    %v8826 = vshrl.u32 %v8825, 7
    %v8827 = vsub.s32 %v8824, %v8826
    %v8828 = vrot.slane %v8806, %v8827
    %v8830 = vunpack.c.l.s4 1966171168
    %v8831 = vunpack.c.0.s8 %v8830
    %v8832 = vlaneseq
    %v8833 = vshrl.u32 %v8832, 7
    %v8834 = vsub.s32 %v8831, %v8833
    %v8835 = vrot.slane %v8807, %v8834
    %v8836 = vcombine.low %v8814, %v8821
    %v8837 = vcombine.low %v8828, %v8835
    %v8839 = vunpack.c.l.s4 1966171168
    %v8840 = vunpack.c.0.s8 %v8839
    %v8841 = vlaneseq
    %v8842 = vshrl.u32 %v8841, 7
    %v8843 = vsub.s32 %v8840, %v8842
    %v8844 = vrot.slane %v8836, %v8843
    %v8846 = vunpack.c.l.s4 1966171168
    %v8847 = vunpack.c.0.s8 %v8846
    %v8848 = vlaneseq
    %v8849 = vshrl.u32 %v8848, 7
    %v8850 = vsub.s32 %v8847, %v8849
    %v8851 = vrot.slane %v8837, %v8850
    %v8852 = vcombine.low %v8844, %v8851
    %v8853 = vcombine.low %v5174, %v5178
    %v8854 = vcombine.low %v5182, %v5186
    %v8855 = vcombine.low %v5190, %v5194
    %v8856 = vcombine.low %v5198, %v5202
    %v8858 = vunpack.c.l.s4 1966171168
    %v8859 = vunpack.c.0.s8 %v8858
    %v8860 = vlaneseq
    %v8861 = vshrl.u32 %v8860, 7
    %v8862 = vsub.s32 %v8859, %v8861
    %v8863 = vrot.slane %v8853, %v8862
    %v8865 = vunpack.c.l.s4 1966171168
    %v8866 = vunpack.c.0.s8 %v8865
    %v8867 = vlaneseq
    %v8868 = vshrl.u32 %v8867, 7
    %v8869 = vsub.s32 %v8866, %v8868
    %v8870 = vrot.slane %v8854, %v8869
    %v8872 = vunpack.c.l.s4 1966171168
    %v8873 = vunpack.c.0.s8 %v8872
    %v8874 = vlaneseq
    %v8875 = vshrl.u32 %v8874, 7
    %v8876 = vsub.s32 %v8873, %v8875
    %v8877 = vrot.slane %v8855, %v8876
    %v8879 = vunpack.c.l.s4 1966171168
    %v8880 = vunpack.c.0.s8 %v8879
    %v8881 = vlaneseq
    %v8882 = vshrl.u32 %v8881, 7
    %v8883 = vsub.s32 %v8880, %v8882
    %v8884 = vrot.slane %v8856, %v8883
    %v8885 = vcombine.low %v8863, %v8870
    %v8886 = vcombine.low %v8877, %v8884
    %v8888 = vunpack.c.l.s4 1966171168
    %v8889 = vunpack.c.0.s8 %v8888
    %v8890 = vlaneseq
    %v8891 = vshrl.u32 %v8890, 7
    %v8892 = vsub.s32 %v8889, %v8891
    %v8893 = vrot.slane %v8885, %v8892
    %v8895 = vunpack.c.l.s4 1966171168
    %v8896 = vunpack.c.0.s8 %v8895
    %v8897 = vlaneseq
    %v8898 = vshrl.u32 %v8897, 7
    %v8899 = vsub.s32 %v8896, %v8898
    %v8900 = vrot.slane %v8886, %v8899
    %v8901 = vcombine.low %v8893, %v8900
    %v8902 = vcombine.low %v5206, %v5210
    %v8903 = vcombine.low %v5214, %v5218
    %v8904 = vcombine.low %v5222, %v5226
    %v8905 = vcombine.low %v5230, %v5234
    %v8907 = vunpack.c.l.s4 1966171168
    %v8908 = vunpack.c.0.s8 %v8907
    %v8909 = vlaneseq
    %v8910 = vshrl.u32 %v8909, 7
    %v8911 = vsub.s32 %v8908, %v8910
    %v8912 = vrot.slane %v8902, %v8911
    %v8914 = vunpack.c.l.s4 1966171168
    %v8915 = vunpack.c.0.s8 %v8914
    %v8916 = vlaneseq
    %v8917 = vshrl.u32 %v8916, 7
    %v8918 = vsub.s32 %v8915, %v8917
    %v8919 = vrot.slane %v8903, %v8918
    %v8921 = vunpack.c.l.s4 1966171168
    %v8922 = vunpack.c.0.s8 %v8921
    %v8923 = vlaneseq
    %v8924 = vshrl.u32 %v8923, 7
    %v8925 = vsub.s32 %v8922, %v8924
    %v8926 = vrot.slane %v8904, %v8925
    %v8928 = vunpack.c.l.s4 1966171168
    %v8929 = vunpack.c.0.s8 %v8928
    %v8930 = vlaneseq
    %v8931 = vshrl.u32 %v8930, 7
    %v8932 = vsub.s32 %v8929, %v8931
    %v8933 = vrot.slane %v8905, %v8932
    %v8934 = vcombine.low %v8912, %v8919
    %v8935 = vcombine.low %v8926, %v8933
    %v8937 = vunpack.c.l.s4 1966171168
    %v8938 = vunpack.c.0.s8 %v8937
    %v8939 = vlaneseq
    %v8940 = vshrl.u32 %v8939, 7
    %v8941 = vsub.s32 %v8938, %v8940
    %v8942 = vrot.slane %v8934, %v8941
    %v8944 = vunpack.c.l.s4 1966171168
    %v8945 = vunpack.c.0.s8 %v8944
    %v8946 = vlaneseq
    %v8947 = vshrl.u32 %v8946, 7
    %v8948 = vsub.s32 %v8945, %v8947
    %v8949 = vrot.slane %v8935, %v8948
    %v8950 = vcombine.low %v8942, %v8949
    %v8951 = vcombine.low %v5238, %v5242
    %v8952 = vcombine.low %v5246, %v5250
    %v8953 = vcombine.low %v5254, %v5258
    %v8954 = vcombine.low %v5262, %v5266
    %v8956 = vunpack.c.l.s4 1966171168
    %v8957 = vunpack.c.0.s8 %v8956
    %v8958 = vlaneseq
    %v8959 = vshrl.u32 %v8958, 7
    %v8960 = vsub.s32 %v8957, %v8959
    %v8961 = vrot.slane %v8951, %v8960
    %v8963 = vunpack.c.l.s4 1966171168
    %v8964 = vunpack.c.0.s8 %v8963
    %v8965 = vlaneseq
    %v8966 = vshrl.u32 %v8965, 7
    %v8967 = vsub.s32 %v8964, %v8966
    %v8968 = vrot.slane %v8952, %v8967
    %v8970 = vunpack.c.l.s4 1966171168
    %v8971 = vunpack.c.0.s8 %v8970
    %v8972 = vlaneseq
    %v8973 = vshrl.u32 %v8972, 7
    %v8974 = vsub.s32 %v8971, %v8973
    %v8975 = vrot.slane %v8953, %v8974
    %v8977 = vunpack.c.l.s4 1966171168
    %v8978 = vunpack.c.0.s8 %v8977
    %v8979 = vlaneseq
    %v8980 = vshrl.u32 %v8979, 7
    %v8981 = vsub.s32 %v8978, %v8980
    %v8982 = vrot.slane %v8954, %v8981
    %v8983 = vcombine.low %v8961, %v8968
    %v8984 = vcombine.low %v8975, %v8982
    %v8986 = vunpack.c.l.s4 1966171168
    %v8987 = vunpack.c.0.s8 %v8986
    %v8988 = vlaneseq
    %v8989 = vshrl.u32 %v8988, 7
    %v8990 = vsub.s32 %v8987, %v8989
    %v8991 = vrot.slane %v8983, %v8990
    %v8993 = vunpack.c.l.s4 1966171168
    %v8994 = vunpack.c.0.s8 %v8993
    %v8995 = vlaneseq
    %v8996 = vshrl.u32 %v8995, 7
    %v8997 = vsub.s32 %v8994, %v8996
    %v8998 = vrot.slane %v8984, %v8997
    %v8999 = vcombine.low %v8991, %v8998
    %v9000 = vcombine.low %v5270, %v5274
    %v9001 = vcombine.low %v5278, %v5282
    %v9002 = vcombine.low %v5286, %v5290
    %v9003 = vcombine.low %v5294, %v5298
    %v9005 = vunpack.c.l.s4 1966171168
    %v9006 = vunpack.c.0.s8 %v9005
    %v9007 = vlaneseq
    %v9008 = vshrl.u32 %v9007, 7
    %v9009 = vsub.s32 %v9006, %v9008
    %v9010 = vrot.slane %v9000, %v9009
    %v9012 = vunpack.c.l.s4 1966171168
    %v9013 = vunpack.c.0.s8 %v9012
    %v9014 = vlaneseq
    %v9015 = vshrl.u32 %v9014, 7
    %v9016 = vsub.s32 %v9013, %v9015
    %v9017 = vrot.slane %v9001, %v9016
    %v9019 = vunpack.c.l.s4 1966171168
    %v9020 = vunpack.c.0.s8 %v9019
    %v9021 = vlaneseq
    %v9022 = vshrl.u32 %v9021, 7
    %v9023 = vsub.s32 %v9020, %v9022
    %v9024 = vrot.slane %v9002, %v9023
    %v9026 = vunpack.c.l.s4 1966171168
    %v9027 = vunpack.c.0.s8 %v9026
    %v9028 = vlaneseq
    %v9029 = vshrl.u32 %v9028, 7
    %v9030 = vsub.s32 %v9027, %v9029
    %v9031 = vrot.slane %v9003, %v9030
    %v9032 = vcombine.low %v9010, %v9017
    %v9033 = vcombine.low %v9024, %v9031
    %v9035 = vunpack.c.l.s4 1966171168
    %v9036 = vunpack.c.0.s8 %v9035
    %v9037 = vlaneseq
    %v9038 = vshrl.u32 %v9037, 7
    %v9039 = vsub.s32 %v9036, %v9038
    %v9040 = vrot.slane %v9032, %v9039
    %v9042 = vunpack.c.l.s4 1966171168
    %v9043 = vunpack.c.0.s8 %v9042
    %v9044 = vlaneseq
    %v9045 = vshrl.u32 %v9044, 7
    %v9046 = vsub.s32 %v9043, %v9045
    %v9047 = vrot.slane %v9033, %v9046
    %v9048 = vcombine.low %v9040, %v9047
    %v9049 = vcombine.low %v5302, %v5306
    %v9050 = vcombine.low %v5310, %v5314
    %v9051 = vcombine.low %v5318, %v5322
    %v9052 = vcombine.low %v5326, %v5330
    %v9054 = vunpack.c.l.s4 1966171168
    %v9055 = vunpack.c.0.s8 %v9054
    %v9056 = vlaneseq
    %v9057 = vshrl.u32 %v9056, 7
    %v9058 = vsub.s32 %v9055, %v9057
    %v9059 = vrot.slane %v9049, %v9058
    %v9061 = vunpack.c.l.s4 1966171168
    %v9062 = vunpack.c.0.s8 %v9061
    %v9063 = vlaneseq
    %v9064 = vshrl.u32 %v9063, 7
    %v9065 = vsub.s32 %v9062, %v9064
    %v9066 = vrot.slane %v9050, %v9065
    %v9068 = vunpack.c.l.s4 1966171168
    %v9069 = vunpack.c.0.s8 %v9068
    %v9070 = vlaneseq
    %v9071 = vshrl.u32 %v9070, 7
    %v9072 = vsub.s32 %v9069, %v9071
    %v9073 = vrot.slane %v9051, %v9072
    %v9075 = vunpack.c.l.s4 1966171168
    %v9076 = vunpack.c.0.s8 %v9075
    %v9077 = vlaneseq
    %v9078 = vshrl.u32 %v9077, 7
    %v9079 = vsub.s32 %v9076, %v9078
    %v9080 = vrot.slane %v9052, %v9079
    %v9081 = vcombine.low %v9059, %v9066
    %v9082 = vcombine.low %v9073, %v9080
    %v9084 = vunpack.c.l.s4 1966171168
    %v9085 = vunpack.c.0.s8 %v9084
    %v9086 = vlaneseq
    %v9087 = vshrl.u32 %v9086, 7
    %v9088 = vsub.s32 %v9085, %v9087
    %v9089 = vrot.slane %v9081, %v9088
    %v9091 = vunpack.c.l.s4 1966171168
    %v9092 = vunpack.c.0.s8 %v9091
    %v9093 = vlaneseq
    %v9094 = vshrl.u32 %v9093, 7
    %v9095 = vsub.s32 %v9092, %v9094
    %v9096 = vrot.slane %v9082, %v9095
    %v9097 = vcombine.low %v9089, %v9096
    %v9098 = vcombine.low %v5334, %v5338
    %v9099 = vcombine.low %v5342, %v5346
    %v9100 = vcombine.low %v5350, %v5354
    %v9101 = vcombine.low %v5358, %v5362
    %v9103 = vunpack.c.l.s4 1966171168
    %v9104 = vunpack.c.0.s8 %v9103
    %v9105 = vlaneseq
    %v9106 = vshrl.u32 %v9105, 7
    %v9107 = vsub.s32 %v9104, %v9106
    %v9108 = vrot.slane %v9098, %v9107
    %v9110 = vunpack.c.l.s4 1966171168
    %v9111 = vunpack.c.0.s8 %v9110
    %v9112 = vlaneseq
    %v9113 = vshrl.u32 %v9112, 7
    %v9114 = vsub.s32 %v9111, %v9113
    %v9115 = vrot.slane %v9099, %v9114
    %v9117 = vunpack.c.l.s4 1966171168
    %v9118 = vunpack.c.0.s8 %v9117
    %v9119 = vlaneseq
    %v9120 = vshrl.u32 %v9119, 7
    %v9121 = vsub.s32 %v9118, %v9120
    %v9122 = vrot.slane %v9100, %v9121
    %v9124 = vunpack.c.l.s4 1966171168
    %v9125 = vunpack.c.0.s8 %v9124
    %v9126 = vlaneseq
    %v9127 = vshrl.u32 %v9126, 7
    %v9128 = vsub.s32 %v9125, %v9127
    %v9129 = vrot.slane %v9101, %v9128
    %v9130 = vcombine.low %v9108, %v9115
    %v9131 = vcombine.low %v9122, %v9129
    %v9133 = vunpack.c.l.s4 1966171168
    %v9134 = vunpack.c.0.s8 %v9133
    %v9135 = vlaneseq
    %v9136 = vshrl.u32 %v9135, 7
    %v9137 = vsub.s32 %v9134, %v9136
    %v9138 = vrot.slane %v9130, %v9137
    %v9140 = vunpack.c.l.s4 1966171168
    %v9141 = vunpack.c.0.s8 %v9140
    %v9142 = vlaneseq
    %v9143 = vshrl.u32 %v9142, 7
    %v9144 = vsub.s32 %v9141, %v9143
    %v9145 = vrot.slane %v9131, %v9144
    %v9146 = vcombine.low %v9138, %v9145
    %v9147 = vcombine.low %v5366, %v5370
    %v9148 = vcombine.low %v5374, %v5378
    %v9149 = vcombine.low %v5382, %v5386
    %v9150 = vcombine.low %v5390, %v5394
    %v9152 = vunpack.c.l.s4 1966171168
    %v9153 = vunpack.c.0.s8 %v9152
    %v9154 = vlaneseq
    %v9155 = vshrl.u32 %v9154, 7
    %v9156 = vsub.s32 %v9153, %v9155
    %v9157 = vrot.slane %v9147, %v9156
    %v9159 = vunpack.c.l.s4 1966171168
    %v9160 = vunpack.c.0.s8 %v9159
    %v9161 = vlaneseq
    %v9162 = vshrl.u32 %v9161, 7
    %v9163 = vsub.s32 %v9160, %v9162
    %v9164 = vrot.slane %v9148, %v9163
    %v9166 = vunpack.c.l.s4 1966171168
    %v9167 = vunpack.c.0.s8 %v9166
    %v9168 = vlaneseq
    %v9169 = vshrl.u32 %v9168, 7
    %v9170 = vsub.s32 %v9167, %v9169
    %v9171 = vrot.slane %v9149, %v9170
    %v9173 = vunpack.c.l.s4 1966171168
    %v9174 = vunpack.c.0.s8 %v9173
    %v9175 = vlaneseq
    %v9176 = vshrl.u32 %v9175, 7
    %v9177 = vsub.s32 %v9174, %v9176
    %v9178 = vrot.slane %v9150, %v9177
    %v9179 = vcombine.low %v9157, %v9164
    %v9180 = vcombine.low %v9171, %v9178
    %v9182 = vunpack.c.l.s4 1966171168
    %v9183 = vunpack.c.0.s8 %v9182
    %v9184 = vlaneseq
    %v9185 = vshrl.u32 %v9184, 7
    %v9186 = vsub.s32 %v9183, %v9185
    %v9187 = vrot.slane %v9179, %v9186
    %v9189 = vunpack.c.l.s4 1966171168
    %v9190 = vunpack.c.0.s8 %v9189
    %v9191 = vlaneseq
    %v9192 = vshrl.u32 %v9191, 7
    %v9193 = vsub.s32 %v9190, %v9192
    %v9194 = vrot.slane %v9180, %v9193
    %v9195 = vcombine.low %v9187, %v9194
    %v9196 = vcombine.low %v5398, %v5402
    %v9197 = vcombine.low %v5406, %v5410
    %v9198 = vcombine.low %v5414, %v5418
    %v9199 = vcombine.low %v5422, %v5426
    %v9201 = vunpack.c.l.s4 1966171168
    %v9202 = vunpack.c.0.s8 %v9201
    %v9203 = vlaneseq
    %v9204 = vshrl.u32 %v9203, 7
    %v9205 = vsub.s32 %v9202, %v9204
    %v9206 = vrot.slane %v9196, %v9205
    %v9208 = vunpack.c.l.s4 1966171168
    %v9209 = vunpack.c.0.s8 %v9208
    %v9210 = vlaneseq
    %v9211 = vshrl.u32 %v9210, 7
    %v9212 = vsub.s32 %v9209, %v9211
    %v9213 = vrot.slane %v9197, %v9212
    %v9215 = vunpack.c.l.s4 1966171168
    %v9216 = vunpack.c.0.s8 %v9215
    %v9217 = vlaneseq
    %v9218 = vshrl.u32 %v9217, 7
    %v9219 = vsub.s32 %v9216, %v9218
    %v9220 = vrot.slane %v9198, %v9219
    %v9222 = vunpack.c.l.s4 1966171168
    %v9223 = vunpack.c.0.s8 %v9222
    %v9224 = vlaneseq
    %v9225 = vshrl.u32 %v9224, 7
    %v9226 = vsub.s32 %v9223, %v9225
    %v9227 = vrot.slane %v9199, %v9226
    %v9228 = vcombine.low %v9206, %v9213
    %v9229 = vcombine.low %v9220, %v9227
    %v9231 = vunpack.c.l.s4 1966171168
    %v9232 = vunpack.c.0.s8 %v9231
    %v9233 = vlaneseq
    %v9234 = vshrl.u32 %v9233, 7
    %v9235 = vsub.s32 %v9232, %v9234
    %v9236 = vrot.slane %v9228, %v9235
    %v9238 = vunpack.c.l.s4 1966171168
    %v9239 = vunpack.c.0.s8 %v9238
    %v9240 = vlaneseq
    %v9241 = vshrl.u32 %v9240, 7
    %v9242 = vsub.s32 %v9239, %v9241
    %v9243 = vrot.slane %v9229, %v9242
    %v9244 = vcombine.low %v9236, %v9243
    %v9245 = vcombine.low %v5430, %v5434
    %v9246 = vcombine.low %v5438, %v5442
    %v9247 = vcombine.low %v5446, %v5450
    %v9248 = vcombine.low %v5454, %v5458
    %v9250 = vunpack.c.l.s4 1966171168
    %v9251 = vunpack.c.0.s8 %v9250
    %v9252 = vlaneseq
    %v9253 = vshrl.u32 %v9252, 7
    %v9254 = vsub.s32 %v9251, %v9253
    %v9255 = vrot.slane %v9245, %v9254
    %v9257 = vunpack.c.l.s4 1966171168
    %v9258 = vunpack.c.0.s8 %v9257
    %v9259 = vlaneseq
    %v9260 = vshrl.u32 %v9259, 7
    %v9261 = vsub.s32 %v9258, %v9260
    %v9262 = vrot.slane %v9246, %v9261
    %v9264 = vunpack.c.l.s4 1966171168
    %v9265 = vunpack.c.0.s8 %v9264
    %v9266 = vlaneseq
    %v9267 = vshrl.u32 %v9266, 7
    %v9268 = vsub.s32 %v9265, %v9267
    %v9269 = vrot.slane %v9247, %v9268
    %v9271 = vunpack.c.l.s4 1966171168
    %v9272 = vunpack.c.0.s8 %v9271
    %v9273 = vlaneseq
    %v9274 = vshrl.u32 %v9273, 7
    %v9275 = vsub.s32 %v9272, %v9274
    %v9276 = vrot.slane %v9248, %v9275
    %v9277 = vcombine.low %v9255, %v9262
    %v9278 = vcombine.low %v9269, %v9276
    %v9280 = vunpack.c.l.s4 1966171168
    %v9281 = vunpack.c.0.s8 %v9280
    %v9282 = vlaneseq
    %v9283 = vshrl.u32 %v9282, 7
    %v9284 = vsub.s32 %v9281, %v9283
    %v9285 = vrot.slane %v9277, %v9284
    %v9287 = vunpack.c.l.s4 1966171168
    %v9288 = vunpack.c.0.s8 %v9287
    %v9289 = vlaneseq
    %v9290 = vshrl.u32 %v9289, 7
    %v9291 = vsub.s32 %v9288, %v9290
    %v9292 = vrot.slane %v9278, %v9291
    %v9293 = vcombine.low %v9285, %v9292
    %v9294 = vcombine.low %v5462, %v5466
    %v9295 = vcombine.low %v5470, %v5474
    %v9296 = vcombine.low %v5478, %v5482
    %v9297 = vcombine.low %v5486, %v5490
    %v9299 = vunpack.c.l.s4 1966171168
    %v9300 = vunpack.c.0.s8 %v9299
    %v9301 = vlaneseq
    %v9302 = vshrl.u32 %v9301, 7
    %v9303 = vsub.s32 %v9300, %v9302
    %v9304 = vrot.slane %v9294, %v9303
    %v9306 = vunpack.c.l.s4 1966171168
    %v9307 = vunpack.c.0.s8 %v9306
    %v9308 = vlaneseq
    %v9309 = vshrl.u32 %v9308, 7
    %v9310 = vsub.s32 %v9307, %v9309
    %v9311 = vrot.slane %v9295, %v9310
    %v9313 = vunpack.c.l.s4 1966171168
    %v9314 = vunpack.c.0.s8 %v9313
    %v9315 = vlaneseq
    %v9316 = vshrl.u32 %v9315, 7
    %v9317 = vsub.s32 %v9314, %v9316
    %v9318 = vrot.slane %v9296, %v9317
    %v9320 = vunpack.c.l.s4 1966171168
    %v9321 = vunpack.c.0.s8 %v9320
    %v9322 = vlaneseq
    %v9323 = vshrl.u32 %v9322, 7
    %v9324 = vsub.s32 %v9321, %v9323
    %v9325 = vrot.slane %v9297, %v9324
    %v9326 = vcombine.low %v9304, %v9311
    %v9327 = vcombine.low %v9318, %v9325
    %v9329 = vunpack.c.l.s4 1966171168
    %v9330 = vunpack.c.0.s8 %v9329
    %v9331 = vlaneseq
    %v9332 = vshrl.u32 %v9331, 7
    %v9333 = vsub.s32 %v9330, %v9332
    %v9334 = vrot.slane %v9326, %v9333
    %v9336 = vunpack.c.l.s4 1966171168
    %v9337 = vunpack.c.0.s8 %v9336
    %v9338 = vlaneseq
    %v9339 = vshrl.u32 %v9338, 7
    %v9340 = vsub.s32 %v9337, %v9339
    %v9341 = vrot.slane %v9327, %v9340
    %v9342 = vcombine.low %v9334, %v9341
    %v9343 = vcombine.low %v5494, %v5498
    %v9344 = vcombine.low %v5502, %v5506
    %v9345 = vcombine.low %v5510, %v5514
    %v9346 = vcombine.low %v5518, %v5522
    %v9348 = vunpack.c.l.s4 1966171168
    %v9349 = vunpack.c.0.s8 %v9348
    %v9350 = vlaneseq
    %v9351 = vshrl.u32 %v9350, 7
    %v9352 = vsub.s32 %v9349, %v9351
    %v9353 = vrot.slane %v9343, %v9352
    %v9355 = vunpack.c.l.s4 1966171168
    %v9356 = vunpack.c.0.s8 %v9355
    %v9357 = vlaneseq
    %v9358 = vshrl.u32 %v9357, 7
    %v9359 = vsub.s32 %v9356, %v9358
    %v9360 = vrot.slane %v9344, %v9359
    %v9362 = vunpack.c.l.s4 1966171168
    %v9363 = vunpack.c.0.s8 %v9362
    %v9364 = vlaneseq
    %v9365 = vshrl.u32 %v9364, 7
    %v9366 = vsub.s32 %v9363, %v9365
    %v9367 = vrot.slane %v9345, %v9366
    %v9369 = vunpack.c.l.s4 1966171168
    %v9370 = vunpack.c.0.s8 %v9369
    %v9371 = vlaneseq
    %v9372 = vshrl.u32 %v9371, 7
    %v9373 = vsub.s32 %v9370, %v9372
    %v9374 = vrot.slane %v9346, %v9373
    %v9375 = vcombine.low %v9353, %v9360
    %v9376 = vcombine.low %v9367, %v9374
    %v9378 = vunpack.c.l.s4 1966171168
    %v9379 = vunpack.c.0.s8 %v9378
    %v9380 = vlaneseq
    %v9381 = vshrl.u32 %v9380, 7
    %v9382 = vsub.s32 %v9379, %v9381
    %v9383 = vrot.slane %v9375, %v9382
    %v9385 = vunpack.c.l.s4 1966171168
    %v9386 = vunpack.c.0.s8 %v9385
    %v9387 = vlaneseq
    %v9388 = vshrl.u32 %v9387, 7
    %v9389 = vsub.s32 %v9386, %v9388
    %v9390 = vrot.slane %v9376, %v9389
    %v9391 = vcombine.low %v9383, %v9390
    %v9392 = vcombine.low %v5526, %v5530
    %v9393 = vcombine.low %v5534, %v5538
    %v9394 = vcombine.low %v5542, %v5546
    %v9395 = vcombine.low %v5550, %v5554
    %v9397 = vunpack.c.l.s4 1966171168
    %v9398 = vunpack.c.0.s8 %v9397
    %v9399 = vlaneseq
    %v9400 = vshrl.u32 %v9399, 7
    %v9401 = vsub.s32 %v9398, %v9400
    %v9402 = vrot.slane %v9392, %v9401
    %v9404 = vunpack.c.l.s4 1966171168
    %v9405 = vunpack.c.0.s8 %v9404
    %v9406 = vlaneseq
    %v9407 = vshrl.u32 %v9406, 7
    %v9408 = vsub.s32 %v9405, %v9407
    %v9409 = vrot.slane %v9393, %v9408
    %v9411 = vunpack.c.l.s4 1966171168
    %v9412 = vunpack.c.0.s8 %v9411
    %v9413 = vlaneseq
    %v9414 = vshrl.u32 %v9413, 7
    %v9415 = vsub.s32 %v9412, %v9414
    %v9416 = vrot.slane %v9394, %v9415
    %v9418 = vunpack.c.l.s4 1966171168
    %v9419 = vunpack.c.0.s8 %v9418
    %v9420 = vlaneseq
    %v9421 = vshrl.u32 %v9420, 7
    %v9422 = vsub.s32 %v9419, %v9421
    %v9423 = vrot.slane %v9395, %v9422
    %v9424 = vcombine.low %v9402, %v9409
    %v9425 = vcombine.low %v9416, %v9423
    %v9427 = vunpack.c.l.s4 1966171168
    %v9428 = vunpack.c.0.s8 %v9427
    %v9429 = vlaneseq
    %v9430 = vshrl.u32 %v9429, 7
    %v9431 = vsub.s32 %v9428, %v9430
    %v9432 = vrot.slane %v9424, %v9431
    %v9434 = vunpack.c.l.s4 1966171168
    %v9435 = vunpack.c.0.s8 %v9434
    %v9436 = vlaneseq
    %v9437 = vshrl.u32 %v9436, 7
    %v9438 = vsub.s32 %v9435, %v9437
    %v9439 = vrot.slane %v9425, %v9438
    %v9440 = vcombine.low %v9432, %v9439
    %v9441 = vcombine.low %v5558, %v5562
    %v9442 = vcombine.low %v5566, %v5570
    %v9443 = vcombine.low %v5574, %v5578
    %v9444 = vcombine.low %v5582, %v5586
    %v9446 = vunpack.c.l.s4 1966171168
    %v9447 = vunpack.c.0.s8 %v9446
    %v9448 = vlaneseq
    %v9449 = vshrl.u32 %v9448, 7
    %v9450 = vsub.s32 %v9447, %v9449
    %v9451 = vrot.slane %v9441, %v9450
    %v9453 = vunpack.c.l.s4 1966171168
    %v9454 = vunpack.c.0.s8 %v9453
    %v9455 = vlaneseq
    %v9456 = vshrl.u32 %v9455, 7
    %v9457 = vsub.s32 %v9454, %v9456
    %v9458 = vrot.slane %v9442, %v9457
    %v9460 = vunpack.c.l.s4 1966171168
    %v9461 = vunpack.c.0.s8 %v9460
    %v9462 = vlaneseq
    %v9463 = vshrl.u32 %v9462, 7
    %v9464 = vsub.s32 %v9461, %v9463
    %v9465 = vrot.slane %v9443, %v9464
    %v9467 = vunpack.c.l.s4 1966171168
    %v9468 = vunpack.c.0.s8 %v9467
    %v9469 = vlaneseq
    %v9470 = vshrl.u32 %v9469, 7
    %v9471 = vsub.s32 %v9468, %v9470
    %v9472 = vrot.slane %v9444, %v9471
    %v9473 = vcombine.low %v9451, %v9458
    %v9474 = vcombine.low %v9465, %v9472
    %v9476 = vunpack.c.l.s4 1966171168
    %v9477 = vunpack.c.0.s8 %v9476
    %v9478 = vlaneseq
    %v9479 = vshrl.u32 %v9478, 7
    %v9480 = vsub.s32 %v9477, %v9479
    %v9481 = vrot.slane %v9473, %v9480
    %v9483 = vunpack.c.l.s4 1966171168
    %v9484 = vunpack.c.0.s8 %v9483
    %v9485 = vlaneseq
    %v9486 = vshrl.u32 %v9485, 7
    %v9487 = vsub.s32 %v9484, %v9486
    %v9488 = vrot.slane %v9474, %v9487
    %v9489 = vcombine.low %v9481, %v9488
    %v9490 = vcombine.low %v5590, %v5594
    %v9491 = vcombine.low %v5598, %v5602
    %v9492 = vcombine.low %v5606, %v5610
    %v9493 = vcombine.low %v5614, %v5618
    %v9495 = vunpack.c.l.s4 1966171168
    %v9496 = vunpack.c.0.s8 %v9495
    %v9497 = vlaneseq
    %v9498 = vshrl.u32 %v9497, 7
    %v9499 = vsub.s32 %v9496, %v9498
    %v9500 = vrot.slane %v9490, %v9499
    %v9502 = vunpack.c.l.s4 1966171168
    %v9503 = vunpack.c.0.s8 %v9502
    %v9504 = vlaneseq
    %v9505 = vshrl.u32 %v9504, 7
    %v9506 = vsub.s32 %v9503, %v9505
    %v9507 = vrot.slane %v9491, %v9506
    %v9509 = vunpack.c.l.s4 1966171168
    %v9510 = vunpack.c.0.s8 %v9509
    %v9511 = vlaneseq
    %v9512 = vshrl.u32 %v9511, 7
    %v9513 = vsub.s32 %v9510, %v9512
    %v9514 = vrot.slane %v9492, %v9513
    %v9516 = vunpack.c.l.s4 1966171168
    %v9517 = vunpack.c.0.s8 %v9516
    %v9518 = vlaneseq
    %v9519 = vshrl.u32 %v9518, 7
    %v9520 = vsub.s32 %v9517, %v9519
    %v9521 = vrot.slane %v9493, %v9520
    %v9522 = vcombine.low %v9500, %v9507
    %v9523 = vcombine.low %v9514, %v9521
    %v9525 = vunpack.c.l.s4 1966171168
    %v9526 = vunpack.c.0.s8 %v9525
    %v9527 = vlaneseq
    %v9528 = vshrl.u32 %v9527, 7
    %v9529 = vsub.s32 %v9526, %v9528
    %v9530 = vrot.slane %v9522, %v9529
    %v9532 = vunpack.c.l.s4 1966171168
    %v9533 = vunpack.c.0.s8 %v9532
    %v9534 = vlaneseq
    %v9535 = vshrl.u32 %v9534, 7
    %v9536 = vsub.s32 %v9533, %v9535
    %v9537 = vrot.slane %v9523, %v9536
    %v9538 = vcombine.low %v9530, %v9537
    %9539 = vset.pattern.permute.xlu0 0
    %9540 = vperm.xlu0 %9539, %v5667
    %v9541 = vpop.permute.xlu0 %9540
    %9542 = vset.pattern.permute.xlu0 0
    %9543 = vperm.xlu0 %9542, %v5716
    %v9544 = vpop.permute.xlu0 %9543
    %9545 = vset.pattern.permute.xlu0 0
    %9546 = vperm.xlu0 %9545, %v5765
    %v9547 = vpop.permute.xlu0 %9546
    %9548 = vset.pattern.permute.xlu0 0
    %9549 = vperm.xlu0 %9548, %v5814
    %v9550 = vpop.permute.xlu0 %9549
    %9551 = vset.pattern.permute.xlu0 0
    %9552 = vperm.xlu0 %9551, %v5863
    %v9553 = vpop.permute.xlu0 %9552
    %9554 = vset.pattern.permute.xlu0 0
    %9555 = vperm.xlu0 %9554, %v5912
    %v9556 = vpop.permute.xlu0 %9555
    %9557 = vset.pattern.permute.xlu0 0
    %9558 = vperm.xlu0 %9557, %v5961
    %v9559 = vpop.permute.xlu0 %9558
    %9560 = vset.pattern.permute.xlu0 0
    %9561 = vperm.xlu0 %9560, %v6010
    %v9562 = vpop.permute.xlu0 %9561
    %9563 = vset.pattern.permute.xlu0 0
    %9564 = vperm.xlu0 %9563, %v6059
    %v9565 = vpop.permute.xlu0 %9564
    %9566 = vset.pattern.permute.xlu0 0
    %9567 = vperm.xlu0 %9566, %v6108
    %v9568 = vpop.permute.xlu0 %9567
    %9569 = vset.pattern.permute.xlu0 0
    %9570 = vperm.xlu0 %9569, %v6157
    %v9571 = vpop.permute.xlu0 %9570
    %9572 = vset.pattern.permute.xlu0 0
    %9573 = vperm.xlu0 %9572, %v6206
    %v9574 = vpop.permute.xlu0 %9573
    %9575 = vset.pattern.permute.xlu0 0
    %9576 = vperm.xlu0 %9575, %v6255
    %v9577 = vpop.permute.xlu0 %9576
    %9578 = vset.pattern.permute.xlu0 0
    %9579 = vperm.xlu0 %9578, %v6304
    %v9580 = vpop.permute.xlu0 %9579
    %9581 = vset.pattern.permute.xlu0 0
    %9582 = vperm.xlu0 %9581, %v6353
    %v9583 = vpop.permute.xlu0 %9582
    %9584 = vset.pattern.permute.xlu0 0
    %9585 = vperm.xlu0 %9584, %v6402
    %v9586 = vpop.permute.xlu0 %9585
    %9587 = vset.pattern.permute.xlu0 0
    %9588 = vperm.xlu0 %9587, %v6451
    %v9589 = vpop.permute.xlu0 %9588
    %9590 = vset.pattern.permute.xlu0 0
    %9591 = vperm.xlu0 %9590, %v6500
    %v9592 = vpop.permute.xlu0 %9591
    %9593 = vset.pattern.permute.xlu0 0
    %9594 = vperm.xlu0 %9593, %v6549
    %v9595 = vpop.permute.xlu0 %9594
    %9596 = vset.pattern.permute.xlu0 0
    %9597 = vperm.xlu0 %9596, %v6598
    %v9598 = vpop.permute.xlu0 %9597
    %9599 = vset.pattern.permute.xlu0 0
    %9600 = vperm.xlu0 %9599, %v6647
    %v9601 = vpop.permute.xlu0 %9600
    %9602 = vset.pattern.permute.xlu0 0
    %9603 = vperm.xlu0 %9602, %v6696
    %v9604 = vpop.permute.xlu0 %9603
    %9605 = vset.pattern.permute.xlu0 0
    %9606 = vperm.xlu0 %9605, %v6745
    %v9607 = vpop.permute.xlu0 %9606
    %9608 = vset.pattern.permute.xlu0 0
    %9609 = vperm.xlu0 %9608, %v6794
    %v9610 = vpop.permute.xlu0 %9609
    %9611 = vset.pattern.permute.xlu0 0
    %9612 = vperm.xlu0 %9611, %v6843
    %v9613 = vpop.permute.xlu0 %9612
    %9614 = vset.pattern.permute.xlu0 0
    %9615 = vperm.xlu0 %9614, %v6892
    %v9616 = vpop.permute.xlu0 %9615
    %9617 = vset.pattern.permute.xlu0 0
    %9618 = vperm.xlu0 %9617, %v6941
    %v9619 = vpop.permute.xlu0 %9618
    %9620 = vset.pattern.permute.xlu0 0
    %9621 = vperm.xlu0 %9620, %v6990
    %v9622 = vpop.permute.xlu0 %9621
    %9623 = vset.pattern.permute.xlu0 0
    %9624 = vperm.xlu0 %9623, %v7039
    %v9625 = vpop.permute.xlu0 %9624
    %9626 = vset.pattern.permute.xlu0 0
    %9627 = vperm.xlu0 %9626, %v7088
    %v9628 = vpop.permute.xlu0 %9627
    %9629 = vset.pattern.permute.xlu0 0
    %9630 = vperm.xlu0 %9629, %v7137
    %v9631 = vpop.permute.xlu0 %9630
    %9632 = vset.pattern.permute.xlu0 0
    %9633 = vperm.xlu0 %9632, %v7186
    %v9634 = vpop.permute.xlu0 %9633
    %9635 = vset.pattern.permute.xlu0 0
    %9636 = vperm.xlu0 %9635, %v7235
    %v9637 = vpop.permute.xlu0 %9636
    %9638 = vset.pattern.permute.xlu0 0
    %9639 = vperm.xlu0 %9638, %v7284
    %v9640 = vpop.permute.xlu0 %9639
    %9641 = vset.pattern.permute.xlu0 0
    %9642 = vperm.xlu0 %9641, %v7333
    %v9643 = vpop.permute.xlu0 %9642
    %9644 = vset.pattern.permute.xlu0 0
    %9645 = vperm.xlu0 %9644, %v7382
    %v9646 = vpop.permute.xlu0 %9645
    %9647 = vset.pattern.permute.xlu0 0
    %9648 = vperm.xlu0 %9647, %v7431
    %v9649 = vpop.permute.xlu0 %9648
    %9650 = vset.pattern.permute.xlu0 0
    %9651 = vperm.xlu0 %9650, %v7480
    %v9652 = vpop.permute.xlu0 %9651
    %9653 = vset.pattern.permute.xlu0 0
    %9654 = vperm.xlu0 %9653, %v7529
    %v9655 = vpop.permute.xlu0 %9654
    %9656 = vset.pattern.permute.xlu0 0
    %9657 = vperm.xlu0 %9656, %v7578
    %v9658 = vpop.permute.xlu0 %9657
    %9659 = vset.pattern.permute.xlu0 0
    %9660 = vperm.xlu0 %9659, %v7627
    %v9661 = vpop.permute.xlu0 %9660
    %9662 = vset.pattern.permute.xlu0 0
    %9663 = vperm.xlu0 %9662, %v7676
    %v9664 = vpop.permute.xlu0 %9663
    %9665 = vset.pattern.permute.xlu0 0
    %9666 = vperm.xlu0 %9665, %v7725
    %v9667 = vpop.permute.xlu0 %9666
    %9668 = vset.pattern.permute.xlu0 0
    %9669 = vperm.xlu0 %9668, %v7774
    %v9670 = vpop.permute.xlu0 %9669
    %9671 = vset.pattern.permute.xlu0 0
    %9672 = vperm.xlu0 %9671, %v7823
    %v9673 = vpop.permute.xlu0 %9672
    %9674 = vset.pattern.permute.xlu0 0
    %9675 = vperm.xlu0 %9674, %v7872
    %v9676 = vpop.permute.xlu0 %9675
    %9677 = vset.pattern.permute.xlu0 0
    %9678 = vperm.xlu0 %9677, %v7921
    %v9679 = vpop.permute.xlu0 %9678
    %9680 = vset.pattern.permute.xlu0 0
    %9681 = vperm.xlu0 %9680, %v7970
    %v9682 = vpop.permute.xlu0 %9681
    %9683 = vset.pattern.permute.xlu0 0
    %9684 = vperm.xlu0 %9683, %v8019
    %v9685 = vpop.permute.xlu0 %9684
    %9686 = vset.pattern.permute.xlu0 0
    %9687 = vperm.xlu0 %9686, %v8068
    %v9688 = vpop.permute.xlu0 %9687
    %9689 = vset.pattern.permute.xlu0 0
    %9690 = vperm.xlu0 %9689, %v8117
    %v9691 = vpop.permute.xlu0 %9690
    %9692 = vset.pattern.permute.xlu0 0
    %9693 = vperm.xlu0 %9692, %v8166
    %v9694 = vpop.permute.xlu0 %9693
    %9695 = vset.pattern.permute.xlu0 0
    %9696 = vperm.xlu0 %9695, %v8215
    %v9697 = vpop.permute.xlu0 %9696
    %9698 = vset.pattern.permute.xlu0 0
    %9699 = vperm.xlu0 %9698, %v8264
    %v9700 = vpop.permute.xlu0 %9699
    %9701 = vset.pattern.permute.xlu0 0
    %9702 = vperm.xlu0 %9701, %v8313
    %v9703 = vpop.permute.xlu0 %9702
    %9704 = vset.pattern.permute.xlu0 0
    %9705 = vperm.xlu0 %9704, %v8362
    %v9706 = vpop.permute.xlu0 %9705
    %9707 = vset.pattern.permute.xlu0 0
    %9708 = vperm.xlu0 %9707, %v8411
    %v9709 = vpop.permute.xlu0 %9708
    %9710 = vset.pattern.permute.xlu0 0
    %9711 = vperm.xlu0 %9710, %v8460
    %v9712 = vpop.permute.xlu0 %9711
    %9713 = vset.pattern.permute.xlu0 0
    %9714 = vperm.xlu0 %9713, %v8509
    %v9715 = vpop.permute.xlu0 %9714
    %9716 = vset.pattern.permute.xlu0 0
    %9717 = vperm.xlu0 %9716, %v8558
    %v9718 = vpop.permute.xlu0 %9717
    %9719 = vset.pattern.permute.xlu0 0
    %9720 = vperm.xlu0 %9719, %v8607
    %v9721 = vpop.permute.xlu0 %9720
    %9722 = vset.pattern.permute.xlu0 0
    %9723 = vperm.xlu0 %9722, %v8656
    %v9724 = vpop.permute.xlu0 %9723
    %9725 = vset.pattern.permute.xlu0 0
    %9726 = vperm.xlu0 %9725, %v8705
    %v9727 = vpop.permute.xlu0 %9726
    %9728 = vset.pattern.permute.xlu0 0
    %9729 = vperm.xlu0 %9728, %v8754
    %v9730 = vpop.permute.xlu0 %9729
    %9731 = vset.pattern.permute.xlu0 0
    %9732 = vperm.xlu0 %9731, %v8803
    %v9733 = vpop.permute.xlu0 %9732
    %9734 = vset.pattern.permute.xlu0 0
    %9735 = vperm.xlu0 %9734, %v8852
    %v9736 = vpop.permute.xlu0 %9735
    %9737 = vset.pattern.permute.xlu0 0
    %9738 = vperm.xlu0 %9737, %v8901
    %v9739 = vpop.permute.xlu0 %9738
    %9740 = vset.pattern.permute.xlu0 0
    %9741 = vperm.xlu0 %9740, %v8950
    %v9742 = vpop.permute.xlu0 %9741
    %9743 = vset.pattern.permute.xlu0 0
    %9744 = vperm.xlu0 %9743, %v8999
    %v9745 = vpop.permute.xlu0 %9744
    %9746 = vset.pattern.permute.xlu0 0
    %9747 = vperm.xlu0 %9746, %v9048
    %v9748 = vpop.permute.xlu0 %9747
    %9749 = vset.pattern.permute.xlu0 0
    %9750 = vperm.xlu0 %9749, %v9097
    %v9751 = vpop.permute.xlu0 %9750
    %9752 = vset.pattern.permute.xlu0 0
    %9753 = vperm.xlu0 %9752, %v9146
    %v9754 = vpop.permute.xlu0 %9753
    %9755 = vset.pattern.permute.xlu0 0
    %9756 = vperm.xlu0 %9755, %v9195
    %v9757 = vpop.permute.xlu0 %9756
    %9758 = vset.pattern.permute.xlu0 0
    %9759 = vperm.xlu0 %9758, %v9244
    %v9760 = vpop.permute.xlu0 %9759
    %9761 = vset.pattern.permute.xlu0 0
    %9762 = vperm.xlu0 %9761, %v9293
    %v9763 = vpop.permute.xlu0 %9762
    %9764 = vset.pattern.permute.xlu0 0
    %9765 = vperm.xlu0 %9764, %v9342
    %v9766 = vpop.permute.xlu0 %9765
    %9767 = vset.pattern.permute.xlu0 0
    %9768 = vperm.xlu0 %9767, %v9391
    %v9769 = vpop.permute.xlu0 %9768
    %9770 = vset.pattern.permute.xlu0 0
    %9771 = vperm.xlu0 %9770, %v9440
    %v9772 = vpop.permute.xlu0 %9771
    %9773 = vset.pattern.permute.xlu0 0
    %9774 = vperm.xlu0 %9773, %v9489
    %v9775 = vpop.permute.xlu0 %9774
    %9776 = vset.pattern.permute.xlu0 0
    %9777 = vperm.xlu0 %9776, %v9538
    %v9778 = vpop.permute.xlu0 %9777
    %v9779 = vlaneseq
    %v9780 = vand.u32 %v9779, 127
    %v9781 = vlaneseq
    %v9782 = vshrl.u32 %v9781, 7
    %v9783 = vsub.s32 %v9780, %v9782
    %v9784 = vrot.slane %v9541, %v9783
    %v9785 = vadd.s32 %v9780, 4294967288
    %v9786 = vlaneseq
    %v9787 = vshrl.u32 %v9786, 7
    %v9788 = vsub.s32 %v9785, %v9787
    %v9789 = vrot.slane %v9544, %v9788
    %vm9790 = vcmask 130112
    %v9791 = vsel %vm9790, %v9789, %v9784
    %v9792 = vadd.s32 %v9780, 4294967280
    %v9793 = vlaneseq
    %v9794 = vshrl.u32 %v9793, 7
    %v9795 = vsub.s32 %v9792, %v9794
    %v9796 = vrot.slane %v9547, %v9795
    %vm9797 = vcmask 195712
    %v9798 = vsel %vm9797, %v9796, %v9791
    %v9799 = vadd.s32 %v9780, 4294967272
    %v9800 = vlaneseq
    %v9801 = vshrl.u32 %v9800, 7
    %v9802 = vsub.s32 %v9799, %v9801
    %v9803 = vrot.slane %v9550, %v9802
    %vm9804 = vcmask 261312
    %v9805 = vsel %vm9804, %v9803, %v9798
    %v9806 = vadd.s32 %v9780, 4294967264
    %v9807 = vlaneseq
    %v9808 = vshrl.u32 %v9807, 7
    %v9809 = vsub.s32 %v9806, %v9808
    %v9810 = vrot.slane %v9553, %v9809
    %vm9811 = vcmask 326912
    %v9812 = vsel %vm9811, %v9810, %v9805
    %v9813 = vadd.s32 %v9780, 4294967256
    %v9814 = vlaneseq
    %v9815 = vshrl.u32 %v9814, 7
    %v9816 = vsub.s32 %v9813, %v9815
    %v9817 = vrot.slane %v9556, %v9816
    %vm9818 = vcmask 392512
    %v9819 = vsel %vm9818, %v9817, %v9812
    %v9820 = vadd.s32 %v9780, 4294967248
    %v9821 = vlaneseq
    %v9822 = vshrl.u32 %v9821, 7
    %v9823 = vsub.s32 %v9820, %v9822
    %v9824 = vrot.slane %v9559, %v9823
    %vm9825 = vcmask 458112
    %v9826 = vsel %vm9825, %v9824, %v9819
    %v9827 = vadd.s32 %v9780, 4294967240
    %v9828 = vlaneseq
    %v9829 = vshrl.u32 %v9828, 7
    %v9830 = vsub.s32 %v9827, %v9829
    %v9831 = vrot.slane %v9562, %v9830
    %vm9832 = vcmask 523712
    %v9833 = vsel %vm9832, %v9831, %v9826
    %v9834 = vadd.s32 %v9780, 4294967232
    %v9835 = vlaneseq
    %v9836 = vshrl.u32 %v9835, 7
    %v9837 = vsub.s32 %v9834, %v9836
    %v9838 = vrot.slane %v9565, %v9837
    %vm9839 = vcmask 589312
    %v9840 = vsel %vm9839, %v9838, %v9833
    %v9841 = vadd.s32 %v9780, 4294967224
    %v9842 = vlaneseq
    %v9843 = vshrl.u32 %v9842, 7
    %v9844 = vsub.s32 %v9841, %v9843
    %v9845 = vrot.slane %v9568, %v9844
    %vm9846 = vcmask 654912
    %v9847 = vsel %vm9846, %v9845, %v9840
    %v9848 = vadd.s32 %v9780, 4294967216
    %v9849 = vlaneseq
    %v9850 = vshrl.u32 %v9849, 7
    %v9851 = vsub.s32 %v9848, %v9850
    %v9852 = vrot.slane %v9571, %v9851
    %vm9853 = vcmask 720512
    %v9854 = vsel %vm9853, %v9852, %v9847
    %v9855 = vadd.s32 %v9780, 4294967208
    %v9856 = vlaneseq
    %v9857 = vshrl.u32 %v9856, 7
    %v9858 = vsub.s32 %v9855, %v9857
    %v9859 = vrot.slane %v9574, %v9858
    %vm9860 = vcmask 786112
    %v9861 = vsel %vm9860, %v9859, %v9854
    %v9862 = vadd.s32 %v9780, 4294967200
    %v9863 = vlaneseq
    %v9864 = vshrl.u32 %v9863, 7
    %v9865 = vsub.s32 %v9862, %v9864
    %v9866 = vrot.slane %v9577, %v9865
    %vm9867 = vcmask 851712
    %v9868 = vsel %vm9867, %v9866, %v9861
    %v9869 = vadd.s32 %v9780, 4294967192
    %v9870 = vlaneseq
    %v9871 = vshrl.u32 %v9870, 7
    %v9872 = vsub.s32 %v9869, %v9871
    %v9873 = vrot.slane %v9580, %v9872
    %vm9874 = vcmask 917312
    %v9875 = vsel %vm9874, %v9873, %v9868
    %v9876 = vadd.s32 %v9780, 4294967184
    %v9877 = vlaneseq
    %v9878 = vshrl.u32 %v9877, 7
    %v9879 = vsub.s32 %v9876, %v9878
    %v9880 = vrot.slane %v9583, %v9879
    %vm9881 = vcmask 982912
    %v9882 = vsel %vm9881, %v9880, %v9875
    %v9883 = vadd.s32 %v9780, 4294967176
    %v9884 = vlaneseq
    %v9885 = vshrl.u32 %v9884, 7
    %v9886 = vsub.s32 %v9883, %v9885
    %v9887 = vrot.slane %v9586, %v9886
    %vm9888 = vcmask 1048512
    %v9889 = vsel %vm9888, %v9887, %v9882
    %v9890 = vlaneseq
    %v9891 = vshrl.u32 %v9890, 7
    %v9892 = vsub.s32 %v9780, %v9891
    %v9893 = vrot.slane %v9589, %v9892
    %v9894 = vlaneseq
    %v9895 = vshrl.u32 %v9894, 7
    %v9896 = vsub.s32 %v9785, %v9895
    %v9897 = vrot.slane %v9592, %v9896
    %v9898 = vsel %vm9790, %v9897, %v9893
    %v9899 = vlaneseq
    %v9900 = vshrl.u32 %v9899, 7
    %v9901 = vsub.s32 %v9792, %v9900
    %v9902 = vrot.slane %v9595, %v9901
    %v9903 = vsel %vm9797, %v9902, %v9898
    %v9904 = vlaneseq
    %v9905 = vshrl.u32 %v9904, 7
    %v9906 = vsub.s32 %v9799, %v9905
    %v9907 = vrot.slane %v9598, %v9906
    %v9908 = vsel %vm9804, %v9907, %v9903
    %v9909 = vlaneseq
    %v9910 = vshrl.u32 %v9909, 7
    %v9911 = vsub.s32 %v9806, %v9910
    %v9912 = vrot.slane %v9601, %v9911
    %v9913 = vsel %vm9811, %v9912, %v9908
    %v9914 = vlaneseq
    %v9915 = vshrl.u32 %v9914, 7
    %v9916 = vsub.s32 %v9813, %v9915
    %v9917 = vrot.slane %v9604, %v9916
    %v9918 = vsel %vm9818, %v9917, %v9913
    %v9919 = vlaneseq
    %v9920 = vshrl.u32 %v9919, 7
    %v9921 = vsub.s32 %v9820, %v9920
    %v9922 = vrot.slane %v9607, %v9921
    %v9923 = vsel %vm9825, %v9922, %v9918
    %v9924 = vlaneseq
    %v9925 = vshrl.u32 %v9924, 7
    %v9926 = vsub.s32 %v9827, %v9925
    %v9927 = vrot.slane %v9610, %v9926
    %v9928 = vsel %vm9832, %v9927, %v9923
    %v9929 = vlaneseq
    %v9930 = vshrl.u32 %v9929, 7
    %v9931 = vsub.s32 %v9834, %v9930
    %v9932 = vrot.slane %v9613, %v9931
    %v9933 = vsel %vm9839, %v9932, %v9928
    %v9934 = vlaneseq
    %v9935 = vshrl.u32 %v9934, 7
    %v9936 = vsub.s32 %v9841, %v9935
    %v9937 = vrot.slane %v9616, %v9936
    %v9938 = vsel %vm9846, %v9937, %v9933
    %v9939 = vlaneseq
    %v9940 = vshrl.u32 %v9939, 7
    %v9941 = vsub.s32 %v9848, %v9940
    %v9942 = vrot.slane %v9619, %v9941
    %v9943 = vsel %vm9853, %v9942, %v9938
    %v9944 = vlaneseq
    %v9945 = vshrl.u32 %v9944, 7
    %v9946 = vsub.s32 %v9855, %v9945
    %v9947 = vrot.slane %v9622, %v9946
    %v9948 = vsel %vm9860, %v9947, %v9943
    %v9949 = vlaneseq
    %v9950 = vshrl.u32 %v9949, 7
    %v9951 = vsub.s32 %v9862, %v9950
    %v9952 = vrot.slane %v9625, %v9951
    %v9953 = vsel %vm9867, %v9952, %v9948
    %v9954 = vlaneseq
    %v9955 = vshrl.u32 %v9954, 7
    %v9956 = vsub.s32 %v9869, %v9955
    %v9957 = vrot.slane %v9628, %v9956
    %v9958 = vsel %vm9874, %v9957, %v9953
    %v9959 = vlaneseq
    %v9960 = vshrl.u32 %v9959, 7
    %v9961 = vsub.s32 %v9876, %v9960
    %v9962 = vrot.slane %v9631, %v9961
    %v9963 = vsel %vm9881, %v9962, %v9958
    %v9964 = vlaneseq
    %v9965 = vshrl.u32 %v9964, 7
    %v9966 = vsub.s32 %v9883, %v9965
    %v9967 = vrot.slane %v9634, %v9966
    %v9968 = vsel %vm9888, %v9967, %v9963
    %v9969 = vlaneseq
    %v9970 = vshrl.u32 %v9969, 7
    %v9971 = vsub.s32 %v9780, %v9970
    %v9972 = vrot.slane %v9637, %v9971
    %v9973 = vlaneseq
    %v9974 = vshrl.u32 %v9973, 7
    %v9975 = vsub.s32 %v9785, %v9974
    %v9976 = vrot.slane %v9640, %v9975
    %v9977 = vsel %vm9790, %v9976, %v9972
    %v9978 = vlaneseq
    %v9979 = vshrl.u32 %v9978, 7
    %v9980 = vsub.s32 %v9792, %v9979
    %v9981 = vrot.slane %v9643, %v9980
    %v9982 = vsel %vm9797, %v9981, %v9977
    %v9983 = vlaneseq
    %v9984 = vshrl.u32 %v9983, 7
    %v9985 = vsub.s32 %v9799, %v9984
    %v9986 = vrot.slane %v9646, %v9985
    %v9987 = vsel %vm9804, %v9986, %v9982
    %v9988 = vlaneseq
    %v9989 = vshrl.u32 %v9988, 7
    %v9990 = vsub.s32 %v9806, %v9989
    %v9991 = vrot.slane %v9649, %v9990
    %v9992 = vsel %vm9811, %v9991, %v9987
    %v9993 = vlaneseq
    %v9994 = vshrl.u32 %v9993, 7
    %v9995 = vsub.s32 %v9813, %v9994
    %v9996 = vrot.slane %v9652, %v9995
    %v9997 = vsel %vm9818, %v9996, %v9992
    %v9998 = vlaneseq
    %v9999 = vshrl.u32 %v9998, 7
    %v10000 = vsub.s32 %v9820, %v9999
    %v10001 = vrot.slane %v9655, %v10000
    %v10002 = vsel %vm9825, %v10001, %v9997
    %v10003 = vlaneseq
    %v10004 = vshrl.u32 %v10003, 7
    %v10005 = vsub.s32 %v9827, %v10004
    %v10006 = vrot.slane %v9658, %v10005
    %v10007 = vsel %vm9832, %v10006, %v10002
    %v10008 = vlaneseq
    %v10009 = vshrl.u32 %v10008, 7
    %v10010 = vsub.s32 %v9834, %v10009
    %v10011 = vrot.slane %v9661, %v10010
    %v10012 = vsel %vm9839, %v10011, %v10007
    %v10013 = vlaneseq
    %v10014 = vshrl.u32 %v10013, 7
    %v10015 = vsub.s32 %v9841, %v10014
    %v10016 = vrot.slane %v9664, %v10015
    %v10017 = vsel %vm9846, %v10016, %v10012
    %v10018 = vlaneseq
    %v10019 = vshrl.u32 %v10018, 7
    %v10020 = vsub.s32 %v9848, %v10019
    %v10021 = vrot.slane %v9667, %v10020
    %v10022 = vsel %vm9853, %v10021, %v10017
    %v10023 = vlaneseq
    %v10024 = vshrl.u32 %v10023, 7
    %v10025 = vsub.s32 %v9855, %v10024
    %v10026 = vrot.slane %v9670, %v10025
    %v10027 = vsel %vm9860, %v10026, %v10022
    %v10028 = vlaneseq
    %v10029 = vshrl.u32 %v10028, 7
    %v10030 = vsub.s32 %v9862, %v10029
    %v10031 = vrot.slane %v9673, %v10030
    %v10032 = vsel %vm9867, %v10031, %v10027
    %v10033 = vlaneseq
    %v10034 = vshrl.u32 %v10033, 7
    %v10035 = vsub.s32 %v9869, %v10034
    %v10036 = vrot.slane %v9676, %v10035
    %v10037 = vsel %vm9874, %v10036, %v10032
    %v10038 = vlaneseq
    %v10039 = vshrl.u32 %v10038, 7
    %v10040 = vsub.s32 %v9876, %v10039
    %v10041 = vrot.slane %v9679, %v10040
    %v10042 = vsel %vm9881, %v10041, %v10037
    %v10043 = vlaneseq
    %v10044 = vshrl.u32 %v10043, 7
    %v10045 = vsub.s32 %v9883, %v10044
    %v10046 = vrot.slane %v9682, %v10045
    %v10047 = vsel %vm9888, %v10046, %v10042
    %v10048 = vlaneseq
    %v10049 = vshrl.u32 %v10048, 7
    %v10050 = vsub.s32 %v9780, %v10049
    %v10051 = vrot.slane %v9685, %v10050
    %v10052 = vlaneseq
    %v10053 = vshrl.u32 %v10052, 7
    %v10054 = vsub.s32 %v9785, %v10053
    %v10055 = vrot.slane %v9688, %v10054
    %v10056 = vsel %vm9790, %v10055, %v10051
    %v10057 = vlaneseq
    %v10058 = vshrl.u32 %v10057, 7
    %v10059 = vsub.s32 %v9792, %v10058
    %v10060 = vrot.slane %v9691, %v10059
    %v10061 = vsel %vm9797, %v10060, %v10056
    %v10062 = vlaneseq
    %v10063 = vshrl.u32 %v10062, 7
    %v10064 = vsub.s32 %v9799, %v10063
    %v10065 = vrot.slane %v9694, %v10064
    %v10066 = vsel %vm9804, %v10065, %v10061
    %v10067 = vlaneseq
    %v10068 = vshrl.u32 %v10067, 7
    %v10069 = vsub.s32 %v9806, %v10068
    %v10070 = vrot.slane %v9697, %v10069
    %v10071 = vsel %vm9811, %v10070, %v10066
    %v10072 = vlaneseq
    %v10073 = vshrl.u32 %v10072, 7
    %v10074 = vsub.s32 %v9813, %v10073
    %v10075 = vrot.slane %v9700, %v10074
    %v10076 = vsel %vm9818, %v10075, %v10071
    %v10077 = vlaneseq
    %v10078 = vshrl.u32 %v10077, 7
    %v10079 = vsub.s32 %v9820, %v10078
    %v10080 = vrot.slane %v9703, %v10079
    %v10081 = vsel %vm9825, %v10080, %v10076
    %v10082 = vlaneseq
    %v10083 = vshrl.u32 %v10082, 7
    %v10084 = vsub.s32 %v9827, %v10083
    %v10085 = vrot.slane %v9706, %v10084
    %v10086 = vsel %vm9832, %v10085, %v10081
    %v10087 = vlaneseq
    %v10088 = vshrl.u32 %v10087, 7
    %v10089 = vsub.s32 %v9834, %v10088
    %v10090 = vrot.slane %v9709, %v10089
    %v10091 = vsel %vm9839, %v10090, %v10086
    %v10092 = vlaneseq
    %v10093 = vshrl.u32 %v10092, 7
    %v10094 = vsub.s32 %v9841, %v10093
    %v10095 = vrot.slane %v9712, %v10094
    %v10096 = vsel %vm9846, %v10095, %v10091
    %v10097 = vlaneseq
    %v10098 = vshrl.u32 %v10097, 7
    %v10099 = vsub.s32 %v9848, %v10098
    %v10100 = vrot.slane %v9715, %v10099
    %v10101 = vsel %vm9853, %v10100, %v10096
    %v10102 = vlaneseq
    %v10103 = vshrl.u32 %v10102, 7
    %v10104 = vsub.s32 %v9855, %v10103
    %v10105 = vrot.slane %v9718, %v10104
    %v10106 = vsel %vm9860, %v10105, %v10101
    %v10107 = vlaneseq
    %v10108 = vshrl.u32 %v10107, 7
    %v10109 = vsub.s32 %v9862, %v10108
    %v10110 = vrot.slane %v9721, %v10109
    %v10111 = vsel %vm9867, %v10110, %v10106
    %v10112 = vlaneseq
    %v10113 = vshrl.u32 %v10112, 7
    %v10114 = vsub.s32 %v9869, %v10113
    %v10115 = vrot.slane %v9724, %v10114
    %v10116 = vsel %vm9874, %v10115, %v10111
    %v10117 = vlaneseq
    %v10118 = vshrl.u32 %v10117, 7
    %v10119 = vsub.s32 %v9876, %v10118
    %v10120 = vrot.slane %v9727, %v10119
    %v10121 = vsel %vm9881, %v10120, %v10116
    %v10122 = vlaneseq
    %v10123 = vshrl.u32 %v10122, 7
    %v10124 = vsub.s32 %v9883, %v10123
    %v10125 = vrot.slane %v9730, %v10124
    %v10126 = vsel %vm9888, %v10125, %v10121
    %v10127 = vlaneseq
    %v10128 = vshrl.u32 %v10127, 7
    %v10129 = vsub.s32 %v9780, %v10128
    %v10130 = vrot.slane %v9733, %v10129
    %v10131 = vlaneseq
    %v10132 = vshrl.u32 %v10131, 7
    %v10133 = vsub.s32 %v9785, %v10132
    %v10134 = vrot.slane %v9736, %v10133
    %v10135 = vsel %vm9790, %v10134, %v10130
    %v10136 = vlaneseq
    %v10137 = vshrl.u32 %v10136, 7
    %v10138 = vsub.s32 %v9792, %v10137
    %v10139 = vrot.slane %v9739, %v10138
    %v10140 = vsel %vm9797, %v10139, %v10135
    %v10141 = vlaneseq
    %v10142 = vshrl.u32 %v10141, 7
    %v10143 = vsub.s32 %v9799, %v10142
    %v10144 = vrot.slane %v9742, %v10143
    %v10145 = vsel %vm9804, %v10144, %v10140
    %v10146 = vlaneseq
    %v10147 = vshrl.u32 %v10146, 7
    %v10148 = vsub.s32 %v9806, %v10147
    %v10149 = vrot.slane %v9745, %v10148
    %v10150 = vsel %vm9811, %v10149, %v10145
    %v10151 = vlaneseq
    %v10152 = vshrl.u32 %v10151, 7
    %v10153 = vsub.s32 %v9813, %v10152
    %v10154 = vrot.slane %v9748, %v10153
    %v10155 = vsel %vm9818, %v10154, %v10150
    %v10156 = vlaneseq
    %v10157 = vshrl.u32 %v10156, 7
    %v10158 = vsub.s32 %v9820, %v10157
    %v10159 = vrot.slane %v9751, %v10158
    %v10160 = vsel %vm9825, %v10159, %v10155
    %v10161 = vlaneseq
    %v10162 = vshrl.u32 %v10161, 7
    %v10163 = vsub.s32 %v9827, %v10162
    %v10164 = vrot.slane %v9754, %v10163
    %v10165 = vsel %vm9832, %v10164, %v10160
    %v10166 = vlaneseq
    %v10167 = vshrl.u32 %v10166, 7
    %v10168 = vsub.s32 %v9834, %v10167
    %v10169 = vrot.slane %v9757, %v10168
    %v10170 = vsel %vm9839, %v10169, %v10165
    %v10171 = vlaneseq
    %v10172 = vshrl.u32 %v10171, 7
    %v10173 = vsub.s32 %v9841, %v10172
    %v10174 = vrot.slane %v9760, %v10173
    %v10175 = vsel %vm9846, %v10174, %v10170
    %v10176 = vlaneseq
    %v10177 = vshrl.u32 %v10176, 7
    %v10178 = vsub.s32 %v9848, %v10177
    %v10179 = vrot.slane %v9763, %v10178
    %v10180 = vsel %vm9853, %v10179, %v10175
    %v10181 = vlaneseq
    %v10182 = vshrl.u32 %v10181, 7
    %v10183 = vsub.s32 %v9855, %v10182
    %v10184 = vrot.slane %v9766, %v10183
    %v10185 = vsel %vm9860, %v10184, %v10180
    %v10186 = vlaneseq
    %v10187 = vshrl.u32 %v10186, 7
    %v10188 = vsub.s32 %v9862, %v10187
    %v10189 = vrot.slane %v9769, %v10188
    %v10190 = vsel %vm9867, %v10189, %v10185
    %v10191 = vlaneseq
    %v10192 = vshrl.u32 %v10191, 7
    %v10193 = vsub.s32 %v9869, %v10192
    %v10194 = vrot.slane %v9772, %v10193
    %v10195 = vsel %vm9874, %v10194, %v10190
    %v10196 = vlaneseq
    %v10197 = vshrl.u32 %v10196, 7
    %v10198 = vsub.s32 %v9876, %v10197
    %v10199 = vrot.slane %v9775, %v10198
    %v10200 = vsel %vm9881, %v10199, %v10195
    %v10201 = vlaneseq
    %v10202 = vshrl.u32 %v10201, 7
    %v10203 = vsub.s32 %v9883, %v10202
    %v10204 = vrot.slane %v9778, %v10203
    %v10205 = vsel %vm9888, %v10204, %v10200
    %v10206 = vcombine.low %v9889, %v9968
    %v10207 = vcombine.low %v10047, %v10126
    %v10209 = vunpack.c.l.s4 1966171168
    %v10210 = vunpack.c.0.s8 %v10209
    %v10211 = vlaneseq
    %v10212 = vshrl.u32 %v10211, 7
    %v10213 = vsub.s32 %v10210, %v10212
    %v10214 = vrot.slane %v10206, %v10213
    %v10216 = vunpack.c.l.s4 1966171168
    %v10217 = vunpack.c.0.s8 %v10216
    %v10218 = vlaneseq
    %v10219 = vshrl.u32 %v10218, 7
    %v10220 = vsub.s32 %v10217, %v10219
    %v10221 = vrot.slane %v10207, %v10220
    %v10223 = vunpack.c.l.s4 1966171168
    %v10224 = vunpack.c.0.s8 %v10223
    %v10225 = vlaneseq
    %v10226 = vshrl.u32 %v10225, 7
    %v10227 = vsub.s32 %v10224, %v10226
    %v10228 = vrot.slane %v10205, %v10227
    %v10229 = vcombine.low %v10214, %v10221
    %v10231 = vunpack.c.l.s4 1966171168
    %v10232 = vunpack.c.0.s8 %v10231
    %v10233 = vlaneseq
    %v10234 = vshrl.u32 %v10233, 7
    %v10235 = vsub.s32 %v10232, %v10234
    %v10236 = vrot.slane %v10229, %v10235
    %v10238 = vunpack.c.l.s4 1966171168
    %v10239 = vunpack.c.0.s8 %v10238
    %v10240 = vlaneseq
    %v10241 = vshrl.u32 %v10240, 7
    %v10242 = vsub.s32 %v10239, %v10241
    %v10243 = vrot.slane %v10228, %v10242
    %v10244 = vcombine.low %v10236, %v10243
    %v10246 = vlaneseq
    %vm10247 = vcmp.ge.s32.totalorder %v10246, 0
    %vm10248 = vcmp.lt.s32.totalorder %v10246, 640
    %vm10249 = vmand %vm10247, %vm10248
    %10250 = vst.msk [vmem:[#allocation3] sm:$0x1f] %vm10249, %v10244
    // Predicated region
    $region30: #{tpu_custom_call.1} parent=1 // pred_check
      _
    $region31: #{tpu_custom_call.1} parent=1 // pred_check_branch
      %10252 = sbr.rel (0) target = $region33
    $region32: #{tpu_custom_call.1} parent=1 // pred_region
      %s10254 = ssub.s32 80, 80
      %10255 = vsyncadd [#allocation4], %s10254
      %s10257 = sshll.u32 [#allocation3], 4
      %s10258 = int_to_ptr.vmem [resolvable:$true] %s10257
      %10260 = dma.vmem_to_hbm [thread:$0]  %s10258, 80, %s7, [#allocation4]
    $region33: #{tpu_custom_call.1} parent=1 // pred_fallthru
      _
    // Predicated region
    $region34: #{tpu_custom_call.1} parent=1 // pred_check
      _
    $region35: #{tpu_custom_call.1} parent=1 // pred_check_branch
      %10262 = sbr.rel (0) target = $region37
    $region36: #{tpu_custom_call.1} parent=1 // pred_region
      %10263 = dma.done [#allocation4], 80
    $region37: #{tpu_custom_call.1} parent=1 // pred_fallthru
      _
    %10264 = vsyncpa [#allocation4], 1

</llo_original>
